<compile_context>
chip_gen: v6e
topology: v6e:2x2x1
jax: 0.10.0
libtpu: 0.0.40
codegen_flags: <defaults>
</compile_context>

<pallas_src>
import functools
import itertools

import numpy as np
import jax
import jax.numpy as jnp
from jax.experimental import pallas as pl
from jax.experimental.pallas import tpu as pltpu


def convblock_kernel(cnt_ref, feats_ref, nbr_ref, w_ref, gmap_ref, eg_ref, eb_ref,
                     o_ref, *, k_vol, cg, eps):
    # cnt_ref  : (B,) int32 in SMEM (scalar prefetch) — valid points per batch item
    # feats_ref: (1, Npad, Cin)   bf16   dense per-batch feature slab (padded rows 0)
    # nbr_ref  : (1, Npad, K)     int32  local neighbor indices, -1 = absent
    # w_ref    : (K, Cin, Coutp)  bf16   conv weight, Cout lane-padded to 128
    # gmap_ref : (Coutp, Coutp)   f32    channel->group-sum->channel map (1 within group)
    # eg_ref/eb_ref : (1, 1, Coutp) f32  folded GN affine + scale_shift (per batch)
    # o_ref    : (1, Npad, Coutp) bf16
    b = pl.program_id(0)
    n_pad = o_ref.shape[1]
    c_outp = o_ref.shape[2]
    n_valid = cnt_ref[b]                                         # scalar int32 (SMEM)

    feats = feats_ref[0]                                         # (Npad, Cin) bf16
    idx = nbr_ref[0]                                             # (Npad, K)   int32
    col = jax.lax.broadcasted_iota(jnp.int32, (n_pad, n_pad), 1)

    # --- sparse conv: in-kernel neighbor gather (one-hot matmul) + weight matmul ---
    # sel is an exact one-hot per row (idx == -1 -> zero row), so the gather reproduces
    # the bf16 feature values exactly; accumulation stays f32 on the MXU.
    y = jnp.zeros((n_pad, c_outp), jnp.float32)
    for k in range(k_vol):                                       # K=27, unrolled
        sel = (idx[:, k:k + 1] == col).astype(jnp.bfloat16)      # (Npad, Npad)
        g = jnp.dot(sel, feats, preferred_element_type=jnp.float32)       # (Npad, Cin)
        y = y + jnp.dot(g.astype(jnp.bfloat16), w_ref[k],
                        preferred_element_type=jnp.float32)               # (Npad, Coutp)

    # --- GroupNorm over this batch item's valid points (padded rows are exact zeros) ---
    denom = jnp.maximum(n_valid.astype(jnp.float32), 1.0) * cg   # elems per group
    ch_sum = jnp.sum(y, axis=0, keepdims=True)                   # (1, Coutp)
    ch_sq = jnp.sum(y * y, axis=0, keepdims=True)                # (1, Coutp)
    stats = jnp.concatenate([ch_sum, ch_sq], axis=0)             # (2, Coutp)
    mom = jnp.dot(stats, gmap_ref[...],
                  preferred_element_type=jnp.float32) / denom    # (2, Coutp)
    mean_c = mom[0:1]                                            # E[x]  per channel
    var_c = jnp.maximum(mom[1:2] - mean_c * mean_c, 0.0)         # clamp >= 0
    inv_c = jax.lax.rsqrt(var_c + eps)

    # --- folded affine (gamma/beta already combined with scale_shift) + SiLU ---
    z = (y - mean_c) * (inv_c * eg_ref[0]) + eb_ref[0]
    z = z * jax.nn.sigmoid(z)

    # padded rows are NOT re-zeroed: consumers slice rows by the per-batch counts.
    o_ref[0] = z.astype(o_ref.dtype)


def conv_block(counts, feats, nbr, w, gmap, eff_gamma, eff_beta, *, cg):
    B, Npad, Cin = feats.shape
    K = nbr.shape[2]
    Coutp = w.shape[2]
    kernel = functools.partial(convblock_kernel, k_vol=K, cg=float(cg), eps=1e-5)
    return pl.pallas_call(
        kernel,
        out_shape=jax.ShapeDtypeStruct((B, Npad, Coutp), jnp.bfloat16),
        grid_spec=pltpu.PrefetchScalarGridSpec(
            num_scalar_prefetch=1,                       # counts -> SMEM
            grid=(B,),
            in_specs=[
                pl.BlockSpec((1, Npad, Cin), lambda b, cnt: (b, 0, 0)),
                pl.BlockSpec((1, Npad, K), lambda b, cnt: (b, 0, 0)),
                pl.BlockSpec((K, Cin, Coutp), lambda b, cnt: (0, 0, 0)),
                pl.BlockSpec((Coutp, Coutp), lambda b, cnt: (0, 0)),
                pl.BlockSpec((1, 1, Coutp), lambda b, cnt: (b, 0, 0)),
                pl.BlockSpec((1, 1, Coutp), lambda b, cnt: (b, 0, 0)),
            ],
            out_specs=pl.BlockSpec((1, Npad, Coutp), lambda b, cnt: (b, 0, 0)),
        ),
        compiler_params=pltpu.CompilerParams(
            dimension_semantics=("parallel",),
            vmem_limit_bytes=64 * 1024 * 1024),
    )(counts, feats, nbr, w, gmap, eff_gamma, eff_beta)


if __name__ == "__main__":
    B, Cin, Cout, groups, kernel_size, dim = 2, 4, 16, 8, 3, 3
    K = kernel_size ** dim                 # 27
    Cg = Cout // groups                    # channels per group
    R = 6                                  # voxel grid extent per axis
    counts = [40, 52]                      # points per batch item
    Npad = 64
    LANE = 128
    Coutp = ((Cout + LANE - 1) // LANE) * LANE   # 128 (lane-dense output)
    rng = np.random.default_rng(0)

    # --- build sparse coordinates (batch index first, like ME) ---
    coords = []
    for b in range(B):
        all_vox = np.array(list(itertools.product(range(R), repeat=3)), dtype=np.int32)
        sel = rng.choice(len(all_vox), size=counts[b], replace=False)
        cb = all_vox[sel]
        coords.append(np.concatenate([np.full((counts[b], 1), b, np.int32), cb], axis=1))
    C = np.concatenate(coords, axis=0)                  # (N, 4)
    N = C.shape[0]
    offsets = np.concatenate([[0], np.cumsum(counts)])[:B]

    # --- deterministic features / parameters ---
    key = jax.random.PRNGKey(0)
    kf, kw, kg, kb, ks1, ks2 = jax.random.split(key, 6)
    F_feats = jax.random.normal(kf, (N, Cin), jnp.float32)
    W = jax.random.normal(kw, (K, Cin, Cout), jnp.float32) * 0.2   # conv weight (no bias)
    gamma = 1.0 + 0.1 * jax.random.normal(kg, (1, Cout), jnp.float32)
    beta = 0.1 * jax.random.normal(kb, (1, Cout), jnp.float32)
    scale = 0.5 * jax.random.normal(ks1, (B, 1, Cout), jnp.float32)
    shift = 0.5 * jax.random.normal(ks2, (B, 1, Cout), jnp.float32)

    # --- neighbor map for ks=3, stride=1, dilation=1, dimension=3 (host glue:
    #     this replaces MinkowskiEngine's coordinate-manager hash-map lookup) ---
    coord_to_idx = {tuple(c): i for i, c in enumerate(C.tolist())}
    kernel_offsets = list(itertools.product((-1, 0, 1), repeat=3))
    nbr_global = np.full((K, N), -1, np.int32)
    for k, off in enumerate(kernel_offsets):
        for i in range(N):
            kc = (int(C[i, 0]), int(C[i, 1] + off[0]),
                  int(C[i, 2] + off[1]), int(C[i, 3] + off[2]))
            nbr_global[k, i] = coord_to_idx.get(kc, -1)

    # --- kernel inputs: dense per-batch feature slab + LOCAL neighbor index table ---
    feats_slab = np.zeros((B, Npad, Cin), np.float32)
    nbr_local = np.full((B, Npad, K), -1, np.int32)
    for b in range(B):
        s, n = int(offsets[b]), counts[b]
        feats_slab[b, :n] = np.asarray(F_feats)[s:s + n]
        loc = nbr_global[:, s:s + n]                      # neighbors stay within a batch
        nbr_local[b, :n, :] = np.where(loc >= 0, loc - s, -1).T

    # conv weight, output channels lane-padded to 128 (padded channels stay exact 0)
    W_pad = np.zeros((K, Cin, Coutp), np.float32)
    W_pad[:, :, :Cout] = np.asarray(W)

    # --- fold scale_shift into the GroupNorm affine (per batch item) ---
    eff_gamma = np.asarray(gamma).reshape(1, 1, Cout) * (np.asarray(scale) + 1.0)
    eff_beta = (np.asarray(beta).reshape(1, 1, Cout) * (np.asarray(scale) + 1.0)
                + np.asarray(shift))
    eg_pad = np.zeros((B, 1, Coutp), np.float32); eg_pad[:, :, :Cout] = eff_gamma
    eb_pad = np.zeros((B, 1, Coutp), np.float32); eb_pad[:, :, :Cout] = eff_beta

    # --- channel<->group map: (stats @ Gmap)[c'] = sum of stats over group(c') ---
    Gmap = np.zeros((Coutp, Coutp), np.float32)
    for c in range(Cout):
        g = c // Cg
        Gmap[c, g * Cg:(g + 1) * Cg] = 1.0

    counts_arr = jnp.asarray(np.asarray(counts, np.int32))

    # --- run Pallas kernel ---
    out_pad = conv_block(counts_arr,
                         jnp.asarray(feats_slab, jnp.bfloat16),
                         jnp.asarray(nbr_local),
                         jnp.asarray(W_pad, jnp.bfloat16),
                         jnp.asarray(Gmap),
                         jnp.asarray(eg_pad), jnp.asarray(eb_pad),
                         cg=Cg)
    out_pad = jax.block_until_ready(out_pad)
    out_pad_f = np.asarray(out_pad.astype(jnp.float32))
    out = np.concatenate([out_pad_f[b, :counts[b], :Cout] for b in range(B)], axis=0)

    # --- pure numpy reference (conv -> per-batch GroupNorm -> scale_shift -> SiLU),
    #     built from the same bf16-quantized features / weights the kernel sees ---
    F_bf = np.asarray(jnp.asarray(F_feats, jnp.bfloat16).astype(jnp.float32))
    W_bf = np.asarray(jnp.asarray(W, jnp.bfloat16).astype(jnp.float32))
    nbr_valid = nbr_global >= 0
    gathered = np.where(nbr_valid[:, :, None],
                        F_bf[np.clip(nbr_global, 0, N - 1)], 0.0).astype(np.float32)
    y = np.einsum('knc,kcd->nd', gathered, W_bf)
    gamma_np, beta_np = np.asarray(gamma)[0], np.asarray(beta)[0]
    scale_np, shift_np = np.asarray(scale)[:, 0], np.asarray(shift)[:, 0]
    ref = np.zeros((N, Cout), np.float32)
    for b in range(B):
        s, n = int(offsets[b]), counts[b]
        yb = y[s:s + n].reshape(n, groups, Cg)
        mean = yb.mean(axis=(0, 2), keepdims=True)
        var = yb.var(axis=(0, 2), keepdims=True)
        nb = ((yb - mean) / np.sqrt(var + 1e-5)).reshape(n, Cout)
        nb = nb * gamma_np + beta_np
        zb = nb * (scale_np[b] + 1.0) + shift_np[b]
        ref[s:s + n] = zb / (1.0 + np.exp(-zb))          # SiLU = z * sigmoid(z)

    # tolerance accounts for bf16 output + bf16 conv operands
    np.testing.assert_allclose(out, ref, rtol=2e-2, atol=2e-2)
    print("KERNEL_OK")
</pallas_src>

<mosaic_0001>
module attributes {stable_mosaic.version = 11 : i64} {
  func.func @convblock_kernel(%arg0: i32, %arg1: memref<2xi32, #tpu.memory_space<smem>>, %arg2: memref<1x64x4xbf16, #tpu.memory_space<vmem>>, %arg3: memref<1x64x27xi32, #tpu.memory_space<vmem>>, %arg4: memref<27x4x128xbf16, #tpu.memory_space<vmem>>, %arg5: memref<128x128xf32, #tpu.memory_space<vmem>>, %arg6: memref<1x1x128xf32, #tpu.memory_space<vmem>>, %arg7: memref<1x1x128xf32, #tpu.memory_space<vmem>>, %arg8: memref<1x64x128xbf16, #tpu.memory_space<vmem>>) attributes {dimension_semantics = [#tpu.dimension_semantics<parallel>], iteration_bounds = array<i64: 2>, scalar_prefetch = 1 : i64, scratch_operands = 0 : i64, tpu.core_type = #tpu.core_type<tc>, window_params = [{transform_indices = @transform_0, window_bounds = array<i64: 1, 64, 4>}, {transform_indices = @transform_1, window_bounds = array<i64: 1, 64, 27>}, {pipeline_mode = #tpu.pipeline_mode<synchronous>, transform_indices = @transform_2, window_bounds = array<i64: 27, 4, 128>}, {pipeline_mode = #tpu.pipeline_mode<synchronous>, transform_indices = @transform_3, window_bounds = array<i64: 128, 128>}, {transform_indices = @transform_4, window_bounds = array<i64: 1, 1, 128>}, {transform_indices = @transform_5, window_bounds = array<i64: 1, 1, 128>}, {transform_indices = @transform_6, window_bounds = array<i64: 1, 64, 128>}]} {
    %0 = arith.index_cast %arg0 : i32 to index
    %1 = memref.load %arg1[%0] : memref<2xi32, #tpu.memory_space<smem>>
    %c0 = arith.constant 0 : index
    %c0_0 = arith.constant 0 : index
    %c0_1 = arith.constant 0 : index
    %2 = vector.load %arg2[%c0, %c0_0, %c0_1] : memref<1x64x4xbf16, #tpu.memory_space<vmem>>, vector<1x64x4xbf16>
    %3 = vector.shape_cast %2 : vector<1x64x4xbf16> to vector<64x4xbf16>
    %c0_2 = arith.constant 0 : index
    %c0_3 = arith.constant 0 : index
    %c0_4 = arith.constant 0 : index
    %4 = vector.load %arg3[%c0_2, %c0_3, %c0_4] : memref<1x64x27xi32, #tpu.memory_space<vmem>>, vector<1x64x27xi32>
    %5 = vector.shape_cast %4 : vector<1x64x27xi32> to vector<64x27xi32>
    %6 = tpu.iota {dimensions = array<i32: 1>} : vector<64x64xi32>
    %cst = arith.constant 0.000000e+00 : f32
    %7 = vector.broadcast %cst : f32 to vector<64x128xf32>
    %8 = vector.extract_strided_slice %5 {offsets = [0, 0], sizes = [64, 1], strides = [1, 1]} : vector<64x27xi32> to vector<64x1xi32>
    %9 = vector.broadcast %8 : vector<64x1xi32> to vector<64x64xi32>
    %10 = arith.cmpi eq, %9, %6 : vector<64x64xi32>
    %11 = arith.extui %10 : vector<64x64xi1> to vector<64x64xi32>
    %12 = arith.sitofp %11 : vector<64x64xi32> to vector<64x64xf32>
    %13 = arith.truncf %12 : vector<64x64xf32> to vector<64x64xbf16>
    %cst_5 = arith.constant dense<0.000000e+00> : vector<64x4xf32>
    %14 = tpu.matmul %13, %3, %cst_5 {dimension_numbers = #tpu.dot_dimension_numbers<[1], [0], [0], [1], [0, 0, 1, 1], [], []>} : vector<64x64xbf16>, vector<64x4xbf16>, vector<64x4xf32> -> vector<64x4xf32>
    %15 = arith.truncf %14 : vector<64x4xf32> to vector<64x4xbf16>
    %c0_6 = arith.constant 0 : index
    %c0_7 = arith.constant 0 : index
    %c0_8 = arith.constant 0 : index
    %16 = vector.load %arg4[%c0_6, %c0_7, %c0_8] : memref<27x4x128xbf16, #tpu.memory_space<vmem>>, vector<1x4x128xbf16>
    %17 = vector.shape_cast %16 : vector<1x4x128xbf16> to vector<4x128xbf16>
    %cst_9 = arith.constant dense<0.000000e+00> : vector<64x128xf32>
    %18 = tpu.matmul %15, %17, %cst_9 {dimension_numbers = #tpu.dot_dimension_numbers<[1], [0], [0], [1], [0, 0, 1, 1], [], []>} : vector<64x4xbf16>, vector<4x128xbf16>, vector<64x128xf32> -> vector<64x128xf32>
    %19 = arith.addf %7, %18 : vector<64x128xf32>
    %20 = vector.extract_strided_slice %5 {offsets = [0, 1], sizes = [64, 1], strides = [1, 1]} : vector<64x27xi32> to vector<64x1xi32>
    %21 = vector.broadcast %20 : vector<64x1xi32> to vector<64x64xi32>
    %22 = arith.cmpi eq, %21, %6 : vector<64x64xi32>
    %23 = arith.extui %22 : vector<64x64xi1> to vector<64x64xi32>
    %24 = arith.sitofp %23 : vector<64x64xi32> to vector<64x64xf32>
    %25 = arith.truncf %24 : vector<64x64xf32> to vector<64x64xbf16>
    %cst_10 = arith.constant dense<0.000000e+00> : vector<64x4xf32>
    %26 = tpu.matmul %25, %3, %cst_10 {dimension_numbers = #tpu.dot_dimension_numbers<[1], [0], [0], [1], [0, 0, 1, 1], [], []>} : vector<64x64xbf16>, vector<64x4xbf16>, vector<64x4xf32> -> vector<64x4xf32>
    %27 = arith.truncf %26 : vector<64x4xf32> to vector<64x4xbf16>
    %c1 = arith.constant 1 : index
    %c0_11 = arith.constant 0 : index
    %c0_12 = arith.constant 0 : index
    %28 = vector.load %arg4[%c1, %c0_11, %c0_12] : memref<27x4x128xbf16, #tpu.memory_space<vmem>>, vector<1x4x128xbf16>
    %29 = vector.shape_cast %28 : vector<1x4x128xbf16> to vector<4x128xbf16>
    %cst_13 = arith.constant dense<0.000000e+00> : vector<64x128xf32>
    %30 = tpu.matmul %27, %29, %cst_13 {dimension_numbers = #tpu.dot_dimension_numbers<[1], [0], [0], [1], [0, 0, 1, 1], [], []>} : vector<64x4xbf16>, vector<4x128xbf16>, vector<64x128xf32> -> vector<64x128xf32>
    %31 = arith.addf %19, %30 : vector<64x128xf32>
    %32 = vector.extract_strided_slice %5 {offsets = [0, 2], sizes = [64, 1], strides = [1, 1]} : vector<64x27xi32> to vector<64x1xi32>
    %33 = vector.broadcast %32 : vector<64x1xi32> to vector<64x64xi32>
    %34 = arith.cmpi eq, %33, %6 : vector<64x64xi32>
    %35 = arith.extui %34 : vector<64x64xi1> to vector<64x64xi32>
    %36 = arith.sitofp %35 : vector<64x64xi32> to vector<64x64xf32>
    %37 = arith.truncf %36 : vector<64x64xf32> to vector<64x64xbf16>
    %cst_14 = arith.constant dense<0.000000e+00> : vector<64x4xf32>
    %38 = tpu.matmul %37, %3, %cst_14 {dimension_numbers = #tpu.dot_dimension_numbers<[1], [0], [0], [1], [0, 0, 1, 1], [], []>} : vector<64x64xbf16>, vector<64x4xbf16>, vector<64x4xf32> -> vector<64x4xf32>
    %39 = arith.truncf %38 : vector<64x4xf32> to vector<64x4xbf16>
    %c2 = arith.constant 2 : index
    %c0_15 = arith.constant 0 : index
    %c0_16 = arith.constant 0 : index
    %40 = vector.load %arg4[%c2, %c0_15, %c0_16] : memref<27x4x128xbf16, #tpu.memory_space<vmem>>, vector<1x4x128xbf16>
    %41 = vector.shape_cast %40 : vector<1x4x128xbf16> to vector<4x128xbf16>
    %cst_17 = arith.constant dense<0.000000e+00> : vector<64x128xf32>
    %42 = tpu.matmul %39, %41, %cst_17 {dimension_numbers = #tpu.dot_dimension_numbers<[1], [0], [0], [1], [0, 0, 1, 1], [], []>} : vector<64x4xbf16>, vector<4x128xbf16>, vector<64x128xf32> -> vector<64x128xf32>
    %43 = arith.addf %31, %42 : vector<64x128xf32>
    %44 = vector.extract_strided_slice %5 {offsets = [0, 3], sizes = [64, 1], strides = [1, 1]} : vector<64x27xi32> to vector<64x1xi32>
    %45 = vector.broadcast %44 : vector<64x1xi32> to vector<64x64xi32>
    %46 = arith.cmpi eq, %45, %6 : vector<64x64xi32>
    %47 = arith.extui %46 : vector<64x64xi1> to vector<64x64xi32>
    %48 = arith.sitofp %47 : vector<64x64xi32> to vector<64x64xf32>
    %49 = arith.truncf %48 : vector<64x64xf32> to vector<64x64xbf16>
    %cst_18 = arith.constant dense<0.000000e+00> : vector<64x4xf32>
    %50 = tpu.matmul %49, %3, %cst_18 {dimension_numbers = #tpu.dot_dimension_numbers<[1], [0], [0], [1], [0, 0, 1, 1], [], []>} : vector<64x64xbf16>, vector<64x4xbf16>, vector<64x4xf32> -> vector<64x4xf32>
    %51 = arith.truncf %50 : vector<64x4xf32> to vector<64x4xbf16>
    %c3 = arith.constant 3 : index
    %c0_19 = arith.constant 0 : index
    %c0_20 = arith.constant 0 : index
    %52 = vector.load %arg4[%c3, %c0_19, %c0_20] : memref<27x4x128xbf16, #tpu.memory_space<vmem>>, vector<1x4x128xbf16>
    %53 = vector.shape_cast %52 : vector<1x4x128xbf16> to vector<4x128xbf16>
    %cst_21 = arith.constant dense<0.000000e+00> : vector<64x128xf32>
    %54 = tpu.matmul %51, %53, %cst_21 {dimension_numbers = #tpu.dot_dimension_numbers<[1], [0], [0], [1], [0, 0, 1, 1], [], []>} : vector<64x4xbf16>, vector<4x128xbf16>, vector<64x128xf32> -> vector<64x128xf32>
    %55 = arith.addf %43, %54 : vector<64x128xf32>
    %56 = vector.extract_strided_slice %5 {offsets = [0, 4], sizes = [64, 1], strides = [1, 1]} : vector<64x27xi32> to vector<64x1xi32>
    %57 = vector.broadcast %56 : vector<64x1xi32> to vector<64x64xi32>
    %58 = arith.cmpi eq, %57, %6 : vector<64x64xi32>
    %59 = arith.extui %58 : vector<64x64xi1> to vector<64x64xi32>
    %60 = arith.sitofp %59 : vector<64x64xi32> to vector<64x64xf32>
    %61 = arith.truncf %60 : vector<64x64xf32> to vector<64x64xbf16>
    %cst_22 = arith.constant dense<0.000000e+00> : vector<64x4xf32>
    %62 = tpu.matmul %61, %3, %cst_22 {dimension_numbers = #tpu.dot_dimension_numbers<[1], [0], [0], [1], [0, 0, 1, 1], [], []>} : vector<64x64xbf16>, vector<64x4xbf16>, vector<64x4xf32> -> vector<64x4xf32>
    %63 = arith.truncf %62 : vector<64x4xf32> to vector<64x4xbf16>
    %c4 = arith.constant 4 : index
    %c0_23 = arith.constant 0 : index
    %c0_24 = arith.constant 0 : index
    %64 = vector.load %arg4[%c4, %c0_23, %c0_24] : memref<27x4x128xbf16, #tpu.memory_space<vmem>>, vector<1x4x128xbf16>
    %65 = vector.shape_cast %64 : vector<1x4x128xbf16> to vector<4x128xbf16>
    %cst_25 = arith.constant dense<0.000000e+00> : vector<64x128xf32>
    %66 = tpu.matmul %63, %65, %cst_25 {dimension_numbers = #tpu.dot_dimension_numbers<[1], [0], [0], [1], [0, 0, 1, 1], [], []>} : vector<64x4xbf16>, vector<4x128xbf16>, vector<64x128xf32> -> vector<64x128xf32>
    %67 = arith.addf %55, %66 : vector<64x128xf32>
    %68 = vector.extract_strided_slice %5 {offsets = [0, 5], sizes = [64, 1], strides = [1, 1]} : vector<64x27xi32> to vector<64x1xi32>
    %69 = vector.broadcast %68 : vector<64x1xi32> to vector<64x64xi32>
    %70 = arith.cmpi eq, %69, %6 : vector<64x64xi32>
    %71 = arith.extui %70 : vector<64x64xi1> to vector<64x64xi32>
    %72 = arith.sitofp %71 : vector<64x64xi32> to vector<64x64xf32>
    %73 = arith.truncf %72 : vector<64x64xf32> to vector<64x64xbf16>
    %cst_26 = arith.constant dense<0.000000e+00> : vector<64x4xf32>
    %74 = tpu.matmul %73, %3, %cst_26 {dimension_numbers = #tpu.dot_dimension_numbers<[1], [0], [0], [1], [0, 0, 1, 1], [], []>} : vector<64x64xbf16>, vector<64x4xbf16>, vector<64x4xf32> -> vector<64x4xf32>
    %75 = arith.truncf %74 : vector<64x4xf32> to vector<64x4xbf16>
    %c5 = arith.constant 5 : index
    %c0_27 = arith.constant 0 : index
    %c0_28 = arith.constant 0 : index
    %76 = vector.load %arg4[%c5, %c0_27, %c0_28] : memref<27x4x128xbf16, #tpu.memory_space<vmem>>, vector<1x4x128xbf16>
    %77 = vector.shape_cast %76 : vector<1x4x128xbf16> to vector<4x128xbf16>
    %cst_29 = arith.constant dense<0.000000e+00> : vector<64x128xf32>
    %78 = tpu.matmul %75, %77, %cst_29 {dimension_numbers = #tpu.dot_dimension_numbers<[1], [0], [0], [1], [0, 0, 1, 1], [], []>} : vector<64x4xbf16>, vector<4x128xbf16>, vector<64x128xf32> -> vector<64x128xf32>
    %79 = arith.addf %67, %78 : vector<64x128xf32>
    %80 = vector.extract_strided_slice %5 {offsets = [0, 6], sizes = [64, 1], strides = [1, 1]} : vector<64x27xi32> to vector<64x1xi32>
    %81 = vector.broadcast %80 : vector<64x1xi32> to vector<64x64xi32>
    %82 = arith.cmpi eq, %81, %6 : vector<64x64xi32>
    %83 = arith.extui %82 : vector<64x64xi1> to vector<64x64xi32>
    %84 = arith.sitofp %83 : vector<64x64xi32> to vector<64x64xf32>
    %85 = arith.truncf %84 : vector<64x64xf32> to vector<64x64xbf16>
    %cst_30 = arith.constant dense<0.000000e+00> : vector<64x4xf32>
    %86 = tpu.matmul %85, %3, %cst_30 {dimension_numbers = #tpu.dot_dimension_numbers<[1], [0], [0], [1], [0, 0, 1, 1], [], []>} : vector<64x64xbf16>, vector<64x4xbf16>, vector<64x4xf32> -> vector<64x4xf32>
    %87 = arith.truncf %86 : vector<64x4xf32> to vector<64x4xbf16>
    %c6 = arith.constant 6 : index
    %c0_31 = arith.constant 0 : index
    %c0_32 = arith.constant 0 : index
    %88 = vector.load %arg4[%c6, %c0_31, %c0_32] : memref<27x4x128xbf16, #tpu.memory_space<vmem>>, vector<1x4x128xbf16>
    %89 = vector.shape_cast %88 : vector<1x4x128xbf16> to vector<4x128xbf16>
    %cst_33 = arith.constant dense<0.000000e+00> : vector<64x128xf32>
    %90 = tpu.matmul %87, %89, %cst_33 {dimension_numbers = #tpu.dot_dimension_numbers<[1], [0], [0], [1], [0, 0, 1, 1], [], []>} : vector<64x4xbf16>, vector<4x128xbf16>, vector<64x128xf32> -> vector<64x128xf32>
    %91 = arith.addf %79, %90 : vector<64x128xf32>
    %92 = vector.extract_strided_slice %5 {offsets = [0, 7], sizes = [64, 1], strides = [1, 1]} : vector<64x27xi32> to vector<64x1xi32>
    %93 = vector.broadcast %92 : vector<64x1xi32> to vector<64x64xi32>
    %94 = arith.cmpi eq, %93, %6 : vector<64x64xi32>
    %95 = arith.extui %94 : vector<64x64xi1> to vector<64x64xi32>
    %96 = arith.sitofp %95 : vector<64x64xi32> to vector<64x64xf32>
    %97 = arith.truncf %96 : vector<64x64xf32> to vector<64x64xbf16>
    %cst_34 = arith.constant dense<0.000000e+00> : vector<64x4xf32>
    %98 = tpu.matmul %97, %3, %cst_34 {dimension_numbers = #tpu.dot_dimension_numbers<[1], [0], [0], [1], [0, 0, 1, 1], [], []>} : vector<64x64xbf16>, vector<64x4xbf16>, vector<64x4xf32> -> vector<64x4xf32>
    %99 = arith.truncf %98 : vector<64x4xf32> to vector<64x4xbf16>
    %c7 = arith.constant 7 : index
    %c0_35 = arith.constant 0 : index
    %c0_36 = arith.constant 0 : index
    %100 = vector.load %arg4[%c7, %c0_35, %c0_36] : memref<27x4x128xbf16, #tpu.memory_space<vmem>>, vector<1x4x128xbf16>
    %101 = vector.shape_cast %100 : vector<1x4x128xbf16> to vector<4x128xbf16>
    %cst_37 = arith.constant dense<0.000000e+00> : vector<64x128xf32>
    %102 = tpu.matmul %99, %101, %cst_37 {dimension_numbers = #tpu.dot_dimension_numbers<[1], [0], [0], [1], [0, 0, 1, 1], [], []>} : vector<64x4xbf16>, vector<4x128xbf16>, vector<64x128xf32> -> vector<64x128xf32>
    %103 = arith.addf %91, %102 : vector<64x128xf32>
    %104 = vector.extract_strided_slice %5 {offsets = [0, 8], sizes = [64, 1], strides = [1, 1]} : vector<64x27xi32> to vector<64x1xi32>
    %105 = vector.broadcast %104 : vector<64x1xi32> to vector<64x64xi32>
    %106 = arith.cmpi eq, %105, %6 : vector<64x64xi32>
    %107 = arith.extui %106 : vector<64x64xi1> to vector<64x64xi32>
    %108 = arith.sitofp %107 : vector<64x64xi32> to vector<64x64xf32>
    %109 = arith.truncf %108 : vector<64x64xf32> to vector<64x64xbf16>
    %cst_38 = arith.constant dense<0.000000e+00> : vector<64x4xf32>
    %110 = tpu.matmul %109, %3, %cst_38 {dimension_numbers = #tpu.dot_dimension_numbers<[1], [0], [0], [1], [0, 0, 1, 1], [], []>} : vector<64x64xbf16>, vector<64x4xbf16>, vector<64x4xf32> -> vector<64x4xf32>
    %111 = arith.truncf %110 : vector<64x4xf32> to vector<64x4xbf16>
    %c8 = arith.constant 8 : index
    %c0_39 = arith.constant 0 : index
    %c0_40 = arith.constant 0 : index
    %112 = vector.load %arg4[%c8, %c0_39, %c0_40] : memref<27x4x128xbf16, #tpu.memory_space<vmem>>, vector<1x4x128xbf16>
    %113 = vector.shape_cast %112 : vector<1x4x128xbf16> to vector<4x128xbf16>
    %cst_41 = arith.constant dense<0.000000e+00> : vector<64x128xf32>
    %114 = tpu.matmul %111, %113, %cst_41 {dimension_numbers = #tpu.dot_dimension_numbers<[1], [0], [0], [1], [0, 0, 1, 1], [], []>} : vector<64x4xbf16>, vector<4x128xbf16>, vector<64x128xf32> -> vector<64x128xf32>
    %115 = arith.addf %103, %114 : vector<64x128xf32>
    %116 = vector.extract_strided_slice %5 {offsets = [0, 9], sizes = [64, 1], strides = [1, 1]} : vector<64x27xi32> to vector<64x1xi32>
    %117 = vector.broadcast %116 : vector<64x1xi32> to vector<64x64xi32>
    %118 = arith.cmpi eq, %117, %6 : vector<64x64xi32>
    %119 = arith.extui %118 : vector<64x64xi1> to vector<64x64xi32>
    %120 = arith.sitofp %119 : vector<64x64xi32> to vector<64x64xf32>
    %121 = arith.truncf %120 : vector<64x64xf32> to vector<64x64xbf16>
    %cst_42 = arith.constant dense<0.000000e+00> : vector<64x4xf32>
    %122 = tpu.matmul %121, %3, %cst_42 {dimension_numbers = #tpu.dot_dimension_numbers<[1], [0], [0], [1], [0, 0, 1, 1], [], []>} : vector<64x64xbf16>, vector<64x4xbf16>, vector<64x4xf32> -> vector<64x4xf32>
    %123 = arith.truncf %122 : vector<64x4xf32> to vector<64x4xbf16>
    %c9 = arith.constant 9 : index
    %c0_43 = arith.constant 0 : index
    %c0_44 = arith.constant 0 : index
    %124 = vector.load %arg4[%c9, %c0_43, %c0_44] : memref<27x4x128xbf16, #tpu.memory_space<vmem>>, vector<1x4x128xbf16>
    %125 = vector.shape_cast %124 : vector<1x4x128xbf16> to vector<4x128xbf16>
    %cst_45 = arith.constant dense<0.000000e+00> : vector<64x128xf32>
    %126 = tpu.matmul %123, %125, %cst_45 {dimension_numbers = #tpu.dot_dimension_numbers<[1], [0], [0], [1], [0, 0, 1, 1], [], []>} : vector<64x4xbf16>, vector<4x128xbf16>, vector<64x128xf32> -> vector<64x128xf32>
    %127 = arith.addf %115, %126 : vector<64x128xf32>
    %128 = vector.extract_strided_slice %5 {offsets = [0, 10], sizes = [64, 1], strides = [1, 1]} : vector<64x27xi32> to vector<64x1xi32>
    %129 = vector.broadcast %128 : vector<64x1xi32> to vector<64x64xi32>
    %130 = arith.cmpi eq, %129, %6 : vector<64x64xi32>
    %131 = arith.extui %130 : vector<64x64xi1> to vector<64x64xi32>
    %132 = arith.sitofp %131 : vector<64x64xi32> to vector<64x64xf32>
    %133 = arith.truncf %132 : vector<64x64xf32> to vector<64x64xbf16>
    %cst_46 = arith.constant dense<0.000000e+00> : vector<64x4xf32>
    %134 = tpu.matmul %133, %3, %cst_46 {dimension_numbers = #tpu.dot_dimension_numbers<[1], [0], [0], [1], [0, 0, 1, 1], [], []>} : vector<64x64xbf16>, vector<64x4xbf16>, vector<64x4xf32> -> vector<64x4xf32>
    %135 = arith.truncf %134 : vector<64x4xf32> to vector<64x4xbf16>
    %c10 = arith.constant 10 : index
    %c0_47 = arith.constant 0 : index
    %c0_48 = arith.constant 0 : index
    %136 = vector.load %arg4[%c10, %c0_47, %c0_48] : memref<27x4x128xbf16, #tpu.memory_space<vmem>>, vector<1x4x128xbf16>
    %137 = vector.shape_cast %136 : vector<1x4x128xbf16> to vector<4x128xbf16>
    %cst_49 = arith.constant dense<0.000000e+00> : vector<64x128xf32>
    %138 = tpu.matmul %135, %137, %cst_49 {dimension_numbers = #tpu.dot_dimension_numbers<[1], [0], [0], [1], [0, 0, 1, 1], [], []>} : vector<64x4xbf16>, vector<4x128xbf16>, vector<64x128xf32> -> vector<64x128xf32>
    %139 = arith.addf %127, %138 : vector<64x128xf32>
    %140 = vector.extract_strided_slice %5 {offsets = [0, 11], sizes = [64, 1], strides = [1, 1]} : vector<64x27xi32> to vector<64x1xi32>
    %141 = vector.broadcast %140 : vector<64x1xi32> to vector<64x64xi32>
    %142 = arith.cmpi eq, %141, %6 : vector<64x64xi32>
    %143 = arith.extui %142 : vector<64x64xi1> to vector<64x64xi32>
    %144 = arith.sitofp %143 : vector<64x64xi32> to vector<64x64xf32>
    %145 = arith.truncf %144 : vector<64x64xf32> to vector<64x64xbf16>
    %cst_50 = arith.constant dense<0.000000e+00> : vector<64x4xf32>
    %146 = tpu.matmul %145, %3, %cst_50 {dimension_numbers = #tpu.dot_dimension_numbers<[1], [0], [0], [1], [0, 0, 1, 1], [], []>} : vector<64x64xbf16>, vector<64x4xbf16>, vector<64x4xf32> -> vector<64x4xf32>
    %147 = arith.truncf %146 : vector<64x4xf32> to vector<64x4xbf16>
    %c11 = arith.constant 11 : index
    %c0_51 = arith.constant 0 : index
    %c0_52 = arith.constant 0 : index
    %148 = vector.load %arg4[%c11, %c0_51, %c0_52] : memref<27x4x128xbf16, #tpu.memory_space<vmem>>, vector<1x4x128xbf16>
    %149 = vector.shape_cast %148 : vector<1x4x128xbf16> to vector<4x128xbf16>
    %cst_53 = arith.constant dense<0.000000e+00> : vector<64x128xf32>
    %150 = tpu.matmul %147, %149, %cst_53 {dimension_numbers = #tpu.dot_dimension_numbers<[1], [0], [0], [1], [0, 0, 1, 1], [], []>} : vector<64x4xbf16>, vector<4x128xbf16>, vector<64x128xf32> -> vector<64x128xf32>
    %151 = arith.addf %139, %150 : vector<64x128xf32>
    %152 = vector.extract_strided_slice %5 {offsets = [0, 12], sizes = [64, 1], strides = [1, 1]} : vector<64x27xi32> to vector<64x1xi32>
    %153 = vector.broadcast %152 : vector<64x1xi32> to vector<64x64xi32>
    %154 = arith.cmpi eq, %153, %6 : vector<64x64xi32>
    %155 = arith.extui %154 : vector<64x64xi1> to vector<64x64xi32>
    %156 = arith.sitofp %155 : vector<64x64xi32> to vector<64x64xf32>
    %157 = arith.truncf %156 : vector<64x64xf32> to vector<64x64xbf16>
    %cst_54 = arith.constant dense<0.000000e+00> : vector<64x4xf32>
    %158 = tpu.matmul %157, %3, %cst_54 {dimension_numbers = #tpu.dot_dimension_numbers<[1], [0], [0], [1], [0, 0, 1, 1], [], []>} : vector<64x64xbf16>, vector<64x4xbf16>, vector<64x4xf32> -> vector<64x4xf32>
    %159 = arith.truncf %158 : vector<64x4xf32> to vector<64x4xbf16>
    %c12 = arith.constant 12 : index
    %c0_55 = arith.constant 0 : index
    %c0_56 = arith.constant 0 : index
    %160 = vector.load %arg4[%c12, %c0_55, %c0_56] : memref<27x4x128xbf16, #tpu.memory_space<vmem>>, vector<1x4x128xbf16>
    %161 = vector.shape_cast %160 : vector<1x4x128xbf16> to vector<4x128xbf16>
    %cst_57 = arith.constant dense<0.000000e+00> : vector<64x128xf32>
    %162 = tpu.matmul %159, %161, %cst_57 {dimension_numbers = #tpu.dot_dimension_numbers<[1], [0], [0], [1], [0, 0, 1, 1], [], []>} : vector<64x4xbf16>, vector<4x128xbf16>, vector<64x128xf32> -> vector<64x128xf32>
    %163 = arith.addf %151, %162 : vector<64x128xf32>
    %164 = vector.extract_strided_slice %5 {offsets = [0, 13], sizes = [64, 1], strides = [1, 1]} : vector<64x27xi32> to vector<64x1xi32>
    %165 = vector.broadcast %164 : vector<64x1xi32> to vector<64x64xi32>
    %166 = arith.cmpi eq, %165, %6 : vector<64x64xi32>
    %167 = arith.extui %166 : vector<64x64xi1> to vector<64x64xi32>
    %168 = arith.sitofp %167 : vector<64x64xi32> to vector<64x64xf32>
    %169 = arith.truncf %168 : vector<64x64xf32> to vector<64x64xbf16>
    %cst_58 = arith.constant dense<0.000000e+00> : vector<64x4xf32>
    %170 = tpu.matmul %169, %3, %cst_58 {dimension_numbers = #tpu.dot_dimension_numbers<[1], [0], [0], [1], [0, 0, 1, 1], [], []>} : vector<64x64xbf16>, vector<64x4xbf16>, vector<64x4xf32> -> vector<64x4xf32>
    %171 = arith.truncf %170 : vector<64x4xf32> to vector<64x4xbf16>
    %c13 = arith.constant 13 : index
    %c0_59 = arith.constant 0 : index
    %c0_60 = arith.constant 0 : index
    %172 = vector.load %arg4[%c13, %c0_59, %c0_60] : memref<27x4x128xbf16, #tpu.memory_space<vmem>>, vector<1x4x128xbf16>
    %173 = vector.shape_cast %172 : vector<1x4x128xbf16> to vector<4x128xbf16>
    %cst_61 = arith.constant dense<0.000000e+00> : vector<64x128xf32>
    %174 = tpu.matmul %171, %173, %cst_61 {dimension_numbers = #tpu.dot_dimension_numbers<[1], [0], [0], [1], [0, 0, 1, 1], [], []>} : vector<64x4xbf16>, vector<4x128xbf16>, vector<64x128xf32> -> vector<64x128xf32>
    %175 = arith.addf %163, %174 : vector<64x128xf32>
    %176 = vector.extract_strided_slice %5 {offsets = [0, 14], sizes = [64, 1], strides = [1, 1]} : vector<64x27xi32> to vector<64x1xi32>
    %177 = vector.broadcast %176 : vector<64x1xi32> to vector<64x64xi32>
    %178 = arith.cmpi eq, %177, %6 : vector<64x64xi32>
    %179 = arith.extui %178 : vector<64x64xi1> to vector<64x64xi32>
    %180 = arith.sitofp %179 : vector<64x64xi32> to vector<64x64xf32>
    %181 = arith.truncf %180 : vector<64x64xf32> to vector<64x64xbf16>
    %cst_62 = arith.constant dense<0.000000e+00> : vector<64x4xf32>
    %182 = tpu.matmul %181, %3, %cst_62 {dimension_numbers = #tpu.dot_dimension_numbers<[1], [0], [0], [1], [0, 0, 1, 1], [], []>} : vector<64x64xbf16>, vector<64x4xbf16>, vector<64x4xf32> -> vector<64x4xf32>
    %183 = arith.truncf %182 : vector<64x4xf32> to vector<64x4xbf16>
    %c14 = arith.constant 14 : index
    %c0_63 = arith.constant 0 : index
    %c0_64 = arith.constant 0 : index
    %184 = vector.load %arg4[%c14, %c0_63, %c0_64] : memref<27x4x128xbf16, #tpu.memory_space<vmem>>, vector<1x4x128xbf16>
    %185 = vector.shape_cast %184 : vector<1x4x128xbf16> to vector<4x128xbf16>
    %cst_65 = arith.constant dense<0.000000e+00> : vector<64x128xf32>
    %186 = tpu.matmul %183, %185, %cst_65 {dimension_numbers = #tpu.dot_dimension_numbers<[1], [0], [0], [1], [0, 0, 1, 1], [], []>} : vector<64x4xbf16>, vector<4x128xbf16>, vector<64x128xf32> -> vector<64x128xf32>
    %187 = arith.addf %175, %186 : vector<64x128xf32>
    %188 = vector.extract_strided_slice %5 {offsets = [0, 15], sizes = [64, 1], strides = [1, 1]} : vector<64x27xi32> to vector<64x1xi32>
    %189 = vector.broadcast %188 : vector<64x1xi32> to vector<64x64xi32>
    %190 = arith.cmpi eq, %189, %6 : vector<64x64xi32>
    %191 = arith.extui %190 : vector<64x64xi1> to vector<64x64xi32>
    %192 = arith.sitofp %191 : vector<64x64xi32> to vector<64x64xf32>
    %193 = arith.truncf %192 : vector<64x64xf32> to vector<64x64xbf16>
    %cst_66 = arith.constant dense<0.000000e+00> : vector<64x4xf32>
    %194 = tpu.matmul %193, %3, %cst_66 {dimension_numbers = #tpu.dot_dimension_numbers<[1], [0], [0], [1], [0, 0, 1, 1], [], []>} : vector<64x64xbf16>, vector<64x4xbf16>, vector<64x4xf32> -> vector<64x4xf32>
    %195 = arith.truncf %194 : vector<64x4xf32> to vector<64x4xbf16>
    %c15 = arith.constant 15 : index
    %c0_67 = arith.constant 0 : index
    %c0_68 = arith.constant 0 : index
    %196 = vector.load %arg4[%c15, %c0_67, %c0_68] : memref<27x4x128xbf16, #tpu.memory_space<vmem>>, vector<1x4x128xbf16>
    %197 = vector.shape_cast %196 : vector<1x4x128xbf16> to vector<4x128xbf16>
    %cst_69 = arith.constant dense<0.000000e+00> : vector<64x128xf32>
    %198 = tpu.matmul %195, %197, %cst_69 {dimension_numbers = #tpu.dot_dimension_numbers<[1], [0], [0], [1], [0, 0, 1, 1], [], []>} : vector<64x4xbf16>, vector<4x128xbf16>, vector<64x128xf32> -> vector<64x128xf32>
    %199 = arith.addf %187, %198 : vector<64x128xf32>
    %200 = vector.extract_strided_slice %5 {offsets = [0, 16], sizes = [64, 1], strides = [1, 1]} : vector<64x27xi32> to vector<64x1xi32>
    %201 = vector.broadcast %200 : vector<64x1xi32> to vector<64x64xi32>
    %202 = arith.cmpi eq, %201, %6 : vector<64x64xi32>
    %203 = arith.extui %202 : vector<64x64xi1> to vector<64x64xi32>
    %204 = arith.sitofp %203 : vector<64x64xi32> to vector<64x64xf32>
    %205 = arith.truncf %204 : vector<64x64xf32> to vector<64x64xbf16>
    %cst_70 = arith.constant dense<0.000000e+00> : vector<64x4xf32>
    %206 = tpu.matmul %205, %3, %cst_70 {dimension_numbers = #tpu.dot_dimension_numbers<[1], [0], [0], [1], [0, 0, 1, 1], [], []>} : vector<64x64xbf16>, vector<64x4xbf16>, vector<64x4xf32> -> vector<64x4xf32>
    %207 = arith.truncf %206 : vector<64x4xf32> to vector<64x4xbf16>
    %c16 = arith.constant 16 : index
    %c0_71 = arith.constant 0 : index
    %c0_72 = arith.constant 0 : index
    %208 = vector.load %arg4[%c16, %c0_71, %c0_72] : memref<27x4x128xbf16, #tpu.memory_space<vmem>>, vector<1x4x128xbf16>
    %209 = vector.shape_cast %208 : vector<1x4x128xbf16> to vector<4x128xbf16>
    %cst_73 = arith.constant dense<0.000000e+00> : vector<64x128xf32>
    %210 = tpu.matmul %207, %209, %cst_73 {dimension_numbers = #tpu.dot_dimension_numbers<[1], [0], [0], [1], [0, 0, 1, 1], [], []>} : vector<64x4xbf16>, vector<4x128xbf16>, vector<64x128xf32> -> vector<64x128xf32>
    %211 = arith.addf %199, %210 : vector<64x128xf32>
    %212 = vector.extract_strided_slice %5 {offsets = [0, 17], sizes = [64, 1], strides = [1, 1]} : vector<64x27xi32> to vector<64x1xi32>
    %213 = vector.broadcast %212 : vector<64x1xi32> to vector<64x64xi32>
    %214 = arith.cmpi eq, %213, %6 : vector<64x64xi32>
    %215 = arith.extui %214 : vector<64x64xi1> to vector<64x64xi32>
    %216 = arith.sitofp %215 : vector<64x64xi32> to vector<64x64xf32>
    %217 = arith.truncf %216 : vector<64x64xf32> to vector<64x64xbf16>
    %cst_74 = arith.constant dense<0.000000e+00> : vector<64x4xf32>
    %218 = tpu.matmul %217, %3, %cst_74 {dimension_numbers = #tpu.dot_dimension_numbers<[1], [0], [0], [1], [0, 0, 1, 1], [], []>} : vector<64x64xbf16>, vector<64x4xbf16>, vector<64x4xf32> -> vector<64x4xf32>
    %219 = arith.truncf %218 : vector<64x4xf32> to vector<64x4xbf16>
    %c17 = arith.constant 17 : index
    %c0_75 = arith.constant 0 : index
    %c0_76 = arith.constant 0 : index
    %220 = vector.load %arg4[%c17, %c0_75, %c0_76] : memref<27x4x128xbf16, #tpu.memory_space<vmem>>, vector<1x4x128xbf16>
    %221 = vector.shape_cast %220 : vector<1x4x128xbf16> to vector<4x128xbf16>
    %cst_77 = arith.constant dense<0.000000e+00> : vector<64x128xf32>
    %222 = tpu.matmul %219, %221, %cst_77 {dimension_numbers = #tpu.dot_dimension_numbers<[1], [0], [0], [1], [0, 0, 1, 1], [], []>} : vector<64x4xbf16>, vector<4x128xbf16>, vector<64x128xf32> -> vector<64x128xf32>
    %223 = arith.addf %211, %222 : vector<64x128xf32>
    %224 = vector.extract_strided_slice %5 {offsets = [0, 18], sizes = [64, 1], strides = [1, 1]} : vector<64x27xi32> to vector<64x1xi32>
    %225 = vector.broadcast %224 : vector<64x1xi32> to vector<64x64xi32>
    %226 = arith.cmpi eq, %225, %6 : vector<64x64xi32>
    %227 = arith.extui %226 : vector<64x64xi1> to vector<64x64xi32>
    %228 = arith.sitofp %227 : vector<64x64xi32> to vector<64x64xf32>
    %229 = arith.truncf %228 : vector<64x64xf32> to vector<64x64xbf16>
    %cst_78 = arith.constant dense<0.000000e+00> : vector<64x4xf32>
    %230 = tpu.matmul %229, %3, %cst_78 {dimension_numbers = #tpu.dot_dimension_numbers<[1], [0], [0], [1], [0, 0, 1, 1], [], []>} : vector<64x64xbf16>, vector<64x4xbf16>, vector<64x4xf32> -> vector<64x4xf32>
    %231 = arith.truncf %230 : vector<64x4xf32> to vector<64x4xbf16>
    %c18 = arith.constant 18 : index
    %c0_79 = arith.constant 0 : index
    %c0_80 = arith.constant 0 : index
    %232 = vector.load %arg4[%c18, %c0_79, %c0_80] : memref<27x4x128xbf16, #tpu.memory_space<vmem>>, vector<1x4x128xbf16>
    %233 = vector.shape_cast %232 : vector<1x4x128xbf16> to vector<4x128xbf16>
    %cst_81 = arith.constant dense<0.000000e+00> : vector<64x128xf32>
    %234 = tpu.matmul %231, %233, %cst_81 {dimension_numbers = #tpu.dot_dimension_numbers<[1], [0], [0], [1], [0, 0, 1, 1], [], []>} : vector<64x4xbf16>, vector<4x128xbf16>, vector<64x128xf32> -> vector<64x128xf32>
    %235 = arith.addf %223, %234 : vector<64x128xf32>
    %236 = vector.extract_strided_slice %5 {offsets = [0, 19], sizes = [64, 1], strides = [1, 1]} : vector<64x27xi32> to vector<64x1xi32>
    %237 = vector.broadcast %236 : vector<64x1xi32> to vector<64x64xi32>
    %238 = arith.cmpi eq, %237, %6 : vector<64x64xi32>
    %239 = arith.extui %238 : vector<64x64xi1> to vector<64x64xi32>
    %240 = arith.sitofp %239 : vector<64x64xi32> to vector<64x64xf32>
    %241 = arith.truncf %240 : vector<64x64xf32> to vector<64x64xbf16>
    %cst_82 = arith.constant dense<0.000000e+00> : vector<64x4xf32>
    %242 = tpu.matmul %241, %3, %cst_82 {dimension_numbers = #tpu.dot_dimension_numbers<[1], [0], [0], [1], [0, 0, 1, 1], [], []>} : vector<64x64xbf16>, vector<64x4xbf16>, vector<64x4xf32> -> vector<64x4xf32>
    %243 = arith.truncf %242 : vector<64x4xf32> to vector<64x4xbf16>
    %c19 = arith.constant 19 : index
    %c0_83 = arith.constant 0 : index
    %c0_84 = arith.constant 0 : index
    %244 = vector.load %arg4[%c19, %c0_83, %c0_84] : memref<27x4x128xbf16, #tpu.memory_space<vmem>>, vector<1x4x128xbf16>
    %245 = vector.shape_cast %244 : vector<1x4x128xbf16> to vector<4x128xbf16>
    %cst_85 = arith.constant dense<0.000000e+00> : vector<64x128xf32>
    %246 = tpu.matmul %243, %245, %cst_85 {dimension_numbers = #tpu.dot_dimension_numbers<[1], [0], [0], [1], [0, 0, 1, 1], [], []>} : vector<64x4xbf16>, vector<4x128xbf16>, vector<64x128xf32> -> vector<64x128xf32>
    %247 = arith.addf %235, %246 : vector<64x128xf32>
    %248 = vector.extract_strided_slice %5 {offsets = [0, 20], sizes = [64, 1], strides = [1, 1]} : vector<64x27xi32> to vector<64x1xi32>
    %249 = vector.broadcast %248 : vector<64x1xi32> to vector<64x64xi32>
    %250 = arith.cmpi eq, %249, %6 : vector<64x64xi32>
    %251 = arith.extui %250 : vector<64x64xi1> to vector<64x64xi32>
    %252 = arith.sitofp %251 : vector<64x64xi32> to vector<64x64xf32>
    %253 = arith.truncf %252 : vector<64x64xf32> to vector<64x64xbf16>
    %cst_86 = arith.constant dense<0.000000e+00> : vector<64x4xf32>
    %254 = tpu.matmul %253, %3, %cst_86 {dimension_numbers = #tpu.dot_dimension_numbers<[1], [0], [0], [1], [0, 0, 1, 1], [], []>} : vector<64x64xbf16>, vector<64x4xbf16>, vector<64x4xf32> -> vector<64x4xf32>
    %255 = arith.truncf %254 : vector<64x4xf32> to vector<64x4xbf16>
    %c20 = arith.constant 20 : index
    %c0_87 = arith.constant 0 : index
    %c0_88 = arith.constant 0 : index
    %256 = vector.load %arg4[%c20, %c0_87, %c0_88] : memref<27x4x128xbf16, #tpu.memory_space<vmem>>, vector<1x4x128xbf16>
    %257 = vector.shape_cast %256 : vector<1x4x128xbf16> to vector<4x128xbf16>
    %cst_89 = arith.constant dense<0.000000e+00> : vector<64x128xf32>
    %258 = tpu.matmul %255, %257, %cst_89 {dimension_numbers = #tpu.dot_dimension_numbers<[1], [0], [0], [1], [0, 0, 1, 1], [], []>} : vector<64x4xbf16>, vector<4x128xbf16>, vector<64x128xf32> -> vector<64x128xf32>
    %259 = arith.addf %247, %258 : vector<64x128xf32>
    %260 = vector.extract_strided_slice %5 {offsets = [0, 21], sizes = [64, 1], strides = [1, 1]} : vector<64x27xi32> to vector<64x1xi32>
    %261 = vector.broadcast %260 : vector<64x1xi32> to vector<64x64xi32>
    %262 = arith.cmpi eq, %261, %6 : vector<64x64xi32>
    %263 = arith.extui %262 : vector<64x64xi1> to vector<64x64xi32>
    %264 = arith.sitofp %263 : vector<64x64xi32> to vector<64x64xf32>
    %265 = arith.truncf %264 : vector<64x64xf32> to vector<64x64xbf16>
    %cst_90 = arith.constant dense<0.000000e+00> : vector<64x4xf32>
    %266 = tpu.matmul %265, %3, %cst_90 {dimension_numbers = #tpu.dot_dimension_numbers<[1], [0], [0], [1], [0, 0, 1, 1], [], []>} : vector<64x64xbf16>, vector<64x4xbf16>, vector<64x4xf32> -> vector<64x4xf32>
    %267 = arith.truncf %266 : vector<64x4xf32> to vector<64x4xbf16>
    %c21 = arith.constant 21 : index
    %c0_91 = arith.constant 0 : index
    %c0_92 = arith.constant 0 : index
    %268 = vector.load %arg4[%c21, %c0_91, %c0_92] : memref<27x4x128xbf16, #tpu.memory_space<vmem>>, vector<1x4x128xbf16>
    %269 = vector.shape_cast %268 : vector<1x4x128xbf16> to vector<4x128xbf16>
    %cst_93 = arith.constant dense<0.000000e+00> : vector<64x128xf32>
    %270 = tpu.matmul %267, %269, %cst_93 {dimension_numbers = #tpu.dot_dimension_numbers<[1], [0], [0], [1], [0, 0, 1, 1], [], []>} : vector<64x4xbf16>, vector<4x128xbf16>, vector<64x128xf32> -> vector<64x128xf32>
    %271 = arith.addf %259, %270 : vector<64x128xf32>
    %272 = vector.extract_strided_slice %5 {offsets = [0, 22], sizes = [64, 1], strides = [1, 1]} : vector<64x27xi32> to vector<64x1xi32>
    %273 = vector.broadcast %272 : vector<64x1xi32> to vector<64x64xi32>
    %274 = arith.cmpi eq, %273, %6 : vector<64x64xi32>
    %275 = arith.extui %274 : vector<64x64xi1> to vector<64x64xi32>
    %276 = arith.sitofp %275 : vector<64x64xi32> to vector<64x64xf32>
    %277 = arith.truncf %276 : vector<64x64xf32> to vector<64x64xbf16>
    %cst_94 = arith.constant dense<0.000000e+00> : vector<64x4xf32>
    %278 = tpu.matmul %277, %3, %cst_94 {dimension_numbers = #tpu.dot_dimension_numbers<[1], [0], [0], [1], [0, 0, 1, 1], [], []>} : vector<64x64xbf16>, vector<64x4xbf16>, vector<64x4xf32> -> vector<64x4xf32>
    %279 = arith.truncf %278 : vector<64x4xf32> to vector<64x4xbf16>
    %c22 = arith.constant 22 : index
    %c0_95 = arith.constant 0 : index
    %c0_96 = arith.constant 0 : index
    %280 = vector.load %arg4[%c22, %c0_95, %c0_96] : memref<27x4x128xbf16, #tpu.memory_space<vmem>>, vector<1x4x128xbf16>
    %281 = vector.shape_cast %280 : vector<1x4x128xbf16> to vector<4x128xbf16>
    %cst_97 = arith.constant dense<0.000000e+00> : vector<64x128xf32>
    %282 = tpu.matmul %279, %281, %cst_97 {dimension_numbers = #tpu.dot_dimension_numbers<[1], [0], [0], [1], [0, 0, 1, 1], [], []>} : vector<64x4xbf16>, vector<4x128xbf16>, vector<64x128xf32> -> vector<64x128xf32>
    %283 = arith.addf %271, %282 : vector<64x128xf32>
    %284 = vector.extract_strided_slice %5 {offsets = [0, 23], sizes = [64, 1], strides = [1, 1]} : vector<64x27xi32> to vector<64x1xi32>
    %285 = vector.broadcast %284 : vector<64x1xi32> to vector<64x64xi32>
    %286 = arith.cmpi eq, %285, %6 : vector<64x64xi32>
    %287 = arith.extui %286 : vector<64x64xi1> to vector<64x64xi32>
    %288 = arith.sitofp %287 : vector<64x64xi32> to vector<64x64xf32>
    %289 = arith.truncf %288 : vector<64x64xf32> to vector<64x64xbf16>
    %cst_98 = arith.constant dense<0.000000e+00> : vector<64x4xf32>
    %290 = tpu.matmul %289, %3, %cst_98 {dimension_numbers = #tpu.dot_dimension_numbers<[1], [0], [0], [1], [0, 0, 1, 1], [], []>} : vector<64x64xbf16>, vector<64x4xbf16>, vector<64x4xf32> -> vector<64x4xf32>
    %291 = arith.truncf %290 : vector<64x4xf32> to vector<64x4xbf16>
    %c23 = arith.constant 23 : index
    %c0_99 = arith.constant 0 : index
    %c0_100 = arith.constant 0 : index
    %292 = vector.load %arg4[%c23, %c0_99, %c0_100] : memref<27x4x128xbf16, #tpu.memory_space<vmem>>, vector<1x4x128xbf16>
    %293 = vector.shape_cast %292 : vector<1x4x128xbf16> to vector<4x128xbf16>
    %cst_101 = arith.constant dense<0.000000e+00> : vector<64x128xf32>
    %294 = tpu.matmul %291, %293, %cst_101 {dimension_numbers = #tpu.dot_dimension_numbers<[1], [0], [0], [1], [0, 0, 1, 1], [], []>} : vector<64x4xbf16>, vector<4x128xbf16>, vector<64x128xf32> -> vector<64x128xf32>
    %295 = arith.addf %283, %294 : vector<64x128xf32>
    %296 = vector.extract_strided_slice %5 {offsets = [0, 24], sizes = [64, 1], strides = [1, 1]} : vector<64x27xi32> to vector<64x1xi32>
    %297 = vector.broadcast %296 : vector<64x1xi32> to vector<64x64xi32>
    %298 = arith.cmpi eq, %297, %6 : vector<64x64xi32>
    %299 = arith.extui %298 : vector<64x64xi1> to vector<64x64xi32>
    %300 = arith.sitofp %299 : vector<64x64xi32> to vector<64x64xf32>
    %301 = arith.truncf %300 : vector<64x64xf32> to vector<64x64xbf16>
    %cst_102 = arith.constant dense<0.000000e+00> : vector<64x4xf32>
    %302 = tpu.matmul %301, %3, %cst_102 {dimension_numbers = #tpu.dot_dimension_numbers<[1], [0], [0], [1], [0, 0, 1, 1], [], []>} : vector<64x64xbf16>, vector<64x4xbf16>, vector<64x4xf32> -> vector<64x4xf32>
    %303 = arith.truncf %302 : vector<64x4xf32> to vector<64x4xbf16>
    %c24 = arith.constant 24 : index
    %c0_103 = arith.constant 0 : index
    %c0_104 = arith.constant 0 : index
    %304 = vector.load %arg4[%c24, %c0_103, %c0_104] : memref<27x4x128xbf16, #tpu.memory_space<vmem>>, vector<1x4x128xbf16>
    %305 = vector.shape_cast %304 : vector<1x4x128xbf16> to vector<4x128xbf16>
    %cst_105 = arith.constant dense<0.000000e+00> : vector<64x128xf32>
    %306 = tpu.matmul %303, %305, %cst_105 {dimension_numbers = #tpu.dot_dimension_numbers<[1], [0], [0], [1], [0, 0, 1, 1], [], []>} : vector<64x4xbf16>, vector<4x128xbf16>, vector<64x128xf32> -> vector<64x128xf32>
    %307 = arith.addf %295, %306 : vector<64x128xf32>
    %308 = vector.extract_strided_slice %5 {offsets = [0, 25], sizes = [64, 1], strides = [1, 1]} : vector<64x27xi32> to vector<64x1xi32>
    %309 = vector.broadcast %308 : vector<64x1xi32> to vector<64x64xi32>
    %310 = arith.cmpi eq, %309, %6 : vector<64x64xi32>
    %311 = arith.extui %310 : vector<64x64xi1> to vector<64x64xi32>
    %312 = arith.sitofp %311 : vector<64x64xi32> to vector<64x64xf32>
    %313 = arith.truncf %312 : vector<64x64xf32> to vector<64x64xbf16>
    %cst_106 = arith.constant dense<0.000000e+00> : vector<64x4xf32>
    %314 = tpu.matmul %313, %3, %cst_106 {dimension_numbers = #tpu.dot_dimension_numbers<[1], [0], [0], [1], [0, 0, 1, 1], [], []>} : vector<64x64xbf16>, vector<64x4xbf16>, vector<64x4xf32> -> vector<64x4xf32>
    %315 = arith.truncf %314 : vector<64x4xf32> to vector<64x4xbf16>
    %c25 = arith.constant 25 : index
    %c0_107 = arith.constant 0 : index
    %c0_108 = arith.constant 0 : index
    %316 = vector.load %arg4[%c25, %c0_107, %c0_108] : memref<27x4x128xbf16, #tpu.memory_space<vmem>>, vector<1x4x128xbf16>
    %317 = vector.shape_cast %316 : vector<1x4x128xbf16> to vector<4x128xbf16>
    %cst_109 = arith.constant dense<0.000000e+00> : vector<64x128xf32>
    %318 = tpu.matmul %315, %317, %cst_109 {dimension_numbers = #tpu.dot_dimension_numbers<[1], [0], [0], [1], [0, 0, 1, 1], [], []>} : vector<64x4xbf16>, vector<4x128xbf16>, vector<64x128xf32> -> vector<64x128xf32>
    %319 = arith.addf %307, %318 : vector<64x128xf32>
    %320 = vector.extract_strided_slice %5 {offsets = [0, 26], sizes = [64, 1], strides = [1, 1]} : vector<64x27xi32> to vector<64x1xi32>
    %321 = vector.broadcast %320 : vector<64x1xi32> to vector<64x64xi32>
    %322 = arith.cmpi eq, %321, %6 : vector<64x64xi32>
    %323 = arith.extui %322 : vector<64x64xi1> to vector<64x64xi32>
    %324 = arith.sitofp %323 : vector<64x64xi32> to vector<64x64xf32>
    %325 = arith.truncf %324 : vector<64x64xf32> to vector<64x64xbf16>
    %cst_110 = arith.constant dense<0.000000e+00> : vector<64x4xf32>
    %326 = tpu.matmul %325, %3, %cst_110 {dimension_numbers = #tpu.dot_dimension_numbers<[1], [0], [0], [1], [0, 0, 1, 1], [], []>} : vector<64x64xbf16>, vector<64x4xbf16>, vector<64x4xf32> -> vector<64x4xf32>
    %327 = arith.truncf %326 : vector<64x4xf32> to vector<64x4xbf16>
    %c26 = arith.constant 26 : index
    %c0_111 = arith.constant 0 : index
    %c0_112 = arith.constant 0 : index
    %328 = vector.load %arg4[%c26, %c0_111, %c0_112] : memref<27x4x128xbf16, #tpu.memory_space<vmem>>, vector<1x4x128xbf16>
    %329 = vector.shape_cast %328 : vector<1x4x128xbf16> to vector<4x128xbf16>
    %cst_113 = arith.constant dense<0.000000e+00> : vector<64x128xf32>
    %330 = tpu.matmul %327, %329, %cst_113 {dimension_numbers = #tpu.dot_dimension_numbers<[1], [0], [0], [1], [0, 0, 1, 1], [], []>} : vector<64x4xbf16>, vector<4x128xbf16>, vector<64x128xf32> -> vector<64x128xf32>
    %331 = arith.addf %319, %330 : vector<64x128xf32>
    %332 = arith.sitofp %1 : i32 to f32
    %cst_114 = arith.constant 1.000000e+00 : f32
    %333 = arith.maximumf %332, %cst_114 : f32
    %cst_115 = arith.constant 2.000000e+00 : f32
    %334 = arith.mulf %333, %cst_115 : f32
    %cst_116 = arith.constant dense<0.000000e+00> : vector<128xf32>
    %335 = vector.multi_reduction <add>, %331, %cst_116 [0] : vector<64x128xf32> to vector<128xf32>
    %336 = vector.shape_cast %335 : vector<128xf32> to vector<1x128xf32>
    %337 = arith.mulf %331, %331 : vector<64x128xf32>
    %cst_117 = arith.constant dense<0.000000e+00> : vector<128xf32>
    %338 = vector.multi_reduction <add>, %337, %cst_117 [0] : vector<64x128xf32> to vector<128xf32>
    %339 = vector.shape_cast %338 : vector<128xf32> to vector<1x128xf32>
    %340 = tpu.concatenate %336, %339 in 0 : vector<1x128xf32>, vector<1x128xf32> -> vector<2x128xf32>
    %c0_118 = arith.constant 0 : index
    %c0_119 = arith.constant 0 : index
    %341 = vector.load %arg5[%c0_118, %c0_119] : memref<128x128xf32, #tpu.memory_space<vmem>>, vector<128x128xf32>
    %cst_120 = arith.constant dense<0.000000e+00> : vector<2x128xf32>
    %342 = tpu.matmul %340, %341, %cst_120 {dimension_numbers = #tpu.dot_dimension_numbers<[1], [0], [0], [1], [0, 0, 1, 1], [], []>} : vector<2x128xf32>, vector<128x128xf32>, vector<2x128xf32> -> vector<2x128xf32>
    %343 = vector.broadcast %334 : f32 to vector<2x128xf32>
    %344 = arith.divf %342, %343 : vector<2x128xf32>
    %345 = vector.extract_strided_slice %344 {offsets = [0, 0], sizes = [1, 128], strides = [1, 1]} : vector<2x128xf32> to vector<1x128xf32>
    %346 = vector.extract_strided_slice %344 {offsets = [1, 0], sizes = [1, 128], strides = [1, 1]} : vector<2x128xf32> to vector<1x128xf32>
    %347 = arith.mulf %345, %345 : vector<1x128xf32>
    %348 = arith.subf %346, %347 : vector<1x128xf32>
    %cst_121 = arith.constant 0.000000e+00 : f32
    %349 = vector.broadcast %cst_121 : f32 to vector<1x128xf32>
    %350 = arith.maximumf %348, %349 : vector<1x128xf32>
    %cst_122 = arith.constant 9.99999974E-6 : f32
    %351 = vector.broadcast %cst_122 : f32 to vector<1x128xf32>
    %352 = arith.addf %350, %351 : vector<1x128xf32>
    %353 = math.rsqrt %352 : vector<1x128xf32>
    %354 = vector.broadcast %345 : vector<1x128xf32> to vector<64x128xf32>
    %355 = arith.subf %331, %354 : vector<64x128xf32>
    %c0_123 = arith.constant 0 : index
    %c0_124 = arith.constant 0 : index
    %c0_125 = arith.constant 0 : index
    %356 = vector.load %arg6[%c0_123, %c0_124, %c0_125] : memref<1x1x128xf32, #tpu.memory_space<vmem>>, vector<1x1x128xf32>
    %357 = vector.shape_cast %356 : vector<1x1x128xf32> to vector<1x128xf32>
    %358 = arith.mulf %353, %357 : vector<1x128xf32>
    %359 = vector.broadcast %358 : vector<1x128xf32> to vector<64x128xf32>
    %360 = arith.mulf %355, %359 : vector<64x128xf32>
    %c0_126 = arith.constant 0 : index
    %c0_127 = arith.constant 0 : index
    %c0_128 = arith.constant 0 : index
    %361 = vector.load %arg7[%c0_126, %c0_127, %c0_128] : memref<1x1x128xf32, #tpu.memory_space<vmem>>, vector<1x1x128xf32>
    %362 = vector.shape_cast %361 : vector<1x1x128xf32> to vector<1x128xf32>
    %363 = vector.broadcast %362 : vector<1x128xf32> to vector<64x128xf32>
    %364 = arith.addf %360, %363 : vector<64x128xf32>
    %365 = arith.negf %364 : vector<64x128xf32>
    %366 = math.exp %365 : vector<64x128xf32>
    %cst_129 = arith.constant 1.000000e+00 : f32
    %367 = vector.broadcast %cst_129 : f32 to vector<64x128xf32>
    %368 = arith.addf %367, %366 : vector<64x128xf32>
    %369 = arith.divf %367, %368 : vector<64x128xf32>
    %370 = arith.mulf %364, %369 : vector<64x128xf32>
    %371 = arith.truncf %370 : vector<64x128xf32> to vector<64x128xbf16>
    %c0_130 = arith.constant 0 : index
    %c0_131 = arith.constant 0 : index
    %c0_132 = arith.constant 0 : index
    %372 = vector.load %arg8[%c0_130, %c0_131, %c0_132] : memref<1x64x128xbf16, #tpu.memory_space<vmem>>, vector<1x64x128xbf16>
    %373 = vector.shape_cast %372 : vector<1x64x128xbf16> to vector<64x128xbf16>
    %374 = vector.shape_cast %371 : vector<64x128xbf16> to vector<1x64x128xbf16>
    tpu.vector_store %arg8[%c0_130, %c0_131, %c0_132], %374 {strides = array<i32>} : memref<1x64x128xbf16, #tpu.memory_space<vmem>>, vector<1x64x128xbf16>,
    return
  }
  func.func @transform_0(%arg0: i32, %arg1: memref<2xi32, #tpu.memory_space<smem>>) -> (i32, i32, i32) {
    %c0_i32 = arith.constant 0 : i32
    %c0_i32_0 = arith.constant 0 : i32
    %c0_i32_1 = arith.constant 0 : i32
    return %arg0, %c0_i32, %c0_i32_0 : i32, i32, i32
  }
  func.func @transform_1(%arg0: i32, %arg1: memref<2xi32, #tpu.memory_space<smem>>) -> (i32, i32, i32) {
    %c0_i32 = arith.constant 0 : i32
    %c0_i32_0 = arith.constant 0 : i32
    %c0_i32_1 = arith.constant 0 : i32
    return %arg0, %c0_i32, %c0_i32_0 : i32, i32, i32
  }
  func.func @transform_2(%arg0: i32, %arg1: memref<2xi32, #tpu.memory_space<smem>>) -> (i32, i32, i32) {
    %c0_i32 = arith.constant 0 : i32
    %c0_i32_0 = arith.constant 0 : i32
    %c0_i32_1 = arith.constant 0 : i32
    %c0_i32_2 = arith.constant 0 : i32
    return %c0_i32, %c0_i32_0, %c0_i32_1 : i32, i32, i32
  }
  func.func @transform_3(%arg0: i32, %arg1: memref<2xi32, #tpu.memory_space<smem>>) -> (i32, i32) {
    %c0_i32 = arith.constant 0 : i32
    %c0_i32_0 = arith.constant 0 : i32
    %c0_i32_1 = arith.constant 0 : i32
    return %c0_i32, %c0_i32_0 : i32, i32
  }
  func.func @transform_4(%arg0: i32, %arg1: memref<2xi32, #tpu.memory_space<smem>>) -> (i32, i32, i32) {
    %c0_i32 = arith.constant 0 : i32
    %c0_i32_0 = arith.constant 0 : i32
    %c0_i32_1 = arith.constant 0 : i32
    return %arg0, %c0_i32, %c0_i32_0 : i32, i32, i32
  }
  func.func @transform_5(%arg0: i32, %arg1: memref<2xi32, #tpu.memory_space<smem>>) -> (i32, i32, i32) {
    %c0_i32 = arith.constant 0 : i32
    %c0_i32_0 = arith.constant 0 : i32
    %c0_i32_1 = arith.constant 0 : i32
    return %arg0, %c0_i32, %c0_i32_0 : i32, i32, i32
  }
  func.func @transform_6(%arg0: i32, %arg1: memref<2xi32, #tpu.memory_space<smem>>) -> (i32, i32, i32) {
    %c0_i32 = arith.constant 0 : i32
    %c0_i32_0 = arith.constant 0 : i32
    %c0_i32_1 = arith.constant 0 : i32
    return %arg0, %c0_i32, %c0_i32_0 : i32, i32, i32
  }
}

</mosaic_0001>

<llo_original>
// kernel: tpu_custom_call.1
$region0: #{tpu_custom_call.1}
  #allocation0 [shape = 'u32[]', space=smem, size = 0x4, offset = 0x4, fixed_abs, tag = 'smem constant byte address 0x4 - core index']
  #allocation1 [shape = 'u32[144,128]{1,0:T(1,128)}', space=vmem, size = 0x12000, scoped, tag = 'internal scratch']
  #allocation2 [shape = 's32[1]{0}', space=sflag, size = 0x4, scoped, tag = 'scoped memory for tpu_custom_call.1']
  #allocation3 [shape = 'u8[512]{0}', space=smem, size = 0x200, scoped, tag = 'prefetched SMEM operand 0']
  %s0 = inlined_call_operand.vmem [shape: s32[2], index: 0, kind: input, shape index: {}]
  %s1 = inlined_call_operand.vmem [shape: bf16[2,64,4], index: 1, kind: input, shape index: {}]
  %s2 = inlined_call_operand.vmem [shape: s32[2,64,27], index: 2, kind: input, shape index: {}]
  %s3 = inlined_call_operand.vmem [shape: bf16[27,4,128], index: 3, kind: input, shape index: {}]
  %s4 = inlined_call_operand.vmem [shape: f32[128,128], index: 4, kind: input, shape index: {}]
  %s5 = inlined_call_operand.vmem [shape: f32[2,1,128], index: 5, kind: input, shape index: {}]
  %s6 = inlined_call_operand.vmem [shape: f32[2,1,128], index: 6, kind: input, shape index: {}]
  %s7 = inlined_call_operand.hbm [shape: bf16[2,64,128], index: 7, kind: output, shape index: {}]
  %s8 = sld [smem:[#allocation0]]
  $region57: #{tpu_custom_call.1} parent=0
    _
  %s10 = ssub.s32 1, %s8
  %s11 = scalar_select 0, %s10, %s8
  %s12 = sshll.u32 %s0, 4
  %s13 = int_to_ptr.vmem [resolvable:$true] %s12
  %15 = dma.vmem_to_smem %s13, 16, [#allocation3], [#allocation2]
  %16 = dma.done [#allocation2], 16
  %17 = sfence
  $region1: #{tpu_custom_call.1} parent=0
    #allocation4 [shape = 'u8[32768]{0}', space=vmem, size = 0x8000, scoped, tag = 'output window, operand 0']
    #allocation5 [shape = 's32[2]{0}', space=sflag, size = 0x8, scoped, tag = 'scoped memory for tpu_custom_call.1']
    %18 = vsyncpa [#allocation5], 0
    %s19 = scalar_lea.sflag [#allocation5], 1
    %20 = vsyncpa %s19, 0
    loop: start=0, step=1, limit=4
    $region2: #{tpu_custom_call.1} parent=1 // loop_pre_header
      _
    $region3: #{tpu_custom_call.1} parent=1 // loop_header
      %s22 = sphi 0, %s26
      %p23 = scmp.ge.s32.totalorder %s22, 4
      %s32 = sphi 0, %s34
      %s35 = sphi 0, %s32
      %s36 = sphi 0, %s35
      %s52 = sphi 0, %s36
      %s58 = sphi 0, %s60
      %s61 = sphi 0, %s58
      %s62 = sphi 0, %s61
      %s78 = sphi 0, %s62
      %s82 = sphi 0, %s82
      %s84 = sphi 0, %s82
      %s85 = sphi 0, %s84
      %s99 = sphi 0, %s85
      %s103 = sphi 0, %s103
      %s105 = sphi 0, %s103
      %s106 = sphi 0, %s105
      %s120 = sphi 0, %s106
      %s126 = sphi 0, %s128
      %s129 = sphi 0, %s126
      %s130 = sphi 0, %s129
      %s146 = sphi 0, %s130
      %s152 = sphi 0, %s154
      %s155 = sphi 0, %s152
      %s156 = sphi 0, %s155
      %s172 = sphi 0, %s156
      %s178 = sphi 0, %s180
      %s181 = sphi 0, %s178
      %s182 = sphi 0, %s181
      %s198 = sphi 0, %s182
    $region4: #{tpu_custom_call.1} parent=1 // loop_header_branch
      %25 = sbr.rel (%p23) target = $region8
    $region5: #{tpu_custom_call.1} parent=1 // loop_body
      %s27 = ssub.s32 %s22, 1
      %s28 = ssub.s32 %s22, 2
      %s29 = sadd.s32 %s22, 1
      %s30 = ssub.s32 %s22, %s29
      %p31 = scmp.eq.s32.totalorder %s30, 0
      %s33 = sadd.s32 %s32, 1
      %s34 = scalar_select %p31, %s32, %s33
      %p37 = pneg %p31
      %p38 = scmp.eq.s32.totalorder %s22, 1
      %p39 = por %p37, %p38
      %p40 = scmp.ne.s32.totalorder %s32, %s35
      %p41 = scmp.eq.s32.totalorder %s22, 0
      %p42 = por %p40, %p41
      %p43 = scmp.ne.s32.totalorder %s32, %s35
      %p44 = scmp.eq.s32.totalorder %s27, 1
      %p45 = por %p43, %p44
      %p46 = scmp.ne.s32.totalorder %s35, %s36
      %p47 = scmp.eq.s32.totalorder %s27, 0
      %p48 = por %p46, %p47
      %p49 = scmp.ne.s32.totalorder %s35, %s36
      %p50 = scmp.eq.s32.totalorder %s28, 1
      %p51 = por %p49, %p50
      %p53 = scmp.ne.s32.totalorder %s36, %s52
      %p54 = scmp.eq.s32.totalorder %s28, 0
      %p55 = por %p53, %p54
      %s56 = ssub.s32 %s22, %s29
      %p57 = scmp.eq.s32.totalorder %s56, 0
      %s59 = sadd.s32 %s58, 1
      %s60 = scalar_select %p57, %s58, %s59
      %p63 = pneg %p57
      %p64 = scmp.eq.s32.totalorder %s22, 1
      %p65 = por %p63, %p64
      %p66 = scmp.ne.s32.totalorder %s58, %s61
      %p67 = scmp.eq.s32.totalorder %s22, 0
      %p68 = por %p66, %p67
      %p69 = scmp.ne.s32.totalorder %s58, %s61
      %p70 = scmp.eq.s32.totalorder %s27, 1
      %p71 = por %p69, %p70
      %p72 = scmp.ne.s32.totalorder %s61, %s62
      %p73 = scmp.eq.s32.totalorder %s27, 0
      %p74 = por %p72, %p73
      %p75 = scmp.ne.s32.totalorder %s61, %s62
      %p76 = scmp.eq.s32.totalorder %s28, 1
      %p77 = por %p75, %p76
      %p79 = scmp.ne.s32.totalorder %s62, %s78
      %p80 = scmp.eq.s32.totalorder %s28, 0
      %p81 = por %p79, %p80
      %s83 = sadd.s32 %s82, 1
      %p86 = scmp.eq.s32.totalorder %s22, 1
      %p87 = scmp.ne.s32.totalorder %s82, %s84
      %p88 = scmp.eq.s32.totalorder %s22, 0
      %p89 = por %p87, %p88
      %p90 = scmp.ne.s32.totalorder %s82, %s84
      %p91 = scmp.eq.s32.totalorder %s27, 1
      %p92 = por %p90, %p91
      %p93 = scmp.ne.s32.totalorder %s84, %s85
      %p94 = scmp.eq.s32.totalorder %s27, 0
      %p95 = por %p93, %p94
      %p96 = scmp.ne.s32.totalorder %s84, %s85
      %p97 = scmp.eq.s32.totalorder %s28, 1
      %p98 = por %p96, %p97
      %p100 = scmp.ne.s32.totalorder %s85, %s99
      %p101 = scmp.eq.s32.totalorder %s28, 0
      %p102 = por %p100, %p101
      %s104 = sadd.s32 %s103, 1
      %p107 = scmp.eq.s32.totalorder %s22, 1
      %p108 = scmp.ne.s32.totalorder %s103, %s105
      %p109 = scmp.eq.s32.totalorder %s22, 0
      %p110 = por %p108, %p109
      %p111 = scmp.ne.s32.totalorder %s103, %s105
      %p112 = scmp.eq.s32.totalorder %s27, 1
      %p113 = por %p111, %p112
      %p114 = scmp.ne.s32.totalorder %s105, %s106
      %p115 = scmp.eq.s32.totalorder %s27, 0
      %p116 = por %p114, %p115
      %p117 = scmp.ne.s32.totalorder %s105, %s106
      %p118 = scmp.eq.s32.totalorder %s28, 1
      %p119 = por %p117, %p118
      %p121 = scmp.ne.s32.totalorder %s106, %s120
      %p122 = scmp.eq.s32.totalorder %s28, 0
      %p123 = por %p121, %p122
      %s124 = ssub.s32 %s22, %s29
      %p125 = scmp.eq.s32.totalorder %s124, 0
      %s127 = sadd.s32 %s126, 1
      %s128 = scalar_select %p125, %s126, %s127
      %p131 = pneg %p125
      %p132 = scmp.eq.s32.totalorder %s22, 1
      %p133 = por %p131, %p132
      %p134 = scmp.ne.s32.totalorder %s126, %s129
      %p135 = scmp.eq.s32.totalorder %s22, 0
      %p136 = por %p134, %p135
      %p137 = scmp.ne.s32.totalorder %s126, %s129
      %p138 = scmp.eq.s32.totalorder %s27, 1
      %p139 = por %p137, %p138
      %p140 = scmp.ne.s32.totalorder %s129, %s130
      %p141 = scmp.eq.s32.totalorder %s27, 0
      %p142 = por %p140, %p141
      %p143 = scmp.ne.s32.totalorder %s129, %s130
      %p144 = scmp.eq.s32.totalorder %s28, 1
      %p145 = por %p143, %p144
      %p147 = scmp.ne.s32.totalorder %s130, %s146
      %p148 = scmp.eq.s32.totalorder %s28, 0
      %p149 = por %p147, %p148
      %s150 = ssub.s32 %s22, %s29
      %p151 = scmp.eq.s32.totalorder %s150, 0
      %s153 = sadd.s32 %s152, 1
      %s154 = scalar_select %p151, %s152, %s153
      %p157 = pneg %p151
      %p158 = scmp.eq.s32.totalorder %s22, 1
      %p159 = por %p157, %p158
      %p160 = scmp.ne.s32.totalorder %s152, %s155
      %p161 = scmp.eq.s32.totalorder %s22, 0
      %p162 = por %p160, %p161
      %p163 = scmp.ne.s32.totalorder %s152, %s155
      %p164 = scmp.eq.s32.totalorder %s27, 1
      %p165 = por %p163, %p164
      %p166 = scmp.ne.s32.totalorder %s155, %s156
      %p167 = scmp.eq.s32.totalorder %s27, 0
      %p168 = por %p166, %p167
      %p169 = scmp.ne.s32.totalorder %s155, %s156
      %p170 = scmp.eq.s32.totalorder %s28, 1
      %p171 = por %p169, %p170
      %p173 = scmp.ne.s32.totalorder %s156, %s172
      %p174 = scmp.eq.s32.totalorder %s28, 0
      %p175 = por %p173, %p174
      %s176 = ssub.s32 %s22, %s29
      %p177 = scmp.eq.s32.totalorder %s176, 0
      %s179 = sadd.s32 %s178, 1
      %s180 = scalar_select %p177, %s178, %s179
      %p183 = pneg %p177
      %p184 = scmp.eq.s32.totalorder %s22, 1
      %p185 = por %p183, %p184
      %p186 = scmp.ne.s32.totalorder %s178, %s181
      %p187 = scmp.eq.s32.totalorder %s22, 0
      %p188 = por %p186, %p187
      %p189 = scmp.ne.s32.totalorder %s178, %s181
      %p190 = scmp.eq.s32.totalorder %s27, 1
      %p191 = por %p189, %p190
      %p192 = scmp.ne.s32.totalorder %s181, %s182
      %p193 = scmp.eq.s32.totalorder %s27, 0
      %p194 = por %p192, %p193
      %p195 = scmp.ne.s32.totalorder %s181, %s182
      %p196 = scmp.eq.s32.totalorder %s28, 1
      %p197 = por %p195, %p196
      %p199 = scmp.ne.s32.totalorder %s182, %s198
      %p200 = scmp.eq.s32.totalorder %s28, 0
      %p201 = por %p199, %p200
      %p202 = scmp.le.s32.totalorder 1, %s22
      %p203 = scmp.lt.s32.totalorder %s22, 3
      %p204 = pnand %p202, %p203
      %p205 = pneg %p204
      // Predicated region
      $region9: #{tpu_custom_call.1} parent=5 // pred_check
        _
      $region10: #{tpu_custom_call.1} parent=5 // pred_check_branch
        %207 = sbr.rel (%p204) target = $region12
      $region11: #{tpu_custom_call.1} parent=5 // pred_region
        %s208 = ssub.s32 %s22, 1
        // Predicated region
        $region13: #{tpu_custom_call.1} parent=11 // pred_check
          %p209 = pneg %p95
        $region14: #{tpu_custom_call.1} parent=11 // pred_check_branch
          %211 = sbr.rel (%p209) target = $region16
        $region15: #{tpu_custom_call.1} parent=11 // pred_region
          _
        $region16: #{tpu_custom_call.1} parent=11 // pred_fallthru
          _
        // Predicated region
        $region17: #{tpu_custom_call.1} parent=11 // pred_check
          %p212 = pneg %p116
        $region18: #{tpu_custom_call.1} parent=11 // pred_check_branch
          %214 = sbr.rel (%p212) target = $region20
        $region19: #{tpu_custom_call.1} parent=11 // pred_region
          _
        $region20: #{tpu_custom_call.1} parent=11 // pred_fallthru
          _
      $region12: #{tpu_custom_call.1} parent=5 // pred_fallthru
        _
      %p215 = scmp.lt.s32.totalorder %s22, 2
      // Predicated region
      $region21: #{tpu_custom_call.1} parent=5 // pred_check
        %p216 = pneg %p215
      $region22: #{tpu_custom_call.1} parent=5 // pred_check_branch
        %218 = sbr.rel (%p216) target = $region24
      $region23: #{tpu_custom_call.1} parent=5 // pred_region
        // Predicated region
        $region25: #{tpu_custom_call.1} parent=23 // pred_check
          %p219 = pneg %p42
        $region26: #{tpu_custom_call.1} parent=23 // pred_check_branch
          %221 = sbr.rel (%p219) target = $region28
        $region27: #{tpu_custom_call.1} parent=23 // pred_region
          %p222 = scmp.lt.s32.totalorder %s22, 1
          %s223 = scalar_select %p222, %s22, 1
          %s224 = smul.addr %s223, 8
          %s225 = smul.addr %s224, 4
          %s226 = scalar_lea.vmem %s1, %s225
        $region28: #{tpu_custom_call.1} parent=23 // pred_fallthru
          _
        // Predicated region
        $region29: #{tpu_custom_call.1} parent=23 // pred_check
          %p227 = pneg %p68
        $region30: #{tpu_custom_call.1} parent=23 // pred_check_branch
          %229 = sbr.rel (%p227) target = $region32
        $region31: #{tpu_custom_call.1} parent=23 // pred_region
          %p230 = scmp.lt.s32.totalorder %s22, 1
          %s231 = scalar_select %p230, %s22, 1
          %s232 = smul.addr %s231, 8
          %s233 = smul.addr %s232, 8
          %s234 = scalar_lea.vmem %s2, %s233
        $region32: #{tpu_custom_call.1} parent=23 // pred_fallthru
          _
        // Predicated region
        $region33: #{tpu_custom_call.1} parent=23 // pred_check
          %p235 = pneg %p136
        $region34: #{tpu_custom_call.1} parent=23 // pred_check_branch
          %237 = sbr.rel (%p235) target = $region36
        $region35: #{tpu_custom_call.1} parent=23 // pred_region
          %p238 = scmp.lt.s32.totalorder %s22, 1
          %s239 = scalar_select %p238, %s22, 1
          %s240 = scalar_lea.vmem %s5, %s239
        $region36: #{tpu_custom_call.1} parent=23 // pred_fallthru
          _
        // Predicated region
        $region37: #{tpu_custom_call.1} parent=23 // pred_check
          %p241 = pneg %p162
        $region38: #{tpu_custom_call.1} parent=23 // pred_check_branch
          %243 = sbr.rel (%p241) target = $region40
        $region39: #{tpu_custom_call.1} parent=23 // pred_region
          %p244 = scmp.lt.s32.totalorder %s22, 1
          %s245 = scalar_select %p244, %s22, 1
          %s246 = scalar_lea.vmem %s6, %s245
        $region40: #{tpu_custom_call.1} parent=23 // pred_fallthru
          _
      $region24: #{tpu_custom_call.1} parent=5 // pred_fallthru
        _
      %p247 = scmp.le.s32.totalorder 1, %s22
      %p248 = scmp.lt.s32.totalorder %s22, 3
      %p249 = pnand %p247, %p248
      %p250 = pneg %p249
      // Predicated region
      $region41: #{tpu_custom_call.1} parent=5 // pred_check
        _
      $region42: #{tpu_custom_call.1} parent=5 // pred_check_branch
        %252 = sbr.rel (%p249) target = $region44
      $region43: #{tpu_custom_call.1} parent=5 // pred_region
        %s253 = ssub.s32 %s22, 1
        %p254 = scmp.lt.s32.totalorder %s27, 1
        %s255 = scalar_select %p254, %s27, 1
        %s256 = smul.addr %s255, 8
        %s257 = smul.addr %s256, 4
        %s258 = scalar_lea.vmem %s1, %s257
        %p259 = pneg %p48
        %p260 = pneg %p45
        %p261 = scmp.lt.s32.totalorder %s27, 1
        %s262 = scalar_select %p261, %s27, 1
        %s263 = smul.addr %s262, 8
        %s264 = smul.addr %s263, 8
        %s265 = scalar_lea.vmem %s2, %s264
        %p266 = pneg %p74
        %p267 = pneg %p71
        %p268 = pneg %p95
        %p269 = pneg %p92
        %p270 = pneg %p116
        %p271 = pneg %p113
        %p272 = scmp.lt.s32.totalorder %s27, 1
        %s273 = scalar_select %p272, %s27, 1
        %s274 = scalar_lea.vmem %s5, %s273
        %p275 = pneg %p142
        %p276 = pneg %p139
        %p277 = scmp.lt.s32.totalorder %s27, 1
        %s278 = scalar_select %p277, %s27, 1
        %s279 = scalar_lea.vmem %s6, %s278
        %p280 = pneg %p168
        %p281 = pneg %p165
        %p282 = pneg %p194
        %p283 = pneg %p191
        %s284 = sand.u32 %s181, 1
        %s285 = scalar_lea.sflag [#allocation5], %s284
        %s286 = sand.u32 %s181, 1
        %s287 = smul.addr %s286, 32
        %s288 = scalar_lea.vmem [#allocation4], %s287
        %p289 = scmp.lt.s32.totalorder %s27, 1
        %s290 = scalar_select %p289, %s27, 1
        %s291 = smul.addr %s290, 8
        %s292 = smul.addr %s291, 4
        %s293 = scalar_lea.vmem %s1, %s292
        %p294 = scmp.lt.s32.totalorder %s27, 1
        %s295 = scalar_select %p294, %s27, 1
        %s296 = smul.addr %s295, 8
        %s297 = smul.addr %s296, 8
        %s298 = scalar_lea.vmem %s2, %s297
        %p299 = scmp.lt.s32.totalorder %s27, 1
        %s300 = scalar_select %p299, %s27, 1
        %s301 = scalar_lea.vmem %s5, %s300
        %p302 = scmp.lt.s32.totalorder %s27, 1
        %s303 = scalar_select %p302, %s27, 1
        %s304 = scalar_lea.vmem %s6, %s303
        %s306 = sld [smem:[#allocation3 + %s27]]
        %v307 = vld [vmem:[%s293] sm:$0xf]
        %v308 = vld [vmem:[%s293 + $0x4] sm:$0xf]
        %v309 = vld [vmem:[%s293 + $0x8] sm:$0xf]
        %v310 = vld [vmem:[%s293 + $0xc] sm:$0xf]
        %v311 = vld [vmem:[%s293 + $0x10] sm:$0xf]
        %v312 = vld [vmem:[%s293 + $0x14] sm:$0xf]
        %v313 = vld [vmem:[%s293 + $0x18] sm:$0xf]
        %v314 = vld [vmem:[%s293 + $0x1c] sm:$0xf]
        %v315 = vld [vmem:[%s298] sm:$0xff]
        %v316 = vld [vmem:[%s298 + $0x8] sm:$0xff]
        %v317 = vld [vmem:[%s298 + $0x10] sm:$0xff]
        %v318 = vld [vmem:[%s298 + $0x18] sm:$0xff]
        %v319 = vld [vmem:[%s298 + $0x20] sm:$0xff]
        %v320 = vld [vmem:[%s298 + $0x28] sm:$0xff]
        %v321 = vld [vmem:[%s298 + $0x30] sm:$0xff]
        %v322 = vld [vmem:[%s298 + $0x38] sm:$0xff]
        %v323 = vlaneseq
        %v324 = vand.u32 %v323, 127
        %325 = vset.pattern.permute.xlu0 0
        %326 = vperm.xlu0 %325, %v315
        %v327 = vpop.permute.xlu0 %326
        %328 = vset.pattern.permute.xlu0 0
        %329 = vperm.xlu0 %328, %v316
        %v330 = vpop.permute.xlu0 %329
        %331 = vset.pattern.permute.xlu0 0
        %332 = vperm.xlu0 %331, %v317
        %v333 = vpop.permute.xlu0 %332
        %334 = vset.pattern.permute.xlu0 0
        %335 = vperm.xlu0 %334, %v318
        %v336 = vpop.permute.xlu0 %335
        %337 = vset.pattern.permute.xlu0 0
        %338 = vperm.xlu0 %337, %v319
        %v339 = vpop.permute.xlu0 %338
        %340 = vset.pattern.permute.xlu0 0
        %341 = vperm.xlu0 %340, %v320
        %v342 = vpop.permute.xlu0 %341
        %343 = vset.pattern.permute.xlu0 0
        %344 = vperm.xlu0 %343, %v321
        %v345 = vpop.permute.xlu0 %344
        %346 = vset.pattern.permute.xlu0 0
        %347 = vperm.xlu0 %346, %v322
        %v348 = vpop.permute.xlu0 %347
        %vm349 = vcmp.eq.s32.totalorder %v327, %v324
        %vm350 = vcmp.eq.s32.totalorder %v330, %v324
        %vm351 = vcmp.eq.s32.totalorder %v333, %v324
        %vm352 = vcmp.eq.s32.totalorder %v336, %v324
        %vm353 = vcmp.eq.s32.totalorder %v339, %v324
        %vm354 = vcmp.eq.s32.totalorder %v342, %v324
        %vm355 = vcmp.eq.s32.totalorder %v345, %v324
        %vm356 = vcmp.eq.s32.totalorder %v348, %v324
        %v357 = vsel %vm349, 1, 0
        %v358 = vsel %vm350, 1, 0
        %v359 = vsel %vm351, 1, 0
        %v360 = vsel %vm352, 1, 0
        %v361 = vsel %vm353, 1, 0
        %v362 = vsel %vm354, 1, 0
        %v363 = vsel %vm355, 1, 0
        %v364 = vsel %vm356, 1, 0
        %v365 = vcvt.s32.f32 %v357
        %v366 = vcvt.s32.f32 %v358
        %v367 = vcvt.s32.f32 %v359
        %v368 = vcvt.s32.f32 %v360
        %v369 = vcvt.s32.f32 %v361
        %v370 = vcvt.s32.f32 %v362
        %v371 = vcvt.s32.f32 %v363
        %v372 = vcvt.s32.f32 %v364
        %v373 = vpack.c.bf16 %v366, %v365
        %v374 = vpack.c.bf16 %v368, %v367
        %v375 = vpack.c.bf16 %v370, %v369
        %v376 = vpack.c.bf16 %v372, %v371
        %v385 = vunpack.c.l.b16 %v307
        %v386 = vunpack.c.l.b16 %v308
        %v387 = vunpack.c.l.b16 %v309
        %v388 = vunpack.c.l.b16 %v310
        %v389 = vunpack.c.l.b16 %v311
        %v390 = vunpack.c.l.b16 %v312
        %v391 = vunpack.c.l.b16 %v313
        %v392 = vunpack.c.l.b16 %v314
        %v393 = vpack.c.b16 %v386, %v385
        %v394 = vpack.c.b16 %v388, %v387
        %v395 = vpack.c.b16 %v390, %v389
        %v396 = vpack.c.b16 %v392, %v391
        %vm401 = vcmask 523264
        %v403 = vsel %vm401, %v373, 0
        %v406 = vsel %vm401, %v374, 0
        %v409 = vsel %vm401, %v375, 0
        %v412 = vsel %vm401, %v376, 0
        %414 = vmatprep.subr.bf16.mxu0 0
        %415 = vmatpush1.bf16.msra.mxu0 0
        %416 = vmatprep.subr.bf16.mxu0 0
        %417 = vmatpush1.bf16.msra.mxu0 0
        %418 = vmatprep.subr.bf16.mxu0 0
        %419 = vmatpush1.bf16.msra.mxu0 0
        %420 = vmatprep.subr.bf16.mxu0 0
        %421 = vmatpush1.bf16.msra.mxu0 0
        %422 = vmatprep.subr.bf16.mxu0 0
        %423 = vmatpush1.bf16.msra.mxu0 %v396
        %424 = vmatprep.subr.bf16.mxu0 0
        %425 = vmatpush1.bf16.msra.mxu0 %v395
        %426 = vmatprep.subr.bf16.mxu0 0
        %427 = vmatpush1.bf16.msra.mxu0 %v394
        %428 = vmatprep.subr.bf16.mxu0 0
        %429 = vmatpush1.bf16.msra.mxu0 %v393
        %430 = vmatprep.subr.bf16.mxu0 0
        %431 = vmatpush2.bf16.msra.mxu0 0
        %432 = vmatprep.subr.bf16.mxu0 0
        %433 = vmatpush2.bf16.msra.mxu0 0
        %434 = vmatprep.subr.bf16.mxu0 0
        %435 = vmatpush2.bf16.msra.mxu0 0
        %436 = vmatprep.subr.bf16.mxu0 0
        %437 = vmatpush2.bf16.msra.mxu0 0
        %438 = vmatprep.subr.bf16.mxu0 0
        %439 = vmatpush2.bf16.msra.mxu0 0
        %440 = vmatprep.subr.bf16.mxu0 0
        %441 = vmatpush2.bf16.msra.mxu0 0
        %442 = vmatprep.subr.bf16.mxu0 0
        %443 = vmatpush2.bf16.msra.mxu0 0
        %444 = vmatprep.subr.bf16.mxu0 0
        %445 = vmatpush2.bf16.msra.mxu0 0
        %446 = vmatprep.mubr.bf16.mxu0 0
        %447 = vmatmul.mubr.bf16.gmra.mxu0 %v403
        %v448 = vpop.f32.mrf.mxu0
        %v449 = vadd.f32 0.0, %v448
        %v450 = vpop.f32.mrf.mxu0
        %v451 = vpop.f32.mrf.mxu0
        %v452 = vadd.f32 0.0, %v451
        %v453 = vpop.f32.mrf.mxu0
        %454 = vmatprep.mubr.bf16.mxu0 0
        %455 = vmatmul.mubr.bf16.gmra.mxu0 %v406
        %v456 = vpop.f32.mrf.mxu0
        %v457 = vadd.f32 0.0, %v456
        %v458 = vpop.f32.mrf.mxu0
        %v459 = vpop.f32.mrf.mxu0
        %v460 = vadd.f32 0.0, %v459
        %v461 = vpop.f32.mrf.mxu0
        %462 = vmatprep.mubr.bf16.mxu0 0
        %463 = vmatmul.mubr.bf16.gmra.mxu0 %v409
        %v464 = vpop.f32.mrf.mxu0
        %v465 = vadd.f32 0.0, %v464
        %v466 = vpop.f32.mrf.mxu0
        %v467 = vpop.f32.mrf.mxu0
        %v468 = vadd.f32 0.0, %v467
        %v469 = vpop.f32.mrf.mxu0
        %470 = vmatprep.mubr.bf16.mxu0 0
        %471 = vmatmul.mubr.bf16.gmra.mxu0 %v412
        %v472 = vpop.f32.mrf.mxu0
        %v473 = vadd.f32 0.0, %v472
        %v474 = vpop.f32.mrf.mxu0
        %v475 = vpop.f32.mrf.mxu0
        %v476 = vadd.f32 0.0, %v475
        %v477 = vpop.f32.mrf.mxu0
        %478 = vdwg.mxu0
        %v479 = vpack.c.bf16 %v452, %v449
        %v480 = vpack.c.bf16 %v460, %v457
        %v481 = vpack.c.bf16 %v468, %v465
        %v482 = vpack.c.bf16 %v476, %v473
        %v483 = vld [vmem:[%s3] sm:$0x3]
        %484 = vset.pattern.permute.xlu0 1
        %485 = vperm.xlu0 %484, %v315
        %v486 = vpop.permute.xlu0 %485
        %487 = vset.pattern.permute.xlu0 1
        %488 = vperm.xlu0 %487, %v316
        %v489 = vpop.permute.xlu0 %488
        %490 = vset.pattern.permute.xlu0 1
        %491 = vperm.xlu0 %490, %v317
        %v492 = vpop.permute.xlu0 %491
        %493 = vset.pattern.permute.xlu0 1
        %494 = vperm.xlu0 %493, %v318
        %v495 = vpop.permute.xlu0 %494
        %496 = vset.pattern.permute.xlu0 1
        %497 = vperm.xlu0 %496, %v319
        %v498 = vpop.permute.xlu0 %497
        %499 = vset.pattern.permute.xlu0 1
        %500 = vperm.xlu0 %499, %v320
        %v501 = vpop.permute.xlu0 %500
        %502 = vset.pattern.permute.xlu0 1
        %503 = vperm.xlu0 %502, %v321
        %v504 = vpop.permute.xlu0 %503
        %505 = vset.pattern.permute.xlu0 1
        %506 = vperm.xlu0 %505, %v322
        %v507 = vpop.permute.xlu0 %506
        %vm508 = vcmp.eq.s32.totalorder %v486, %v324
        %vm509 = vcmp.eq.s32.totalorder %v489, %v324
        %vm510 = vcmp.eq.s32.totalorder %v492, %v324
        %vm511 = vcmp.eq.s32.totalorder %v495, %v324
        %vm512 = vcmp.eq.s32.totalorder %v498, %v324
        %vm513 = vcmp.eq.s32.totalorder %v501, %v324
        %vm514 = vcmp.eq.s32.totalorder %v504, %v324
        %vm515 = vcmp.eq.s32.totalorder %v507, %v324
        %v516 = vsel %vm508, 1, 0
        %v517 = vsel %vm509, 1, 0
        %v518 = vsel %vm510, 1, 0
        %v519 = vsel %vm511, 1, 0
        %v520 = vsel %vm512, 1, 0
        %v521 = vsel %vm513, 1, 0
        %v522 = vsel %vm514, 1, 0
        %v523 = vsel %vm515, 1, 0
        %v524 = vcvt.s32.f32 %v516
        %v525 = vcvt.s32.f32 %v517
        %v526 = vcvt.s32.f32 %v518
        %v527 = vcvt.s32.f32 %v519
        %v528 = vcvt.s32.f32 %v520
        %v529 = vcvt.s32.f32 %v521
        %v530 = vcvt.s32.f32 %v522
        %v531 = vcvt.s32.f32 %v523
        %v532 = vpack.c.bf16 %v525, %v524
        %v533 = vpack.c.bf16 %v527, %v526
        %v534 = vpack.c.bf16 %v529, %v528
        %v535 = vpack.c.bf16 %v531, %v530
        %v537 = vsel %vm401, %v532, 0
        %v540 = vsel %vm401, %v533, 0
        %v543 = vsel %vm401, %v534, 0
        %v546 = vsel %vm401, %v535, 0
        %548 = vmatprep.subr.bf16.mxu0 0
        %549 = vmatpush1.bf16.msra.mxu0 0
        %550 = vmatprep.subr.bf16.mxu0 0
        %551 = vmatpush1.bf16.msra.mxu0 0
        %552 = vmatprep.subr.bf16.mxu0 0
        %553 = vmatpush1.bf16.msra.mxu0 0
        %554 = vmatprep.subr.bf16.mxu0 0
        %555 = vmatpush1.bf16.msra.mxu0 0
        %556 = vmatprep.subr.bf16.mxu0 0
        %557 = vmatpush1.bf16.msra.mxu0 %v396
        %558 = vmatprep.subr.bf16.mxu0 0
        %559 = vmatpush1.bf16.msra.mxu0 %v395
        %560 = vmatprep.subr.bf16.mxu0 0
        %561 = vmatpush1.bf16.msra.mxu0 %v394
        %562 = vmatprep.subr.bf16.mxu0 0
        %563 = vmatpush1.bf16.msra.mxu0 %v393
        %564 = vmatprep.subr.bf16.mxu0 0
        %565 = vmatpush2.bf16.msra.mxu0 0
        %566 = vmatprep.subr.bf16.mxu0 0
        %567 = vmatpush2.bf16.msra.mxu0 0
        %568 = vmatprep.subr.bf16.mxu0 0
        %569 = vmatpush2.bf16.msra.mxu0 0
        %570 = vmatprep.subr.bf16.mxu0 0
        %571 = vmatpush2.bf16.msra.mxu0 0
        %572 = vmatprep.subr.bf16.mxu0 0
        %573 = vmatpush2.bf16.msra.mxu0 0
        %574 = vmatprep.subr.bf16.mxu0 0
        %575 = vmatpush2.bf16.msra.mxu0 0
        %576 = vmatprep.subr.bf16.mxu0 0
        %577 = vmatpush2.bf16.msra.mxu0 0
        %578 = vmatprep.subr.bf16.mxu0 0
        %579 = vmatpush2.bf16.msra.mxu0 0
        %580 = vmatprep.mubr.bf16.mxu0 0
        %581 = vmatmul.mubr.bf16.gmra.mxu0 %v537
        %v582 = vpop.f32.mrf.mxu0
        %v583 = vadd.f32 0.0, %v582
        %v584 = vpop.f32.mrf.mxu0
        %v585 = vpop.f32.mrf.mxu0
        %v586 = vadd.f32 0.0, %v585
        %v587 = vpop.f32.mrf.mxu0
        %588 = vmatprep.mubr.bf16.mxu0 0
        %589 = vmatmul.mubr.bf16.gmra.mxu0 %v540
        %v590 = vpop.f32.mrf.mxu0
        %v591 = vadd.f32 0.0, %v590
        %v592 = vpop.f32.mrf.mxu0
        %v593 = vpop.f32.mrf.mxu0
        %v594 = vadd.f32 0.0, %v593
        %v595 = vpop.f32.mrf.mxu0
        %596 = vmatprep.mubr.bf16.mxu0 0
        %597 = vmatmul.mubr.bf16.gmra.mxu0 %v543
        %v598 = vpop.f32.mrf.mxu0
        %v599 = vadd.f32 0.0, %v598
        %v600 = vpop.f32.mrf.mxu0
        %v601 = vpop.f32.mrf.mxu0
        %v602 = vadd.f32 0.0, %v601
        %v603 = vpop.f32.mrf.mxu0
        %604 = vmatprep.mubr.bf16.mxu0 0
        %605 = vmatmul.mubr.bf16.gmra.mxu0 %v546
        %v606 = vpop.f32.mrf.mxu0
        %v607 = vadd.f32 0.0, %v606
        %v608 = vpop.f32.mrf.mxu0
        %v609 = vpop.f32.mrf.mxu0
        %v610 = vadd.f32 0.0, %v609
        %v611 = vpop.f32.mrf.mxu0
        %612 = vdwg.mxu0
        %v613 = vpack.c.bf16 %v586, %v583
        %v614 = vpack.c.bf16 %v594, %v591
        %v615 = vpack.c.bf16 %v602, %v599
        %v616 = vpack.c.bf16 %v610, %v607
        %s617 = scalar_lea.vmem %s3, 2
        %v618 = vld [vmem:[%s617] sm:$0x3]
        %vm619 = vcmask 31744
        %v621 = vsel %vm619, %v613, 0
        %v624 = vsel %vm619, %v614, 0
        %v627 = vsel %vm619, %v615, 0
        %v630 = vsel %vm619, %v616, 0
        %vm632 = vcmask 1041408
        %v634 = vsel %vm632, %v618, 0
        %636 = vmatprep.subr.bf16.mxu0 0
        %637 = vmatpush1.bf16.msra.mxu0 0
        %638 = vmatprep.subr.bf16.mxu0 0
        %639 = vmatpush1.bf16.msra.mxu0 0
        %640 = vmatprep.subr.bf16.mxu0 0
        %641 = vmatpush1.bf16.msra.mxu0 0
        %642 = vmatprep.subr.bf16.mxu0 0
        %643 = vmatpush1.bf16.msra.mxu0 0
        %644 = vmatprep.subr.bf16.mxu0 0
        %645 = vmatpush1.bf16.msra.mxu0 0
        %646 = vmatprep.subr.bf16.mxu0 0
        %647 = vmatpush1.bf16.msra.mxu0 0
        %648 = vmatprep.subr.bf16.mxu0 0
        %649 = vmatpush1.bf16.msra.mxu0 0
        %650 = vmatprep.subr.bf16.mxu0 0
        %651 = vmatpush1.bf16.msra.mxu0 %v634
        %652 = vmatprep.subr.bf16.mxu0 0
        %653 = vmatpush2.bf16.msra.mxu0 0
        %654 = vmatprep.subr.bf16.mxu0 0
        %655 = vmatpush2.bf16.msra.mxu0 0
        %656 = vmatprep.subr.bf16.mxu0 0
        %657 = vmatpush2.bf16.msra.mxu0 0
        %658 = vmatprep.subr.bf16.mxu0 0
        %659 = vmatpush2.bf16.msra.mxu0 0
        %660 = vmatprep.subr.bf16.mxu0 0
        %661 = vmatpush2.bf16.msra.mxu0 0
        %662 = vmatprep.subr.bf16.mxu0 0
        %663 = vmatpush2.bf16.msra.mxu0 0
        %664 = vmatprep.subr.bf16.mxu0 0
        %665 = vmatpush2.bf16.msra.mxu0 0
        %666 = vmatprep.subr.bf16.mxu0 0
        %667 = vmatpush2.bf16.msra.mxu0 0
        %668 = vmatprep.mubr.bf16.mxu0 0
        %669 = vmatmul.mubr.bf16.gmra.mxu0 %v621
        %v670 = vpop.f32.mrf.mxu0
        %v671 = vadd.f32 0.0, %v670
        %v672 = vpop.f32.mrf.mxu0
        %v673 = vpop.f32.mrf.mxu0
        %v674 = vadd.f32 0.0, %v673
        %v675 = vpop.f32.mrf.mxu0
        %676 = vmatprep.mubr.bf16.mxu0 0
        %677 = vmatmul.mubr.bf16.gmra.mxu0 %v624
        %v678 = vpop.f32.mrf.mxu0
        %v679 = vadd.f32 0.0, %v678
        %v680 = vpop.f32.mrf.mxu0
        %v681 = vpop.f32.mrf.mxu0
        %v682 = vadd.f32 0.0, %v681
        %v683 = vpop.f32.mrf.mxu0
        %684 = vmatprep.mubr.bf16.mxu0 0
        %685 = vmatmul.mubr.bf16.gmra.mxu0 %v627
        %v686 = vpop.f32.mrf.mxu0
        %v687 = vadd.f32 0.0, %v686
        %v688 = vpop.f32.mrf.mxu0
        %v689 = vpop.f32.mrf.mxu0
        %v690 = vadd.f32 0.0, %v689
        %v691 = vpop.f32.mrf.mxu0
        %692 = vmatprep.mubr.bf16.mxu0 0
        %693 = vmatmul.mubr.bf16.gmra.mxu0 %v630
        %v694 = vpop.f32.mrf.mxu0
        %v695 = vadd.f32 0.0, %v694
        %v696 = vpop.f32.mrf.mxu0
        %v697 = vpop.f32.mrf.mxu0
        %v698 = vadd.f32 0.0, %v697
        %v699 = vpop.f32.mrf.mxu0
        %700 = vdwg.mxu0
        %v702 = vsel %vm619, %v479, 0
        %v705 = vsel %vm619, %v480, 0
        %v708 = vsel %vm619, %v481, 0
        %v711 = vsel %vm619, %v482, 0
        %v714 = vsel %vm632, %v483, 0
        %716 = vmatprep.subr.bf16.mxu0 0
        %717 = vmatpush1.bf16.msra.mxu0 0
        %718 = vmatprep.subr.bf16.mxu0 0
        %719 = vmatpush1.bf16.msra.mxu0 0
        %720 = vmatprep.subr.bf16.mxu0 0
        %721 = vmatpush1.bf16.msra.mxu0 0
        %722 = vmatprep.subr.bf16.mxu0 0
        %723 = vmatpush1.bf16.msra.mxu0 0
        %724 = vmatprep.subr.bf16.mxu0 0
        %725 = vmatpush1.bf16.msra.mxu0 0
        %726 = vmatprep.subr.bf16.mxu0 0
        %727 = vmatpush1.bf16.msra.mxu0 0
        %728 = vmatprep.subr.bf16.mxu0 0
        %729 = vmatpush1.bf16.msra.mxu0 0
        %730 = vmatprep.subr.bf16.mxu0 0
        %731 = vmatpush1.bf16.msra.mxu0 %v714
        %732 = vmatprep.subr.bf16.mxu0 0
        %733 = vmatpush2.bf16.msra.mxu0 0
        %734 = vmatprep.subr.bf16.mxu0 0
        %735 = vmatpush2.bf16.msra.mxu0 0
        %736 = vmatprep.subr.bf16.mxu0 0
        %737 = vmatpush2.bf16.msra.mxu0 0
        %738 = vmatprep.subr.bf16.mxu0 0
        %739 = vmatpush2.bf16.msra.mxu0 0
        %740 = vmatprep.subr.bf16.mxu0 0
        %741 = vmatpush2.bf16.msra.mxu0 0
        %742 = vmatprep.subr.bf16.mxu0 0
        %743 = vmatpush2.bf16.msra.mxu0 0
        %744 = vmatprep.subr.bf16.mxu0 0
        %745 = vmatpush2.bf16.msra.mxu0 0
        %746 = vmatprep.subr.bf16.mxu0 0
        %747 = vmatpush2.bf16.msra.mxu0 0
        %748 = vmatprep.mubr.bf16.mxu0 0
        %749 = vmatmul.mubr.bf16.gmra.mxu0 %v702
        %v750 = vpop.f32.mrf.mxu0
        %v751 = vadd.f32 %v671, %v750
        %v752 = vpop.f32.mrf.mxu0
        %v753 = vpop.f32.mrf.mxu0
        %v754 = vadd.f32 %v674, %v753
        %v755 = vpop.f32.mrf.mxu0
        %756 = vmatprep.mubr.bf16.mxu0 0
        %757 = vmatmul.mubr.bf16.gmra.mxu0 %v705
        %v758 = vpop.f32.mrf.mxu0
        %v759 = vadd.f32 %v679, %v758
        %v760 = vpop.f32.mrf.mxu0
        %v761 = vpop.f32.mrf.mxu0
        %v762 = vadd.f32 %v682, %v761
        %v763 = vpop.f32.mrf.mxu0
        %764 = vmatprep.mubr.bf16.mxu0 0
        %765 = vmatmul.mubr.bf16.gmra.mxu0 %v708
        %v766 = vpop.f32.mrf.mxu0
        %v767 = vadd.f32 %v687, %v766
        %v768 = vpop.f32.mrf.mxu0
        %v769 = vpop.f32.mrf.mxu0
        %v770 = vadd.f32 %v690, %v769
        %v771 = vpop.f32.mrf.mxu0
        %772 = vmatprep.mubr.bf16.mxu0 0
        %773 = vmatmul.mubr.bf16.gmra.mxu0 %v711
        %v774 = vpop.f32.mrf.mxu0
        %v775 = vadd.f32 %v695, %v774
        %v776 = vpop.f32.mrf.mxu0
        %v777 = vpop.f32.mrf.mxu0
        %v778 = vadd.f32 %v698, %v777
        %v779 = vpop.f32.mrf.mxu0
        %780 = vdwg.mxu0
        %781 = vset.pattern.permute.xlu0 2
        %782 = vperm.xlu0 %781, %v315
        %v783 = vpop.permute.xlu0 %782
        %784 = vset.pattern.permute.xlu0 2
        %785 = vperm.xlu0 %784, %v316
        %v786 = vpop.permute.xlu0 %785
        %787 = vset.pattern.permute.xlu0 2
        %788 = vperm.xlu0 %787, %v317
        %v789 = vpop.permute.xlu0 %788
        %790 = vset.pattern.permute.xlu0 2
        %791 = vperm.xlu0 %790, %v318
        %v792 = vpop.permute.xlu0 %791
        %793 = vset.pattern.permute.xlu0 2
        %794 = vperm.xlu0 %793, %v319
        %v795 = vpop.permute.xlu0 %794
        %796 = vset.pattern.permute.xlu0 2
        %797 = vperm.xlu0 %796, %v320
        %v798 = vpop.permute.xlu0 %797
        %799 = vset.pattern.permute.xlu0 2
        %800 = vperm.xlu0 %799, %v321
        %v801 = vpop.permute.xlu0 %800
        %802 = vset.pattern.permute.xlu0 2
        %803 = vperm.xlu0 %802, %v322
        %v804 = vpop.permute.xlu0 %803
        %vm805 = vcmp.eq.s32.totalorder %v783, %v324
        %vm806 = vcmp.eq.s32.totalorder %v786, %v324
        %vm807 = vcmp.eq.s32.totalorder %v789, %v324
        %vm808 = vcmp.eq.s32.totalorder %v792, %v324
        %vm809 = vcmp.eq.s32.totalorder %v795, %v324
        %vm810 = vcmp.eq.s32.totalorder %v798, %v324
        %vm811 = vcmp.eq.s32.totalorder %v801, %v324
        %vm812 = vcmp.eq.s32.totalorder %v804, %v324
        %v813 = vsel %vm805, 1, 0
        %v814 = vsel %vm806, 1, 0
        %v815 = vsel %vm807, 1, 0
        %v816 = vsel %vm808, 1, 0
        %v817 = vsel %vm809, 1, 0
        %v818 = vsel %vm810, 1, 0
        %v819 = vsel %vm811, 1, 0
        %v820 = vsel %vm812, 1, 0
        %v821 = vcvt.s32.f32 %v813
        %v822 = vcvt.s32.f32 %v814
        %v823 = vcvt.s32.f32 %v815
        %v824 = vcvt.s32.f32 %v816
        %v825 = vcvt.s32.f32 %v817
        %v826 = vcvt.s32.f32 %v818
        %v827 = vcvt.s32.f32 %v819
        %v828 = vcvt.s32.f32 %v820
        %v829 = vpack.c.bf16 %v822, %v821
        %v830 = vpack.c.bf16 %v824, %v823
        %v831 = vpack.c.bf16 %v826, %v825
        %v832 = vpack.c.bf16 %v828, %v827
        %v834 = vsel %vm401, %v829, 0
        %v837 = vsel %vm401, %v830, 0
        %v840 = vsel %vm401, %v831, 0
        %v843 = vsel %vm401, %v832, 0
        %845 = vmatprep.subr.bf16.mxu0 0
        %846 = vmatpush1.bf16.msra.mxu0 0
        %847 = vmatprep.subr.bf16.mxu0 0
        %848 = vmatpush1.bf16.msra.mxu0 0
        %849 = vmatprep.subr.bf16.mxu0 0
        %850 = vmatpush1.bf16.msra.mxu0 0
        %851 = vmatprep.subr.bf16.mxu0 0
        %852 = vmatpush1.bf16.msra.mxu0 0
        %853 = vmatprep.subr.bf16.mxu0 0
        %854 = vmatpush1.bf16.msra.mxu0 %v396
        %855 = vmatprep.subr.bf16.mxu0 0
        %856 = vmatpush1.bf16.msra.mxu0 %v395
        %857 = vmatprep.subr.bf16.mxu0 0
        %858 = vmatpush1.bf16.msra.mxu0 %v394
        %859 = vmatprep.subr.bf16.mxu0 0
        %860 = vmatpush1.bf16.msra.mxu0 %v393
        %861 = vmatprep.subr.bf16.mxu0 0
        %862 = vmatpush2.bf16.msra.mxu0 0
        %863 = vmatprep.subr.bf16.mxu0 0
        %864 = vmatpush2.bf16.msra.mxu0 0
        %865 = vmatprep.subr.bf16.mxu0 0
        %866 = vmatpush2.bf16.msra.mxu0 0
        %867 = vmatprep.subr.bf16.mxu0 0
        %868 = vmatpush2.bf16.msra.mxu0 0
        %869 = vmatprep.subr.bf16.mxu0 0
        %870 = vmatpush2.bf16.msra.mxu0 0
        %871 = vmatprep.subr.bf16.mxu0 0
        %872 = vmatpush2.bf16.msra.mxu0 0
        %873 = vmatprep.subr.bf16.mxu0 0
        %874 = vmatpush2.bf16.msra.mxu0 0
        %875 = vmatprep.subr.bf16.mxu0 0
        %876 = vmatpush2.bf16.msra.mxu0 0
        %877 = vmatprep.mubr.bf16.mxu0 0
        %878 = vmatmul.mubr.bf16.gmra.mxu0 %v834
        %v879 = vpop.f32.mrf.mxu0
        %v880 = vadd.f32 0.0, %v879
        %v881 = vpop.f32.mrf.mxu0
        %v882 = vpop.f32.mrf.mxu0
        %v883 = vadd.f32 0.0, %v882
        %v884 = vpop.f32.mrf.mxu0
        %885 = vmatprep.mubr.bf16.mxu0 0
        %886 = vmatmul.mubr.bf16.gmra.mxu0 %v837
        %v887 = vpop.f32.mrf.mxu0
        %v888 = vadd.f32 0.0, %v887
        %v889 = vpop.f32.mrf.mxu0
        %v890 = vpop.f32.mrf.mxu0
        %v891 = vadd.f32 0.0, %v890
        %v892 = vpop.f32.mrf.mxu0
        %893 = vmatprep.mubr.bf16.mxu0 0
        %894 = vmatmul.mubr.bf16.gmra.mxu0 %v840
        %v895 = vpop.f32.mrf.mxu0
        %v896 = vadd.f32 0.0, %v895
        %v897 = vpop.f32.mrf.mxu0
        %v898 = vpop.f32.mrf.mxu0
        %v899 = vadd.f32 0.0, %v898
        %v900 = vpop.f32.mrf.mxu0
        %901 = vmatprep.mubr.bf16.mxu0 0
        %902 = vmatmul.mubr.bf16.gmra.mxu0 %v843
        %v903 = vpop.f32.mrf.mxu0
        %v904 = vadd.f32 0.0, %v903
        %v905 = vpop.f32.mrf.mxu0
        %v906 = vpop.f32.mrf.mxu0
        %v907 = vadd.f32 0.0, %v906
        %v908 = vpop.f32.mrf.mxu0
        %909 = vdwg.mxu0
        %v910 = vpack.c.bf16 %v883, %v880
        %v911 = vpack.c.bf16 %v891, %v888
        %v912 = vpack.c.bf16 %v899, %v896
        %v913 = vpack.c.bf16 %v907, %v904
        %s914 = scalar_lea.vmem %s3, 4
        %v915 = vld [vmem:[%s914] sm:$0x3]
        %v917 = vsel %vm619, %v910, 0
        %v920 = vsel %vm619, %v911, 0
        %v923 = vsel %vm619, %v912, 0
        %v926 = vsel %vm619, %v913, 0
        %v929 = vsel %vm632, %v915, 0
        %931 = vmatprep.subr.bf16.mxu0 0
        %932 = vmatpush1.bf16.msra.mxu0 0
        %933 = vmatprep.subr.bf16.mxu0 0
        %934 = vmatpush1.bf16.msra.mxu0 0
        %935 = vmatprep.subr.bf16.mxu0 0
        %936 = vmatpush1.bf16.msra.mxu0 0
        %937 = vmatprep.subr.bf16.mxu0 0
        %938 = vmatpush1.bf16.msra.mxu0 0
        %939 = vmatprep.subr.bf16.mxu0 0
        %940 = vmatpush1.bf16.msra.mxu0 0
        %941 = vmatprep.subr.bf16.mxu0 0
        %942 = vmatpush1.bf16.msra.mxu0 0
        %943 = vmatprep.subr.bf16.mxu0 0
        %944 = vmatpush1.bf16.msra.mxu0 0
        %945 = vmatprep.subr.bf16.mxu0 0
        %946 = vmatpush1.bf16.msra.mxu0 %v929
        %947 = vmatprep.subr.bf16.mxu0 0
        %948 = vmatpush2.bf16.msra.mxu0 0
        %949 = vmatprep.subr.bf16.mxu0 0
        %950 = vmatpush2.bf16.msra.mxu0 0
        %951 = vmatprep.subr.bf16.mxu0 0
        %952 = vmatpush2.bf16.msra.mxu0 0
        %953 = vmatprep.subr.bf16.mxu0 0
        %954 = vmatpush2.bf16.msra.mxu0 0
        %955 = vmatprep.subr.bf16.mxu0 0
        %956 = vmatpush2.bf16.msra.mxu0 0
        %957 = vmatprep.subr.bf16.mxu0 0
        %958 = vmatpush2.bf16.msra.mxu0 0
        %959 = vmatprep.subr.bf16.mxu0 0
        %960 = vmatpush2.bf16.msra.mxu0 0
        %961 = vmatprep.subr.bf16.mxu0 0
        %962 = vmatpush2.bf16.msra.mxu0 0
        %963 = vmatprep.mubr.bf16.mxu0 0
        %964 = vmatmul.mubr.bf16.gmra.mxu0 %v917
        %v965 = vpop.f32.mrf.mxu0
        %v966 = vadd.f32 0.0, %v965
        %v967 = vpop.f32.mrf.mxu0
        %v968 = vpop.f32.mrf.mxu0
        %v969 = vadd.f32 0.0, %v968
        %v970 = vpop.f32.mrf.mxu0
        %971 = vmatprep.mubr.bf16.mxu0 0
        %972 = vmatmul.mubr.bf16.gmra.mxu0 %v920
        %v973 = vpop.f32.mrf.mxu0
        %v974 = vadd.f32 0.0, %v973
        %v975 = vpop.f32.mrf.mxu0
        %v976 = vpop.f32.mrf.mxu0
        %v977 = vadd.f32 0.0, %v976
        %v978 = vpop.f32.mrf.mxu0
        %979 = vmatprep.mubr.bf16.mxu0 0
        %980 = vmatmul.mubr.bf16.gmra.mxu0 %v923
        %v981 = vpop.f32.mrf.mxu0
        %v982 = vadd.f32 0.0, %v981
        %v983 = vpop.f32.mrf.mxu0
        %v984 = vpop.f32.mrf.mxu0
        %v985 = vadd.f32 0.0, %v984
        %v986 = vpop.f32.mrf.mxu0
        %987 = vmatprep.mubr.bf16.mxu0 0
        %988 = vmatmul.mubr.bf16.gmra.mxu0 %v926
        %v989 = vpop.f32.mrf.mxu0
        %v990 = vadd.f32 0.0, %v989
        %v991 = vpop.f32.mrf.mxu0
        %v992 = vpop.f32.mrf.mxu0
        %v993 = vadd.f32 0.0, %v992
        %v994 = vpop.f32.mrf.mxu0
        %995 = vdwg.mxu0
        %v996 = vadd.f32 %v751, %v966
        %v997 = vadd.f32 %v754, %v969
        %v998 = vadd.f32 %v759, %v974
        %v999 = vadd.f32 %v762, %v977
        %v1000 = vadd.f32 %v767, %v982
        %v1001 = vadd.f32 %v770, %v985
        %v1002 = vadd.f32 %v775, %v990
        %v1003 = vadd.f32 %v778, %v993
        %1004 = vset.pattern.permute.xlu0 3
        %1005 = vperm.xlu0 %1004, %v315
        %v1006 = vpop.permute.xlu0 %1005
        %1007 = vset.pattern.permute.xlu0 3
        %1008 = vperm.xlu0 %1007, %v316
        %v1009 = vpop.permute.xlu0 %1008
        %1010 = vset.pattern.permute.xlu0 3
        %1011 = vperm.xlu0 %1010, %v317
        %v1012 = vpop.permute.xlu0 %1011
        %1013 = vset.pattern.permute.xlu0 3
        %1014 = vperm.xlu0 %1013, %v318
        %v1015 = vpop.permute.xlu0 %1014
        %1016 = vset.pattern.permute.xlu0 3
        %1017 = vperm.xlu0 %1016, %v319
        %v1018 = vpop.permute.xlu0 %1017
        %1019 = vset.pattern.permute.xlu0 3
        %1020 = vperm.xlu0 %1019, %v320
        %v1021 = vpop.permute.xlu0 %1020
        %1022 = vset.pattern.permute.xlu0 3
        %1023 = vperm.xlu0 %1022, %v321
        %v1024 = vpop.permute.xlu0 %1023
        %1025 = vset.pattern.permute.xlu0 3
        %1026 = vperm.xlu0 %1025, %v322
        %v1027 = vpop.permute.xlu0 %1026
        %vm1028 = vcmp.eq.s32.totalorder %v1006, %v324
        %vm1029 = vcmp.eq.s32.totalorder %v1009, %v324
        %vm1030 = vcmp.eq.s32.totalorder %v1012, %v324
        %vm1031 = vcmp.eq.s32.totalorder %v1015, %v324
        %vm1032 = vcmp.eq.s32.totalorder %v1018, %v324
        %vm1033 = vcmp.eq.s32.totalorder %v1021, %v324
        %vm1034 = vcmp.eq.s32.totalorder %v1024, %v324
        %vm1035 = vcmp.eq.s32.totalorder %v1027, %v324
        %v1036 = vsel %vm1028, 1, 0
        %v1037 = vsel %vm1029, 1, 0
        %v1038 = vsel %vm1030, 1, 0
        %v1039 = vsel %vm1031, 1, 0
        %v1040 = vsel %vm1032, 1, 0
        %v1041 = vsel %vm1033, 1, 0
        %v1042 = vsel %vm1034, 1, 0
        %v1043 = vsel %vm1035, 1, 0
        %v1044 = vcvt.s32.f32 %v1036
        %v1045 = vcvt.s32.f32 %v1037
        %v1046 = vcvt.s32.f32 %v1038
        %v1047 = vcvt.s32.f32 %v1039
        %v1048 = vcvt.s32.f32 %v1040
        %v1049 = vcvt.s32.f32 %v1041
        %v1050 = vcvt.s32.f32 %v1042
        %v1051 = vcvt.s32.f32 %v1043
        %v1052 = vpack.c.bf16 %v1045, %v1044
        %v1053 = vpack.c.bf16 %v1047, %v1046
        %v1054 = vpack.c.bf16 %v1049, %v1048
        %v1055 = vpack.c.bf16 %v1051, %v1050
        %v1057 = vsel %vm401, %v1052, 0
        %v1060 = vsel %vm401, %v1053, 0
        %v1063 = vsel %vm401, %v1054, 0
        %v1066 = vsel %vm401, %v1055, 0
        %1068 = vmatprep.subr.bf16.mxu0 0
        %1069 = vmatpush1.bf16.msra.mxu0 0
        %1070 = vmatprep.subr.bf16.mxu0 0
        %1071 = vmatpush1.bf16.msra.mxu0 0
        %1072 = vmatprep.subr.bf16.mxu0 0
        %1073 = vmatpush1.bf16.msra.mxu0 0
        %1074 = vmatprep.subr.bf16.mxu0 0
        %1075 = vmatpush1.bf16.msra.mxu0 0
        %1076 = vmatprep.subr.bf16.mxu0 0
        %1077 = vmatpush1.bf16.msra.mxu0 %v396
        %1078 = vmatprep.subr.bf16.mxu0 0
        %1079 = vmatpush1.bf16.msra.mxu0 %v395
        %1080 = vmatprep.subr.bf16.mxu0 0
        %1081 = vmatpush1.bf16.msra.mxu0 %v394
        %1082 = vmatprep.subr.bf16.mxu0 0
        %1083 = vmatpush1.bf16.msra.mxu0 %v393
        %1084 = vmatprep.subr.bf16.mxu0 0
        %1085 = vmatpush2.bf16.msra.mxu0 0
        %1086 = vmatprep.subr.bf16.mxu0 0
        %1087 = vmatpush2.bf16.msra.mxu0 0
        %1088 = vmatprep.subr.bf16.mxu0 0
        %1089 = vmatpush2.bf16.msra.mxu0 0
        %1090 = vmatprep.subr.bf16.mxu0 0
        %1091 = vmatpush2.bf16.msra.mxu0 0
        %1092 = vmatprep.subr.bf16.mxu0 0
        %1093 = vmatpush2.bf16.msra.mxu0 0
        %1094 = vmatprep.subr.bf16.mxu0 0
        %1095 = vmatpush2.bf16.msra.mxu0 0
        %1096 = vmatprep.subr.bf16.mxu0 0
        %1097 = vmatpush2.bf16.msra.mxu0 0
        %1098 = vmatprep.subr.bf16.mxu0 0
        %1099 = vmatpush2.bf16.msra.mxu0 0
        %1100 = vmatprep.mubr.bf16.mxu0 0
        %1101 = vmatmul.mubr.bf16.gmra.mxu0 %v1057
        %v1102 = vpop.f32.mrf.mxu0
        %v1103 = vadd.f32 0.0, %v1102
        %v1104 = vpop.f32.mrf.mxu0
        %v1105 = vpop.f32.mrf.mxu0
        %v1106 = vadd.f32 0.0, %v1105
        %v1107 = vpop.f32.mrf.mxu0
        %1108 = vmatprep.mubr.bf16.mxu0 0
        %1109 = vmatmul.mubr.bf16.gmra.mxu0 %v1060
        %v1110 = vpop.f32.mrf.mxu0
        %v1111 = vadd.f32 0.0, %v1110
        %v1112 = vpop.f32.mrf.mxu0
        %v1113 = vpop.f32.mrf.mxu0
        %v1114 = vadd.f32 0.0, %v1113
        %v1115 = vpop.f32.mrf.mxu0
        %1116 = vmatprep.mubr.bf16.mxu0 0
        %1117 = vmatmul.mubr.bf16.gmra.mxu0 %v1063
        %v1118 = vpop.f32.mrf.mxu0
        %v1119 = vadd.f32 0.0, %v1118
        %v1120 = vpop.f32.mrf.mxu0
        %v1121 = vpop.f32.mrf.mxu0
        %v1122 = vadd.f32 0.0, %v1121
        %v1123 = vpop.f32.mrf.mxu0
        %1124 = vmatprep.mubr.bf16.mxu0 0
        %1125 = vmatmul.mubr.bf16.gmra.mxu0 %v1066
        %v1126 = vpop.f32.mrf.mxu0
        %v1127 = vadd.f32 0.0, %v1126
        %v1128 = vpop.f32.mrf.mxu0
        %v1129 = vpop.f32.mrf.mxu0
        %v1130 = vadd.f32 0.0, %v1129
        %v1131 = vpop.f32.mrf.mxu0
        %1132 = vdwg.mxu0
        %v1133 = vpack.c.bf16 %v1106, %v1103
        %v1134 = vpack.c.bf16 %v1114, %v1111
        %v1135 = vpack.c.bf16 %v1122, %v1119
        %v1136 = vpack.c.bf16 %v1130, %v1127
        %s1137 = scalar_lea.vmem %s3, 6
        %v1138 = vld [vmem:[%s1137] sm:$0x3]
        %v1140 = vsel %vm619, %v1133, 0
        %v1143 = vsel %vm619, %v1134, 0
        %v1146 = vsel %vm619, %v1135, 0
        %v1149 = vsel %vm619, %v1136, 0
        %v1152 = vsel %vm632, %v1138, 0
        %1154 = vmatprep.subr.bf16.mxu0 0
        %1155 = vmatpush1.bf16.msra.mxu0 0
        %1156 = vmatprep.subr.bf16.mxu0 0
        %1157 = vmatpush1.bf16.msra.mxu0 0
        %1158 = vmatprep.subr.bf16.mxu0 0
        %1159 = vmatpush1.bf16.msra.mxu0 0
        %1160 = vmatprep.subr.bf16.mxu0 0
        %1161 = vmatpush1.bf16.msra.mxu0 0
        %1162 = vmatprep.subr.bf16.mxu0 0
        %1163 = vmatpush1.bf16.msra.mxu0 0
        %1164 = vmatprep.subr.bf16.mxu0 0
        %1165 = vmatpush1.bf16.msra.mxu0 0
        %1166 = vmatprep.subr.bf16.mxu0 0
        %1167 = vmatpush1.bf16.msra.mxu0 0
        %1168 = vmatprep.subr.bf16.mxu0 0
        %1169 = vmatpush1.bf16.msra.mxu0 %v1152
        %1170 = vmatprep.subr.bf16.mxu0 0
        %1171 = vmatpush2.bf16.msra.mxu0 0
        %1172 = vmatprep.subr.bf16.mxu0 0
        %1173 = vmatpush2.bf16.msra.mxu0 0
        %1174 = vmatprep.subr.bf16.mxu0 0
        %1175 = vmatpush2.bf16.msra.mxu0 0
        %1176 = vmatprep.subr.bf16.mxu0 0
        %1177 = vmatpush2.bf16.msra.mxu0 0
        %1178 = vmatprep.subr.bf16.mxu0 0
        %1179 = vmatpush2.bf16.msra.mxu0 0
        %1180 = vmatprep.subr.bf16.mxu0 0
        %1181 = vmatpush2.bf16.msra.mxu0 0
        %1182 = vmatprep.subr.bf16.mxu0 0
        %1183 = vmatpush2.bf16.msra.mxu0 0
        %1184 = vmatprep.subr.bf16.mxu0 0
        %1185 = vmatpush2.bf16.msra.mxu0 0
        %1186 = vmatprep.mubr.bf16.mxu0 0
        %1187 = vmatmul.mubr.bf16.gmra.mxu0 %v1140
        %v1188 = vpop.f32.mrf.mxu0
        %v1189 = vadd.f32 0.0, %v1188
        %v1190 = vpop.f32.mrf.mxu0
        %v1191 = vpop.f32.mrf.mxu0
        %v1192 = vadd.f32 0.0, %v1191
        %v1193 = vpop.f32.mrf.mxu0
        %1194 = vmatprep.mubr.bf16.mxu0 0
        %1195 = vmatmul.mubr.bf16.gmra.mxu0 %v1143
        %v1196 = vpop.f32.mrf.mxu0
        %v1197 = vadd.f32 0.0, %v1196
        %v1198 = vpop.f32.mrf.mxu0
        %v1199 = vpop.f32.mrf.mxu0
        %v1200 = vadd.f32 0.0, %v1199
        %v1201 = vpop.f32.mrf.mxu0
        %1202 = vmatprep.mubr.bf16.mxu0 0
        %1203 = vmatmul.mubr.bf16.gmra.mxu0 %v1146
        %v1204 = vpop.f32.mrf.mxu0
        %v1205 = vadd.f32 0.0, %v1204
        %v1206 = vpop.f32.mrf.mxu0
        %v1207 = vpop.f32.mrf.mxu0
        %v1208 = vadd.f32 0.0, %v1207
        %v1209 = vpop.f32.mrf.mxu0
        %1210 = vmatprep.mubr.bf16.mxu0 0
        %1211 = vmatmul.mubr.bf16.gmra.mxu0 %v1149
        %v1212 = vpop.f32.mrf.mxu0
        %v1213 = vadd.f32 0.0, %v1212
        %v1214 = vpop.f32.mrf.mxu0
        %v1215 = vpop.f32.mrf.mxu0
        %v1216 = vadd.f32 0.0, %v1215
        %v1217 = vpop.f32.mrf.mxu0
        %1218 = vdwg.mxu0
        %v1219 = vadd.f32 %v996, %v1189
        %v1220 = vadd.f32 %v997, %v1192
        %v1221 = vadd.f32 %v998, %v1197
        %v1222 = vadd.f32 %v999, %v1200
        %v1223 = vadd.f32 %v1000, %v1205
        %v1224 = vadd.f32 %v1001, %v1208
        %v1225 = vadd.f32 %v1002, %v1213
        %v1226 = vadd.f32 %v1003, %v1216
        %1227 = vset.pattern.permute.xlu0 4
        %1228 = vperm.xlu0 %1227, %v315
        %v1229 = vpop.permute.xlu0 %1228
        %1230 = vset.pattern.permute.xlu0 4
        %1231 = vperm.xlu0 %1230, %v316
        %v1232 = vpop.permute.xlu0 %1231
        %1233 = vset.pattern.permute.xlu0 4
        %1234 = vperm.xlu0 %1233, %v317
        %v1235 = vpop.permute.xlu0 %1234
        %1236 = vset.pattern.permute.xlu0 4
        %1237 = vperm.xlu0 %1236, %v318
        %v1238 = vpop.permute.xlu0 %1237
        %1239 = vset.pattern.permute.xlu0 4
        %1240 = vperm.xlu0 %1239, %v319
        %v1241 = vpop.permute.xlu0 %1240
        %1242 = vset.pattern.permute.xlu0 4
        %1243 = vperm.xlu0 %1242, %v320
        %v1244 = vpop.permute.xlu0 %1243
        %1245 = vset.pattern.permute.xlu0 4
        %1246 = vperm.xlu0 %1245, %v321
        %v1247 = vpop.permute.xlu0 %1246
        %1248 = vset.pattern.permute.xlu0 4
        %1249 = vperm.xlu0 %1248, %v322
        %v1250 = vpop.permute.xlu0 %1249
        %vm1251 = vcmp.eq.s32.totalorder %v1229, %v324
        %vm1252 = vcmp.eq.s32.totalorder %v1232, %v324
        %vm1253 = vcmp.eq.s32.totalorder %v1235, %v324
        %vm1254 = vcmp.eq.s32.totalorder %v1238, %v324
        %vm1255 = vcmp.eq.s32.totalorder %v1241, %v324
        %vm1256 = vcmp.eq.s32.totalorder %v1244, %v324
        %vm1257 = vcmp.eq.s32.totalorder %v1247, %v324
        %vm1258 = vcmp.eq.s32.totalorder %v1250, %v324
        %v1259 = vsel %vm1251, 1, 0
        %v1260 = vsel %vm1252, 1, 0
        %v1261 = vsel %vm1253, 1, 0
        %v1262 = vsel %vm1254, 1, 0
        %v1263 = vsel %vm1255, 1, 0
        %v1264 = vsel %vm1256, 1, 0
        %v1265 = vsel %vm1257, 1, 0
        %v1266 = vsel %vm1258, 1, 0
        %v1267 = vcvt.s32.f32 %v1259
        %v1268 = vcvt.s32.f32 %v1260
        %v1269 = vcvt.s32.f32 %v1261
        %v1270 = vcvt.s32.f32 %v1262
        %v1271 = vcvt.s32.f32 %v1263
        %v1272 = vcvt.s32.f32 %v1264
        %v1273 = vcvt.s32.f32 %v1265
        %v1274 = vcvt.s32.f32 %v1266
        %v1275 = vpack.c.bf16 %v1268, %v1267
        %v1276 = vpack.c.bf16 %v1270, %v1269
        %v1277 = vpack.c.bf16 %v1272, %v1271
        %v1278 = vpack.c.bf16 %v1274, %v1273
        %v1280 = vsel %vm401, %v1275, 0
        %v1283 = vsel %vm401, %v1276, 0
        %v1286 = vsel %vm401, %v1277, 0
        %v1289 = vsel %vm401, %v1278, 0
        %1291 = vmatprep.subr.bf16.mxu0 0
        %1292 = vmatpush1.bf16.msra.mxu0 0
        %1293 = vmatprep.subr.bf16.mxu0 0
        %1294 = vmatpush1.bf16.msra.mxu0 0
        %1295 = vmatprep.subr.bf16.mxu0 0
        %1296 = vmatpush1.bf16.msra.mxu0 0
        %1297 = vmatprep.subr.bf16.mxu0 0
        %1298 = vmatpush1.bf16.msra.mxu0 0
        %1299 = vmatprep.subr.bf16.mxu0 0
        %1300 = vmatpush1.bf16.msra.mxu0 %v396
        %1301 = vmatprep.subr.bf16.mxu0 0
        %1302 = vmatpush1.bf16.msra.mxu0 %v395
        %1303 = vmatprep.subr.bf16.mxu0 0
        %1304 = vmatpush1.bf16.msra.mxu0 %v394
        %1305 = vmatprep.subr.bf16.mxu0 0
        %1306 = vmatpush1.bf16.msra.mxu0 %v393
        %1307 = vmatprep.subr.bf16.mxu0 0
        %1308 = vmatpush2.bf16.msra.mxu0 0
        %1309 = vmatprep.subr.bf16.mxu0 0
        %1310 = vmatpush2.bf16.msra.mxu0 0
        %1311 = vmatprep.subr.bf16.mxu0 0
        %1312 = vmatpush2.bf16.msra.mxu0 0
        %1313 = vmatprep.subr.bf16.mxu0 0
        %1314 = vmatpush2.bf16.msra.mxu0 0
        %1315 = vmatprep.subr.bf16.mxu0 0
        %1316 = vmatpush2.bf16.msra.mxu0 0
        %1317 = vmatprep.subr.bf16.mxu0 0
        %1318 = vmatpush2.bf16.msra.mxu0 0
        %1319 = vmatprep.subr.bf16.mxu0 0
        %1320 = vmatpush2.bf16.msra.mxu0 0
        %1321 = vmatprep.subr.bf16.mxu0 0
        %1322 = vmatpush2.bf16.msra.mxu0 0
        %1323 = vmatprep.mubr.bf16.mxu0 0
        %1324 = vmatmul.mubr.bf16.gmra.mxu0 %v1280
        %v1325 = vpop.f32.mrf.mxu0
        %v1326 = vadd.f32 0.0, %v1325
        %v1327 = vpop.f32.mrf.mxu0
        %v1328 = vpop.f32.mrf.mxu0
        %v1329 = vadd.f32 0.0, %v1328
        %v1330 = vpop.f32.mrf.mxu0
        %1331 = vmatprep.mubr.bf16.mxu0 0
        %1332 = vmatmul.mubr.bf16.gmra.mxu0 %v1283
        %v1333 = vpop.f32.mrf.mxu0
        %v1334 = vadd.f32 0.0, %v1333
        %v1335 = vpop.f32.mrf.mxu0
        %v1336 = vpop.f32.mrf.mxu0
        %v1337 = vadd.f32 0.0, %v1336
        %v1338 = vpop.f32.mrf.mxu0
        %1339 = vmatprep.mubr.bf16.mxu0 0
        %1340 = vmatmul.mubr.bf16.gmra.mxu0 %v1286
        %v1341 = vpop.f32.mrf.mxu0
        %v1342 = vadd.f32 0.0, %v1341
        %v1343 = vpop.f32.mrf.mxu0
        %v1344 = vpop.f32.mrf.mxu0
        %v1345 = vadd.f32 0.0, %v1344
        %v1346 = vpop.f32.mrf.mxu0
        %1347 = vmatprep.mubr.bf16.mxu0 0
        %1348 = vmatmul.mubr.bf16.gmra.mxu0 %v1289
        %v1349 = vpop.f32.mrf.mxu0
        %v1350 = vadd.f32 0.0, %v1349
        %v1351 = vpop.f32.mrf.mxu0
        %v1352 = vpop.f32.mrf.mxu0
        %v1353 = vadd.f32 0.0, %v1352
        %v1354 = vpop.f32.mrf.mxu0
        %1355 = vdwg.mxu0
        %v1356 = vpack.c.bf16 %v1329, %v1326
        %v1357 = vpack.c.bf16 %v1337, %v1334
        %v1358 = vpack.c.bf16 %v1345, %v1342
        %v1359 = vpack.c.bf16 %v1353, %v1350
        %s1360 = scalar_lea.vmem %s3, 8
        %v1361 = vld [vmem:[%s1360] sm:$0x3]
        %v1363 = vsel %vm619, %v1356, 0
        %v1366 = vsel %vm619, %v1357, 0
        %v1369 = vsel %vm619, %v1358, 0
        %v1372 = vsel %vm619, %v1359, 0
        %v1375 = vsel %vm632, %v1361, 0
        %1377 = vmatprep.subr.bf16.mxu0 0
        %1378 = vmatpush1.bf16.msra.mxu0 0
        %1379 = vmatprep.subr.bf16.mxu0 0
        %1380 = vmatpush1.bf16.msra.mxu0 0
        %1381 = vmatprep.subr.bf16.mxu0 0
        %1382 = vmatpush1.bf16.msra.mxu0 0
        %1383 = vmatprep.subr.bf16.mxu0 0
        %1384 = vmatpush1.bf16.msra.mxu0 0
        %1385 = vmatprep.subr.bf16.mxu0 0
        %1386 = vmatpush1.bf16.msra.mxu0 0
        %1387 = vmatprep.subr.bf16.mxu0 0
        %1388 = vmatpush1.bf16.msra.mxu0 0
        %1389 = vmatprep.subr.bf16.mxu0 0
        %1390 = vmatpush1.bf16.msra.mxu0 0
        %1391 = vmatprep.subr.bf16.mxu0 0
        %1392 = vmatpush1.bf16.msra.mxu0 %v1375
        %1393 = vmatprep.subr.bf16.mxu0 0
        %1394 = vmatpush2.bf16.msra.mxu0 0
        %1395 = vmatprep.subr.bf16.mxu0 0
        %1396 = vmatpush2.bf16.msra.mxu0 0
        %1397 = vmatprep.subr.bf16.mxu0 0
        %1398 = vmatpush2.bf16.msra.mxu0 0
        %1399 = vmatprep.subr.bf16.mxu0 0
        %1400 = vmatpush2.bf16.msra.mxu0 0
        %1401 = vmatprep.subr.bf16.mxu0 0
        %1402 = vmatpush2.bf16.msra.mxu0 0
        %1403 = vmatprep.subr.bf16.mxu0 0
        %1404 = vmatpush2.bf16.msra.mxu0 0
        %1405 = vmatprep.subr.bf16.mxu0 0
        %1406 = vmatpush2.bf16.msra.mxu0 0
        %1407 = vmatprep.subr.bf16.mxu0 0
        %1408 = vmatpush2.bf16.msra.mxu0 0
        %1409 = vmatprep.mubr.bf16.mxu0 0
        %1410 = vmatmul.mubr.bf16.gmra.mxu0 %v1363
        %v1411 = vpop.f32.mrf.mxu0
        %v1412 = vadd.f32 0.0, %v1411
        %v1413 = vpop.f32.mrf.mxu0
        %v1414 = vpop.f32.mrf.mxu0
        %v1415 = vadd.f32 0.0, %v1414
        %v1416 = vpop.f32.mrf.mxu0
        %1417 = vmatprep.mubr.bf16.mxu0 0
        %1418 = vmatmul.mubr.bf16.gmra.mxu0 %v1366
        %v1419 = vpop.f32.mrf.mxu0
        %v1420 = vadd.f32 0.0, %v1419
        %v1421 = vpop.f32.mrf.mxu0
        %v1422 = vpop.f32.mrf.mxu0
        %v1423 = vadd.f32 0.0, %v1422
        %v1424 = vpop.f32.mrf.mxu0
        %1425 = vmatprep.mubr.bf16.mxu0 0
        %1426 = vmatmul.mubr.bf16.gmra.mxu0 %v1369
        %v1427 = vpop.f32.mrf.mxu0
        %v1428 = vadd.f32 0.0, %v1427
        %v1429 = vpop.f32.mrf.mxu0
        %v1430 = vpop.f32.mrf.mxu0
        %v1431 = vadd.f32 0.0, %v1430
        %v1432 = vpop.f32.mrf.mxu0
        %1433 = vmatprep.mubr.bf16.mxu0 0
        %1434 = vmatmul.mubr.bf16.gmra.mxu0 %v1372
        %v1435 = vpop.f32.mrf.mxu0
        %v1436 = vadd.f32 0.0, %v1435
        %v1437 = vpop.f32.mrf.mxu0
        %v1438 = vpop.f32.mrf.mxu0
        %v1439 = vadd.f32 0.0, %v1438
        %v1440 = vpop.f32.mrf.mxu0
        %1441 = vdwg.mxu0
        %v1442 = vadd.f32 %v1219, %v1412
        %v1443 = vadd.f32 %v1220, %v1415
        %v1444 = vadd.f32 %v1221, %v1420
        %v1445 = vadd.f32 %v1222, %v1423
        %v1446 = vadd.f32 %v1223, %v1428
        %v1447 = vadd.f32 %v1224, %v1431
        %v1448 = vadd.f32 %v1225, %v1436
        %v1449 = vadd.f32 %v1226, %v1439
        %1450 = vset.pattern.permute.xlu0 5
        %1451 = vperm.xlu0 %1450, %v315
        %v1452 = vpop.permute.xlu0 %1451
        %1453 = vset.pattern.permute.xlu0 5
        %1454 = vperm.xlu0 %1453, %v316
        %v1455 = vpop.permute.xlu0 %1454
        %1456 = vset.pattern.permute.xlu0 5
        %1457 = vperm.xlu0 %1456, %v317
        %v1458 = vpop.permute.xlu0 %1457
        %1459 = vset.pattern.permute.xlu0 5
        %1460 = vperm.xlu0 %1459, %v318
        %v1461 = vpop.permute.xlu0 %1460
        %1462 = vset.pattern.permute.xlu0 5
        %1463 = vperm.xlu0 %1462, %v319
        %v1464 = vpop.permute.xlu0 %1463
        %1465 = vset.pattern.permute.xlu0 5
        %1466 = vperm.xlu0 %1465, %v320
        %v1467 = vpop.permute.xlu0 %1466
        %1468 = vset.pattern.permute.xlu0 5
        %1469 = vperm.xlu0 %1468, %v321
        %v1470 = vpop.permute.xlu0 %1469
        %1471 = vset.pattern.permute.xlu0 5
        %1472 = vperm.xlu0 %1471, %v322
        %v1473 = vpop.permute.xlu0 %1472
        %vm1474 = vcmp.eq.s32.totalorder %v1452, %v324
        %vm1475 = vcmp.eq.s32.totalorder %v1455, %v324
        %vm1476 = vcmp.eq.s32.totalorder %v1458, %v324
        %vm1477 = vcmp.eq.s32.totalorder %v1461, %v324
        %vm1478 = vcmp.eq.s32.totalorder %v1464, %v324
        %vm1479 = vcmp.eq.s32.totalorder %v1467, %v324
        %vm1480 = vcmp.eq.s32.totalorder %v1470, %v324
        %vm1481 = vcmp.eq.s32.totalorder %v1473, %v324
        %v1482 = vsel %vm1474, 1, 0
        %v1483 = vsel %vm1475, 1, 0
        %v1484 = vsel %vm1476, 1, 0
        %v1485 = vsel %vm1477, 1, 0
        %v1486 = vsel %vm1478, 1, 0
        %v1487 = vsel %vm1479, 1, 0
        %v1488 = vsel %vm1480, 1, 0
        %v1489 = vsel %vm1481, 1, 0
        %v1490 = vcvt.s32.f32 %v1482
        %v1491 = vcvt.s32.f32 %v1483
        %v1492 = vcvt.s32.f32 %v1484
        %v1493 = vcvt.s32.f32 %v1485
        %v1494 = vcvt.s32.f32 %v1486
        %v1495 = vcvt.s32.f32 %v1487
        %v1496 = vcvt.s32.f32 %v1488
        %v1497 = vcvt.s32.f32 %v1489
        %v1498 = vpack.c.bf16 %v1491, %v1490
        %v1499 = vpack.c.bf16 %v1493, %v1492
        %v1500 = vpack.c.bf16 %v1495, %v1494
        %v1501 = vpack.c.bf16 %v1497, %v1496
        %v1503 = vsel %vm401, %v1498, 0
        %v1506 = vsel %vm401, %v1499, 0
        %v1509 = vsel %vm401, %v1500, 0
        %v1512 = vsel %vm401, %v1501, 0
        %1514 = vmatprep.subr.bf16.mxu0 0
        %1515 = vmatpush1.bf16.msra.mxu0 0
        %1516 = vmatprep.subr.bf16.mxu0 0
        %1517 = vmatpush1.bf16.msra.mxu0 0
        %1518 = vmatprep.subr.bf16.mxu0 0
        %1519 = vmatpush1.bf16.msra.mxu0 0
        %1520 = vmatprep.subr.bf16.mxu0 0
        %1521 = vmatpush1.bf16.msra.mxu0 0
        %1522 = vmatprep.subr.bf16.mxu0 0
        %1523 = vmatpush1.bf16.msra.mxu0 %v396
        %1524 = vmatprep.subr.bf16.mxu0 0
        %1525 = vmatpush1.bf16.msra.mxu0 %v395
        %1526 = vmatprep.subr.bf16.mxu0 0
        %1527 = vmatpush1.bf16.msra.mxu0 %v394
        %1528 = vmatprep.subr.bf16.mxu0 0
        %1529 = vmatpush1.bf16.msra.mxu0 %v393
        %1530 = vmatprep.subr.bf16.mxu0 0
        %1531 = vmatpush2.bf16.msra.mxu0 0
        %1532 = vmatprep.subr.bf16.mxu0 0
        %1533 = vmatpush2.bf16.msra.mxu0 0
        %1534 = vmatprep.subr.bf16.mxu0 0
        %1535 = vmatpush2.bf16.msra.mxu0 0
        %1536 = vmatprep.subr.bf16.mxu0 0
        %1537 = vmatpush2.bf16.msra.mxu0 0
        %1538 = vmatprep.subr.bf16.mxu0 0
        %1539 = vmatpush2.bf16.msra.mxu0 0
        %1540 = vmatprep.subr.bf16.mxu0 0
        %1541 = vmatpush2.bf16.msra.mxu0 0
        %1542 = vmatprep.subr.bf16.mxu0 0
        %1543 = vmatpush2.bf16.msra.mxu0 0
        %1544 = vmatprep.subr.bf16.mxu0 0
        %1545 = vmatpush2.bf16.msra.mxu0 0
        %1546 = vmatprep.mubr.bf16.mxu0 0
        %1547 = vmatmul.mubr.bf16.gmra.mxu0 %v1503
        %v1548 = vpop.f32.mrf.mxu0
        %v1549 = vadd.f32 0.0, %v1548
        %v1550 = vpop.f32.mrf.mxu0
        %v1551 = vpop.f32.mrf.mxu0
        %v1552 = vadd.f32 0.0, %v1551
        %v1553 = vpop.f32.mrf.mxu0
        %1554 = vmatprep.mubr.bf16.mxu0 0
        %1555 = vmatmul.mubr.bf16.gmra.mxu0 %v1506
        %v1556 = vpop.f32.mrf.mxu0
        %v1557 = vadd.f32 0.0, %v1556
        %v1558 = vpop.f32.mrf.mxu0
        %v1559 = vpop.f32.mrf.mxu0
        %v1560 = vadd.f32 0.0, %v1559
        %v1561 = vpop.f32.mrf.mxu0
        %1562 = vmatprep.mubr.bf16.mxu0 0
        %1563 = vmatmul.mubr.bf16.gmra.mxu0 %v1509
        %v1564 = vpop.f32.mrf.mxu0
        %v1565 = vadd.f32 0.0, %v1564
        %v1566 = vpop.f32.mrf.mxu0
        %v1567 = vpop.f32.mrf.mxu0
        %v1568 = vadd.f32 0.0, %v1567
        %v1569 = vpop.f32.mrf.mxu0
        %1570 = vmatprep.mubr.bf16.mxu0 0
        %1571 = vmatmul.mubr.bf16.gmra.mxu0 %v1512
        %v1572 = vpop.f32.mrf.mxu0
        %v1573 = vadd.f32 0.0, %v1572
        %v1574 = vpop.f32.mrf.mxu0
        %v1575 = vpop.f32.mrf.mxu0
        %v1576 = vadd.f32 0.0, %v1575
        %v1577 = vpop.f32.mrf.mxu0
        %1578 = vdwg.mxu0
        %v1579 = vpack.c.bf16 %v1552, %v1549
        %v1580 = vpack.c.bf16 %v1560, %v1557
        %v1581 = vpack.c.bf16 %v1568, %v1565
        %v1582 = vpack.c.bf16 %v1576, %v1573
        %s1583 = scalar_lea.vmem %s3, 10
        %v1584 = vld [vmem:[%s1583] sm:$0x3]
        %v1586 = vsel %vm619, %v1579, 0
        %v1589 = vsel %vm619, %v1580, 0
        %v1592 = vsel %vm619, %v1581, 0
        %v1595 = vsel %vm619, %v1582, 0
        %v1598 = vsel %vm632, %v1584, 0
        %1600 = vmatprep.subr.bf16.mxu0 0
        %1601 = vmatpush1.bf16.msra.mxu0 0
        %1602 = vmatprep.subr.bf16.mxu0 0
        %1603 = vmatpush1.bf16.msra.mxu0 0
        %1604 = vmatprep.subr.bf16.mxu0 0
        %1605 = vmatpush1.bf16.msra.mxu0 0
        %1606 = vmatprep.subr.bf16.mxu0 0
        %1607 = vmatpush1.bf16.msra.mxu0 0
        %1608 = vmatprep.subr.bf16.mxu0 0
        %1609 = vmatpush1.bf16.msra.mxu0 0
        %1610 = vmatprep.subr.bf16.mxu0 0
        %1611 = vmatpush1.bf16.msra.mxu0 0
        %1612 = vmatprep.subr.bf16.mxu0 0
        %1613 = vmatpush1.bf16.msra.mxu0 0
        %1614 = vmatprep.subr.bf16.mxu0 0
        %1615 = vmatpush1.bf16.msra.mxu0 %v1598
        %1616 = vmatprep.subr.bf16.mxu0 0
        %1617 = vmatpush2.bf16.msra.mxu0 0
        %1618 = vmatprep.subr.bf16.mxu0 0
        %1619 = vmatpush2.bf16.msra.mxu0 0
        %1620 = vmatprep.subr.bf16.mxu0 0
        %1621 = vmatpush2.bf16.msra.mxu0 0
        %1622 = vmatprep.subr.bf16.mxu0 0
        %1623 = vmatpush2.bf16.msra.mxu0 0
        %1624 = vmatprep.subr.bf16.mxu0 0
        %1625 = vmatpush2.bf16.msra.mxu0 0
        %1626 = vmatprep.subr.bf16.mxu0 0
        %1627 = vmatpush2.bf16.msra.mxu0 0
        %1628 = vmatprep.subr.bf16.mxu0 0
        %1629 = vmatpush2.bf16.msra.mxu0 0
        %1630 = vmatprep.subr.bf16.mxu0 0
        %1631 = vmatpush2.bf16.msra.mxu0 0
        %1632 = vmatprep.mubr.bf16.mxu0 0
        %1633 = vmatmul.mubr.bf16.gmra.mxu0 %v1586
        %v1634 = vpop.f32.mrf.mxu0
        %v1635 = vadd.f32 0.0, %v1634
        %v1636 = vpop.f32.mrf.mxu0
        %v1637 = vpop.f32.mrf.mxu0
        %v1638 = vadd.f32 0.0, %v1637
        %v1639 = vpop.f32.mrf.mxu0
        %1640 = vmatprep.mubr.bf16.mxu0 0
        %1641 = vmatmul.mubr.bf16.gmra.mxu0 %v1589
        %v1642 = vpop.f32.mrf.mxu0
        %v1643 = vadd.f32 0.0, %v1642
        %v1644 = vpop.f32.mrf.mxu0
        %v1645 = vpop.f32.mrf.mxu0
        %v1646 = vadd.f32 0.0, %v1645
        %v1647 = vpop.f32.mrf.mxu0
        %1648 = vmatprep.mubr.bf16.mxu0 0
        %1649 = vmatmul.mubr.bf16.gmra.mxu0 %v1592
        %v1650 = vpop.f32.mrf.mxu0
        %v1651 = vadd.f32 0.0, %v1650
        %v1652 = vpop.f32.mrf.mxu0
        %v1653 = vpop.f32.mrf.mxu0
        %v1654 = vadd.f32 0.0, %v1653
        %v1655 = vpop.f32.mrf.mxu0
        %1656 = vmatprep.mubr.bf16.mxu0 0
        %1657 = vmatmul.mubr.bf16.gmra.mxu0 %v1595
        %v1658 = vpop.f32.mrf.mxu0
        %v1659 = vadd.f32 0.0, %v1658
        %v1660 = vpop.f32.mrf.mxu0
        %v1661 = vpop.f32.mrf.mxu0
        %v1662 = vadd.f32 0.0, %v1661
        %v1663 = vpop.f32.mrf.mxu0
        %1664 = vdwg.mxu0
        %v1665 = vadd.f32 %v1442, %v1635
        %v1666 = vadd.f32 %v1443, %v1638
        %v1667 = vadd.f32 %v1444, %v1643
        %v1668 = vadd.f32 %v1445, %v1646
        %v1669 = vadd.f32 %v1446, %v1651
        %v1670 = vadd.f32 %v1447, %v1654
        %v1671 = vadd.f32 %v1448, %v1659
        %v1672 = vadd.f32 %v1449, %v1662
        %1673 = vset.pattern.permute.xlu0 6
        %1674 = vperm.xlu0 %1673, %v315
        %v1675 = vpop.permute.xlu0 %1674
        %1676 = vset.pattern.permute.xlu0 6
        %1677 = vperm.xlu0 %1676, %v316
        %v1678 = vpop.permute.xlu0 %1677
        %1679 = vset.pattern.permute.xlu0 6
        %1680 = vperm.xlu0 %1679, %v317
        %v1681 = vpop.permute.xlu0 %1680
        %1682 = vset.pattern.permute.xlu0 6
        %1683 = vperm.xlu0 %1682, %v318
        %v1684 = vpop.permute.xlu0 %1683
        %1685 = vset.pattern.permute.xlu0 6
        %1686 = vperm.xlu0 %1685, %v319
        %v1687 = vpop.permute.xlu0 %1686
        %1688 = vset.pattern.permute.xlu0 6
        %1689 = vperm.xlu0 %1688, %v320
        %v1690 = vpop.permute.xlu0 %1689
        %1691 = vset.pattern.permute.xlu0 6
        %1692 = vperm.xlu0 %1691, %v321
        %v1693 = vpop.permute.xlu0 %1692
        %1694 = vset.pattern.permute.xlu0 6
        %1695 = vperm.xlu0 %1694, %v322
        %v1696 = vpop.permute.xlu0 %1695
        %vm1697 = vcmp.eq.s32.totalorder %v1675, %v324
        %vm1698 = vcmp.eq.s32.totalorder %v1678, %v324
        %vm1699 = vcmp.eq.s32.totalorder %v1681, %v324
        %vm1700 = vcmp.eq.s32.totalorder %v1684, %v324
        %vm1701 = vcmp.eq.s32.totalorder %v1687, %v324
        %vm1702 = vcmp.eq.s32.totalorder %v1690, %v324
        %vm1703 = vcmp.eq.s32.totalorder %v1693, %v324
        %vm1704 = vcmp.eq.s32.totalorder %v1696, %v324
        %v1705 = vsel %vm1697, 1, 0
        %v1706 = vsel %vm1698, 1, 0
        %v1707 = vsel %vm1699, 1, 0
        %v1708 = vsel %vm1700, 1, 0
        %v1709 = vsel %vm1701, 1, 0
        %v1710 = vsel %vm1702, 1, 0
        %v1711 = vsel %vm1703, 1, 0
        %v1712 = vsel %vm1704, 1, 0
        %v1713 = vcvt.s32.f32 %v1705
        %v1714 = vcvt.s32.f32 %v1706
        %v1715 = vcvt.s32.f32 %v1707
        %v1716 = vcvt.s32.f32 %v1708
        %v1717 = vcvt.s32.f32 %v1709
        %v1718 = vcvt.s32.f32 %v1710
        %v1719 = vcvt.s32.f32 %v1711
        %v1720 = vcvt.s32.f32 %v1712
        %v1721 = vpack.c.bf16 %v1714, %v1713
        %v1722 = vpack.c.bf16 %v1716, %v1715
        %v1723 = vpack.c.bf16 %v1718, %v1717
        %v1724 = vpack.c.bf16 %v1720, %v1719
        %v1726 = vsel %vm401, %v1721, 0
        %v1729 = vsel %vm401, %v1722, 0
        %v1732 = vsel %vm401, %v1723, 0
        %v1735 = vsel %vm401, %v1724, 0
        %1737 = vmatprep.subr.bf16.mxu0 0
        %1738 = vmatpush1.bf16.msra.mxu0 0
        %1739 = vmatprep.subr.bf16.mxu0 0
        %1740 = vmatpush1.bf16.msra.mxu0 0
        %1741 = vmatprep.subr.bf16.mxu0 0
        %1742 = vmatpush1.bf16.msra.mxu0 0
        %1743 = vmatprep.subr.bf16.mxu0 0
        %1744 = vmatpush1.bf16.msra.mxu0 0
        %1745 = vmatprep.subr.bf16.mxu0 0
        %1746 = vmatpush1.bf16.msra.mxu0 %v396
        %1747 = vmatprep.subr.bf16.mxu0 0
        %1748 = vmatpush1.bf16.msra.mxu0 %v395
        %1749 = vmatprep.subr.bf16.mxu0 0
        %1750 = vmatpush1.bf16.msra.mxu0 %v394
        %1751 = vmatprep.subr.bf16.mxu0 0
        %1752 = vmatpush1.bf16.msra.mxu0 %v393
        %1753 = vmatprep.subr.bf16.mxu0 0
        %1754 = vmatpush2.bf16.msra.mxu0 0
        %1755 = vmatprep.subr.bf16.mxu0 0
        %1756 = vmatpush2.bf16.msra.mxu0 0
        %1757 = vmatprep.subr.bf16.mxu0 0
        %1758 = vmatpush2.bf16.msra.mxu0 0
        %1759 = vmatprep.subr.bf16.mxu0 0
        %1760 = vmatpush2.bf16.msra.mxu0 0
        %1761 = vmatprep.subr.bf16.mxu0 0
        %1762 = vmatpush2.bf16.msra.mxu0 0
        %1763 = vmatprep.subr.bf16.mxu0 0
        %1764 = vmatpush2.bf16.msra.mxu0 0
        %1765 = vmatprep.subr.bf16.mxu0 0
        %1766 = vmatpush2.bf16.msra.mxu0 0
        %1767 = vmatprep.subr.bf16.mxu0 0
        %1768 = vmatpush2.bf16.msra.mxu0 0
        %1769 = vmatprep.mubr.bf16.mxu0 0
        %1770 = vmatmul.mubr.bf16.gmra.mxu0 %v1726
        %v1771 = vpop.f32.mrf.mxu0
        %v1772 = vadd.f32 0.0, %v1771
        %v1773 = vpop.f32.mrf.mxu0
        %v1774 = vpop.f32.mrf.mxu0
        %v1775 = vadd.f32 0.0, %v1774
        %v1776 = vpop.f32.mrf.mxu0
        %1777 = vmatprep.mubr.bf16.mxu0 0
        %1778 = vmatmul.mubr.bf16.gmra.mxu0 %v1729
        %v1779 = vpop.f32.mrf.mxu0
        %v1780 = vadd.f32 0.0, %v1779
        %v1781 = vpop.f32.mrf.mxu0
        %v1782 = vpop.f32.mrf.mxu0
        %v1783 = vadd.f32 0.0, %v1782
        %v1784 = vpop.f32.mrf.mxu0
        %1785 = vmatprep.mubr.bf16.mxu0 0
        %1786 = vmatmul.mubr.bf16.gmra.mxu0 %v1732
        %v1787 = vpop.f32.mrf.mxu0
        %v1788 = vadd.f32 0.0, %v1787
        %v1789 = vpop.f32.mrf.mxu0
        %v1790 = vpop.f32.mrf.mxu0
        %v1791 = vadd.f32 0.0, %v1790
        %v1792 = vpop.f32.mrf.mxu0
        %1793 = vmatprep.mubr.bf16.mxu0 0
        %1794 = vmatmul.mubr.bf16.gmra.mxu0 %v1735
        %v1795 = vpop.f32.mrf.mxu0
        %v1796 = vadd.f32 0.0, %v1795
        %v1797 = vpop.f32.mrf.mxu0
        %v1798 = vpop.f32.mrf.mxu0
        %v1799 = vadd.f32 0.0, %v1798
        %v1800 = vpop.f32.mrf.mxu0
        %1801 = vdwg.mxu0
        %v1802 = vpack.c.bf16 %v1775, %v1772
        %v1803 = vpack.c.bf16 %v1783, %v1780
        %v1804 = vpack.c.bf16 %v1791, %v1788
        %v1805 = vpack.c.bf16 %v1799, %v1796
        %s1806 = scalar_lea.vmem %s3, 12
        %v1807 = vld [vmem:[%s1806] sm:$0x3]
        %v1809 = vsel %vm619, %v1802, 0
        %v1812 = vsel %vm619, %v1803, 0
        %v1815 = vsel %vm619, %v1804, 0
        %v1818 = vsel %vm619, %v1805, 0
        %v1821 = vsel %vm632, %v1807, 0
        %1823 = vmatprep.subr.bf16.mxu0 0
        %1824 = vmatpush1.bf16.msra.mxu0 0
        %1825 = vmatprep.subr.bf16.mxu0 0
        %1826 = vmatpush1.bf16.msra.mxu0 0
        %1827 = vmatprep.subr.bf16.mxu0 0
        %1828 = vmatpush1.bf16.msra.mxu0 0
        %1829 = vmatprep.subr.bf16.mxu0 0
        %1830 = vmatpush1.bf16.msra.mxu0 0
        %1831 = vmatprep.subr.bf16.mxu0 0
        %1832 = vmatpush1.bf16.msra.mxu0 0
        %1833 = vmatprep.subr.bf16.mxu0 0
        %1834 = vmatpush1.bf16.msra.mxu0 0
        %1835 = vmatprep.subr.bf16.mxu0 0
        %1836 = vmatpush1.bf16.msra.mxu0 0
        %1837 = vmatprep.subr.bf16.mxu0 0
        %1838 = vmatpush1.bf16.msra.mxu0 %v1821
        %1839 = vmatprep.subr.bf16.mxu0 0
        %1840 = vmatpush2.bf16.msra.mxu0 0
        %1841 = vmatprep.subr.bf16.mxu0 0
        %1842 = vmatpush2.bf16.msra.mxu0 0
        %1843 = vmatprep.subr.bf16.mxu0 0
        %1844 = vmatpush2.bf16.msra.mxu0 0
        %1845 = vmatprep.subr.bf16.mxu0 0
        %1846 = vmatpush2.bf16.msra.mxu0 0
        %1847 = vmatprep.subr.bf16.mxu0 0
        %1848 = vmatpush2.bf16.msra.mxu0 0
        %1849 = vmatprep.subr.bf16.mxu0 0
        %1850 = vmatpush2.bf16.msra.mxu0 0
        %1851 = vmatprep.subr.bf16.mxu0 0
        %1852 = vmatpush2.bf16.msra.mxu0 0
        %1853 = vmatprep.subr.bf16.mxu0 0
        %1854 = vmatpush2.bf16.msra.mxu0 0
        %1855 = vmatprep.mubr.bf16.mxu0 0
        %1856 = vmatmul.mubr.bf16.gmra.mxu0 %v1809
        %v1857 = vpop.f32.mrf.mxu0
        %v1858 = vadd.f32 0.0, %v1857
        %v1859 = vpop.f32.mrf.mxu0
        %v1860 = vpop.f32.mrf.mxu0
        %v1861 = vadd.f32 0.0, %v1860
        %v1862 = vpop.f32.mrf.mxu0
        %1863 = vmatprep.mubr.bf16.mxu0 0
        %1864 = vmatmul.mubr.bf16.gmra.mxu0 %v1812
        %v1865 = vpop.f32.mrf.mxu0
        %v1866 = vadd.f32 0.0, %v1865
        %v1867 = vpop.f32.mrf.mxu0
        %v1868 = vpop.f32.mrf.mxu0
        %v1869 = vadd.f32 0.0, %v1868
        %v1870 = vpop.f32.mrf.mxu0
        %1871 = vmatprep.mubr.bf16.mxu0 0
        %1872 = vmatmul.mubr.bf16.gmra.mxu0 %v1815
        %v1873 = vpop.f32.mrf.mxu0
        %v1874 = vadd.f32 0.0, %v1873
        %v1875 = vpop.f32.mrf.mxu0
        %v1876 = vpop.f32.mrf.mxu0
        %v1877 = vadd.f32 0.0, %v1876
        %v1878 = vpop.f32.mrf.mxu0
        %1879 = vmatprep.mubr.bf16.mxu0 0
        %1880 = vmatmul.mubr.bf16.gmra.mxu0 %v1818
        %v1881 = vpop.f32.mrf.mxu0
        %v1882 = vadd.f32 0.0, %v1881
        %v1883 = vpop.f32.mrf.mxu0
        %v1884 = vpop.f32.mrf.mxu0
        %v1885 = vadd.f32 0.0, %v1884
        %v1886 = vpop.f32.mrf.mxu0
        %1887 = vdwg.mxu0
        %v1888 = vadd.f32 %v1665, %v1858
        %v1889 = vadd.f32 %v1666, %v1861
        %v1890 = vadd.f32 %v1667, %v1866
        %v1891 = vadd.f32 %v1668, %v1869
        %v1892 = vadd.f32 %v1669, %v1874
        %v1893 = vadd.f32 %v1670, %v1877
        %v1894 = vadd.f32 %v1671, %v1882
        %v1895 = vadd.f32 %v1672, %v1885
        %1896 = vset.pattern.permute.xlu0 7
        %1897 = vperm.xlu0 %1896, %v315
        %v1898 = vpop.permute.xlu0 %1897
        %1899 = vset.pattern.permute.xlu0 7
        %1900 = vperm.xlu0 %1899, %v316
        %v1901 = vpop.permute.xlu0 %1900
        %1902 = vset.pattern.permute.xlu0 7
        %1903 = vperm.xlu0 %1902, %v317
        %v1904 = vpop.permute.xlu0 %1903
        %1905 = vset.pattern.permute.xlu0 7
        %1906 = vperm.xlu0 %1905, %v318
        %v1907 = vpop.permute.xlu0 %1906
        %1908 = vset.pattern.permute.xlu0 7
        %1909 = vperm.xlu0 %1908, %v319
        %v1910 = vpop.permute.xlu0 %1909
        %1911 = vset.pattern.permute.xlu0 7
        %1912 = vperm.xlu0 %1911, %v320
        %v1913 = vpop.permute.xlu0 %1912
        %1914 = vset.pattern.permute.xlu0 7
        %1915 = vperm.xlu0 %1914, %v321
        %v1916 = vpop.permute.xlu0 %1915
        %1917 = vset.pattern.permute.xlu0 7
        %1918 = vperm.xlu0 %1917, %v322
        %v1919 = vpop.permute.xlu0 %1918
        %vm1920 = vcmp.eq.s32.totalorder %v1898, %v324
        %vm1921 = vcmp.eq.s32.totalorder %v1901, %v324
        %vm1922 = vcmp.eq.s32.totalorder %v1904, %v324
        %vm1923 = vcmp.eq.s32.totalorder %v1907, %v324
        %vm1924 = vcmp.eq.s32.totalorder %v1910, %v324
        %vm1925 = vcmp.eq.s32.totalorder %v1913, %v324
        %vm1926 = vcmp.eq.s32.totalorder %v1916, %v324
        %vm1927 = vcmp.eq.s32.totalorder %v1919, %v324
        %v1928 = vsel %vm1920, 1, 0
        %v1929 = vsel %vm1921, 1, 0
        %v1930 = vsel %vm1922, 1, 0
        %v1931 = vsel %vm1923, 1, 0
        %v1932 = vsel %vm1924, 1, 0
        %v1933 = vsel %vm1925, 1, 0
        %v1934 = vsel %vm1926, 1, 0
        %v1935 = vsel %vm1927, 1, 0
        %v1936 = vcvt.s32.f32 %v1928
        %v1937 = vcvt.s32.f32 %v1929
        %v1938 = vcvt.s32.f32 %v1930
        %v1939 = vcvt.s32.f32 %v1931
        %v1940 = vcvt.s32.f32 %v1932
        %v1941 = vcvt.s32.f32 %v1933
        %v1942 = vcvt.s32.f32 %v1934
        %v1943 = vcvt.s32.f32 %v1935
        %v1944 = vpack.c.bf16 %v1937, %v1936
        %v1945 = vpack.c.bf16 %v1939, %v1938
        %v1946 = vpack.c.bf16 %v1941, %v1940
        %v1947 = vpack.c.bf16 %v1943, %v1942
        %v1949 = vsel %vm401, %v1944, 0
        %v1952 = vsel %vm401, %v1945, 0
        %v1955 = vsel %vm401, %v1946, 0
        %v1958 = vsel %vm401, %v1947, 0
        %1960 = vmatprep.subr.bf16.mxu0 0
        %1961 = vmatpush1.bf16.msra.mxu0 0
        %1962 = vmatprep.subr.bf16.mxu0 0
        %1963 = vmatpush1.bf16.msra.mxu0 0
        %1964 = vmatprep.subr.bf16.mxu0 0
        %1965 = vmatpush1.bf16.msra.mxu0 0
        %1966 = vmatprep.subr.bf16.mxu0 0
        %1967 = vmatpush1.bf16.msra.mxu0 0
        %1968 = vmatprep.subr.bf16.mxu0 0
        %1969 = vmatpush1.bf16.msra.mxu0 %v396
        %1970 = vmatprep.subr.bf16.mxu0 0
        %1971 = vmatpush1.bf16.msra.mxu0 %v395
        %1972 = vmatprep.subr.bf16.mxu0 0
        %1973 = vmatpush1.bf16.msra.mxu0 %v394
        %1974 = vmatprep.subr.bf16.mxu0 0
        %1975 = vmatpush1.bf16.msra.mxu0 %v393
        %1976 = vmatprep.subr.bf16.mxu0 0
        %1977 = vmatpush2.bf16.msra.mxu0 0
        %1978 = vmatprep.subr.bf16.mxu0 0
        %1979 = vmatpush2.bf16.msra.mxu0 0
        %1980 = vmatprep.subr.bf16.mxu0 0
        %1981 = vmatpush2.bf16.msra.mxu0 0
        %1982 = vmatprep.subr.bf16.mxu0 0
        %1983 = vmatpush2.bf16.msra.mxu0 0
        %1984 = vmatprep.subr.bf16.mxu0 0
        %1985 = vmatpush2.bf16.msra.mxu0 0
        %1986 = vmatprep.subr.bf16.mxu0 0
        %1987 = vmatpush2.bf16.msra.mxu0 0
        %1988 = vmatprep.subr.bf16.mxu0 0
        %1989 = vmatpush2.bf16.msra.mxu0 0
        %1990 = vmatprep.subr.bf16.mxu0 0
        %1991 = vmatpush2.bf16.msra.mxu0 0
        %1992 = vmatprep.mubr.bf16.mxu0 0
        %1993 = vmatmul.mubr.bf16.gmra.mxu0 %v1949
        %v1994 = vpop.f32.mrf.mxu0
        %v1995 = vadd.f32 0.0, %v1994
        %v1996 = vpop.f32.mrf.mxu0
        %v1997 = vpop.f32.mrf.mxu0
        %v1998 = vadd.f32 0.0, %v1997
        %v1999 = vpop.f32.mrf.mxu0
        %2000 = vmatprep.mubr.bf16.mxu0 0
        %2001 = vmatmul.mubr.bf16.gmra.mxu0 %v1952
        %v2002 = vpop.f32.mrf.mxu0
        %v2003 = vadd.f32 0.0, %v2002
        %v2004 = vpop.f32.mrf.mxu0
        %v2005 = vpop.f32.mrf.mxu0
        %v2006 = vadd.f32 0.0, %v2005
        %v2007 = vpop.f32.mrf.mxu0
        %2008 = vmatprep.mubr.bf16.mxu0 0
        %2009 = vmatmul.mubr.bf16.gmra.mxu0 %v1955
        %v2010 = vpop.f32.mrf.mxu0
        %v2011 = vadd.f32 0.0, %v2010
        %v2012 = vpop.f32.mrf.mxu0
        %v2013 = vpop.f32.mrf.mxu0
        %v2014 = vadd.f32 0.0, %v2013
        %v2015 = vpop.f32.mrf.mxu0
        %2016 = vmatprep.mubr.bf16.mxu0 0
        %2017 = vmatmul.mubr.bf16.gmra.mxu0 %v1958
        %v2018 = vpop.f32.mrf.mxu0
        %v2019 = vadd.f32 0.0, %v2018
        %v2020 = vpop.f32.mrf.mxu0
        %v2021 = vpop.f32.mrf.mxu0
        %v2022 = vadd.f32 0.0, %v2021
        %v2023 = vpop.f32.mrf.mxu0
        %2024 = vdwg.mxu0
        %v2025 = vpack.c.bf16 %v1998, %v1995
        %v2026 = vpack.c.bf16 %v2006, %v2003
        %v2027 = vpack.c.bf16 %v2014, %v2011
        %v2028 = vpack.c.bf16 %v2022, %v2019
        %s2029 = scalar_lea.vmem %s3, 14
        %v2030 = vld [vmem:[%s2029] sm:$0x3]
        %v2032 = vsel %vm619, %v2025, 0
        %v2035 = vsel %vm619, %v2026, 0
        %v2038 = vsel %vm619, %v2027, 0
        %v2041 = vsel %vm619, %v2028, 0
        %v2044 = vsel %vm632, %v2030, 0
        %2046 = vmatprep.subr.bf16.mxu0 0
        %2047 = vmatpush1.bf16.msra.mxu0 0
        %2048 = vmatprep.subr.bf16.mxu0 0
        %2049 = vmatpush1.bf16.msra.mxu0 0
        %2050 = vmatprep.subr.bf16.mxu0 0
        %2051 = vmatpush1.bf16.msra.mxu0 0
        %2052 = vmatprep.subr.bf16.mxu0 0
        %2053 = vmatpush1.bf16.msra.mxu0 0
        %2054 = vmatprep.subr.bf16.mxu0 0
        %2055 = vmatpush1.bf16.msra.mxu0 0
        %2056 = vmatprep.subr.bf16.mxu0 0
        %2057 = vmatpush1.bf16.msra.mxu0 0
        %2058 = vmatprep.subr.bf16.mxu0 0
        %2059 = vmatpush1.bf16.msra.mxu0 0
        %2060 = vmatprep.subr.bf16.mxu0 0
        %2061 = vmatpush1.bf16.msra.mxu0 %v2044
        %2062 = vmatprep.subr.bf16.mxu0 0
        %2063 = vmatpush2.bf16.msra.mxu0 0
        %2064 = vmatprep.subr.bf16.mxu0 0
        %2065 = vmatpush2.bf16.msra.mxu0 0
        %2066 = vmatprep.subr.bf16.mxu0 0
        %2067 = vmatpush2.bf16.msra.mxu0 0
        %2068 = vmatprep.subr.bf16.mxu0 0
        %2069 = vmatpush2.bf16.msra.mxu0 0
        %2070 = vmatprep.subr.bf16.mxu0 0
        %2071 = vmatpush2.bf16.msra.mxu0 0
        %2072 = vmatprep.subr.bf16.mxu0 0
        %2073 = vmatpush2.bf16.msra.mxu0 0
        %2074 = vmatprep.subr.bf16.mxu0 0
        %2075 = vmatpush2.bf16.msra.mxu0 0
        %2076 = vmatprep.subr.bf16.mxu0 0
        %2077 = vmatpush2.bf16.msra.mxu0 0
        %2078 = vmatprep.mubr.bf16.mxu0 0
        %2079 = vmatmul.mubr.bf16.gmra.mxu0 %v2032
        %v2080 = vpop.f32.mrf.mxu0
        %v2081 = vadd.f32 0.0, %v2080
        %v2082 = vpop.f32.mrf.mxu0
        %v2083 = vpop.f32.mrf.mxu0
        %v2084 = vadd.f32 0.0, %v2083
        %v2085 = vpop.f32.mrf.mxu0
        %2086 = vmatprep.mubr.bf16.mxu0 0
        %2087 = vmatmul.mubr.bf16.gmra.mxu0 %v2035
        %v2088 = vpop.f32.mrf.mxu0
        %v2089 = vadd.f32 0.0, %v2088
        %v2090 = vpop.f32.mrf.mxu0
        %v2091 = vpop.f32.mrf.mxu0
        %v2092 = vadd.f32 0.0, %v2091
        %v2093 = vpop.f32.mrf.mxu0
        %2094 = vmatprep.mubr.bf16.mxu0 0
        %2095 = vmatmul.mubr.bf16.gmra.mxu0 %v2038
        %v2096 = vpop.f32.mrf.mxu0
        %v2097 = vadd.f32 0.0, %v2096
        %v2098 = vpop.f32.mrf.mxu0
        %v2099 = vpop.f32.mrf.mxu0
        %v2100 = vadd.f32 0.0, %v2099
        %v2101 = vpop.f32.mrf.mxu0
        %2102 = vmatprep.mubr.bf16.mxu0 0
        %2103 = vmatmul.mubr.bf16.gmra.mxu0 %v2041
        %v2104 = vpop.f32.mrf.mxu0
        %v2105 = vadd.f32 0.0, %v2104
        %v2106 = vpop.f32.mrf.mxu0
        %v2107 = vpop.f32.mrf.mxu0
        %v2108 = vadd.f32 0.0, %v2107
        %v2109 = vpop.f32.mrf.mxu0
        %2110 = vdwg.mxu0
        %v2111 = vadd.f32 %v1888, %v2081
        %v2112 = vadd.f32 %v1889, %v2084
        %v2113 = vadd.f32 %v1890, %v2089
        %v2114 = vadd.f32 %v1891, %v2092
        %v2115 = vadd.f32 %v1892, %v2097
        %v2116 = vadd.f32 %v1893, %v2100
        %v2117 = vadd.f32 %v1894, %v2105
        %v2118 = vadd.f32 %v1895, %v2108
        %2119 = vset.pattern.permute.xlu0 8
        %2120 = vperm.xlu0 %2119, %v315
        %v2121 = vpop.permute.xlu0 %2120
        %2122 = vset.pattern.permute.xlu0 8
        %2123 = vperm.xlu0 %2122, %v316
        %v2124 = vpop.permute.xlu0 %2123
        %2125 = vset.pattern.permute.xlu0 8
        %2126 = vperm.xlu0 %2125, %v317
        %v2127 = vpop.permute.xlu0 %2126
        %2128 = vset.pattern.permute.xlu0 8
        %2129 = vperm.xlu0 %2128, %v318
        %v2130 = vpop.permute.xlu0 %2129
        %2131 = vset.pattern.permute.xlu0 8
        %2132 = vperm.xlu0 %2131, %v319
        %v2133 = vpop.permute.xlu0 %2132
        %2134 = vset.pattern.permute.xlu0 8
        %2135 = vperm.xlu0 %2134, %v320
        %v2136 = vpop.permute.xlu0 %2135
        %2137 = vset.pattern.permute.xlu0 8
        %2138 = vperm.xlu0 %2137, %v321
        %v2139 = vpop.permute.xlu0 %2138
        %2140 = vset.pattern.permute.xlu0 8
        %2141 = vperm.xlu0 %2140, %v322
        %v2142 = vpop.permute.xlu0 %2141
        %vm2143 = vcmp.eq.s32.totalorder %v2121, %v324
        %vm2144 = vcmp.eq.s32.totalorder %v2124, %v324
        %vm2145 = vcmp.eq.s32.totalorder %v2127, %v324
        %vm2146 = vcmp.eq.s32.totalorder %v2130, %v324
        %vm2147 = vcmp.eq.s32.totalorder %v2133, %v324
        %vm2148 = vcmp.eq.s32.totalorder %v2136, %v324
        %vm2149 = vcmp.eq.s32.totalorder %v2139, %v324
        %vm2150 = vcmp.eq.s32.totalorder %v2142, %v324
        %v2151 = vsel %vm2143, 1, 0
        %v2152 = vsel %vm2144, 1, 0
        %v2153 = vsel %vm2145, 1, 0
        %v2154 = vsel %vm2146, 1, 0
        %v2155 = vsel %vm2147, 1, 0
        %v2156 = vsel %vm2148, 1, 0
        %v2157 = vsel %vm2149, 1, 0
        %v2158 = vsel %vm2150, 1, 0
        %v2159 = vcvt.s32.f32 %v2151
        %v2160 = vcvt.s32.f32 %v2152
        %v2161 = vcvt.s32.f32 %v2153
        %v2162 = vcvt.s32.f32 %v2154
        %v2163 = vcvt.s32.f32 %v2155
        %v2164 = vcvt.s32.f32 %v2156
        %v2165 = vcvt.s32.f32 %v2157
        %v2166 = vcvt.s32.f32 %v2158
        %v2167 = vpack.c.bf16 %v2160, %v2159
        %v2168 = vpack.c.bf16 %v2162, %v2161
        %v2169 = vpack.c.bf16 %v2164, %v2163
        %v2170 = vpack.c.bf16 %v2166, %v2165
        %v2172 = vsel %vm401, %v2167, 0
        %v2175 = vsel %vm401, %v2168, 0
        %v2178 = vsel %vm401, %v2169, 0
        %v2181 = vsel %vm401, %v2170, 0
        %2183 = vmatprep.subr.bf16.mxu0 0
        %2184 = vmatpush1.bf16.msra.mxu0 0
        %2185 = vmatprep.subr.bf16.mxu0 0
        %2186 = vmatpush1.bf16.msra.mxu0 0
        %2187 = vmatprep.subr.bf16.mxu0 0
        %2188 = vmatpush1.bf16.msra.mxu0 0
        %2189 = vmatprep.subr.bf16.mxu0 0
        %2190 = vmatpush1.bf16.msra.mxu0 0
        %2191 = vmatprep.subr.bf16.mxu0 0
        %2192 = vmatpush1.bf16.msra.mxu0 %v396
        %2193 = vmatprep.subr.bf16.mxu0 0
        %2194 = vmatpush1.bf16.msra.mxu0 %v395
        %2195 = vmatprep.subr.bf16.mxu0 0
        %2196 = vmatpush1.bf16.msra.mxu0 %v394
        %2197 = vmatprep.subr.bf16.mxu0 0
        %2198 = vmatpush1.bf16.msra.mxu0 %v393
        %2199 = vmatprep.subr.bf16.mxu0 0
        %2200 = vmatpush2.bf16.msra.mxu0 0
        %2201 = vmatprep.subr.bf16.mxu0 0
        %2202 = vmatpush2.bf16.msra.mxu0 0
        %2203 = vmatprep.subr.bf16.mxu0 0
        %2204 = vmatpush2.bf16.msra.mxu0 0
        %2205 = vmatprep.subr.bf16.mxu0 0
        %2206 = vmatpush2.bf16.msra.mxu0 0
        %2207 = vmatprep.subr.bf16.mxu0 0
        %2208 = vmatpush2.bf16.msra.mxu0 0
        %2209 = vmatprep.subr.bf16.mxu0 0
        %2210 = vmatpush2.bf16.msra.mxu0 0
        %2211 = vmatprep.subr.bf16.mxu0 0
        %2212 = vmatpush2.bf16.msra.mxu0 0
        %2213 = vmatprep.subr.bf16.mxu0 0
        %2214 = vmatpush2.bf16.msra.mxu0 0
        %2215 = vmatprep.mubr.bf16.mxu0 0
        %2216 = vmatmul.mubr.bf16.gmra.mxu0 %v2172
        %v2217 = vpop.f32.mrf.mxu0
        %v2218 = vadd.f32 0.0, %v2217
        %v2219 = vpop.f32.mrf.mxu0
        %v2220 = vpop.f32.mrf.mxu0
        %v2221 = vadd.f32 0.0, %v2220
        %v2222 = vpop.f32.mrf.mxu0
        %2223 = vmatprep.mubr.bf16.mxu0 0
        %2224 = vmatmul.mubr.bf16.gmra.mxu0 %v2175
        %v2225 = vpop.f32.mrf.mxu0
        %v2226 = vadd.f32 0.0, %v2225
        %v2227 = vpop.f32.mrf.mxu0
        %v2228 = vpop.f32.mrf.mxu0
        %v2229 = vadd.f32 0.0, %v2228
        %v2230 = vpop.f32.mrf.mxu0
        %2231 = vmatprep.mubr.bf16.mxu0 0
        %2232 = vmatmul.mubr.bf16.gmra.mxu0 %v2178
        %v2233 = vpop.f32.mrf.mxu0
        %v2234 = vadd.f32 0.0, %v2233
        %v2235 = vpop.f32.mrf.mxu0
        %v2236 = vpop.f32.mrf.mxu0
        %v2237 = vadd.f32 0.0, %v2236
        %v2238 = vpop.f32.mrf.mxu0
        %2239 = vmatprep.mubr.bf16.mxu0 0
        %2240 = vmatmul.mubr.bf16.gmra.mxu0 %v2181
        %v2241 = vpop.f32.mrf.mxu0
        %v2242 = vadd.f32 0.0, %v2241
        %v2243 = vpop.f32.mrf.mxu0
        %v2244 = vpop.f32.mrf.mxu0
        %v2245 = vadd.f32 0.0, %v2244
        %v2246 = vpop.f32.mrf.mxu0
        %2247 = vdwg.mxu0
        %v2248 = vpack.c.bf16 %v2221, %v2218
        %v2249 = vpack.c.bf16 %v2229, %v2226
        %v2250 = vpack.c.bf16 %v2237, %v2234
        %v2251 = vpack.c.bf16 %v2245, %v2242
        %s2252 = scalar_lea.vmem %s3, 16
        %v2253 = vld [vmem:[%s2252] sm:$0x3]
        %v2255 = vsel %vm619, %v2248, 0
        %v2258 = vsel %vm619, %v2249, 0
        %v2261 = vsel %vm619, %v2250, 0
        %v2264 = vsel %vm619, %v2251, 0
        %v2267 = vsel %vm632, %v2253, 0
        %2269 = vmatprep.subr.bf16.mxu0 0
        %2270 = vmatpush1.bf16.msra.mxu0 0
        %2271 = vmatprep.subr.bf16.mxu0 0
        %2272 = vmatpush1.bf16.msra.mxu0 0
        %2273 = vmatprep.subr.bf16.mxu0 0
        %2274 = vmatpush1.bf16.msra.mxu0 0
        %2275 = vmatprep.subr.bf16.mxu0 0
        %2276 = vmatpush1.bf16.msra.mxu0 0
        %2277 = vmatprep.subr.bf16.mxu0 0
        %2278 = vmatpush1.bf16.msra.mxu0 0
        %2279 = vmatprep.subr.bf16.mxu0 0
        %2280 = vmatpush1.bf16.msra.mxu0 0
        %2281 = vmatprep.subr.bf16.mxu0 0
        %2282 = vmatpush1.bf16.msra.mxu0 0
        %2283 = vmatprep.subr.bf16.mxu0 0
        %2284 = vmatpush1.bf16.msra.mxu0 %v2267
        %2285 = vmatprep.subr.bf16.mxu0 0
        %2286 = vmatpush2.bf16.msra.mxu0 0
        %2287 = vmatprep.subr.bf16.mxu0 0
        %2288 = vmatpush2.bf16.msra.mxu0 0
        %2289 = vmatprep.subr.bf16.mxu0 0
        %2290 = vmatpush2.bf16.msra.mxu0 0
        %2291 = vmatprep.subr.bf16.mxu0 0
        %2292 = vmatpush2.bf16.msra.mxu0 0
        %2293 = vmatprep.subr.bf16.mxu0 0
        %2294 = vmatpush2.bf16.msra.mxu0 0
        %2295 = vmatprep.subr.bf16.mxu0 0
        %2296 = vmatpush2.bf16.msra.mxu0 0
        %2297 = vmatprep.subr.bf16.mxu0 0
        %2298 = vmatpush2.bf16.msra.mxu0 0
        %2299 = vmatprep.subr.bf16.mxu0 0
        %2300 = vmatpush2.bf16.msra.mxu0 0
        %2301 = vmatprep.mubr.bf16.mxu0 0
        %2302 = vmatmul.mubr.bf16.gmra.mxu0 %v2255
        %v2303 = vpop.f32.mrf.mxu0
        %v2304 = vadd.f32 0.0, %v2303
        %v2305 = vpop.f32.mrf.mxu0
        %v2306 = vpop.f32.mrf.mxu0
        %v2307 = vadd.f32 0.0, %v2306
        %v2308 = vpop.f32.mrf.mxu0
        %2309 = vmatprep.mubr.bf16.mxu0 0
        %2310 = vmatmul.mubr.bf16.gmra.mxu0 %v2258
        %v2311 = vpop.f32.mrf.mxu0
        %v2312 = vadd.f32 0.0, %v2311
        %v2313 = vpop.f32.mrf.mxu0
        %v2314 = vpop.f32.mrf.mxu0
        %v2315 = vadd.f32 0.0, %v2314
        %v2316 = vpop.f32.mrf.mxu0
        %2317 = vmatprep.mubr.bf16.mxu0 0
        %2318 = vmatmul.mubr.bf16.gmra.mxu0 %v2261
        %v2319 = vpop.f32.mrf.mxu0
        %v2320 = vadd.f32 0.0, %v2319
        %v2321 = vpop.f32.mrf.mxu0
        %v2322 = vpop.f32.mrf.mxu0
        %v2323 = vadd.f32 0.0, %v2322
        %v2324 = vpop.f32.mrf.mxu0
        %2325 = vmatprep.mubr.bf16.mxu0 0
        %2326 = vmatmul.mubr.bf16.gmra.mxu0 %v2264
        %v2327 = vpop.f32.mrf.mxu0
        %v2328 = vadd.f32 0.0, %v2327
        %v2329 = vpop.f32.mrf.mxu0
        %v2330 = vpop.f32.mrf.mxu0
        %v2331 = vadd.f32 0.0, %v2330
        %v2332 = vpop.f32.mrf.mxu0
        %2333 = vdwg.mxu0
        %v2334 = vadd.f32 %v2111, %v2304
        %v2335 = vadd.f32 %v2112, %v2307
        %v2336 = vadd.f32 %v2113, %v2312
        %v2337 = vadd.f32 %v2114, %v2315
        %v2338 = vadd.f32 %v2115, %v2320
        %v2339 = vadd.f32 %v2116, %v2323
        %v2340 = vadd.f32 %v2117, %v2328
        %v2341 = vadd.f32 %v2118, %v2331
        %2342 = vset.pattern.permute.xlu0 9
        %2343 = vperm.xlu0 %2342, %v315
        %v2344 = vpop.permute.xlu0 %2343
        %2345 = vset.pattern.permute.xlu0 9
        %2346 = vperm.xlu0 %2345, %v316
        %v2347 = vpop.permute.xlu0 %2346
        %2348 = vset.pattern.permute.xlu0 9
        %2349 = vperm.xlu0 %2348, %v317
        %v2350 = vpop.permute.xlu0 %2349
        %2351 = vset.pattern.permute.xlu0 9
        %2352 = vperm.xlu0 %2351, %v318
        %v2353 = vpop.permute.xlu0 %2352
        %2354 = vset.pattern.permute.xlu0 9
        %2355 = vperm.xlu0 %2354, %v319
        %v2356 = vpop.permute.xlu0 %2355
        %2357 = vset.pattern.permute.xlu0 9
        %2358 = vperm.xlu0 %2357, %v320
        %v2359 = vpop.permute.xlu0 %2358
        %2360 = vset.pattern.permute.xlu0 9
        %2361 = vperm.xlu0 %2360, %v321
        %v2362 = vpop.permute.xlu0 %2361
        %2363 = vset.pattern.permute.xlu0 9
        %2364 = vperm.xlu0 %2363, %v322
        %v2365 = vpop.permute.xlu0 %2364
        %vm2366 = vcmp.eq.s32.totalorder %v2344, %v324
        %vm2367 = vcmp.eq.s32.totalorder %v2347, %v324
        %vm2368 = vcmp.eq.s32.totalorder %v2350, %v324
        %vm2369 = vcmp.eq.s32.totalorder %v2353, %v324
        %vm2370 = vcmp.eq.s32.totalorder %v2356, %v324
        %vm2371 = vcmp.eq.s32.totalorder %v2359, %v324
        %vm2372 = vcmp.eq.s32.totalorder %v2362, %v324
        %vm2373 = vcmp.eq.s32.totalorder %v2365, %v324
        %v2374 = vsel %vm2366, 1, 0
        %v2375 = vsel %vm2367, 1, 0
        %v2376 = vsel %vm2368, 1, 0
        %v2377 = vsel %vm2369, 1, 0
        %v2378 = vsel %vm2370, 1, 0
        %v2379 = vsel %vm2371, 1, 0
        %v2380 = vsel %vm2372, 1, 0
        %v2381 = vsel %vm2373, 1, 0
        %v2382 = vcvt.s32.f32 %v2374
        %v2383 = vcvt.s32.f32 %v2375
        %v2384 = vcvt.s32.f32 %v2376
        %v2385 = vcvt.s32.f32 %v2377
        %v2386 = vcvt.s32.f32 %v2378
        %v2387 = vcvt.s32.f32 %v2379
        %v2388 = vcvt.s32.f32 %v2380
        %v2389 = vcvt.s32.f32 %v2381
        %v2390 = vpack.c.bf16 %v2383, %v2382
        %v2391 = vpack.c.bf16 %v2385, %v2384
        %v2392 = vpack.c.bf16 %v2387, %v2386
        %v2393 = vpack.c.bf16 %v2389, %v2388
        %v2395 = vsel %vm401, %v2390, 0
        %v2398 = vsel %vm401, %v2391, 0
        %v2401 = vsel %vm401, %v2392, 0
        %v2404 = vsel %vm401, %v2393, 0
        %2406 = vmatprep.subr.bf16.mxu0 0
        %2407 = vmatpush1.bf16.msra.mxu0 0
        %2408 = vmatprep.subr.bf16.mxu0 0
        %2409 = vmatpush1.bf16.msra.mxu0 0
        %2410 = vmatprep.subr.bf16.mxu0 0
        %2411 = vmatpush1.bf16.msra.mxu0 0
        %2412 = vmatprep.subr.bf16.mxu0 0
        %2413 = vmatpush1.bf16.msra.mxu0 0
        %2414 = vmatprep.subr.bf16.mxu0 0
        %2415 = vmatpush1.bf16.msra.mxu0 %v396
        %2416 = vmatprep.subr.bf16.mxu0 0
        %2417 = vmatpush1.bf16.msra.mxu0 %v395
        %2418 = vmatprep.subr.bf16.mxu0 0
        %2419 = vmatpush1.bf16.msra.mxu0 %v394
        %2420 = vmatprep.subr.bf16.mxu0 0
        %2421 = vmatpush1.bf16.msra.mxu0 %v393
        %2422 = vmatprep.subr.bf16.mxu0 0
        %2423 = vmatpush2.bf16.msra.mxu0 0
        %2424 = vmatprep.subr.bf16.mxu0 0
        %2425 = vmatpush2.bf16.msra.mxu0 0
        %2426 = vmatprep.subr.bf16.mxu0 0
        %2427 = vmatpush2.bf16.msra.mxu0 0
        %2428 = vmatprep.subr.bf16.mxu0 0
        %2429 = vmatpush2.bf16.msra.mxu0 0
        %2430 = vmatprep.subr.bf16.mxu0 0
        %2431 = vmatpush2.bf16.msra.mxu0 0
        %2432 = vmatprep.subr.bf16.mxu0 0
        %2433 = vmatpush2.bf16.msra.mxu0 0
        %2434 = vmatprep.subr.bf16.mxu0 0
        %2435 = vmatpush2.bf16.msra.mxu0 0
        %2436 = vmatprep.subr.bf16.mxu0 0
        %2437 = vmatpush2.bf16.msra.mxu0 0
        %2438 = vmatprep.mubr.bf16.mxu0 0
        %2439 = vmatmul.mubr.bf16.gmra.mxu0 %v2395
        %v2440 = vpop.f32.mrf.mxu0
        %v2441 = vadd.f32 0.0, %v2440
        %v2442 = vpop.f32.mrf.mxu0
        %v2443 = vpop.f32.mrf.mxu0
        %v2444 = vadd.f32 0.0, %v2443
        %v2445 = vpop.f32.mrf.mxu0
        %2446 = vmatprep.mubr.bf16.mxu0 0
        %2447 = vmatmul.mubr.bf16.gmra.mxu0 %v2398
        %v2448 = vpop.f32.mrf.mxu0
        %v2449 = vadd.f32 0.0, %v2448
        %v2450 = vpop.f32.mrf.mxu0
        %v2451 = vpop.f32.mrf.mxu0
        %v2452 = vadd.f32 0.0, %v2451
        %v2453 = vpop.f32.mrf.mxu0
        %2454 = vmatprep.mubr.bf16.mxu0 0
        %2455 = vmatmul.mubr.bf16.gmra.mxu0 %v2401
        %v2456 = vpop.f32.mrf.mxu0
        %v2457 = vadd.f32 0.0, %v2456
        %v2458 = vpop.f32.mrf.mxu0
        %v2459 = vpop.f32.mrf.mxu0
        %v2460 = vadd.f32 0.0, %v2459
        %v2461 = vpop.f32.mrf.mxu0
        %2462 = vmatprep.mubr.bf16.mxu0 0
        %2463 = vmatmul.mubr.bf16.gmra.mxu0 %v2404
        %v2464 = vpop.f32.mrf.mxu0
        %v2465 = vadd.f32 0.0, %v2464
        %v2466 = vpop.f32.mrf.mxu0
        %v2467 = vpop.f32.mrf.mxu0
        %v2468 = vadd.f32 0.0, %v2467
        %v2469 = vpop.f32.mrf.mxu0
        %2470 = vdwg.mxu0
        %v2471 = vpack.c.bf16 %v2444, %v2441
        %v2472 = vpack.c.bf16 %v2452, %v2449
        %v2473 = vpack.c.bf16 %v2460, %v2457
        %v2474 = vpack.c.bf16 %v2468, %v2465
        %s2475 = scalar_lea.vmem %s3, 18
        %v2476 = vld [vmem:[%s2475] sm:$0x3]
        %v2478 = vsel %vm619, %v2471, 0
        %v2481 = vsel %vm619, %v2472, 0
        %v2484 = vsel %vm619, %v2473, 0
        %v2487 = vsel %vm619, %v2474, 0
        %v2490 = vsel %vm632, %v2476, 0
        %2492 = vmatprep.subr.bf16.mxu0 0
        %2493 = vmatpush1.bf16.msra.mxu0 0
        %2494 = vmatprep.subr.bf16.mxu0 0
        %2495 = vmatpush1.bf16.msra.mxu0 0
        %2496 = vmatprep.subr.bf16.mxu0 0
        %2497 = vmatpush1.bf16.msra.mxu0 0
        %2498 = vmatprep.subr.bf16.mxu0 0
        %2499 = vmatpush1.bf16.msra.mxu0 0
        %2500 = vmatprep.subr.bf16.mxu0 0
        %2501 = vmatpush1.bf16.msra.mxu0 0
        %2502 = vmatprep.subr.bf16.mxu0 0
        %2503 = vmatpush1.bf16.msra.mxu0 0
        %2504 = vmatprep.subr.bf16.mxu0 0
        %2505 = vmatpush1.bf16.msra.mxu0 0
        %2506 = vmatprep.subr.bf16.mxu0 0
        %2507 = vmatpush1.bf16.msra.mxu0 %v2490
        %2508 = vmatprep.subr.bf16.mxu0 0
        %2509 = vmatpush2.bf16.msra.mxu0 0
        %2510 = vmatprep.subr.bf16.mxu0 0
        %2511 = vmatpush2.bf16.msra.mxu0 0
        %2512 = vmatprep.subr.bf16.mxu0 0
        %2513 = vmatpush2.bf16.msra.mxu0 0
        %2514 = vmatprep.subr.bf16.mxu0 0
        %2515 = vmatpush2.bf16.msra.mxu0 0
        %2516 = vmatprep.subr.bf16.mxu0 0
        %2517 = vmatpush2.bf16.msra.mxu0 0
        %2518 = vmatprep.subr.bf16.mxu0 0
        %2519 = vmatpush2.bf16.msra.mxu0 0
        %2520 = vmatprep.subr.bf16.mxu0 0
        %2521 = vmatpush2.bf16.msra.mxu0 0
        %2522 = vmatprep.subr.bf16.mxu0 0
        %2523 = vmatpush2.bf16.msra.mxu0 0
        %2524 = vmatprep.mubr.bf16.mxu0 0
        %2525 = vmatmul.mubr.bf16.gmra.mxu0 %v2478
        %v2526 = vpop.f32.mrf.mxu0
        %v2527 = vadd.f32 0.0, %v2526
        %v2528 = vpop.f32.mrf.mxu0
        %v2529 = vpop.f32.mrf.mxu0
        %v2530 = vadd.f32 0.0, %v2529
        %v2531 = vpop.f32.mrf.mxu0
        %2532 = vmatprep.mubr.bf16.mxu0 0
        %2533 = vmatmul.mubr.bf16.gmra.mxu0 %v2481
        %v2534 = vpop.f32.mrf.mxu0
        %v2535 = vadd.f32 0.0, %v2534
        %v2536 = vpop.f32.mrf.mxu0
        %v2537 = vpop.f32.mrf.mxu0
        %v2538 = vadd.f32 0.0, %v2537
        %v2539 = vpop.f32.mrf.mxu0
        %2540 = vmatprep.mubr.bf16.mxu0 0
        %2541 = vmatmul.mubr.bf16.gmra.mxu0 %v2484
        %v2542 = vpop.f32.mrf.mxu0
        %v2543 = vadd.f32 0.0, %v2542
        %v2544 = vpop.f32.mrf.mxu0
        %v2545 = vpop.f32.mrf.mxu0
        %v2546 = vadd.f32 0.0, %v2545
        %v2547 = vpop.f32.mrf.mxu0
        %2548 = vmatprep.mubr.bf16.mxu0 0
        %2549 = vmatmul.mubr.bf16.gmra.mxu0 %v2487
        %v2550 = vpop.f32.mrf.mxu0
        %v2551 = vadd.f32 0.0, %v2550
        %v2552 = vpop.f32.mrf.mxu0
        %v2553 = vpop.f32.mrf.mxu0
        %v2554 = vadd.f32 0.0, %v2553
        %v2555 = vpop.f32.mrf.mxu0
        %2556 = vdwg.mxu0
        %v2557 = vadd.f32 %v2334, %v2527
        %v2558 = vadd.f32 %v2335, %v2530
        %v2559 = vadd.f32 %v2336, %v2535
        %v2560 = vadd.f32 %v2337, %v2538
        %v2561 = vadd.f32 %v2338, %v2543
        %v2562 = vadd.f32 %v2339, %v2546
        %v2563 = vadd.f32 %v2340, %v2551
        %v2564 = vadd.f32 %v2341, %v2554
        %2565 = vset.pattern.permute.xlu0 10
        %2566 = vperm.xlu0 %2565, %v315
        %v2567 = vpop.permute.xlu0 %2566
        %2568 = vset.pattern.permute.xlu0 10
        %2569 = vperm.xlu0 %2568, %v316
        %v2570 = vpop.permute.xlu0 %2569
        %2571 = vset.pattern.permute.xlu0 10
        %2572 = vperm.xlu0 %2571, %v317
        %v2573 = vpop.permute.xlu0 %2572
        %2574 = vset.pattern.permute.xlu0 10
        %2575 = vperm.xlu0 %2574, %v318
        %v2576 = vpop.permute.xlu0 %2575
        %2577 = vset.pattern.permute.xlu0 10
        %2578 = vperm.xlu0 %2577, %v319
        %v2579 = vpop.permute.xlu0 %2578
        %2580 = vset.pattern.permute.xlu0 10
        %2581 = vperm.xlu0 %2580, %v320
        %v2582 = vpop.permute.xlu0 %2581
        %2583 = vset.pattern.permute.xlu0 10
        %2584 = vperm.xlu0 %2583, %v321
        %v2585 = vpop.permute.xlu0 %2584
        %2586 = vset.pattern.permute.xlu0 10
        %2587 = vperm.xlu0 %2586, %v322
        %v2588 = vpop.permute.xlu0 %2587
        %vm2589 = vcmp.eq.s32.totalorder %v2567, %v324
        %vm2590 = vcmp.eq.s32.totalorder %v2570, %v324
        %vm2591 = vcmp.eq.s32.totalorder %v2573, %v324
        %vm2592 = vcmp.eq.s32.totalorder %v2576, %v324
        %vm2593 = vcmp.eq.s32.totalorder %v2579, %v324
        %vm2594 = vcmp.eq.s32.totalorder %v2582, %v324
        %vm2595 = vcmp.eq.s32.totalorder %v2585, %v324
        %vm2596 = vcmp.eq.s32.totalorder %v2588, %v324
        %v2597 = vsel %vm2589, 1, 0
        %v2598 = vsel %vm2590, 1, 0
        %v2599 = vsel %vm2591, 1, 0
        %v2600 = vsel %vm2592, 1, 0
        %v2601 = vsel %vm2593, 1, 0
        %v2602 = vsel %vm2594, 1, 0
        %v2603 = vsel %vm2595, 1, 0
        %v2604 = vsel %vm2596, 1, 0
        %v2605 = vcvt.s32.f32 %v2597
        %v2606 = vcvt.s32.f32 %v2598
        %v2607 = vcvt.s32.f32 %v2599
        %v2608 = vcvt.s32.f32 %v2600
        %v2609 = vcvt.s32.f32 %v2601
        %v2610 = vcvt.s32.f32 %v2602
        %v2611 = vcvt.s32.f32 %v2603
        %v2612 = vcvt.s32.f32 %v2604
        %v2613 = vpack.c.bf16 %v2606, %v2605
        %v2614 = vpack.c.bf16 %v2608, %v2607
        %v2615 = vpack.c.bf16 %v2610, %v2609
        %v2616 = vpack.c.bf16 %v2612, %v2611
        %v2618 = vsel %vm401, %v2613, 0
        %v2621 = vsel %vm401, %v2614, 0
        %v2624 = vsel %vm401, %v2615, 0
        %v2627 = vsel %vm401, %v2616, 0
        %2629 = vmatprep.subr.bf16.mxu0 0
        %2630 = vmatpush1.bf16.msra.mxu0 0
        %2631 = vmatprep.subr.bf16.mxu0 0
        %2632 = vmatpush1.bf16.msra.mxu0 0
        %2633 = vmatprep.subr.bf16.mxu0 0
        %2634 = vmatpush1.bf16.msra.mxu0 0
        %2635 = vmatprep.subr.bf16.mxu0 0
        %2636 = vmatpush1.bf16.msra.mxu0 0
        %2637 = vmatprep.subr.bf16.mxu0 0
        %2638 = vmatpush1.bf16.msra.mxu0 %v396
        %2639 = vmatprep.subr.bf16.mxu0 0
        %2640 = vmatpush1.bf16.msra.mxu0 %v395
        %2641 = vmatprep.subr.bf16.mxu0 0
        %2642 = vmatpush1.bf16.msra.mxu0 %v394
        %2643 = vmatprep.subr.bf16.mxu0 0
        %2644 = vmatpush1.bf16.msra.mxu0 %v393
        %2645 = vmatprep.subr.bf16.mxu0 0
        %2646 = vmatpush2.bf16.msra.mxu0 0
        %2647 = vmatprep.subr.bf16.mxu0 0
        %2648 = vmatpush2.bf16.msra.mxu0 0
        %2649 = vmatprep.subr.bf16.mxu0 0
        %2650 = vmatpush2.bf16.msra.mxu0 0
        %2651 = vmatprep.subr.bf16.mxu0 0
        %2652 = vmatpush2.bf16.msra.mxu0 0
        %2653 = vmatprep.subr.bf16.mxu0 0
        %2654 = vmatpush2.bf16.msra.mxu0 0
        %2655 = vmatprep.subr.bf16.mxu0 0
        %2656 = vmatpush2.bf16.msra.mxu0 0
        %2657 = vmatprep.subr.bf16.mxu0 0
        %2658 = vmatpush2.bf16.msra.mxu0 0
        %2659 = vmatprep.subr.bf16.mxu0 0
        %2660 = vmatpush2.bf16.msra.mxu0 0
        %2661 = vmatprep.mubr.bf16.mxu0 0
        %2662 = vmatmul.mubr.bf16.gmra.mxu0 %v2618
        %v2663 = vpop.f32.mrf.mxu0
        %v2664 = vadd.f32 0.0, %v2663
        %v2665 = vpop.f32.mrf.mxu0
        %v2666 = vpop.f32.mrf.mxu0
        %v2667 = vadd.f32 0.0, %v2666
        %v2668 = vpop.f32.mrf.mxu0
        %2669 = vmatprep.mubr.bf16.mxu0 0
        %2670 = vmatmul.mubr.bf16.gmra.mxu0 %v2621
        %v2671 = vpop.f32.mrf.mxu0
        %v2672 = vadd.f32 0.0, %v2671
        %v2673 = vpop.f32.mrf.mxu0
        %v2674 = vpop.f32.mrf.mxu0
        %v2675 = vadd.f32 0.0, %v2674
        %v2676 = vpop.f32.mrf.mxu0
        %2677 = vmatprep.mubr.bf16.mxu0 0
        %2678 = vmatmul.mubr.bf16.gmra.mxu0 %v2624
        %v2679 = vpop.f32.mrf.mxu0
        %v2680 = vadd.f32 0.0, %v2679
        %v2681 = vpop.f32.mrf.mxu0
        %v2682 = vpop.f32.mrf.mxu0
        %v2683 = vadd.f32 0.0, %v2682
        %v2684 = vpop.f32.mrf.mxu0
        %2685 = vmatprep.mubr.bf16.mxu0 0
        %2686 = vmatmul.mubr.bf16.gmra.mxu0 %v2627
        %v2687 = vpop.f32.mrf.mxu0
        %v2688 = vadd.f32 0.0, %v2687
        %v2689 = vpop.f32.mrf.mxu0
        %v2690 = vpop.f32.mrf.mxu0
        %v2691 = vadd.f32 0.0, %v2690
        %v2692 = vpop.f32.mrf.mxu0
        %2693 = vdwg.mxu0
        %v2694 = vpack.c.bf16 %v2667, %v2664
        %v2695 = vpack.c.bf16 %v2675, %v2672
        %v2696 = vpack.c.bf16 %v2683, %v2680
        %v2697 = vpack.c.bf16 %v2691, %v2688
        %s2698 = scalar_lea.vmem %s3, 20
        %v2699 = vld [vmem:[%s2698] sm:$0x3]
        %v2701 = vsel %vm619, %v2694, 0
        %v2704 = vsel %vm619, %v2695, 0
        %v2707 = vsel %vm619, %v2696, 0
        %v2710 = vsel %vm619, %v2697, 0
        %v2713 = vsel %vm632, %v2699, 0
        %2715 = vmatprep.subr.bf16.mxu0 0
        %2716 = vmatpush1.bf16.msra.mxu0 0
        %2717 = vmatprep.subr.bf16.mxu0 0
        %2718 = vmatpush1.bf16.msra.mxu0 0
        %2719 = vmatprep.subr.bf16.mxu0 0
        %2720 = vmatpush1.bf16.msra.mxu0 0
        %2721 = vmatprep.subr.bf16.mxu0 0
        %2722 = vmatpush1.bf16.msra.mxu0 0
        %2723 = vmatprep.subr.bf16.mxu0 0
        %2724 = vmatpush1.bf16.msra.mxu0 0
        %2725 = vmatprep.subr.bf16.mxu0 0
        %2726 = vmatpush1.bf16.msra.mxu0 0
        %2727 = vmatprep.subr.bf16.mxu0 0
        %2728 = vmatpush1.bf16.msra.mxu0 0
        %2729 = vmatprep.subr.bf16.mxu0 0
        %2730 = vmatpush1.bf16.msra.mxu0 %v2713
        %2731 = vmatprep.subr.bf16.mxu0 0
        %2732 = vmatpush2.bf16.msra.mxu0 0
        %2733 = vmatprep.subr.bf16.mxu0 0
        %2734 = vmatpush2.bf16.msra.mxu0 0
        %2735 = vmatprep.subr.bf16.mxu0 0
        %2736 = vmatpush2.bf16.msra.mxu0 0
        %2737 = vmatprep.subr.bf16.mxu0 0
        %2738 = vmatpush2.bf16.msra.mxu0 0
        %2739 = vmatprep.subr.bf16.mxu0 0
        %2740 = vmatpush2.bf16.msra.mxu0 0
        %2741 = vmatprep.subr.bf16.mxu0 0
        %2742 = vmatpush2.bf16.msra.mxu0 0
        %2743 = vmatprep.subr.bf16.mxu0 0
        %2744 = vmatpush2.bf16.msra.mxu0 0
        %2745 = vmatprep.subr.bf16.mxu0 0
        %2746 = vmatpush2.bf16.msra.mxu0 0
        %2747 = vmatprep.mubr.bf16.mxu0 0
        %2748 = vmatmul.mubr.bf16.gmra.mxu0 %v2701
        %v2749 = vpop.f32.mrf.mxu0
        %v2750 = vadd.f32 0.0, %v2749
        %v2751 = vpop.f32.mrf.mxu0
        %v2752 = vpop.f32.mrf.mxu0
        %v2753 = vadd.f32 0.0, %v2752
        %v2754 = vpop.f32.mrf.mxu0
        %2755 = vmatprep.mubr.bf16.mxu0 0
        %2756 = vmatmul.mubr.bf16.gmra.mxu0 %v2704
        %v2757 = vpop.f32.mrf.mxu0
        %v2758 = vadd.f32 0.0, %v2757
        %v2759 = vpop.f32.mrf.mxu0
        %v2760 = vpop.f32.mrf.mxu0
        %v2761 = vadd.f32 0.0, %v2760
        %v2762 = vpop.f32.mrf.mxu0
        %2763 = vmatprep.mubr.bf16.mxu0 0
        %2764 = vmatmul.mubr.bf16.gmra.mxu0 %v2707
        %v2765 = vpop.f32.mrf.mxu0
        %v2766 = vadd.f32 0.0, %v2765
        %v2767 = vpop.f32.mrf.mxu0
        %v2768 = vpop.f32.mrf.mxu0
        %v2769 = vadd.f32 0.0, %v2768
        %v2770 = vpop.f32.mrf.mxu0
        %2771 = vmatprep.mubr.bf16.mxu0 0
        %2772 = vmatmul.mubr.bf16.gmra.mxu0 %v2710
        %v2773 = vpop.f32.mrf.mxu0
        %v2774 = vadd.f32 0.0, %v2773
        %v2775 = vpop.f32.mrf.mxu0
        %v2776 = vpop.f32.mrf.mxu0
        %v2777 = vadd.f32 0.0, %v2776
        %v2778 = vpop.f32.mrf.mxu0
        %2779 = vdwg.mxu0
        %v2780 = vadd.f32 %v2557, %v2750
        %v2781 = vadd.f32 %v2558, %v2753
        %v2782 = vadd.f32 %v2559, %v2758
        %v2783 = vadd.f32 %v2560, %v2761
        %v2784 = vadd.f32 %v2561, %v2766
        %v2785 = vadd.f32 %v2562, %v2769
        %v2786 = vadd.f32 %v2563, %v2774
        %v2787 = vadd.f32 %v2564, %v2777
        %2788 = vset.pattern.permute.xlu0 11
        %2789 = vperm.xlu0 %2788, %v315
        %v2790 = vpop.permute.xlu0 %2789
        %2791 = vset.pattern.permute.xlu0 11
        %2792 = vperm.xlu0 %2791, %v316
        %v2793 = vpop.permute.xlu0 %2792
        %2794 = vset.pattern.permute.xlu0 11
        %2795 = vperm.xlu0 %2794, %v317
        %v2796 = vpop.permute.xlu0 %2795
        %2797 = vset.pattern.permute.xlu0 11
        %2798 = vperm.xlu0 %2797, %v318
        %v2799 = vpop.permute.xlu0 %2798
        %2800 = vset.pattern.permute.xlu0 11
        %2801 = vperm.xlu0 %2800, %v319
        %v2802 = vpop.permute.xlu0 %2801
        %2803 = vset.pattern.permute.xlu0 11
        %2804 = vperm.xlu0 %2803, %v320
        %v2805 = vpop.permute.xlu0 %2804
        %2806 = vset.pattern.permute.xlu0 11
        %2807 = vperm.xlu0 %2806, %v321
        %v2808 = vpop.permute.xlu0 %2807
        %2809 = vset.pattern.permute.xlu0 11
        %2810 = vperm.xlu0 %2809, %v322
        %v2811 = vpop.permute.xlu0 %2810
        %vm2812 = vcmp.eq.s32.totalorder %v2790, %v324
        %vm2813 = vcmp.eq.s32.totalorder %v2793, %v324
        %vm2814 = vcmp.eq.s32.totalorder %v2796, %v324
        %vm2815 = vcmp.eq.s32.totalorder %v2799, %v324
        %vm2816 = vcmp.eq.s32.totalorder %v2802, %v324
        %vm2817 = vcmp.eq.s32.totalorder %v2805, %v324
        %vm2818 = vcmp.eq.s32.totalorder %v2808, %v324
        %vm2819 = vcmp.eq.s32.totalorder %v2811, %v324
        %v2820 = vsel %vm2812, 1, 0
        %v2821 = vsel %vm2813, 1, 0
        %v2822 = vsel %vm2814, 1, 0
        %v2823 = vsel %vm2815, 1, 0
        %v2824 = vsel %vm2816, 1, 0
        %v2825 = vsel %vm2817, 1, 0
        %v2826 = vsel %vm2818, 1, 0
        %v2827 = vsel %vm2819, 1, 0
        %v2828 = vcvt.s32.f32 %v2820
        %v2829 = vcvt.s32.f32 %v2821
        %v2830 = vcvt.s32.f32 %v2822
        %v2831 = vcvt.s32.f32 %v2823
        %v2832 = vcvt.s32.f32 %v2824
        %v2833 = vcvt.s32.f32 %v2825
        %v2834 = vcvt.s32.f32 %v2826
        %v2835 = vcvt.s32.f32 %v2827
        %v2836 = vpack.c.bf16 %v2829, %v2828
        %v2837 = vpack.c.bf16 %v2831, %v2830
        %v2838 = vpack.c.bf16 %v2833, %v2832
        %v2839 = vpack.c.bf16 %v2835, %v2834
        %v2841 = vsel %vm401, %v2836, 0
        %v2844 = vsel %vm401, %v2837, 0
        %v2847 = vsel %vm401, %v2838, 0
        %v2850 = vsel %vm401, %v2839, 0
        %2852 = vmatprep.subr.bf16.mxu0 0
        %2853 = vmatpush1.bf16.msra.mxu0 0
        %2854 = vmatprep.subr.bf16.mxu0 0
        %2855 = vmatpush1.bf16.msra.mxu0 0
        %2856 = vmatprep.subr.bf16.mxu0 0
        %2857 = vmatpush1.bf16.msra.mxu0 0
        %2858 = vmatprep.subr.bf16.mxu0 0
        %2859 = vmatpush1.bf16.msra.mxu0 0
        %2860 = vmatprep.subr.bf16.mxu0 0
        %2861 = vmatpush1.bf16.msra.mxu0 %v396
        %2862 = vmatprep.subr.bf16.mxu0 0
        %2863 = vmatpush1.bf16.msra.mxu0 %v395
        %2864 = vmatprep.subr.bf16.mxu0 0
        %2865 = vmatpush1.bf16.msra.mxu0 %v394
        %2866 = vmatprep.subr.bf16.mxu0 0
        %2867 = vmatpush1.bf16.msra.mxu0 %v393
        %2868 = vmatprep.subr.bf16.mxu0 0
        %2869 = vmatpush2.bf16.msra.mxu0 0
        %2870 = vmatprep.subr.bf16.mxu0 0
        %2871 = vmatpush2.bf16.msra.mxu0 0
        %2872 = vmatprep.subr.bf16.mxu0 0
        %2873 = vmatpush2.bf16.msra.mxu0 0
        %2874 = vmatprep.subr.bf16.mxu0 0
        %2875 = vmatpush2.bf16.msra.mxu0 0
        %2876 = vmatprep.subr.bf16.mxu0 0
        %2877 = vmatpush2.bf16.msra.mxu0 0
        %2878 = vmatprep.subr.bf16.mxu0 0
        %2879 = vmatpush2.bf16.msra.mxu0 0
        %2880 = vmatprep.subr.bf16.mxu0 0
        %2881 = vmatpush2.bf16.msra.mxu0 0
        %2882 = vmatprep.subr.bf16.mxu0 0
        %2883 = vmatpush2.bf16.msra.mxu0 0
        %2884 = vmatprep.mubr.bf16.mxu0 0
        %2885 = vmatmul.mubr.bf16.gmra.mxu0 %v2841
        %v2886 = vpop.f32.mrf.mxu0
        %v2887 = vadd.f32 0.0, %v2886
        %v2888 = vpop.f32.mrf.mxu0
        %v2889 = vpop.f32.mrf.mxu0
        %v2890 = vadd.f32 0.0, %v2889
        %v2891 = vpop.f32.mrf.mxu0
        %2892 = vmatprep.mubr.bf16.mxu0 0
        %2893 = vmatmul.mubr.bf16.gmra.mxu0 %v2844
        %v2894 = vpop.f32.mrf.mxu0
        %v2895 = vadd.f32 0.0, %v2894
        %v2896 = vpop.f32.mrf.mxu0
        %v2897 = vpop.f32.mrf.mxu0
        %v2898 = vadd.f32 0.0, %v2897
        %v2899 = vpop.f32.mrf.mxu0
        %2900 = vmatprep.mubr.bf16.mxu0 0
        %2901 = vmatmul.mubr.bf16.gmra.mxu0 %v2847
        %v2902 = vpop.f32.mrf.mxu0
        %v2903 = vadd.f32 0.0, %v2902
        %v2904 = vpop.f32.mrf.mxu0
        %v2905 = vpop.f32.mrf.mxu0
        %v2906 = vadd.f32 0.0, %v2905
        %v2907 = vpop.f32.mrf.mxu0
        %2908 = vmatprep.mubr.bf16.mxu0 0
        %2909 = vmatmul.mubr.bf16.gmra.mxu0 %v2850
        %v2910 = vpop.f32.mrf.mxu0
        %v2911 = vadd.f32 0.0, %v2910
        %v2912 = vpop.f32.mrf.mxu0
        %v2913 = vpop.f32.mrf.mxu0
        %v2914 = vadd.f32 0.0, %v2913
        %v2915 = vpop.f32.mrf.mxu0
        %2916 = vdwg.mxu0
        %v2917 = vpack.c.bf16 %v2890, %v2887
        %v2918 = vpack.c.bf16 %v2898, %v2895
        %v2919 = vpack.c.bf16 %v2906, %v2903
        %v2920 = vpack.c.bf16 %v2914, %v2911
        %s2921 = scalar_lea.vmem %s3, 22
        %v2922 = vld [vmem:[%s2921] sm:$0x3]
        %v2924 = vsel %vm619, %v2917, 0
        %v2927 = vsel %vm619, %v2918, 0
        %v2930 = vsel %vm619, %v2919, 0
        %v2933 = vsel %vm619, %v2920, 0
        %v2936 = vsel %vm632, %v2922, 0
        %2938 = vmatprep.subr.bf16.mxu0 0
        %2939 = vmatpush1.bf16.msra.mxu0 0
        %2940 = vmatprep.subr.bf16.mxu0 0
        %2941 = vmatpush1.bf16.msra.mxu0 0
        %2942 = vmatprep.subr.bf16.mxu0 0
        %2943 = vmatpush1.bf16.msra.mxu0 0
        %2944 = vmatprep.subr.bf16.mxu0 0
        %2945 = vmatpush1.bf16.msra.mxu0 0
        %2946 = vmatprep.subr.bf16.mxu0 0
        %2947 = vmatpush1.bf16.msra.mxu0 0
        %2948 = vmatprep.subr.bf16.mxu0 0
        %2949 = vmatpush1.bf16.msra.mxu0 0
        %2950 = vmatprep.subr.bf16.mxu0 0
        %2951 = vmatpush1.bf16.msra.mxu0 0
        %2952 = vmatprep.subr.bf16.mxu0 0
        %2953 = vmatpush1.bf16.msra.mxu0 %v2936
        %2954 = vmatprep.subr.bf16.mxu0 0
        %2955 = vmatpush2.bf16.msra.mxu0 0
        %2956 = vmatprep.subr.bf16.mxu0 0
        %2957 = vmatpush2.bf16.msra.mxu0 0
        %2958 = vmatprep.subr.bf16.mxu0 0
        %2959 = vmatpush2.bf16.msra.mxu0 0
        %2960 = vmatprep.subr.bf16.mxu0 0
        %2961 = vmatpush2.bf16.msra.mxu0 0
        %2962 = vmatprep.subr.bf16.mxu0 0
        %2963 = vmatpush2.bf16.msra.mxu0 0
        %2964 = vmatprep.subr.bf16.mxu0 0
        %2965 = vmatpush2.bf16.msra.mxu0 0
        %2966 = vmatprep.subr.bf16.mxu0 0
        %2967 = vmatpush2.bf16.msra.mxu0 0
        %2968 = vmatprep.subr.bf16.mxu0 0
        %2969 = vmatpush2.bf16.msra.mxu0 0
        %2970 = vmatprep.mubr.bf16.mxu0 0
        %2971 = vmatmul.mubr.bf16.gmra.mxu0 %v2924
        %v2972 = vpop.f32.mrf.mxu0
        %v2973 = vadd.f32 0.0, %v2972
        %v2974 = vpop.f32.mrf.mxu0
        %v2975 = vpop.f32.mrf.mxu0
        %v2976 = vadd.f32 0.0, %v2975
        %v2977 = vpop.f32.mrf.mxu0
        %2978 = vmatprep.mubr.bf16.mxu0 0
        %2979 = vmatmul.mubr.bf16.gmra.mxu0 %v2927
        %v2980 = vpop.f32.mrf.mxu0
        %v2981 = vadd.f32 0.0, %v2980
        %v2982 = vpop.f32.mrf.mxu0
        %v2983 = vpop.f32.mrf.mxu0
        %v2984 = vadd.f32 0.0, %v2983
        %v2985 = vpop.f32.mrf.mxu0
        %2986 = vmatprep.mubr.bf16.mxu0 0
        %2987 = vmatmul.mubr.bf16.gmra.mxu0 %v2930
        %v2988 = vpop.f32.mrf.mxu0
        %v2989 = vadd.f32 0.0, %v2988
        %v2990 = vpop.f32.mrf.mxu0
        %v2991 = vpop.f32.mrf.mxu0
        %v2992 = vadd.f32 0.0, %v2991
        %v2993 = vpop.f32.mrf.mxu0
        %2994 = vmatprep.mubr.bf16.mxu0 0
        %2995 = vmatmul.mubr.bf16.gmra.mxu0 %v2933
        %v2996 = vpop.f32.mrf.mxu0
        %v2997 = vadd.f32 0.0, %v2996
        %v2998 = vpop.f32.mrf.mxu0
        %v2999 = vpop.f32.mrf.mxu0
        %v3000 = vadd.f32 0.0, %v2999
        %v3001 = vpop.f32.mrf.mxu0
        %3002 = vdwg.mxu0
        %v3003 = vadd.f32 %v2780, %v2973
        %v3004 = vadd.f32 %v2781, %v2976
        %v3005 = vadd.f32 %v2782, %v2981
        %v3006 = vadd.f32 %v2783, %v2984
        %v3007 = vadd.f32 %v2784, %v2989
        %v3008 = vadd.f32 %v2785, %v2992
        %v3009 = vadd.f32 %v2786, %v2997
        %v3010 = vadd.f32 %v2787, %v3000
        %3011 = vset.pattern.permute.xlu0 12
        %3012 = vperm.xlu0 %3011, %v315
        %v3013 = vpop.permute.xlu0 %3012
        %3014 = vset.pattern.permute.xlu0 12
        %3015 = vperm.xlu0 %3014, %v316
        %v3016 = vpop.permute.xlu0 %3015
        %3017 = vset.pattern.permute.xlu0 12
        %3018 = vperm.xlu0 %3017, %v317
        %v3019 = vpop.permute.xlu0 %3018
        %3020 = vset.pattern.permute.xlu0 12
        %3021 = vperm.xlu0 %3020, %v318
        %v3022 = vpop.permute.xlu0 %3021
        %3023 = vset.pattern.permute.xlu0 12
        %3024 = vperm.xlu0 %3023, %v319
        %v3025 = vpop.permute.xlu0 %3024
        %3026 = vset.pattern.permute.xlu0 12
        %3027 = vperm.xlu0 %3026, %v320
        %v3028 = vpop.permute.xlu0 %3027
        %3029 = vset.pattern.permute.xlu0 12
        %3030 = vperm.xlu0 %3029, %v321
        %v3031 = vpop.permute.xlu0 %3030
        %3032 = vset.pattern.permute.xlu0 12
        %3033 = vperm.xlu0 %3032, %v322
        %v3034 = vpop.permute.xlu0 %3033
        %vm3035 = vcmp.eq.s32.totalorder %v3013, %v324
        %vm3036 = vcmp.eq.s32.totalorder %v3016, %v324
        %vm3037 = vcmp.eq.s32.totalorder %v3019, %v324
        %vm3038 = vcmp.eq.s32.totalorder %v3022, %v324
        %vm3039 = vcmp.eq.s32.totalorder %v3025, %v324
        %vm3040 = vcmp.eq.s32.totalorder %v3028, %v324
        %vm3041 = vcmp.eq.s32.totalorder %v3031, %v324
        %vm3042 = vcmp.eq.s32.totalorder %v3034, %v324
        %v3043 = vsel %vm3035, 1, 0
        %v3044 = vsel %vm3036, 1, 0
        %v3045 = vsel %vm3037, 1, 0
        %v3046 = vsel %vm3038, 1, 0
        %v3047 = vsel %vm3039, 1, 0
        %v3048 = vsel %vm3040, 1, 0
        %v3049 = vsel %vm3041, 1, 0
        %v3050 = vsel %vm3042, 1, 0
        %v3051 = vcvt.s32.f32 %v3043
        %v3052 = vcvt.s32.f32 %v3044
        %v3053 = vcvt.s32.f32 %v3045
        %v3054 = vcvt.s32.f32 %v3046
        %v3055 = vcvt.s32.f32 %v3047
        %v3056 = vcvt.s32.f32 %v3048
        %v3057 = vcvt.s32.f32 %v3049
        %v3058 = vcvt.s32.f32 %v3050
        %v3059 = vpack.c.bf16 %v3052, %v3051
        %v3060 = vpack.c.bf16 %v3054, %v3053
        %v3061 = vpack.c.bf16 %v3056, %v3055
        %v3062 = vpack.c.bf16 %v3058, %v3057
        %v3064 = vsel %vm401, %v3059, 0
        %v3067 = vsel %vm401, %v3060, 0
        %v3070 = vsel %vm401, %v3061, 0
        %v3073 = vsel %vm401, %v3062, 0
        %3075 = vmatprep.subr.bf16.mxu0 0
        %3076 = vmatpush1.bf16.msra.mxu0 0
        %3077 = vmatprep.subr.bf16.mxu0 0
        %3078 = vmatpush1.bf16.msra.mxu0 0
        %3079 = vmatprep.subr.bf16.mxu0 0
        %3080 = vmatpush1.bf16.msra.mxu0 0
        %3081 = vmatprep.subr.bf16.mxu0 0
        %3082 = vmatpush1.bf16.msra.mxu0 0
        %3083 = vmatprep.subr.bf16.mxu0 0
        %3084 = vmatpush1.bf16.msra.mxu0 %v396
        %3085 = vmatprep.subr.bf16.mxu0 0
        %3086 = vmatpush1.bf16.msra.mxu0 %v395
        %3087 = vmatprep.subr.bf16.mxu0 0
        %3088 = vmatpush1.bf16.msra.mxu0 %v394
        %3089 = vmatprep.subr.bf16.mxu0 0
        %3090 = vmatpush1.bf16.msra.mxu0 %v393
        %3091 = vmatprep.subr.bf16.mxu0 0
        %3092 = vmatpush2.bf16.msra.mxu0 0
        %3093 = vmatprep.subr.bf16.mxu0 0
        %3094 = vmatpush2.bf16.msra.mxu0 0
        %3095 = vmatprep.subr.bf16.mxu0 0
        %3096 = vmatpush2.bf16.msra.mxu0 0
        %3097 = vmatprep.subr.bf16.mxu0 0
        %3098 = vmatpush2.bf16.msra.mxu0 0
        %3099 = vmatprep.subr.bf16.mxu0 0
        %3100 = vmatpush2.bf16.msra.mxu0 0
        %3101 = vmatprep.subr.bf16.mxu0 0
        %3102 = vmatpush2.bf16.msra.mxu0 0
        %3103 = vmatprep.subr.bf16.mxu0 0
        %3104 = vmatpush2.bf16.msra.mxu0 0
        %3105 = vmatprep.subr.bf16.mxu0 0
        %3106 = vmatpush2.bf16.msra.mxu0 0
        %3107 = vmatprep.mubr.bf16.mxu0 0
        %3108 = vmatmul.mubr.bf16.gmra.mxu0 %v3064
        %v3109 = vpop.f32.mrf.mxu0
        %v3110 = vadd.f32 0.0, %v3109
        %v3111 = vpop.f32.mrf.mxu0
        %v3112 = vpop.f32.mrf.mxu0
        %v3113 = vadd.f32 0.0, %v3112
        %v3114 = vpop.f32.mrf.mxu0
        %3115 = vmatprep.mubr.bf16.mxu0 0
        %3116 = vmatmul.mubr.bf16.gmra.mxu0 %v3067
        %v3117 = vpop.f32.mrf.mxu0
        %v3118 = vadd.f32 0.0, %v3117
        %v3119 = vpop.f32.mrf.mxu0
        %v3120 = vpop.f32.mrf.mxu0
        %v3121 = vadd.f32 0.0, %v3120
        %v3122 = vpop.f32.mrf.mxu0
        %3123 = vmatprep.mubr.bf16.mxu0 0
        %3124 = vmatmul.mubr.bf16.gmra.mxu0 %v3070
        %v3125 = vpop.f32.mrf.mxu0
        %v3126 = vadd.f32 0.0, %v3125
        %v3127 = vpop.f32.mrf.mxu0
        %v3128 = vpop.f32.mrf.mxu0
        %v3129 = vadd.f32 0.0, %v3128
        %v3130 = vpop.f32.mrf.mxu0
        %3131 = vmatprep.mubr.bf16.mxu0 0
        %3132 = vmatmul.mubr.bf16.gmra.mxu0 %v3073
        %v3133 = vpop.f32.mrf.mxu0
        %v3134 = vadd.f32 0.0, %v3133
        %v3135 = vpop.f32.mrf.mxu0
        %v3136 = vpop.f32.mrf.mxu0
        %v3137 = vadd.f32 0.0, %v3136
        %v3138 = vpop.f32.mrf.mxu0
        %3139 = vdwg.mxu0
        %v3140 = vpack.c.bf16 %v3113, %v3110
        %v3141 = vpack.c.bf16 %v3121, %v3118
        %v3142 = vpack.c.bf16 %v3129, %v3126
        %v3143 = vpack.c.bf16 %v3137, %v3134
        %s3144 = scalar_lea.vmem %s3, 24
        %v3145 = vld [vmem:[%s3144] sm:$0x3]
        %v3147 = vsel %vm619, %v3140, 0
        %v3150 = vsel %vm619, %v3141, 0
        %v3153 = vsel %vm619, %v3142, 0
        %v3156 = vsel %vm619, %v3143, 0
        %v3159 = vsel %vm632, %v3145, 0
        %3161 = vmatprep.subr.bf16.mxu0 0
        %3162 = vmatpush1.bf16.msra.mxu0 0
        %3163 = vmatprep.subr.bf16.mxu0 0
        %3164 = vmatpush1.bf16.msra.mxu0 0
        %3165 = vmatprep.subr.bf16.mxu0 0
        %3166 = vmatpush1.bf16.msra.mxu0 0
        %3167 = vmatprep.subr.bf16.mxu0 0
        %3168 = vmatpush1.bf16.msra.mxu0 0
        %3169 = vmatprep.subr.bf16.mxu0 0
        %3170 = vmatpush1.bf16.msra.mxu0 0
        %3171 = vmatprep.subr.bf16.mxu0 0
        %3172 = vmatpush1.bf16.msra.mxu0 0
        %3173 = vmatprep.subr.bf16.mxu0 0
        %3174 = vmatpush1.bf16.msra.mxu0 0
        %3175 = vmatprep.subr.bf16.mxu0 0
        %3176 = vmatpush1.bf16.msra.mxu0 %v3159
        %3177 = vmatprep.subr.bf16.mxu0 0
        %3178 = vmatpush2.bf16.msra.mxu0 0
        %3179 = vmatprep.subr.bf16.mxu0 0
        %3180 = vmatpush2.bf16.msra.mxu0 0
        %3181 = vmatprep.subr.bf16.mxu0 0
        %3182 = vmatpush2.bf16.msra.mxu0 0
        %3183 = vmatprep.subr.bf16.mxu0 0
        %3184 = vmatpush2.bf16.msra.mxu0 0
        %3185 = vmatprep.subr.bf16.mxu0 0
        %3186 = vmatpush2.bf16.msra.mxu0 0
        %3187 = vmatprep.subr.bf16.mxu0 0
        %3188 = vmatpush2.bf16.msra.mxu0 0
        %3189 = vmatprep.subr.bf16.mxu0 0
        %3190 = vmatpush2.bf16.msra.mxu0 0
        %3191 = vmatprep.subr.bf16.mxu0 0
        %3192 = vmatpush2.bf16.msra.mxu0 0
        %3193 = vmatprep.mubr.bf16.mxu0 0
        %3194 = vmatmul.mubr.bf16.gmra.mxu0 %v3147
        %v3195 = vpop.f32.mrf.mxu0
        %v3196 = vadd.f32 0.0, %v3195
        %v3197 = vpop.f32.mrf.mxu0
        %v3198 = vpop.f32.mrf.mxu0
        %v3199 = vadd.f32 0.0, %v3198
        %v3200 = vpop.f32.mrf.mxu0
        %3201 = vmatprep.mubr.bf16.mxu0 0
        %3202 = vmatmul.mubr.bf16.gmra.mxu0 %v3150
        %v3203 = vpop.f32.mrf.mxu0
        %v3204 = vadd.f32 0.0, %v3203
        %v3205 = vpop.f32.mrf.mxu0
        %v3206 = vpop.f32.mrf.mxu0
        %v3207 = vadd.f32 0.0, %v3206
        %v3208 = vpop.f32.mrf.mxu0
        %3209 = vmatprep.mubr.bf16.mxu0 0
        %3210 = vmatmul.mubr.bf16.gmra.mxu0 %v3153
        %v3211 = vpop.f32.mrf.mxu0
        %v3212 = vadd.f32 0.0, %v3211
        %v3213 = vpop.f32.mrf.mxu0
        %v3214 = vpop.f32.mrf.mxu0
        %v3215 = vadd.f32 0.0, %v3214
        %v3216 = vpop.f32.mrf.mxu0
        %3217 = vmatprep.mubr.bf16.mxu0 0
        %3218 = vmatmul.mubr.bf16.gmra.mxu0 %v3156
        %v3219 = vpop.f32.mrf.mxu0
        %v3220 = vadd.f32 0.0, %v3219
        %v3221 = vpop.f32.mrf.mxu0
        %v3222 = vpop.f32.mrf.mxu0
        %v3223 = vadd.f32 0.0, %v3222
        %v3224 = vpop.f32.mrf.mxu0
        %3225 = vdwg.mxu0
        %v3226 = vadd.f32 %v3003, %v3196
        %v3227 = vadd.f32 %v3004, %v3199
        %v3228 = vadd.f32 %v3005, %v3204
        %v3229 = vadd.f32 %v3006, %v3207
        %v3230 = vadd.f32 %v3007, %v3212
        %v3231 = vadd.f32 %v3008, %v3215
        %v3232 = vadd.f32 %v3009, %v3220
        %v3233 = vadd.f32 %v3010, %v3223
        %3234 = vset.pattern.permute.xlu0 13
        %3235 = vperm.xlu0 %3234, %v315
        %v3236 = vpop.permute.xlu0 %3235
        %3237 = vset.pattern.permute.xlu0 13
        %3238 = vperm.xlu0 %3237, %v316
        %v3239 = vpop.permute.xlu0 %3238
        %3240 = vset.pattern.permute.xlu0 13
        %3241 = vperm.xlu0 %3240, %v317
        %v3242 = vpop.permute.xlu0 %3241
        %3243 = vset.pattern.permute.xlu0 13
        %3244 = vperm.xlu0 %3243, %v318
        %v3245 = vpop.permute.xlu0 %3244
        %3246 = vset.pattern.permute.xlu0 13
        %3247 = vperm.xlu0 %3246, %v319
        %v3248 = vpop.permute.xlu0 %3247
        %3249 = vset.pattern.permute.xlu0 13
        %3250 = vperm.xlu0 %3249, %v320
        %v3251 = vpop.permute.xlu0 %3250
        %3252 = vset.pattern.permute.xlu0 13
        %3253 = vperm.xlu0 %3252, %v321
        %v3254 = vpop.permute.xlu0 %3253
        %3255 = vset.pattern.permute.xlu0 13
        %3256 = vperm.xlu0 %3255, %v322
        %v3257 = vpop.permute.xlu0 %3256
        %vm3258 = vcmp.eq.s32.totalorder %v3236, %v324
        %vm3259 = vcmp.eq.s32.totalorder %v3239, %v324
        %vm3260 = vcmp.eq.s32.totalorder %v3242, %v324
        %vm3261 = vcmp.eq.s32.totalorder %v3245, %v324
        %vm3262 = vcmp.eq.s32.totalorder %v3248, %v324
        %vm3263 = vcmp.eq.s32.totalorder %v3251, %v324
        %vm3264 = vcmp.eq.s32.totalorder %v3254, %v324
        %vm3265 = vcmp.eq.s32.totalorder %v3257, %v324
        %v3266 = vsel %vm3258, 1, 0
        %v3267 = vsel %vm3259, 1, 0
        %v3268 = vsel %vm3260, 1, 0
        %v3269 = vsel %vm3261, 1, 0
        %v3270 = vsel %vm3262, 1, 0
        %v3271 = vsel %vm3263, 1, 0
        %v3272 = vsel %vm3264, 1, 0
        %v3273 = vsel %vm3265, 1, 0
        %v3274 = vcvt.s32.f32 %v3266
        %v3275 = vcvt.s32.f32 %v3267
        %v3276 = vcvt.s32.f32 %v3268
        %v3277 = vcvt.s32.f32 %v3269
        %v3278 = vcvt.s32.f32 %v3270
        %v3279 = vcvt.s32.f32 %v3271
        %v3280 = vcvt.s32.f32 %v3272
        %v3281 = vcvt.s32.f32 %v3273
        %v3282 = vpack.c.bf16 %v3275, %v3274
        %v3283 = vpack.c.bf16 %v3277, %v3276
        %v3284 = vpack.c.bf16 %v3279, %v3278
        %v3285 = vpack.c.bf16 %v3281, %v3280
        %v3287 = vsel %vm401, %v3282, 0
        %v3290 = vsel %vm401, %v3283, 0
        %v3293 = vsel %vm401, %v3284, 0
        %v3296 = vsel %vm401, %v3285, 0
        %3298 = vmatprep.subr.bf16.mxu0 0
        %3299 = vmatpush1.bf16.msra.mxu0 0
        %3300 = vmatprep.subr.bf16.mxu0 0
        %3301 = vmatpush1.bf16.msra.mxu0 0
        %3302 = vmatprep.subr.bf16.mxu0 0
        %3303 = vmatpush1.bf16.msra.mxu0 0
        %3304 = vmatprep.subr.bf16.mxu0 0
        %3305 = vmatpush1.bf16.msra.mxu0 0
        %3306 = vmatprep.subr.bf16.mxu0 0
        %3307 = vmatpush1.bf16.msra.mxu0 %v396
        %3308 = vmatprep.subr.bf16.mxu0 0
        %3309 = vmatpush1.bf16.msra.mxu0 %v395
        %3310 = vmatprep.subr.bf16.mxu0 0
        %3311 = vmatpush1.bf16.msra.mxu0 %v394
        %3312 = vmatprep.subr.bf16.mxu0 0
        %3313 = vmatpush1.bf16.msra.mxu0 %v393
        %3314 = vmatprep.subr.bf16.mxu0 0
        %3315 = vmatpush2.bf16.msra.mxu0 0
        %3316 = vmatprep.subr.bf16.mxu0 0
        %3317 = vmatpush2.bf16.msra.mxu0 0
        %3318 = vmatprep.subr.bf16.mxu0 0
        %3319 = vmatpush2.bf16.msra.mxu0 0
        %3320 = vmatprep.subr.bf16.mxu0 0
        %3321 = vmatpush2.bf16.msra.mxu0 0
        %3322 = vmatprep.subr.bf16.mxu0 0
        %3323 = vmatpush2.bf16.msra.mxu0 0
        %3324 = vmatprep.subr.bf16.mxu0 0
        %3325 = vmatpush2.bf16.msra.mxu0 0
        %3326 = vmatprep.subr.bf16.mxu0 0
        %3327 = vmatpush2.bf16.msra.mxu0 0
        %3328 = vmatprep.subr.bf16.mxu0 0
        %3329 = vmatpush2.bf16.msra.mxu0 0
        %3330 = vmatprep.mubr.bf16.mxu0 0
        %3331 = vmatmul.mubr.bf16.gmra.mxu0 %v3287
        %v3332 = vpop.f32.mrf.mxu0
        %v3333 = vadd.f32 0.0, %v3332
        %v3334 = vpop.f32.mrf.mxu0
        %v3335 = vpop.f32.mrf.mxu0
        %v3336 = vadd.f32 0.0, %v3335
        %v3337 = vpop.f32.mrf.mxu0
        %3338 = vmatprep.mubr.bf16.mxu0 0
        %3339 = vmatmul.mubr.bf16.gmra.mxu0 %v3290
        %v3340 = vpop.f32.mrf.mxu0
        %v3341 = vadd.f32 0.0, %v3340
        %v3342 = vpop.f32.mrf.mxu0
        %v3343 = vpop.f32.mrf.mxu0
        %v3344 = vadd.f32 0.0, %v3343
        %v3345 = vpop.f32.mrf.mxu0
        %3346 = vmatprep.mubr.bf16.mxu0 0
        %3347 = vmatmul.mubr.bf16.gmra.mxu0 %v3293
        %v3348 = vpop.f32.mrf.mxu0
        %v3349 = vadd.f32 0.0, %v3348
        %v3350 = vpop.f32.mrf.mxu0
        %v3351 = vpop.f32.mrf.mxu0
        %v3352 = vadd.f32 0.0, %v3351
        %v3353 = vpop.f32.mrf.mxu0
        %3354 = vmatprep.mubr.bf16.mxu0 0
        %3355 = vmatmul.mubr.bf16.gmra.mxu0 %v3296
        %v3356 = vpop.f32.mrf.mxu0
        %v3357 = vadd.f32 0.0, %v3356
        %v3358 = vpop.f32.mrf.mxu0
        %v3359 = vpop.f32.mrf.mxu0
        %v3360 = vadd.f32 0.0, %v3359
        %v3361 = vpop.f32.mrf.mxu0
        %3362 = vdwg.mxu0
        %v3363 = vpack.c.bf16 %v3336, %v3333
        %v3364 = vpack.c.bf16 %v3344, %v3341
        %v3365 = vpack.c.bf16 %v3352, %v3349
        %v3366 = vpack.c.bf16 %v3360, %v3357
        %s3367 = scalar_lea.vmem %s3, 26
        %v3368 = vld [vmem:[%s3367] sm:$0x3]
        %v3370 = vsel %vm619, %v3363, 0
        %v3373 = vsel %vm619, %v3364, 0
        %v3376 = vsel %vm619, %v3365, 0
        %v3379 = vsel %vm619, %v3366, 0
        %v3382 = vsel %vm632, %v3368, 0
        %3384 = vmatprep.subr.bf16.mxu0 0
        %3385 = vmatpush1.bf16.msra.mxu0 0
        %3386 = vmatprep.subr.bf16.mxu0 0
        %3387 = vmatpush1.bf16.msra.mxu0 0
        %3388 = vmatprep.subr.bf16.mxu0 0
        %3389 = vmatpush1.bf16.msra.mxu0 0
        %3390 = vmatprep.subr.bf16.mxu0 0
        %3391 = vmatpush1.bf16.msra.mxu0 0
        %3392 = vmatprep.subr.bf16.mxu0 0
        %3393 = vmatpush1.bf16.msra.mxu0 0
        %3394 = vmatprep.subr.bf16.mxu0 0
        %3395 = vmatpush1.bf16.msra.mxu0 0
        %3396 = vmatprep.subr.bf16.mxu0 0
        %3397 = vmatpush1.bf16.msra.mxu0 0
        %3398 = vmatprep.subr.bf16.mxu0 0
        %3399 = vmatpush1.bf16.msra.mxu0 %v3382
        %3400 = vmatprep.subr.bf16.mxu0 0
        %3401 = vmatpush2.bf16.msra.mxu0 0
        %3402 = vmatprep.subr.bf16.mxu0 0
        %3403 = vmatpush2.bf16.msra.mxu0 0
        %3404 = vmatprep.subr.bf16.mxu0 0
        %3405 = vmatpush2.bf16.msra.mxu0 0
        %3406 = vmatprep.subr.bf16.mxu0 0
        %3407 = vmatpush2.bf16.msra.mxu0 0
        %3408 = vmatprep.subr.bf16.mxu0 0
        %3409 = vmatpush2.bf16.msra.mxu0 0
        %3410 = vmatprep.subr.bf16.mxu0 0
        %3411 = vmatpush2.bf16.msra.mxu0 0
        %3412 = vmatprep.subr.bf16.mxu0 0
        %3413 = vmatpush2.bf16.msra.mxu0 0
        %3414 = vmatprep.subr.bf16.mxu0 0
        %3415 = vmatpush2.bf16.msra.mxu0 0
        %3416 = vmatprep.mubr.bf16.mxu0 0
        %3417 = vmatmul.mubr.bf16.gmra.mxu0 %v3370
        %v3418 = vpop.f32.mrf.mxu0
        %v3419 = vadd.f32 0.0, %v3418
        %v3420 = vpop.f32.mrf.mxu0
        %v3421 = vpop.f32.mrf.mxu0
        %v3422 = vadd.f32 0.0, %v3421
        %v3423 = vpop.f32.mrf.mxu0
        %3424 = vmatprep.mubr.bf16.mxu0 0
        %3425 = vmatmul.mubr.bf16.gmra.mxu0 %v3373
        %v3426 = vpop.f32.mrf.mxu0
        %v3427 = vadd.f32 0.0, %v3426
        %v3428 = vpop.f32.mrf.mxu0
        %v3429 = vpop.f32.mrf.mxu0
        %v3430 = vadd.f32 0.0, %v3429
        %v3431 = vpop.f32.mrf.mxu0
        %3432 = vmatprep.mubr.bf16.mxu0 0
        %3433 = vmatmul.mubr.bf16.gmra.mxu0 %v3376
        %v3434 = vpop.f32.mrf.mxu0
        %v3435 = vadd.f32 0.0, %v3434
        %v3436 = vpop.f32.mrf.mxu0
        %v3437 = vpop.f32.mrf.mxu0
        %v3438 = vadd.f32 0.0, %v3437
        %v3439 = vpop.f32.mrf.mxu0
        %3440 = vmatprep.mubr.bf16.mxu0 0
        %3441 = vmatmul.mubr.bf16.gmra.mxu0 %v3379
        %v3442 = vpop.f32.mrf.mxu0
        %v3443 = vadd.f32 0.0, %v3442
        %v3444 = vpop.f32.mrf.mxu0
        %v3445 = vpop.f32.mrf.mxu0
        %v3446 = vadd.f32 0.0, %v3445
        %v3447 = vpop.f32.mrf.mxu0
        %3448 = vdwg.mxu0
        %v3449 = vadd.f32 %v3226, %v3419
        %v3450 = vadd.f32 %v3227, %v3422
        %v3451 = vadd.f32 %v3228, %v3427
        %v3452 = vadd.f32 %v3229, %v3430
        %v3453 = vadd.f32 %v3230, %v3435
        %v3454 = vadd.f32 %v3231, %v3438
        %v3455 = vadd.f32 %v3232, %v3443
        %v3456 = vadd.f32 %v3233, %v3446
        %3457 = vset.pattern.permute.xlu0 14
        %3458 = vperm.xlu0 %3457, %v315
        %v3459 = vpop.permute.xlu0 %3458
        %3460 = vset.pattern.permute.xlu0 14
        %3461 = vperm.xlu0 %3460, %v316
        %v3462 = vpop.permute.xlu0 %3461
        %3463 = vset.pattern.permute.xlu0 14
        %3464 = vperm.xlu0 %3463, %v317
        %v3465 = vpop.permute.xlu0 %3464
        %3466 = vset.pattern.permute.xlu0 14
        %3467 = vperm.xlu0 %3466, %v318
        %v3468 = vpop.permute.xlu0 %3467
        %3469 = vset.pattern.permute.xlu0 14
        %3470 = vperm.xlu0 %3469, %v319
        %v3471 = vpop.permute.xlu0 %3470
        %3472 = vset.pattern.permute.xlu0 14
        %3473 = vperm.xlu0 %3472, %v320
        %v3474 = vpop.permute.xlu0 %3473
        %3475 = vset.pattern.permute.xlu0 14
        %3476 = vperm.xlu0 %3475, %v321
        %v3477 = vpop.permute.xlu0 %3476
        %3478 = vset.pattern.permute.xlu0 14
        %3479 = vperm.xlu0 %3478, %v322
        %v3480 = vpop.permute.xlu0 %3479
        %vm3481 = vcmp.eq.s32.totalorder %v3459, %v324
        %vm3482 = vcmp.eq.s32.totalorder %v3462, %v324
        %vm3483 = vcmp.eq.s32.totalorder %v3465, %v324
        %vm3484 = vcmp.eq.s32.totalorder %v3468, %v324
        %vm3485 = vcmp.eq.s32.totalorder %v3471, %v324
        %vm3486 = vcmp.eq.s32.totalorder %v3474, %v324
        %vm3487 = vcmp.eq.s32.totalorder %v3477, %v324
        %vm3488 = vcmp.eq.s32.totalorder %v3480, %v324
        %v3489 = vsel %vm3481, 1, 0
        %v3490 = vsel %vm3482, 1, 0
        %v3491 = vsel %vm3483, 1, 0
        %v3492 = vsel %vm3484, 1, 0
        %v3493 = vsel %vm3485, 1, 0
        %v3494 = vsel %vm3486, 1, 0
        %v3495 = vsel %vm3487, 1, 0
        %v3496 = vsel %vm3488, 1, 0
        %v3497 = vcvt.s32.f32 %v3489
        %v3498 = vcvt.s32.f32 %v3490
        %v3499 = vcvt.s32.f32 %v3491
        %v3500 = vcvt.s32.f32 %v3492
        %v3501 = vcvt.s32.f32 %v3493
        %v3502 = vcvt.s32.f32 %v3494
        %v3503 = vcvt.s32.f32 %v3495
        %v3504 = vcvt.s32.f32 %v3496
        %v3505 = vpack.c.bf16 %v3498, %v3497
        %v3506 = vpack.c.bf16 %v3500, %v3499
        %v3507 = vpack.c.bf16 %v3502, %v3501
        %v3508 = vpack.c.bf16 %v3504, %v3503
        %v3510 = vsel %vm401, %v3505, 0
        %v3513 = vsel %vm401, %v3506, 0
        %v3516 = vsel %vm401, %v3507, 0
        %v3519 = vsel %vm401, %v3508, 0
        %3521 = vmatprep.subr.bf16.mxu0 0
        %3522 = vmatpush1.bf16.msra.mxu0 0
        %3523 = vmatprep.subr.bf16.mxu0 0
        %3524 = vmatpush1.bf16.msra.mxu0 0
        %3525 = vmatprep.subr.bf16.mxu0 0
        %3526 = vmatpush1.bf16.msra.mxu0 0
        %3527 = vmatprep.subr.bf16.mxu0 0
        %3528 = vmatpush1.bf16.msra.mxu0 0
        %3529 = vmatprep.subr.bf16.mxu0 0
        %3530 = vmatpush1.bf16.msra.mxu0 %v396
        %3531 = vmatprep.subr.bf16.mxu0 0
        %3532 = vmatpush1.bf16.msra.mxu0 %v395
        %3533 = vmatprep.subr.bf16.mxu0 0
        %3534 = vmatpush1.bf16.msra.mxu0 %v394
        %3535 = vmatprep.subr.bf16.mxu0 0
        %3536 = vmatpush1.bf16.msra.mxu0 %v393
        %3537 = vmatprep.subr.bf16.mxu0 0
        %3538 = vmatpush2.bf16.msra.mxu0 0
        %3539 = vmatprep.subr.bf16.mxu0 0
        %3540 = vmatpush2.bf16.msra.mxu0 0
        %3541 = vmatprep.subr.bf16.mxu0 0
        %3542 = vmatpush2.bf16.msra.mxu0 0
        %3543 = vmatprep.subr.bf16.mxu0 0
        %3544 = vmatpush2.bf16.msra.mxu0 0
        %3545 = vmatprep.subr.bf16.mxu0 0
        %3546 = vmatpush2.bf16.msra.mxu0 0
        %3547 = vmatprep.subr.bf16.mxu0 0
        %3548 = vmatpush2.bf16.msra.mxu0 0
        %3549 = vmatprep.subr.bf16.mxu0 0
        %3550 = vmatpush2.bf16.msra.mxu0 0
        %3551 = vmatprep.subr.bf16.mxu0 0
        %3552 = vmatpush2.bf16.msra.mxu0 0
        %3553 = vmatprep.mubr.bf16.mxu0 0
        %3554 = vmatmul.mubr.bf16.gmra.mxu0 %v3510
        %v3555 = vpop.f32.mrf.mxu0
        %v3556 = vadd.f32 0.0, %v3555
        %v3557 = vpop.f32.mrf.mxu0
        %v3558 = vpop.f32.mrf.mxu0
        %v3559 = vadd.f32 0.0, %v3558
        %v3560 = vpop.f32.mrf.mxu0
        %3561 = vmatprep.mubr.bf16.mxu0 0
        %3562 = vmatmul.mubr.bf16.gmra.mxu0 %v3513
        %v3563 = vpop.f32.mrf.mxu0
        %v3564 = vadd.f32 0.0, %v3563
        %v3565 = vpop.f32.mrf.mxu0
        %v3566 = vpop.f32.mrf.mxu0
        %v3567 = vadd.f32 0.0, %v3566
        %v3568 = vpop.f32.mrf.mxu0
        %3569 = vmatprep.mubr.bf16.mxu0 0
        %3570 = vmatmul.mubr.bf16.gmra.mxu0 %v3516
        %v3571 = vpop.f32.mrf.mxu0
        %v3572 = vadd.f32 0.0, %v3571
        %v3573 = vpop.f32.mrf.mxu0
        %v3574 = vpop.f32.mrf.mxu0
        %v3575 = vadd.f32 0.0, %v3574
        %v3576 = vpop.f32.mrf.mxu0
        %3577 = vmatprep.mubr.bf16.mxu0 0
        %3578 = vmatmul.mubr.bf16.gmra.mxu0 %v3519
        %v3579 = vpop.f32.mrf.mxu0
        %v3580 = vadd.f32 0.0, %v3579
        %v3581 = vpop.f32.mrf.mxu0
        %v3582 = vpop.f32.mrf.mxu0
        %v3583 = vadd.f32 0.0, %v3582
        %v3584 = vpop.f32.mrf.mxu0
        %3585 = vdwg.mxu0
        %v3586 = vpack.c.bf16 %v3559, %v3556
        %v3587 = vpack.c.bf16 %v3567, %v3564
        %v3588 = vpack.c.bf16 %v3575, %v3572
        %v3589 = vpack.c.bf16 %v3583, %v3580
        %s3590 = scalar_lea.vmem %s3, 28
        %v3591 = vld [vmem:[%s3590] sm:$0x3]
        %v3593 = vsel %vm619, %v3586, 0
        %v3596 = vsel %vm619, %v3587, 0
        %v3599 = vsel %vm619, %v3588, 0
        %v3602 = vsel %vm619, %v3589, 0
        %v3605 = vsel %vm632, %v3591, 0
        %3607 = vmatprep.subr.bf16.mxu0 0
        %3608 = vmatpush1.bf16.msra.mxu0 0
        %3609 = vmatprep.subr.bf16.mxu0 0
        %3610 = vmatpush1.bf16.msra.mxu0 0
        %3611 = vmatprep.subr.bf16.mxu0 0
        %3612 = vmatpush1.bf16.msra.mxu0 0
        %3613 = vmatprep.subr.bf16.mxu0 0
        %3614 = vmatpush1.bf16.msra.mxu0 0
        %3615 = vmatprep.subr.bf16.mxu0 0
        %3616 = vmatpush1.bf16.msra.mxu0 0
        %3617 = vmatprep.subr.bf16.mxu0 0
        %3618 = vmatpush1.bf16.msra.mxu0 0
        %3619 = vmatprep.subr.bf16.mxu0 0
        %3620 = vmatpush1.bf16.msra.mxu0 0
        %3621 = vmatprep.subr.bf16.mxu0 0
        %3622 = vmatpush1.bf16.msra.mxu0 %v3605
        %3623 = vmatprep.subr.bf16.mxu0 0
        %3624 = vmatpush2.bf16.msra.mxu0 0
        %3625 = vmatprep.subr.bf16.mxu0 0
        %3626 = vmatpush2.bf16.msra.mxu0 0
        %3627 = vmatprep.subr.bf16.mxu0 0
        %3628 = vmatpush2.bf16.msra.mxu0 0
        %3629 = vmatprep.subr.bf16.mxu0 0
        %3630 = vmatpush2.bf16.msra.mxu0 0
        %3631 = vmatprep.subr.bf16.mxu0 0
        %3632 = vmatpush2.bf16.msra.mxu0 0
        %3633 = vmatprep.subr.bf16.mxu0 0
        %3634 = vmatpush2.bf16.msra.mxu0 0
        %3635 = vmatprep.subr.bf16.mxu0 0
        %3636 = vmatpush2.bf16.msra.mxu0 0
        %3637 = vmatprep.subr.bf16.mxu0 0
        %3638 = vmatpush2.bf16.msra.mxu0 0
        %3639 = vmatprep.mubr.bf16.mxu0 0
        %3640 = vmatmul.mubr.bf16.gmra.mxu0 %v3593
        %v3641 = vpop.f32.mrf.mxu0
        %v3642 = vadd.f32 0.0, %v3641
        %v3643 = vpop.f32.mrf.mxu0
        %v3644 = vpop.f32.mrf.mxu0
        %v3645 = vadd.f32 0.0, %v3644
        %v3646 = vpop.f32.mrf.mxu0
        %3647 = vmatprep.mubr.bf16.mxu0 0
        %3648 = vmatmul.mubr.bf16.gmra.mxu0 %v3596
        %v3649 = vpop.f32.mrf.mxu0
        %v3650 = vadd.f32 0.0, %v3649
        %v3651 = vpop.f32.mrf.mxu0
        %v3652 = vpop.f32.mrf.mxu0
        %v3653 = vadd.f32 0.0, %v3652
        %v3654 = vpop.f32.mrf.mxu0
        %3655 = vmatprep.mubr.bf16.mxu0 0
        %3656 = vmatmul.mubr.bf16.gmra.mxu0 %v3599
        %v3657 = vpop.f32.mrf.mxu0
        %v3658 = vadd.f32 0.0, %v3657
        %v3659 = vpop.f32.mrf.mxu0
        %v3660 = vpop.f32.mrf.mxu0
        %v3661 = vadd.f32 0.0, %v3660
        %v3662 = vpop.f32.mrf.mxu0
        %3663 = vmatprep.mubr.bf16.mxu0 0
        %3664 = vmatmul.mubr.bf16.gmra.mxu0 %v3602
        %v3665 = vpop.f32.mrf.mxu0
        %v3666 = vadd.f32 0.0, %v3665
        %v3667 = vpop.f32.mrf.mxu0
        %v3668 = vpop.f32.mrf.mxu0
        %v3669 = vadd.f32 0.0, %v3668
        %v3670 = vpop.f32.mrf.mxu0
        %3671 = vdwg.mxu0
        %v3672 = vadd.f32 %v3449, %v3642
        %v3673 = vadd.f32 %v3450, %v3645
        %v3674 = vadd.f32 %v3451, %v3650
        %v3675 = vadd.f32 %v3452, %v3653
        %v3676 = vadd.f32 %v3453, %v3658
        %v3677 = vadd.f32 %v3454, %v3661
        %v3678 = vadd.f32 %v3455, %v3666
        %v3679 = vadd.f32 %v3456, %v3669
        %3680 = vset.pattern.permute.xlu0 15
        %3681 = vperm.xlu0 %3680, %v315
        %v3682 = vpop.permute.xlu0 %3681
        %3683 = vset.pattern.permute.xlu0 15
        %3684 = vperm.xlu0 %3683, %v316
        %v3685 = vpop.permute.xlu0 %3684
        %3686 = vset.pattern.permute.xlu0 15
        %3687 = vperm.xlu0 %3686, %v317
        %v3688 = vpop.permute.xlu0 %3687
        %3689 = vset.pattern.permute.xlu0 15
        %3690 = vperm.xlu0 %3689, %v318
        %v3691 = vpop.permute.xlu0 %3690
        %3692 = vset.pattern.permute.xlu0 15
        %3693 = vperm.xlu0 %3692, %v319
        %v3694 = vpop.permute.xlu0 %3693
        %3695 = vset.pattern.permute.xlu0 15
        %3696 = vperm.xlu0 %3695, %v320
        %v3697 = vpop.permute.xlu0 %3696
        %3698 = vset.pattern.permute.xlu0 15
        %3699 = vperm.xlu0 %3698, %v321
        %v3700 = vpop.permute.xlu0 %3699
        %3701 = vset.pattern.permute.xlu0 15
        %3702 = vperm.xlu0 %3701, %v322
        %v3703 = vpop.permute.xlu0 %3702
        %vm3704 = vcmp.eq.s32.totalorder %v3682, %v324
        %vm3705 = vcmp.eq.s32.totalorder %v3685, %v324
        %vm3706 = vcmp.eq.s32.totalorder %v3688, %v324
        %vm3707 = vcmp.eq.s32.totalorder %v3691, %v324
        %vm3708 = vcmp.eq.s32.totalorder %v3694, %v324
        %vm3709 = vcmp.eq.s32.totalorder %v3697, %v324
        %vm3710 = vcmp.eq.s32.totalorder %v3700, %v324
        %vm3711 = vcmp.eq.s32.totalorder %v3703, %v324
        %v3712 = vsel %vm3704, 1, 0
        %v3713 = vsel %vm3705, 1, 0
        %v3714 = vsel %vm3706, 1, 0
        %v3715 = vsel %vm3707, 1, 0
        %v3716 = vsel %vm3708, 1, 0
        %v3717 = vsel %vm3709, 1, 0
        %v3718 = vsel %vm3710, 1, 0
        %v3719 = vsel %vm3711, 1, 0
        %v3720 = vcvt.s32.f32 %v3712
        %v3721 = vcvt.s32.f32 %v3713
        %v3722 = vcvt.s32.f32 %v3714
        %v3723 = vcvt.s32.f32 %v3715
        %v3724 = vcvt.s32.f32 %v3716
        %v3725 = vcvt.s32.f32 %v3717
        %v3726 = vcvt.s32.f32 %v3718
        %v3727 = vcvt.s32.f32 %v3719
        %v3728 = vpack.c.bf16 %v3721, %v3720
        %v3729 = vpack.c.bf16 %v3723, %v3722
        %v3730 = vpack.c.bf16 %v3725, %v3724
        %v3731 = vpack.c.bf16 %v3727, %v3726
        %v3733 = vsel %vm401, %v3728, 0
        %v3736 = vsel %vm401, %v3729, 0
        %v3739 = vsel %vm401, %v3730, 0
        %v3742 = vsel %vm401, %v3731, 0
        %3744 = vmatprep.subr.bf16.mxu0 0
        %3745 = vmatpush1.bf16.msra.mxu0 0
        %3746 = vmatprep.subr.bf16.mxu0 0
        %3747 = vmatpush1.bf16.msra.mxu0 0
        %3748 = vmatprep.subr.bf16.mxu0 0
        %3749 = vmatpush1.bf16.msra.mxu0 0
        %3750 = vmatprep.subr.bf16.mxu0 0
        %3751 = vmatpush1.bf16.msra.mxu0 0
        %3752 = vmatprep.subr.bf16.mxu0 0
        %3753 = vmatpush1.bf16.msra.mxu0 %v396
        %3754 = vmatprep.subr.bf16.mxu0 0
        %3755 = vmatpush1.bf16.msra.mxu0 %v395
        %3756 = vmatprep.subr.bf16.mxu0 0
        %3757 = vmatpush1.bf16.msra.mxu0 %v394
        %3758 = vmatprep.subr.bf16.mxu0 0
        %3759 = vmatpush1.bf16.msra.mxu0 %v393
        %3760 = vmatprep.subr.bf16.mxu0 0
        %3761 = vmatpush2.bf16.msra.mxu0 0
        %3762 = vmatprep.subr.bf16.mxu0 0
        %3763 = vmatpush2.bf16.msra.mxu0 0
        %3764 = vmatprep.subr.bf16.mxu0 0
        %3765 = vmatpush2.bf16.msra.mxu0 0
        %3766 = vmatprep.subr.bf16.mxu0 0
        %3767 = vmatpush2.bf16.msra.mxu0 0
        %3768 = vmatprep.subr.bf16.mxu0 0
        %3769 = vmatpush2.bf16.msra.mxu0 0
        %3770 = vmatprep.subr.bf16.mxu0 0
        %3771 = vmatpush2.bf16.msra.mxu0 0
        %3772 = vmatprep.subr.bf16.mxu0 0
        %3773 = vmatpush2.bf16.msra.mxu0 0
        %3774 = vmatprep.subr.bf16.mxu0 0
        %3775 = vmatpush2.bf16.msra.mxu0 0
        %3776 = vmatprep.mubr.bf16.mxu0 0
        %3777 = vmatmul.mubr.bf16.gmra.mxu0 %v3733
        %v3778 = vpop.f32.mrf.mxu0
        %v3779 = vadd.f32 0.0, %v3778
        %v3780 = vpop.f32.mrf.mxu0
        %v3781 = vpop.f32.mrf.mxu0
        %v3782 = vadd.f32 0.0, %v3781
        %v3783 = vpop.f32.mrf.mxu0
        %3784 = vmatprep.mubr.bf16.mxu0 0
        %3785 = vmatmul.mubr.bf16.gmra.mxu0 %v3736
        %v3786 = vpop.f32.mrf.mxu0
        %v3787 = vadd.f32 0.0, %v3786
        %v3788 = vpop.f32.mrf.mxu0
        %v3789 = vpop.f32.mrf.mxu0
        %v3790 = vadd.f32 0.0, %v3789
        %v3791 = vpop.f32.mrf.mxu0
        %3792 = vmatprep.mubr.bf16.mxu0 0
        %3793 = vmatmul.mubr.bf16.gmra.mxu0 %v3739
        %v3794 = vpop.f32.mrf.mxu0
        %v3795 = vadd.f32 0.0, %v3794
        %v3796 = vpop.f32.mrf.mxu0
        %v3797 = vpop.f32.mrf.mxu0
        %v3798 = vadd.f32 0.0, %v3797
        %v3799 = vpop.f32.mrf.mxu0
        %3800 = vmatprep.mubr.bf16.mxu0 0
        %3801 = vmatmul.mubr.bf16.gmra.mxu0 %v3742
        %v3802 = vpop.f32.mrf.mxu0
        %v3803 = vadd.f32 0.0, %v3802
        %v3804 = vpop.f32.mrf.mxu0
        %v3805 = vpop.f32.mrf.mxu0
        %v3806 = vadd.f32 0.0, %v3805
        %v3807 = vpop.f32.mrf.mxu0
        %3808 = vdwg.mxu0
        %v3809 = vpack.c.bf16 %v3782, %v3779
        %v3810 = vpack.c.bf16 %v3790, %v3787
        %v3811 = vpack.c.bf16 %v3798, %v3795
        %v3812 = vpack.c.bf16 %v3806, %v3803
        %s3813 = scalar_lea.vmem %s3, 30
        %v3814 = vld [vmem:[%s3813] sm:$0x3]
        %v3816 = vsel %vm619, %v3809, 0
        %v3819 = vsel %vm619, %v3810, 0
        %v3822 = vsel %vm619, %v3811, 0
        %v3825 = vsel %vm619, %v3812, 0
        %v3828 = vsel %vm632, %v3814, 0
        %3830 = vmatprep.subr.bf16.mxu0 0
        %3831 = vmatpush1.bf16.msra.mxu0 0
        %3832 = vmatprep.subr.bf16.mxu0 0
        %3833 = vmatpush1.bf16.msra.mxu0 0
        %3834 = vmatprep.subr.bf16.mxu0 0
        %3835 = vmatpush1.bf16.msra.mxu0 0
        %3836 = vmatprep.subr.bf16.mxu0 0
        %3837 = vmatpush1.bf16.msra.mxu0 0
        %3838 = vmatprep.subr.bf16.mxu0 0
        %3839 = vmatpush1.bf16.msra.mxu0 0
        %3840 = vmatprep.subr.bf16.mxu0 0
        %3841 = vmatpush1.bf16.msra.mxu0 0
        %3842 = vmatprep.subr.bf16.mxu0 0
        %3843 = vmatpush1.bf16.msra.mxu0 0
        %3844 = vmatprep.subr.bf16.mxu0 0
        %3845 = vmatpush1.bf16.msra.mxu0 %v3828
        %3846 = vmatprep.subr.bf16.mxu0 0
        %3847 = vmatpush2.bf16.msra.mxu0 0
        %3848 = vmatprep.subr.bf16.mxu0 0
        %3849 = vmatpush2.bf16.msra.mxu0 0
        %3850 = vmatprep.subr.bf16.mxu0 0
        %3851 = vmatpush2.bf16.msra.mxu0 0
        %3852 = vmatprep.subr.bf16.mxu0 0
        %3853 = vmatpush2.bf16.msra.mxu0 0
        %3854 = vmatprep.subr.bf16.mxu0 0
        %3855 = vmatpush2.bf16.msra.mxu0 0
        %3856 = vmatprep.subr.bf16.mxu0 0
        %3857 = vmatpush2.bf16.msra.mxu0 0
        %3858 = vmatprep.subr.bf16.mxu0 0
        %3859 = vmatpush2.bf16.msra.mxu0 0
        %3860 = vmatprep.subr.bf16.mxu0 0
        %3861 = vmatpush2.bf16.msra.mxu0 0
        %3862 = vmatprep.mubr.bf16.mxu0 0
        %3863 = vmatmul.mubr.bf16.gmra.mxu0 %v3816
        %v3864 = vpop.f32.mrf.mxu0
        %v3865 = vadd.f32 0.0, %v3864
        %v3866 = vpop.f32.mrf.mxu0
        %v3867 = vpop.f32.mrf.mxu0
        %v3868 = vadd.f32 0.0, %v3867
        %v3869 = vpop.f32.mrf.mxu0
        %3870 = vmatprep.mubr.bf16.mxu0 0
        %3871 = vmatmul.mubr.bf16.gmra.mxu0 %v3819
        %v3872 = vpop.f32.mrf.mxu0
        %v3873 = vadd.f32 0.0, %v3872
        %v3874 = vpop.f32.mrf.mxu0
        %v3875 = vpop.f32.mrf.mxu0
        %v3876 = vadd.f32 0.0, %v3875
        %v3877 = vpop.f32.mrf.mxu0
        %3878 = vmatprep.mubr.bf16.mxu0 0
        %3879 = vmatmul.mubr.bf16.gmra.mxu0 %v3822
        %v3880 = vpop.f32.mrf.mxu0
        %v3881 = vadd.f32 0.0, %v3880
        %v3882 = vpop.f32.mrf.mxu0
        %v3883 = vpop.f32.mrf.mxu0
        %v3884 = vadd.f32 0.0, %v3883
        %v3885 = vpop.f32.mrf.mxu0
        %3886 = vmatprep.mubr.bf16.mxu0 0
        %3887 = vmatmul.mubr.bf16.gmra.mxu0 %v3825
        %v3888 = vpop.f32.mrf.mxu0
        %v3889 = vadd.f32 0.0, %v3888
        %v3890 = vpop.f32.mrf.mxu0
        %v3891 = vpop.f32.mrf.mxu0
        %v3892 = vadd.f32 0.0, %v3891
        %v3893 = vpop.f32.mrf.mxu0
        %3894 = vdwg.mxu0
        %v3895 = vadd.f32 %v3672, %v3865
        %v3896 = vadd.f32 %v3673, %v3868
        %v3897 = vadd.f32 %v3674, %v3873
        %v3898 = vadd.f32 %v3675, %v3876
        %v3899 = vadd.f32 %v3676, %v3881
        %v3900 = vadd.f32 %v3677, %v3884
        %v3901 = vadd.f32 %v3678, %v3889
        %v3902 = vadd.f32 %v3679, %v3892
        %3903 = vset.pattern.permute.xlu0 16
        %3904 = vperm.xlu0 %3903, %v315
        %v3905 = vpop.permute.xlu0 %3904
        %3906 = vset.pattern.permute.xlu0 16
        %3907 = vperm.xlu0 %3906, %v316
        %v3908 = vpop.permute.xlu0 %3907
        %3909 = vset.pattern.permute.xlu0 16
        %3910 = vperm.xlu0 %3909, %v317
        %v3911 = vpop.permute.xlu0 %3910
        %3912 = vset.pattern.permute.xlu0 16
        %3913 = vperm.xlu0 %3912, %v318
        %v3914 = vpop.permute.xlu0 %3913
        %3915 = vset.pattern.permute.xlu0 16
        %3916 = vperm.xlu0 %3915, %v319
        %v3917 = vpop.permute.xlu0 %3916
        %3918 = vset.pattern.permute.xlu0 16
        %3919 = vperm.xlu0 %3918, %v320
        %v3920 = vpop.permute.xlu0 %3919
        %3921 = vset.pattern.permute.xlu0 16
        %3922 = vperm.xlu0 %3921, %v321
        %v3923 = vpop.permute.xlu0 %3922
        %3924 = vset.pattern.permute.xlu0 16
        %3925 = vperm.xlu0 %3924, %v322
        %v3926 = vpop.permute.xlu0 %3925
        %vm3927 = vcmp.eq.s32.totalorder %v3905, %v324
        %vm3928 = vcmp.eq.s32.totalorder %v3908, %v324
        %vm3929 = vcmp.eq.s32.totalorder %v3911, %v324
        %vm3930 = vcmp.eq.s32.totalorder %v3914, %v324
        %vm3931 = vcmp.eq.s32.totalorder %v3917, %v324
        %vm3932 = vcmp.eq.s32.totalorder %v3920, %v324
        %vm3933 = vcmp.eq.s32.totalorder %v3923, %v324
        %vm3934 = vcmp.eq.s32.totalorder %v3926, %v324
        %v3935 = vsel %vm3927, 1, 0
        %v3936 = vsel %vm3928, 1, 0
        %v3937 = vsel %vm3929, 1, 0
        %v3938 = vsel %vm3930, 1, 0
        %v3939 = vsel %vm3931, 1, 0
        %v3940 = vsel %vm3932, 1, 0
        %v3941 = vsel %vm3933, 1, 0
        %v3942 = vsel %vm3934, 1, 0
        %v3943 = vcvt.s32.f32 %v3935
        %v3944 = vcvt.s32.f32 %v3936
        %v3945 = vcvt.s32.f32 %v3937
        %v3946 = vcvt.s32.f32 %v3938
        %v3947 = vcvt.s32.f32 %v3939
        %v3948 = vcvt.s32.f32 %v3940
        %v3949 = vcvt.s32.f32 %v3941
        %v3950 = vcvt.s32.f32 %v3942
        %v3951 = vpack.c.bf16 %v3944, %v3943
        %v3952 = vpack.c.bf16 %v3946, %v3945
        %v3953 = vpack.c.bf16 %v3948, %v3947
        %v3954 = vpack.c.bf16 %v3950, %v3949
        %v3956 = vsel %vm401, %v3951, 0
        %v3959 = vsel %vm401, %v3952, 0
        %v3962 = vsel %vm401, %v3953, 0
        %v3965 = vsel %vm401, %v3954, 0
        %3967 = vmatprep.subr.bf16.mxu0 0
        %3968 = vmatpush1.bf16.msra.mxu0 0
        %3969 = vmatprep.subr.bf16.mxu0 0
        %3970 = vmatpush1.bf16.msra.mxu0 0
        %3971 = vmatprep.subr.bf16.mxu0 0
        %3972 = vmatpush1.bf16.msra.mxu0 0
        %3973 = vmatprep.subr.bf16.mxu0 0
        %3974 = vmatpush1.bf16.msra.mxu0 0
        %3975 = vmatprep.subr.bf16.mxu0 0
        %3976 = vmatpush1.bf16.msra.mxu0 %v396
        %3977 = vmatprep.subr.bf16.mxu0 0
        %3978 = vmatpush1.bf16.msra.mxu0 %v395
        %3979 = vmatprep.subr.bf16.mxu0 0
        %3980 = vmatpush1.bf16.msra.mxu0 %v394
        %3981 = vmatprep.subr.bf16.mxu0 0
        %3982 = vmatpush1.bf16.msra.mxu0 %v393
        %3983 = vmatprep.subr.bf16.mxu0 0
        %3984 = vmatpush2.bf16.msra.mxu0 0
        %3985 = vmatprep.subr.bf16.mxu0 0
        %3986 = vmatpush2.bf16.msra.mxu0 0
        %3987 = vmatprep.subr.bf16.mxu0 0
        %3988 = vmatpush2.bf16.msra.mxu0 0
        %3989 = vmatprep.subr.bf16.mxu0 0
        %3990 = vmatpush2.bf16.msra.mxu0 0
        %3991 = vmatprep.subr.bf16.mxu0 0
        %3992 = vmatpush2.bf16.msra.mxu0 0
        %3993 = vmatprep.subr.bf16.mxu0 0
        %3994 = vmatpush2.bf16.msra.mxu0 0
        %3995 = vmatprep.subr.bf16.mxu0 0
        %3996 = vmatpush2.bf16.msra.mxu0 0
        %3997 = vmatprep.subr.bf16.mxu0 0
        %3998 = vmatpush2.bf16.msra.mxu0 0
        %3999 = vmatprep.mubr.bf16.mxu0 0
        %4000 = vmatmul.mubr.bf16.gmra.mxu0 %v3956
        %v4001 = vpop.f32.mrf.mxu0
        %v4002 = vadd.f32 0.0, %v4001
        %v4003 = vpop.f32.mrf.mxu0
        %v4004 = vpop.f32.mrf.mxu0
        %v4005 = vadd.f32 0.0, %v4004
        %v4006 = vpop.f32.mrf.mxu0
        %4007 = vmatprep.mubr.bf16.mxu0 0
        %4008 = vmatmul.mubr.bf16.gmra.mxu0 %v3959
        %v4009 = vpop.f32.mrf.mxu0
        %v4010 = vadd.f32 0.0, %v4009
        %v4011 = vpop.f32.mrf.mxu0
        %v4012 = vpop.f32.mrf.mxu0
        %v4013 = vadd.f32 0.0, %v4012
        %v4014 = vpop.f32.mrf.mxu0
        %4015 = vmatprep.mubr.bf16.mxu0 0
        %4016 = vmatmul.mubr.bf16.gmra.mxu0 %v3962
        %v4017 = vpop.f32.mrf.mxu0
        %v4018 = vadd.f32 0.0, %v4017
        %v4019 = vpop.f32.mrf.mxu0
        %v4020 = vpop.f32.mrf.mxu0
        %v4021 = vadd.f32 0.0, %v4020
        %v4022 = vpop.f32.mrf.mxu0
        %4023 = vmatprep.mubr.bf16.mxu0 0
        %4024 = vmatmul.mubr.bf16.gmra.mxu0 %v3965
        %v4025 = vpop.f32.mrf.mxu0
        %v4026 = vadd.f32 0.0, %v4025
        %v4027 = vpop.f32.mrf.mxu0
        %v4028 = vpop.f32.mrf.mxu0
        %v4029 = vadd.f32 0.0, %v4028
        %v4030 = vpop.f32.mrf.mxu0
        %4031 = vdwg.mxu0
        %v4032 = vpack.c.bf16 %v4005, %v4002
        %v4033 = vpack.c.bf16 %v4013, %v4010
        %v4034 = vpack.c.bf16 %v4021, %v4018
        %v4035 = vpack.c.bf16 %v4029, %v4026
        %s4036 = scalar_lea.vmem %s3, 32
        %v4037 = vld [vmem:[%s4036] sm:$0x3]
        %v4039 = vsel %vm619, %v4032, 0
        %v4042 = vsel %vm619, %v4033, 0
        %v4045 = vsel %vm619, %v4034, 0
        %v4048 = vsel %vm619, %v4035, 0
        %v4051 = vsel %vm632, %v4037, 0
        %4053 = vmatprep.subr.bf16.mxu0 0
        %4054 = vmatpush1.bf16.msra.mxu0 0
        %4055 = vmatprep.subr.bf16.mxu0 0
        %4056 = vmatpush1.bf16.msra.mxu0 0
        %4057 = vmatprep.subr.bf16.mxu0 0
        %4058 = vmatpush1.bf16.msra.mxu0 0
        %4059 = vmatprep.subr.bf16.mxu0 0
        %4060 = vmatpush1.bf16.msra.mxu0 0
        %4061 = vmatprep.subr.bf16.mxu0 0
        %4062 = vmatpush1.bf16.msra.mxu0 0
        %4063 = vmatprep.subr.bf16.mxu0 0
        %4064 = vmatpush1.bf16.msra.mxu0 0
        %4065 = vmatprep.subr.bf16.mxu0 0
        %4066 = vmatpush1.bf16.msra.mxu0 0
        %4067 = vmatprep.subr.bf16.mxu0 0
        %4068 = vmatpush1.bf16.msra.mxu0 %v4051
        %4069 = vmatprep.subr.bf16.mxu0 0
        %4070 = vmatpush2.bf16.msra.mxu0 0
        %4071 = vmatprep.subr.bf16.mxu0 0
        %4072 = vmatpush2.bf16.msra.mxu0 0
        %4073 = vmatprep.subr.bf16.mxu0 0
        %4074 = vmatpush2.bf16.msra.mxu0 0
        %4075 = vmatprep.subr.bf16.mxu0 0
        %4076 = vmatpush2.bf16.msra.mxu0 0
        %4077 = vmatprep.subr.bf16.mxu0 0
        %4078 = vmatpush2.bf16.msra.mxu0 0
        %4079 = vmatprep.subr.bf16.mxu0 0
        %4080 = vmatpush2.bf16.msra.mxu0 0
        %4081 = vmatprep.subr.bf16.mxu0 0
        %4082 = vmatpush2.bf16.msra.mxu0 0
        %4083 = vmatprep.subr.bf16.mxu0 0
        %4084 = vmatpush2.bf16.msra.mxu0 0
        %4085 = vmatprep.mubr.bf16.mxu0 0
        %4086 = vmatmul.mubr.bf16.gmra.mxu0 %v4039
        %v4087 = vpop.f32.mrf.mxu0
        %v4088 = vadd.f32 0.0, %v4087
        %v4089 = vpop.f32.mrf.mxu0
        %v4090 = vpop.f32.mrf.mxu0
        %v4091 = vadd.f32 0.0, %v4090
        %v4092 = vpop.f32.mrf.mxu0
        %4093 = vmatprep.mubr.bf16.mxu0 0
        %4094 = vmatmul.mubr.bf16.gmra.mxu0 %v4042
        %v4095 = vpop.f32.mrf.mxu0
        %v4096 = vadd.f32 0.0, %v4095
        %v4097 = vpop.f32.mrf.mxu0
        %v4098 = vpop.f32.mrf.mxu0
        %v4099 = vadd.f32 0.0, %v4098
        %v4100 = vpop.f32.mrf.mxu0
        %4101 = vmatprep.mubr.bf16.mxu0 0
        %4102 = vmatmul.mubr.bf16.gmra.mxu0 %v4045
        %v4103 = vpop.f32.mrf.mxu0
        %v4104 = vadd.f32 0.0, %v4103
        %v4105 = vpop.f32.mrf.mxu0
        %v4106 = vpop.f32.mrf.mxu0
        %v4107 = vadd.f32 0.0, %v4106
        %v4108 = vpop.f32.mrf.mxu0
        %4109 = vmatprep.mubr.bf16.mxu0 0
        %4110 = vmatmul.mubr.bf16.gmra.mxu0 %v4048
        %v4111 = vpop.f32.mrf.mxu0
        %v4112 = vadd.f32 0.0, %v4111
        %v4113 = vpop.f32.mrf.mxu0
        %v4114 = vpop.f32.mrf.mxu0
        %v4115 = vadd.f32 0.0, %v4114
        %v4116 = vpop.f32.mrf.mxu0
        %4117 = vdwg.mxu0
        %v4118 = vadd.f32 %v3895, %v4088
        %v4119 = vadd.f32 %v3896, %v4091
        %v4120 = vadd.f32 %v3897, %v4096
        %v4121 = vadd.f32 %v3898, %v4099
        %v4122 = vadd.f32 %v3899, %v4104
        %v4123 = vadd.f32 %v3900, %v4107
        %v4124 = vadd.f32 %v3901, %v4112
        %v4125 = vadd.f32 %v3902, %v4115
        %4126 = vset.pattern.permute.xlu0 17
        %4127 = vperm.xlu0 %4126, %v315
        %v4128 = vpop.permute.xlu0 %4127
        %4129 = vset.pattern.permute.xlu0 17
        %4130 = vperm.xlu0 %4129, %v316
        %v4131 = vpop.permute.xlu0 %4130
        %4132 = vset.pattern.permute.xlu0 17
        %4133 = vperm.xlu0 %4132, %v317
        %v4134 = vpop.permute.xlu0 %4133
        %4135 = vset.pattern.permute.xlu0 17
        %4136 = vperm.xlu0 %4135, %v318
        %v4137 = vpop.permute.xlu0 %4136
        %4138 = vset.pattern.permute.xlu0 17
        %4139 = vperm.xlu0 %4138, %v319
        %v4140 = vpop.permute.xlu0 %4139
        %4141 = vset.pattern.permute.xlu0 17
        %4142 = vperm.xlu0 %4141, %v320
        %v4143 = vpop.permute.xlu0 %4142
        %4144 = vset.pattern.permute.xlu0 17
        %4145 = vperm.xlu0 %4144, %v321
        %v4146 = vpop.permute.xlu0 %4145
        %4147 = vset.pattern.permute.xlu0 17
        %4148 = vperm.xlu0 %4147, %v322
        %v4149 = vpop.permute.xlu0 %4148
        %vm4150 = vcmp.eq.s32.totalorder %v4128, %v324
        %vm4151 = vcmp.eq.s32.totalorder %v4131, %v324
        %vm4152 = vcmp.eq.s32.totalorder %v4134, %v324
        %vm4153 = vcmp.eq.s32.totalorder %v4137, %v324
        %vm4154 = vcmp.eq.s32.totalorder %v4140, %v324
        %vm4155 = vcmp.eq.s32.totalorder %v4143, %v324
        %vm4156 = vcmp.eq.s32.totalorder %v4146, %v324
        %vm4157 = vcmp.eq.s32.totalorder %v4149, %v324
        %v4158 = vsel %vm4150, 1, 0
        %v4159 = vsel %vm4151, 1, 0
        %v4160 = vsel %vm4152, 1, 0
        %v4161 = vsel %vm4153, 1, 0
        %v4162 = vsel %vm4154, 1, 0
        %v4163 = vsel %vm4155, 1, 0
        %v4164 = vsel %vm4156, 1, 0
        %v4165 = vsel %vm4157, 1, 0
        %v4166 = vcvt.s32.f32 %v4158
        %v4167 = vcvt.s32.f32 %v4159
        %v4168 = vcvt.s32.f32 %v4160
        %v4169 = vcvt.s32.f32 %v4161
        %v4170 = vcvt.s32.f32 %v4162
        %v4171 = vcvt.s32.f32 %v4163
        %v4172 = vcvt.s32.f32 %v4164
        %v4173 = vcvt.s32.f32 %v4165
        %v4174 = vpack.c.bf16 %v4167, %v4166
        %v4175 = vpack.c.bf16 %v4169, %v4168
        %v4176 = vpack.c.bf16 %v4171, %v4170
        %v4177 = vpack.c.bf16 %v4173, %v4172
        %v4179 = vsel %vm401, %v4174, 0
        %v4182 = vsel %vm401, %v4175, 0
        %v4185 = vsel %vm401, %v4176, 0
        %v4188 = vsel %vm401, %v4177, 0
        %4190 = vmatprep.subr.bf16.mxu0 0
        %4191 = vmatpush1.bf16.msra.mxu0 0
        %4192 = vmatprep.subr.bf16.mxu0 0
        %4193 = vmatpush1.bf16.msra.mxu0 0
        %4194 = vmatprep.subr.bf16.mxu0 0
        %4195 = vmatpush1.bf16.msra.mxu0 0
        %4196 = vmatprep.subr.bf16.mxu0 0
        %4197 = vmatpush1.bf16.msra.mxu0 0
        %4198 = vmatprep.subr.bf16.mxu0 0
        %4199 = vmatpush1.bf16.msra.mxu0 %v396
        %4200 = vmatprep.subr.bf16.mxu0 0
        %4201 = vmatpush1.bf16.msra.mxu0 %v395
        %4202 = vmatprep.subr.bf16.mxu0 0
        %4203 = vmatpush1.bf16.msra.mxu0 %v394
        %4204 = vmatprep.subr.bf16.mxu0 0
        %4205 = vmatpush1.bf16.msra.mxu0 %v393
        %4206 = vmatprep.subr.bf16.mxu0 0
        %4207 = vmatpush2.bf16.msra.mxu0 0
        %4208 = vmatprep.subr.bf16.mxu0 0
        %4209 = vmatpush2.bf16.msra.mxu0 0
        %4210 = vmatprep.subr.bf16.mxu0 0
        %4211 = vmatpush2.bf16.msra.mxu0 0
        %4212 = vmatprep.subr.bf16.mxu0 0
        %4213 = vmatpush2.bf16.msra.mxu0 0
        %4214 = vmatprep.subr.bf16.mxu0 0
        %4215 = vmatpush2.bf16.msra.mxu0 0
        %4216 = vmatprep.subr.bf16.mxu0 0
        %4217 = vmatpush2.bf16.msra.mxu0 0
        %4218 = vmatprep.subr.bf16.mxu0 0
        %4219 = vmatpush2.bf16.msra.mxu0 0
        %4220 = vmatprep.subr.bf16.mxu0 0
        %4221 = vmatpush2.bf16.msra.mxu0 0
        %4222 = vmatprep.mubr.bf16.mxu0 0
        %4223 = vmatmul.mubr.bf16.gmra.mxu0 %v4179
        %v4224 = vpop.f32.mrf.mxu0
        %v4225 = vadd.f32 0.0, %v4224
        %v4226 = vpop.f32.mrf.mxu0
        %v4227 = vpop.f32.mrf.mxu0
        %v4228 = vadd.f32 0.0, %v4227
        %v4229 = vpop.f32.mrf.mxu0
        %4230 = vmatprep.mubr.bf16.mxu0 0
        %4231 = vmatmul.mubr.bf16.gmra.mxu0 %v4182
        %v4232 = vpop.f32.mrf.mxu0
        %v4233 = vadd.f32 0.0, %v4232
        %v4234 = vpop.f32.mrf.mxu0
        %v4235 = vpop.f32.mrf.mxu0
        %v4236 = vadd.f32 0.0, %v4235
        %v4237 = vpop.f32.mrf.mxu0
        %4238 = vmatprep.mubr.bf16.mxu0 0
        %4239 = vmatmul.mubr.bf16.gmra.mxu0 %v4185
        %v4240 = vpop.f32.mrf.mxu0
        %v4241 = vadd.f32 0.0, %v4240
        %v4242 = vpop.f32.mrf.mxu0
        %v4243 = vpop.f32.mrf.mxu0
        %v4244 = vadd.f32 0.0, %v4243
        %v4245 = vpop.f32.mrf.mxu0
        %4246 = vmatprep.mubr.bf16.mxu0 0
        %4247 = vmatmul.mubr.bf16.gmra.mxu0 %v4188
        %v4248 = vpop.f32.mrf.mxu0
        %v4249 = vadd.f32 0.0, %v4248
        %v4250 = vpop.f32.mrf.mxu0
        %v4251 = vpop.f32.mrf.mxu0
        %v4252 = vadd.f32 0.0, %v4251
        %v4253 = vpop.f32.mrf.mxu0
        %4254 = vdwg.mxu0
        %v4255 = vpack.c.bf16 %v4228, %v4225
        %v4256 = vpack.c.bf16 %v4236, %v4233
        %v4257 = vpack.c.bf16 %v4244, %v4241
        %v4258 = vpack.c.bf16 %v4252, %v4249
        %s4259 = scalar_lea.vmem %s3, 34
        %v4260 = vld [vmem:[%s4259] sm:$0x3]
        %v4262 = vsel %vm619, %v4255, 0
        %v4265 = vsel %vm619, %v4256, 0
        %v4268 = vsel %vm619, %v4257, 0
        %v4271 = vsel %vm619, %v4258, 0
        %v4274 = vsel %vm632, %v4260, 0
        %4276 = vmatprep.subr.bf16.mxu0 0
        %4277 = vmatpush1.bf16.msra.mxu0 0
        %4278 = vmatprep.subr.bf16.mxu0 0
        %4279 = vmatpush1.bf16.msra.mxu0 0
        %4280 = vmatprep.subr.bf16.mxu0 0
        %4281 = vmatpush1.bf16.msra.mxu0 0
        %4282 = vmatprep.subr.bf16.mxu0 0
        %4283 = vmatpush1.bf16.msra.mxu0 0
        %4284 = vmatprep.subr.bf16.mxu0 0
        %4285 = vmatpush1.bf16.msra.mxu0 0
        %4286 = vmatprep.subr.bf16.mxu0 0
        %4287 = vmatpush1.bf16.msra.mxu0 0
        %4288 = vmatprep.subr.bf16.mxu0 0
        %4289 = vmatpush1.bf16.msra.mxu0 0
        %4290 = vmatprep.subr.bf16.mxu0 0
        %4291 = vmatpush1.bf16.msra.mxu0 %v4274
        %4292 = vmatprep.subr.bf16.mxu0 0
        %4293 = vmatpush2.bf16.msra.mxu0 0
        %4294 = vmatprep.subr.bf16.mxu0 0
        %4295 = vmatpush2.bf16.msra.mxu0 0
        %4296 = vmatprep.subr.bf16.mxu0 0
        %4297 = vmatpush2.bf16.msra.mxu0 0
        %4298 = vmatprep.subr.bf16.mxu0 0
        %4299 = vmatpush2.bf16.msra.mxu0 0
        %4300 = vmatprep.subr.bf16.mxu0 0
        %4301 = vmatpush2.bf16.msra.mxu0 0
        %4302 = vmatprep.subr.bf16.mxu0 0
        %4303 = vmatpush2.bf16.msra.mxu0 0
        %4304 = vmatprep.subr.bf16.mxu0 0
        %4305 = vmatpush2.bf16.msra.mxu0 0
        %4306 = vmatprep.subr.bf16.mxu0 0
        %4307 = vmatpush2.bf16.msra.mxu0 0
        %4308 = vmatprep.mubr.bf16.mxu0 0
        %4309 = vmatmul.mubr.bf16.gmra.mxu0 %v4262
        %v4310 = vpop.f32.mrf.mxu0
        %v4311 = vadd.f32 0.0, %v4310
        %v4312 = vpop.f32.mrf.mxu0
        %v4313 = vpop.f32.mrf.mxu0
        %v4314 = vadd.f32 0.0, %v4313
        %v4315 = vpop.f32.mrf.mxu0
        %4316 = vmatprep.mubr.bf16.mxu0 0
        %4317 = vmatmul.mubr.bf16.gmra.mxu0 %v4265
        %v4318 = vpop.f32.mrf.mxu0
        %v4319 = vadd.f32 0.0, %v4318
        %v4320 = vpop.f32.mrf.mxu0
        %v4321 = vpop.f32.mrf.mxu0
        %v4322 = vadd.f32 0.0, %v4321
        %v4323 = vpop.f32.mrf.mxu0
        %4324 = vmatprep.mubr.bf16.mxu0 0
        %4325 = vmatmul.mubr.bf16.gmra.mxu0 %v4268
        %v4326 = vpop.f32.mrf.mxu0
        %v4327 = vadd.f32 0.0, %v4326
        %v4328 = vpop.f32.mrf.mxu0
        %v4329 = vpop.f32.mrf.mxu0
        %v4330 = vadd.f32 0.0, %v4329
        %v4331 = vpop.f32.mrf.mxu0
        %4332 = vmatprep.mubr.bf16.mxu0 0
        %4333 = vmatmul.mubr.bf16.gmra.mxu0 %v4271
        %v4334 = vpop.f32.mrf.mxu0
        %v4335 = vadd.f32 0.0, %v4334
        %v4336 = vpop.f32.mrf.mxu0
        %v4337 = vpop.f32.mrf.mxu0
        %v4338 = vadd.f32 0.0, %v4337
        %v4339 = vpop.f32.mrf.mxu0
        %4340 = vdwg.mxu0
        %v4341 = vadd.f32 %v4118, %v4311
        %v4342 = vadd.f32 %v4119, %v4314
        %v4343 = vadd.f32 %v4120, %v4319
        %v4344 = vadd.f32 %v4121, %v4322
        %v4345 = vadd.f32 %v4122, %v4327
        %v4346 = vadd.f32 %v4123, %v4330
        %v4347 = vadd.f32 %v4124, %v4335
        %v4348 = vadd.f32 %v4125, %v4338
        %4349 = vset.pattern.permute.xlu0 18
        %4350 = vperm.xlu0 %4349, %v315
        %v4351 = vpop.permute.xlu0 %4350
        %4352 = vset.pattern.permute.xlu0 18
        %4353 = vperm.xlu0 %4352, %v316
        %v4354 = vpop.permute.xlu0 %4353
        %4355 = vset.pattern.permute.xlu0 18
        %4356 = vperm.xlu0 %4355, %v317
        %v4357 = vpop.permute.xlu0 %4356
        %4358 = vset.pattern.permute.xlu0 18
        %4359 = vperm.xlu0 %4358, %v318
        %v4360 = vpop.permute.xlu0 %4359
        %4361 = vset.pattern.permute.xlu0 18
        %4362 = vperm.xlu0 %4361, %v319
        %v4363 = vpop.permute.xlu0 %4362
        %4364 = vset.pattern.permute.xlu0 18
        %4365 = vperm.xlu0 %4364, %v320
        %v4366 = vpop.permute.xlu0 %4365
        %4367 = vset.pattern.permute.xlu0 18
        %4368 = vperm.xlu0 %4367, %v321
        %v4369 = vpop.permute.xlu0 %4368
        %4370 = vset.pattern.permute.xlu0 18
        %4371 = vperm.xlu0 %4370, %v322
        %v4372 = vpop.permute.xlu0 %4371
        %vm4373 = vcmp.eq.s32.totalorder %v4351, %v324
        %vm4374 = vcmp.eq.s32.totalorder %v4354, %v324
        %vm4375 = vcmp.eq.s32.totalorder %v4357, %v324
        %vm4376 = vcmp.eq.s32.totalorder %v4360, %v324
        %vm4377 = vcmp.eq.s32.totalorder %v4363, %v324
        %vm4378 = vcmp.eq.s32.totalorder %v4366, %v324
        %vm4379 = vcmp.eq.s32.totalorder %v4369, %v324
        %vm4380 = vcmp.eq.s32.totalorder %v4372, %v324
        %v4381 = vsel %vm4373, 1, 0
        %v4382 = vsel %vm4374, 1, 0
        %v4383 = vsel %vm4375, 1, 0
        %v4384 = vsel %vm4376, 1, 0
        %v4385 = vsel %vm4377, 1, 0
        %v4386 = vsel %vm4378, 1, 0
        %v4387 = vsel %vm4379, 1, 0
        %v4388 = vsel %vm4380, 1, 0
        %v4389 = vcvt.s32.f32 %v4381
        %v4390 = vcvt.s32.f32 %v4382
        %v4391 = vcvt.s32.f32 %v4383
        %v4392 = vcvt.s32.f32 %v4384
        %v4393 = vcvt.s32.f32 %v4385
        %v4394 = vcvt.s32.f32 %v4386
        %v4395 = vcvt.s32.f32 %v4387
        %v4396 = vcvt.s32.f32 %v4388
        %v4397 = vpack.c.bf16 %v4390, %v4389
        %v4398 = vpack.c.bf16 %v4392, %v4391
        %v4399 = vpack.c.bf16 %v4394, %v4393
        %v4400 = vpack.c.bf16 %v4396, %v4395
        %v4402 = vsel %vm401, %v4397, 0
        %v4405 = vsel %vm401, %v4398, 0
        %v4408 = vsel %vm401, %v4399, 0
        %v4411 = vsel %vm401, %v4400, 0
        %4413 = vmatprep.subr.bf16.mxu0 0
        %4414 = vmatpush1.bf16.msra.mxu0 0
        %4415 = vmatprep.subr.bf16.mxu0 0
        %4416 = vmatpush1.bf16.msra.mxu0 0
        %4417 = vmatprep.subr.bf16.mxu0 0
        %4418 = vmatpush1.bf16.msra.mxu0 0
        %4419 = vmatprep.subr.bf16.mxu0 0
        %4420 = vmatpush1.bf16.msra.mxu0 0
        %4421 = vmatprep.subr.bf16.mxu0 0
        %4422 = vmatpush1.bf16.msra.mxu0 %v396
        %4423 = vmatprep.subr.bf16.mxu0 0
        %4424 = vmatpush1.bf16.msra.mxu0 %v395
        %4425 = vmatprep.subr.bf16.mxu0 0
        %4426 = vmatpush1.bf16.msra.mxu0 %v394
        %4427 = vmatprep.subr.bf16.mxu0 0
        %4428 = vmatpush1.bf16.msra.mxu0 %v393
        %4429 = vmatprep.subr.bf16.mxu0 0
        %4430 = vmatpush2.bf16.msra.mxu0 0
        %4431 = vmatprep.subr.bf16.mxu0 0
        %4432 = vmatpush2.bf16.msra.mxu0 0
        %4433 = vmatprep.subr.bf16.mxu0 0
        %4434 = vmatpush2.bf16.msra.mxu0 0
        %4435 = vmatprep.subr.bf16.mxu0 0
        %4436 = vmatpush2.bf16.msra.mxu0 0
        %4437 = vmatprep.subr.bf16.mxu0 0
        %4438 = vmatpush2.bf16.msra.mxu0 0
        %4439 = vmatprep.subr.bf16.mxu0 0
        %4440 = vmatpush2.bf16.msra.mxu0 0
        %4441 = vmatprep.subr.bf16.mxu0 0
        %4442 = vmatpush2.bf16.msra.mxu0 0
        %4443 = vmatprep.subr.bf16.mxu0 0
        %4444 = vmatpush2.bf16.msra.mxu0 0
        %4445 = vmatprep.mubr.bf16.mxu0 0
        %4446 = vmatmul.mubr.bf16.gmra.mxu0 %v4402
        %v4447 = vpop.f32.mrf.mxu0
        %v4448 = vadd.f32 0.0, %v4447
        %v4449 = vpop.f32.mrf.mxu0
        %v4450 = vpop.f32.mrf.mxu0
        %v4451 = vadd.f32 0.0, %v4450
        %v4452 = vpop.f32.mrf.mxu0
        %4453 = vmatprep.mubr.bf16.mxu0 0
        %4454 = vmatmul.mubr.bf16.gmra.mxu0 %v4405
        %v4455 = vpop.f32.mrf.mxu0
        %v4456 = vadd.f32 0.0, %v4455
        %v4457 = vpop.f32.mrf.mxu0
        %v4458 = vpop.f32.mrf.mxu0
        %v4459 = vadd.f32 0.0, %v4458
        %v4460 = vpop.f32.mrf.mxu0
        %4461 = vmatprep.mubr.bf16.mxu0 0
        %4462 = vmatmul.mubr.bf16.gmra.mxu0 %v4408
        %v4463 = vpop.f32.mrf.mxu0
        %v4464 = vadd.f32 0.0, %v4463
        %v4465 = vpop.f32.mrf.mxu0
        %v4466 = vpop.f32.mrf.mxu0
        %v4467 = vadd.f32 0.0, %v4466
        %v4468 = vpop.f32.mrf.mxu0
        %4469 = vmatprep.mubr.bf16.mxu0 0
        %4470 = vmatmul.mubr.bf16.gmra.mxu0 %v4411
        %v4471 = vpop.f32.mrf.mxu0
        %v4472 = vadd.f32 0.0, %v4471
        %v4473 = vpop.f32.mrf.mxu0
        %v4474 = vpop.f32.mrf.mxu0
        %v4475 = vadd.f32 0.0, %v4474
        %v4476 = vpop.f32.mrf.mxu0
        %4477 = vdwg.mxu0
        %v4478 = vpack.c.bf16 %v4451, %v4448
        %v4479 = vpack.c.bf16 %v4459, %v4456
        %v4480 = vpack.c.bf16 %v4467, %v4464
        %v4481 = vpack.c.bf16 %v4475, %v4472
        %s4482 = scalar_lea.vmem %s3, 36
        %v4483 = vld [vmem:[%s4482] sm:$0x3]
        %v4485 = vsel %vm619, %v4478, 0
        %v4488 = vsel %vm619, %v4479, 0
        %v4491 = vsel %vm619, %v4480, 0
        %v4494 = vsel %vm619, %v4481, 0
        %v4497 = vsel %vm632, %v4483, 0
        %4499 = vmatprep.subr.bf16.mxu0 0
        %4500 = vmatpush1.bf16.msra.mxu0 0
        %4501 = vmatprep.subr.bf16.mxu0 0
        %4502 = vmatpush1.bf16.msra.mxu0 0
        %4503 = vmatprep.subr.bf16.mxu0 0
        %4504 = vmatpush1.bf16.msra.mxu0 0
        %4505 = vmatprep.subr.bf16.mxu0 0
        %4506 = vmatpush1.bf16.msra.mxu0 0
        %4507 = vmatprep.subr.bf16.mxu0 0
        %4508 = vmatpush1.bf16.msra.mxu0 0
        %4509 = vmatprep.subr.bf16.mxu0 0
        %4510 = vmatpush1.bf16.msra.mxu0 0
        %4511 = vmatprep.subr.bf16.mxu0 0
        %4512 = vmatpush1.bf16.msra.mxu0 0
        %4513 = vmatprep.subr.bf16.mxu0 0
        %4514 = vmatpush1.bf16.msra.mxu0 %v4497
        %4515 = vmatprep.subr.bf16.mxu0 0
        %4516 = vmatpush2.bf16.msra.mxu0 0
        %4517 = vmatprep.subr.bf16.mxu0 0
        %4518 = vmatpush2.bf16.msra.mxu0 0
        %4519 = vmatprep.subr.bf16.mxu0 0
        %4520 = vmatpush2.bf16.msra.mxu0 0
        %4521 = vmatprep.subr.bf16.mxu0 0
        %4522 = vmatpush2.bf16.msra.mxu0 0
        %4523 = vmatprep.subr.bf16.mxu0 0
        %4524 = vmatpush2.bf16.msra.mxu0 0
        %4525 = vmatprep.subr.bf16.mxu0 0
        %4526 = vmatpush2.bf16.msra.mxu0 0
        %4527 = vmatprep.subr.bf16.mxu0 0
        %4528 = vmatpush2.bf16.msra.mxu0 0
        %4529 = vmatprep.subr.bf16.mxu0 0
        %4530 = vmatpush2.bf16.msra.mxu0 0
        %4531 = vmatprep.mubr.bf16.mxu0 0
        %4532 = vmatmul.mubr.bf16.gmra.mxu0 %v4485
        %v4533 = vpop.f32.mrf.mxu0
        %v4534 = vadd.f32 0.0, %v4533
        %v4535 = vpop.f32.mrf.mxu0
        %v4536 = vpop.f32.mrf.mxu0
        %v4537 = vadd.f32 0.0, %v4536
        %v4538 = vpop.f32.mrf.mxu0
        %4539 = vmatprep.mubr.bf16.mxu0 0
        %4540 = vmatmul.mubr.bf16.gmra.mxu0 %v4488
        %v4541 = vpop.f32.mrf.mxu0
        %v4542 = vadd.f32 0.0, %v4541
        %v4543 = vpop.f32.mrf.mxu0
        %v4544 = vpop.f32.mrf.mxu0
        %v4545 = vadd.f32 0.0, %v4544
        %v4546 = vpop.f32.mrf.mxu0
        %4547 = vmatprep.mubr.bf16.mxu0 0
        %4548 = vmatmul.mubr.bf16.gmra.mxu0 %v4491
        %v4549 = vpop.f32.mrf.mxu0
        %v4550 = vadd.f32 0.0, %v4549
        %v4551 = vpop.f32.mrf.mxu0
        %v4552 = vpop.f32.mrf.mxu0
        %v4553 = vadd.f32 0.0, %v4552
        %v4554 = vpop.f32.mrf.mxu0
        %4555 = vmatprep.mubr.bf16.mxu0 0
        %4556 = vmatmul.mubr.bf16.gmra.mxu0 %v4494
        %v4557 = vpop.f32.mrf.mxu0
        %v4558 = vadd.f32 0.0, %v4557
        %v4559 = vpop.f32.mrf.mxu0
        %v4560 = vpop.f32.mrf.mxu0
        %v4561 = vadd.f32 0.0, %v4560
        %v4562 = vpop.f32.mrf.mxu0
        %4563 = vdwg.mxu0
        %v4564 = vadd.f32 %v4341, %v4534
        %v4565 = vadd.f32 %v4342, %v4537
        %v4566 = vadd.f32 %v4343, %v4542
        %v4567 = vadd.f32 %v4344, %v4545
        %v4568 = vadd.f32 %v4345, %v4550
        %v4569 = vadd.f32 %v4346, %v4553
        %v4570 = vadd.f32 %v4347, %v4558
        %v4571 = vadd.f32 %v4348, %v4561
        %4572 = vset.pattern.permute.xlu0 19
        %4573 = vperm.xlu0 %4572, %v315
        %v4574 = vpop.permute.xlu0 %4573
        %4575 = vset.pattern.permute.xlu0 19
        %4576 = vperm.xlu0 %4575, %v316
        %v4577 = vpop.permute.xlu0 %4576
        %4578 = vset.pattern.permute.xlu0 19
        %4579 = vperm.xlu0 %4578, %v317
        %v4580 = vpop.permute.xlu0 %4579
        %4581 = vset.pattern.permute.xlu0 19
        %4582 = vperm.xlu0 %4581, %v318
        %v4583 = vpop.permute.xlu0 %4582
        %4584 = vset.pattern.permute.xlu0 19
        %4585 = vperm.xlu0 %4584, %v319
        %v4586 = vpop.permute.xlu0 %4585
        %4587 = vset.pattern.permute.xlu0 19
        %4588 = vperm.xlu0 %4587, %v320
        %v4589 = vpop.permute.xlu0 %4588
        %4590 = vset.pattern.permute.xlu0 19
        %4591 = vperm.xlu0 %4590, %v321
        %v4592 = vpop.permute.xlu0 %4591
        %4593 = vset.pattern.permute.xlu0 19
        %4594 = vperm.xlu0 %4593, %v322
        %v4595 = vpop.permute.xlu0 %4594
        %vm4596 = vcmp.eq.s32.totalorder %v4574, %v324
        %vm4597 = vcmp.eq.s32.totalorder %v4577, %v324
        %vm4598 = vcmp.eq.s32.totalorder %v4580, %v324
        %vm4599 = vcmp.eq.s32.totalorder %v4583, %v324
        %vm4600 = vcmp.eq.s32.totalorder %v4586, %v324
        %vm4601 = vcmp.eq.s32.totalorder %v4589, %v324
        %vm4602 = vcmp.eq.s32.totalorder %v4592, %v324
        %vm4603 = vcmp.eq.s32.totalorder %v4595, %v324
        %v4604 = vsel %vm4596, 1, 0
        %v4605 = vsel %vm4597, 1, 0
        %v4606 = vsel %vm4598, 1, 0
        %v4607 = vsel %vm4599, 1, 0
        %v4608 = vsel %vm4600, 1, 0
        %v4609 = vsel %vm4601, 1, 0
        %v4610 = vsel %vm4602, 1, 0
        %v4611 = vsel %vm4603, 1, 0
        %v4612 = vcvt.s32.f32 %v4604
        %v4613 = vcvt.s32.f32 %v4605
        %v4614 = vcvt.s32.f32 %v4606
        %v4615 = vcvt.s32.f32 %v4607
        %v4616 = vcvt.s32.f32 %v4608
        %v4617 = vcvt.s32.f32 %v4609
        %v4618 = vcvt.s32.f32 %v4610
        %v4619 = vcvt.s32.f32 %v4611
        %v4620 = vpack.c.bf16 %v4613, %v4612
        %v4621 = vpack.c.bf16 %v4615, %v4614
        %v4622 = vpack.c.bf16 %v4617, %v4616
        %v4623 = vpack.c.bf16 %v4619, %v4618
        %v4625 = vsel %vm401, %v4620, 0
        %v4628 = vsel %vm401, %v4621, 0
        %v4631 = vsel %vm401, %v4622, 0
        %v4634 = vsel %vm401, %v4623, 0
        %4636 = vmatprep.subr.bf16.mxu0 0
        %4637 = vmatpush1.bf16.msra.mxu0 0
        %4638 = vmatprep.subr.bf16.mxu0 0
        %4639 = vmatpush1.bf16.msra.mxu0 0
        %4640 = vmatprep.subr.bf16.mxu0 0
        %4641 = vmatpush1.bf16.msra.mxu0 0
        %4642 = vmatprep.subr.bf16.mxu0 0
        %4643 = vmatpush1.bf16.msra.mxu0 0
        %4644 = vmatprep.subr.bf16.mxu0 0
        %4645 = vmatpush1.bf16.msra.mxu0 %v396
        %4646 = vmatprep.subr.bf16.mxu0 0
        %4647 = vmatpush1.bf16.msra.mxu0 %v395
        %4648 = vmatprep.subr.bf16.mxu0 0
        %4649 = vmatpush1.bf16.msra.mxu0 %v394
        %4650 = vmatprep.subr.bf16.mxu0 0
        %4651 = vmatpush1.bf16.msra.mxu0 %v393
        %4652 = vmatprep.subr.bf16.mxu0 0
        %4653 = vmatpush2.bf16.msra.mxu0 0
        %4654 = vmatprep.subr.bf16.mxu0 0
        %4655 = vmatpush2.bf16.msra.mxu0 0
        %4656 = vmatprep.subr.bf16.mxu0 0
        %4657 = vmatpush2.bf16.msra.mxu0 0
        %4658 = vmatprep.subr.bf16.mxu0 0
        %4659 = vmatpush2.bf16.msra.mxu0 0
        %4660 = vmatprep.subr.bf16.mxu0 0
        %4661 = vmatpush2.bf16.msra.mxu0 0
        %4662 = vmatprep.subr.bf16.mxu0 0
        %4663 = vmatpush2.bf16.msra.mxu0 0
        %4664 = vmatprep.subr.bf16.mxu0 0
        %4665 = vmatpush2.bf16.msra.mxu0 0
        %4666 = vmatprep.subr.bf16.mxu0 0
        %4667 = vmatpush2.bf16.msra.mxu0 0
        %4668 = vmatprep.mubr.bf16.mxu0 0
        %4669 = vmatmul.mubr.bf16.gmra.mxu0 %v4625
        %v4670 = vpop.f32.mrf.mxu0
        %v4671 = vadd.f32 0.0, %v4670
        %v4672 = vpop.f32.mrf.mxu0
        %v4673 = vpop.f32.mrf.mxu0
        %v4674 = vadd.f32 0.0, %v4673
        %v4675 = vpop.f32.mrf.mxu0
        %4676 = vmatprep.mubr.bf16.mxu0 0
        %4677 = vmatmul.mubr.bf16.gmra.mxu0 %v4628
        %v4678 = vpop.f32.mrf.mxu0
        %v4679 = vadd.f32 0.0, %v4678
        %v4680 = vpop.f32.mrf.mxu0
        %v4681 = vpop.f32.mrf.mxu0
        %v4682 = vadd.f32 0.0, %v4681
        %v4683 = vpop.f32.mrf.mxu0
        %4684 = vmatprep.mubr.bf16.mxu0 0
        %4685 = vmatmul.mubr.bf16.gmra.mxu0 %v4631
        %v4686 = vpop.f32.mrf.mxu0
        %v4687 = vadd.f32 0.0, %v4686
        %v4688 = vpop.f32.mrf.mxu0
        %v4689 = vpop.f32.mrf.mxu0
        %v4690 = vadd.f32 0.0, %v4689
        %v4691 = vpop.f32.mrf.mxu0
        %4692 = vmatprep.mubr.bf16.mxu0 0
        %4693 = vmatmul.mubr.bf16.gmra.mxu0 %v4634
        %v4694 = vpop.f32.mrf.mxu0
        %v4695 = vadd.f32 0.0, %v4694
        %v4696 = vpop.f32.mrf.mxu0
        %v4697 = vpop.f32.mrf.mxu0
        %v4698 = vadd.f32 0.0, %v4697
        %v4699 = vpop.f32.mrf.mxu0
        %4700 = vdwg.mxu0
        %v4701 = vpack.c.bf16 %v4674, %v4671
        %v4702 = vpack.c.bf16 %v4682, %v4679
        %v4703 = vpack.c.bf16 %v4690, %v4687
        %v4704 = vpack.c.bf16 %v4698, %v4695
        %s4705 = scalar_lea.vmem %s3, 38
        %v4706 = vld [vmem:[%s4705] sm:$0x3]
        %v4708 = vsel %vm619, %v4701, 0
        %v4711 = vsel %vm619, %v4702, 0
        %v4714 = vsel %vm619, %v4703, 0
        %v4717 = vsel %vm619, %v4704, 0
        %v4720 = vsel %vm632, %v4706, 0
        %4722 = vmatprep.subr.bf16.mxu0 0
        %4723 = vmatpush1.bf16.msra.mxu0 0
        %4724 = vmatprep.subr.bf16.mxu0 0
        %4725 = vmatpush1.bf16.msra.mxu0 0
        %4726 = vmatprep.subr.bf16.mxu0 0
        %4727 = vmatpush1.bf16.msra.mxu0 0
        %4728 = vmatprep.subr.bf16.mxu0 0
        %4729 = vmatpush1.bf16.msra.mxu0 0
        %4730 = vmatprep.subr.bf16.mxu0 0
        %4731 = vmatpush1.bf16.msra.mxu0 0
        %4732 = vmatprep.subr.bf16.mxu0 0
        %4733 = vmatpush1.bf16.msra.mxu0 0
        %4734 = vmatprep.subr.bf16.mxu0 0
        %4735 = vmatpush1.bf16.msra.mxu0 0
        %4736 = vmatprep.subr.bf16.mxu0 0
        %4737 = vmatpush1.bf16.msra.mxu0 %v4720
        %4738 = vmatprep.subr.bf16.mxu0 0
        %4739 = vmatpush2.bf16.msra.mxu0 0
        %4740 = vmatprep.subr.bf16.mxu0 0
        %4741 = vmatpush2.bf16.msra.mxu0 0
        %4742 = vmatprep.subr.bf16.mxu0 0
        %4743 = vmatpush2.bf16.msra.mxu0 0
        %4744 = vmatprep.subr.bf16.mxu0 0
        %4745 = vmatpush2.bf16.msra.mxu0 0
        %4746 = vmatprep.subr.bf16.mxu0 0
        %4747 = vmatpush2.bf16.msra.mxu0 0
        %4748 = vmatprep.subr.bf16.mxu0 0
        %4749 = vmatpush2.bf16.msra.mxu0 0
        %4750 = vmatprep.subr.bf16.mxu0 0
        %4751 = vmatpush2.bf16.msra.mxu0 0
        %4752 = vmatprep.subr.bf16.mxu0 0
        %4753 = vmatpush2.bf16.msra.mxu0 0
        %4754 = vmatprep.mubr.bf16.mxu0 0
        %4755 = vmatmul.mubr.bf16.gmra.mxu0 %v4708
        %v4756 = vpop.f32.mrf.mxu0
        %v4757 = vadd.f32 0.0, %v4756
        %v4758 = vpop.f32.mrf.mxu0
        %v4759 = vpop.f32.mrf.mxu0
        %v4760 = vadd.f32 0.0, %v4759
        %v4761 = vpop.f32.mrf.mxu0
        %4762 = vmatprep.mubr.bf16.mxu0 0
        %4763 = vmatmul.mubr.bf16.gmra.mxu0 %v4711
        %v4764 = vpop.f32.mrf.mxu0
        %v4765 = vadd.f32 0.0, %v4764
        %v4766 = vpop.f32.mrf.mxu0
        %v4767 = vpop.f32.mrf.mxu0
        %v4768 = vadd.f32 0.0, %v4767
        %v4769 = vpop.f32.mrf.mxu0
        %4770 = vmatprep.mubr.bf16.mxu0 0
        %4771 = vmatmul.mubr.bf16.gmra.mxu0 %v4714
        %v4772 = vpop.f32.mrf.mxu0
        %v4773 = vadd.f32 0.0, %v4772
        %v4774 = vpop.f32.mrf.mxu0
        %v4775 = vpop.f32.mrf.mxu0
        %v4776 = vadd.f32 0.0, %v4775
        %v4777 = vpop.f32.mrf.mxu0
        %4778 = vmatprep.mubr.bf16.mxu0 0
        %4779 = vmatmul.mubr.bf16.gmra.mxu0 %v4717
        %v4780 = vpop.f32.mrf.mxu0
        %v4781 = vadd.f32 0.0, %v4780
        %v4782 = vpop.f32.mrf.mxu0
        %v4783 = vpop.f32.mrf.mxu0
        %v4784 = vadd.f32 0.0, %v4783
        %v4785 = vpop.f32.mrf.mxu0
        %4786 = vdwg.mxu0
        %v4787 = vadd.f32 %v4564, %v4757
        %v4788 = vadd.f32 %v4565, %v4760
        %v4789 = vadd.f32 %v4566, %v4765
        %v4790 = vadd.f32 %v4567, %v4768
        %v4791 = vadd.f32 %v4568, %v4773
        %v4792 = vadd.f32 %v4569, %v4776
        %v4793 = vadd.f32 %v4570, %v4781
        %v4794 = vadd.f32 %v4571, %v4784
        %4795 = vset.pattern.permute.xlu0 20
        %4796 = vperm.xlu0 %4795, %v315
        %v4797 = vpop.permute.xlu0 %4796
        %4798 = vset.pattern.permute.xlu0 20
        %4799 = vperm.xlu0 %4798, %v316
        %v4800 = vpop.permute.xlu0 %4799
        %4801 = vset.pattern.permute.xlu0 20
        %4802 = vperm.xlu0 %4801, %v317
        %v4803 = vpop.permute.xlu0 %4802
        %4804 = vset.pattern.permute.xlu0 20
        %4805 = vperm.xlu0 %4804, %v318
        %v4806 = vpop.permute.xlu0 %4805
        %4807 = vset.pattern.permute.xlu0 20
        %4808 = vperm.xlu0 %4807, %v319
        %v4809 = vpop.permute.xlu0 %4808
        %4810 = vset.pattern.permute.xlu0 20
        %4811 = vperm.xlu0 %4810, %v320
        %v4812 = vpop.permute.xlu0 %4811
        %4813 = vset.pattern.permute.xlu0 20
        %4814 = vperm.xlu0 %4813, %v321
        %v4815 = vpop.permute.xlu0 %4814
        %4816 = vset.pattern.permute.xlu0 20
        %4817 = vperm.xlu0 %4816, %v322
        %v4818 = vpop.permute.xlu0 %4817
        %vm4819 = vcmp.eq.s32.totalorder %v4797, %v324
        %vm4820 = vcmp.eq.s32.totalorder %v4800, %v324
        %vm4821 = vcmp.eq.s32.totalorder %v4803, %v324
        %vm4822 = vcmp.eq.s32.totalorder %v4806, %v324
        %vm4823 = vcmp.eq.s32.totalorder %v4809, %v324
        %vm4824 = vcmp.eq.s32.totalorder %v4812, %v324
        %vm4825 = vcmp.eq.s32.totalorder %v4815, %v324
        %vm4826 = vcmp.eq.s32.totalorder %v4818, %v324
        %v4827 = vsel %vm4819, 1, 0
        %v4828 = vsel %vm4820, 1, 0
        %v4829 = vsel %vm4821, 1, 0
        %v4830 = vsel %vm4822, 1, 0
        %v4831 = vsel %vm4823, 1, 0
        %v4832 = vsel %vm4824, 1, 0
        %v4833 = vsel %vm4825, 1, 0
        %v4834 = vsel %vm4826, 1, 0
        %v4835 = vcvt.s32.f32 %v4827
        %v4836 = vcvt.s32.f32 %v4828
        %v4837 = vcvt.s32.f32 %v4829
        %v4838 = vcvt.s32.f32 %v4830
        %v4839 = vcvt.s32.f32 %v4831
        %v4840 = vcvt.s32.f32 %v4832
        %v4841 = vcvt.s32.f32 %v4833
        %v4842 = vcvt.s32.f32 %v4834
        %v4843 = vpack.c.bf16 %v4836, %v4835
        %v4844 = vpack.c.bf16 %v4838, %v4837
        %v4845 = vpack.c.bf16 %v4840, %v4839
        %v4846 = vpack.c.bf16 %v4842, %v4841
        %v4848 = vsel %vm401, %v4843, 0
        %v4851 = vsel %vm401, %v4844, 0
        %v4854 = vsel %vm401, %v4845, 0
        %v4857 = vsel %vm401, %v4846, 0
        %4859 = vmatprep.subr.bf16.mxu0 0
        %4860 = vmatpush1.bf16.msra.mxu0 0
        %4861 = vmatprep.subr.bf16.mxu0 0
        %4862 = vmatpush1.bf16.msra.mxu0 0
        %4863 = vmatprep.subr.bf16.mxu0 0
        %4864 = vmatpush1.bf16.msra.mxu0 0
        %4865 = vmatprep.subr.bf16.mxu0 0
        %4866 = vmatpush1.bf16.msra.mxu0 0
        %4867 = vmatprep.subr.bf16.mxu0 0
        %4868 = vmatpush1.bf16.msra.mxu0 %v396
        %4869 = vmatprep.subr.bf16.mxu0 0
        %4870 = vmatpush1.bf16.msra.mxu0 %v395
        %4871 = vmatprep.subr.bf16.mxu0 0
        %4872 = vmatpush1.bf16.msra.mxu0 %v394
        %4873 = vmatprep.subr.bf16.mxu0 0
        %4874 = vmatpush1.bf16.msra.mxu0 %v393
        %4875 = vmatprep.subr.bf16.mxu0 0
        %4876 = vmatpush2.bf16.msra.mxu0 0
        %4877 = vmatprep.subr.bf16.mxu0 0
        %4878 = vmatpush2.bf16.msra.mxu0 0
        %4879 = vmatprep.subr.bf16.mxu0 0
        %4880 = vmatpush2.bf16.msra.mxu0 0
        %4881 = vmatprep.subr.bf16.mxu0 0
        %4882 = vmatpush2.bf16.msra.mxu0 0
        %4883 = vmatprep.subr.bf16.mxu0 0
        %4884 = vmatpush2.bf16.msra.mxu0 0
        %4885 = vmatprep.subr.bf16.mxu0 0
        %4886 = vmatpush2.bf16.msra.mxu0 0
        %4887 = vmatprep.subr.bf16.mxu0 0
        %4888 = vmatpush2.bf16.msra.mxu0 0
        %4889 = vmatprep.subr.bf16.mxu0 0
        %4890 = vmatpush2.bf16.msra.mxu0 0
        %4891 = vmatprep.mubr.bf16.mxu0 0
        %4892 = vmatmul.mubr.bf16.gmra.mxu0 %v4848
        %v4893 = vpop.f32.mrf.mxu0
        %v4894 = vadd.f32 0.0, %v4893
        %v4895 = vpop.f32.mrf.mxu0
        %v4896 = vpop.f32.mrf.mxu0
        %v4897 = vadd.f32 0.0, %v4896
        %v4898 = vpop.f32.mrf.mxu0
        %4899 = vmatprep.mubr.bf16.mxu0 0
        %4900 = vmatmul.mubr.bf16.gmra.mxu0 %v4851
        %v4901 = vpop.f32.mrf.mxu0
        %v4902 = vadd.f32 0.0, %v4901
        %v4903 = vpop.f32.mrf.mxu0
        %v4904 = vpop.f32.mrf.mxu0
        %v4905 = vadd.f32 0.0, %v4904
        %v4906 = vpop.f32.mrf.mxu0
        %4907 = vmatprep.mubr.bf16.mxu0 0
        %4908 = vmatmul.mubr.bf16.gmra.mxu0 %v4854
        %v4909 = vpop.f32.mrf.mxu0
        %v4910 = vadd.f32 0.0, %v4909
        %v4911 = vpop.f32.mrf.mxu0
        %v4912 = vpop.f32.mrf.mxu0
        %v4913 = vadd.f32 0.0, %v4912
        %v4914 = vpop.f32.mrf.mxu0
        %4915 = vmatprep.mubr.bf16.mxu0 0
        %4916 = vmatmul.mubr.bf16.gmra.mxu0 %v4857
        %v4917 = vpop.f32.mrf.mxu0
        %v4918 = vadd.f32 0.0, %v4917
        %v4919 = vpop.f32.mrf.mxu0
        %v4920 = vpop.f32.mrf.mxu0
        %v4921 = vadd.f32 0.0, %v4920
        %v4922 = vpop.f32.mrf.mxu0
        %4923 = vdwg.mxu0
        %v4924 = vpack.c.bf16 %v4897, %v4894
        %v4925 = vpack.c.bf16 %v4905, %v4902
        %v4926 = vpack.c.bf16 %v4913, %v4910
        %v4927 = vpack.c.bf16 %v4921, %v4918
        %s4928 = scalar_lea.vmem %s3, 40
        %v4929 = vld [vmem:[%s4928] sm:$0x3]
        %v4931 = vsel %vm619, %v4924, 0
        %v4934 = vsel %vm619, %v4925, 0
        %v4937 = vsel %vm619, %v4926, 0
        %v4940 = vsel %vm619, %v4927, 0
        %v4943 = vsel %vm632, %v4929, 0
        %4945 = vmatprep.subr.bf16.mxu0 0
        %4946 = vmatpush1.bf16.msra.mxu0 0
        %4947 = vmatprep.subr.bf16.mxu0 0
        %4948 = vmatpush1.bf16.msra.mxu0 0
        %4949 = vmatprep.subr.bf16.mxu0 0
        %4950 = vmatpush1.bf16.msra.mxu0 0
        %4951 = vmatprep.subr.bf16.mxu0 0
        %4952 = vmatpush1.bf16.msra.mxu0 0
        %4953 = vmatprep.subr.bf16.mxu0 0
        %4954 = vmatpush1.bf16.msra.mxu0 0
        %4955 = vmatprep.subr.bf16.mxu0 0
        %4956 = vmatpush1.bf16.msra.mxu0 0
        %4957 = vmatprep.subr.bf16.mxu0 0
        %4958 = vmatpush1.bf16.msra.mxu0 0
        %4959 = vmatprep.subr.bf16.mxu0 0
        %4960 = vmatpush1.bf16.msra.mxu0 %v4943
        %4961 = vmatprep.subr.bf16.mxu0 0
        %4962 = vmatpush2.bf16.msra.mxu0 0
        %4963 = vmatprep.subr.bf16.mxu0 0
        %4964 = vmatpush2.bf16.msra.mxu0 0
        %4965 = vmatprep.subr.bf16.mxu0 0
        %4966 = vmatpush2.bf16.msra.mxu0 0
        %4967 = vmatprep.subr.bf16.mxu0 0
        %4968 = vmatpush2.bf16.msra.mxu0 0
        %4969 = vmatprep.subr.bf16.mxu0 0
        %4970 = vmatpush2.bf16.msra.mxu0 0
        %4971 = vmatprep.subr.bf16.mxu0 0
        %4972 = vmatpush2.bf16.msra.mxu0 0
        %4973 = vmatprep.subr.bf16.mxu0 0
        %4974 = vmatpush2.bf16.msra.mxu0 0
        %4975 = vmatprep.subr.bf16.mxu0 0
        %4976 = vmatpush2.bf16.msra.mxu0 0
        %4977 = vmatprep.mubr.bf16.mxu0 0
        %4978 = vmatmul.mubr.bf16.gmra.mxu0 %v4931
        %v4979 = vpop.f32.mrf.mxu0
        %v4980 = vadd.f32 0.0, %v4979
        %v4981 = vpop.f32.mrf.mxu0
        %v4982 = vpop.f32.mrf.mxu0
        %v4983 = vadd.f32 0.0, %v4982
        %v4984 = vpop.f32.mrf.mxu0
        %4985 = vmatprep.mubr.bf16.mxu0 0
        %4986 = vmatmul.mubr.bf16.gmra.mxu0 %v4934
        %v4987 = vpop.f32.mrf.mxu0
        %v4988 = vadd.f32 0.0, %v4987
        %v4989 = vpop.f32.mrf.mxu0
        %v4990 = vpop.f32.mrf.mxu0
        %v4991 = vadd.f32 0.0, %v4990
        %v4992 = vpop.f32.mrf.mxu0
        %4993 = vmatprep.mubr.bf16.mxu0 0
        %4994 = vmatmul.mubr.bf16.gmra.mxu0 %v4937
        %v4995 = vpop.f32.mrf.mxu0
        %v4996 = vadd.f32 0.0, %v4995
        %v4997 = vpop.f32.mrf.mxu0
        %v4998 = vpop.f32.mrf.mxu0
        %v4999 = vadd.f32 0.0, %v4998
        %v5000 = vpop.f32.mrf.mxu0
        %5001 = vmatprep.mubr.bf16.mxu0 0
        %5002 = vmatmul.mubr.bf16.gmra.mxu0 %v4940
        %v5003 = vpop.f32.mrf.mxu0
        %v5004 = vadd.f32 0.0, %v5003
        %v5005 = vpop.f32.mrf.mxu0
        %v5006 = vpop.f32.mrf.mxu0
        %v5007 = vadd.f32 0.0, %v5006
        %v5008 = vpop.f32.mrf.mxu0
        %5009 = vdwg.mxu0
        %v5010 = vadd.f32 %v4787, %v4980
        %v5011 = vadd.f32 %v4788, %v4983
        %v5012 = vadd.f32 %v4789, %v4988
        %v5013 = vadd.f32 %v4790, %v4991
        %v5014 = vadd.f32 %v4791, %v4996
        %v5015 = vadd.f32 %v4792, %v4999
        %v5016 = vadd.f32 %v4793, %v5004
        %v5017 = vadd.f32 %v4794, %v5007
        %5018 = vset.pattern.permute.xlu0 21
        %5019 = vperm.xlu0 %5018, %v315
        %v5020 = vpop.permute.xlu0 %5019
        %5021 = vset.pattern.permute.xlu0 21
        %5022 = vperm.xlu0 %5021, %v316
        %v5023 = vpop.permute.xlu0 %5022
        %5024 = vset.pattern.permute.xlu0 21
        %5025 = vperm.xlu0 %5024, %v317
        %v5026 = vpop.permute.xlu0 %5025
        %5027 = vset.pattern.permute.xlu0 21
        %5028 = vperm.xlu0 %5027, %v318
        %v5029 = vpop.permute.xlu0 %5028
        %5030 = vset.pattern.permute.xlu0 21
        %5031 = vperm.xlu0 %5030, %v319
        %v5032 = vpop.permute.xlu0 %5031
        %5033 = vset.pattern.permute.xlu0 21
        %5034 = vperm.xlu0 %5033, %v320
        %v5035 = vpop.permute.xlu0 %5034
        %5036 = vset.pattern.permute.xlu0 21
        %5037 = vperm.xlu0 %5036, %v321
        %v5038 = vpop.permute.xlu0 %5037
        %5039 = vset.pattern.permute.xlu0 21
        %5040 = vperm.xlu0 %5039, %v322
        %v5041 = vpop.permute.xlu0 %5040
        %vm5042 = vcmp.eq.s32.totalorder %v5020, %v324
        %vm5043 = vcmp.eq.s32.totalorder %v5023, %v324
        %vm5044 = vcmp.eq.s32.totalorder %v5026, %v324
        %vm5045 = vcmp.eq.s32.totalorder %v5029, %v324
        %vm5046 = vcmp.eq.s32.totalorder %v5032, %v324
        %vm5047 = vcmp.eq.s32.totalorder %v5035, %v324
        %vm5048 = vcmp.eq.s32.totalorder %v5038, %v324
        %vm5049 = vcmp.eq.s32.totalorder %v5041, %v324
        %v5050 = vsel %vm5042, 1, 0
        %v5051 = vsel %vm5043, 1, 0
        %v5052 = vsel %vm5044, 1, 0
        %v5053 = vsel %vm5045, 1, 0
        %v5054 = vsel %vm5046, 1, 0
        %v5055 = vsel %vm5047, 1, 0
        %v5056 = vsel %vm5048, 1, 0
        %v5057 = vsel %vm5049, 1, 0
        %v5058 = vcvt.s32.f32 %v5050
        %v5059 = vcvt.s32.f32 %v5051
        %v5060 = vcvt.s32.f32 %v5052
        %v5061 = vcvt.s32.f32 %v5053
        %v5062 = vcvt.s32.f32 %v5054
        %v5063 = vcvt.s32.f32 %v5055
        %v5064 = vcvt.s32.f32 %v5056
        %v5065 = vcvt.s32.f32 %v5057
        %v5066 = vpack.c.bf16 %v5059, %v5058
        %v5067 = vpack.c.bf16 %v5061, %v5060
        %v5068 = vpack.c.bf16 %v5063, %v5062
        %v5069 = vpack.c.bf16 %v5065, %v5064
        %v5071 = vsel %vm401, %v5066, 0
        %v5074 = vsel %vm401, %v5067, 0
        %v5077 = vsel %vm401, %v5068, 0
        %v5080 = vsel %vm401, %v5069, 0
        %5082 = vmatprep.subr.bf16.mxu0 0
        %5083 = vmatpush1.bf16.msra.mxu0 0
        %5084 = vmatprep.subr.bf16.mxu0 0
        %5085 = vmatpush1.bf16.msra.mxu0 0
        %5086 = vmatprep.subr.bf16.mxu0 0
        %5087 = vmatpush1.bf16.msra.mxu0 0
        %5088 = vmatprep.subr.bf16.mxu0 0
        %5089 = vmatpush1.bf16.msra.mxu0 0
        %5090 = vmatprep.subr.bf16.mxu0 0
        %5091 = vmatpush1.bf16.msra.mxu0 %v396
        %5092 = vmatprep.subr.bf16.mxu0 0
        %5093 = vmatpush1.bf16.msra.mxu0 %v395
        %5094 = vmatprep.subr.bf16.mxu0 0
        %5095 = vmatpush1.bf16.msra.mxu0 %v394
        %5096 = vmatprep.subr.bf16.mxu0 0
        %5097 = vmatpush1.bf16.msra.mxu0 %v393
        %5098 = vmatprep.subr.bf16.mxu0 0
        %5099 = vmatpush2.bf16.msra.mxu0 0
        %5100 = vmatprep.subr.bf16.mxu0 0
        %5101 = vmatpush2.bf16.msra.mxu0 0
        %5102 = vmatprep.subr.bf16.mxu0 0
        %5103 = vmatpush2.bf16.msra.mxu0 0
        %5104 = vmatprep.subr.bf16.mxu0 0
        %5105 = vmatpush2.bf16.msra.mxu0 0
        %5106 = vmatprep.subr.bf16.mxu0 0
        %5107 = vmatpush2.bf16.msra.mxu0 0
        %5108 = vmatprep.subr.bf16.mxu0 0
        %5109 = vmatpush2.bf16.msra.mxu0 0
        %5110 = vmatprep.subr.bf16.mxu0 0
        %5111 = vmatpush2.bf16.msra.mxu0 0
        %5112 = vmatprep.subr.bf16.mxu0 0
        %5113 = vmatpush2.bf16.msra.mxu0 0
        %5114 = vmatprep.mubr.bf16.mxu0 0
        %5115 = vmatmul.mubr.bf16.gmra.mxu0 %v5071
        %v5116 = vpop.f32.mrf.mxu0
        %v5117 = vadd.f32 0.0, %v5116
        %v5118 = vpop.f32.mrf.mxu0
        %v5119 = vpop.f32.mrf.mxu0
        %v5120 = vadd.f32 0.0, %v5119
        %v5121 = vpop.f32.mrf.mxu0
        %5122 = vmatprep.mubr.bf16.mxu0 0
        %5123 = vmatmul.mubr.bf16.gmra.mxu0 %v5074
        %v5124 = vpop.f32.mrf.mxu0
        %v5125 = vadd.f32 0.0, %v5124
        %v5126 = vpop.f32.mrf.mxu0
        %v5127 = vpop.f32.mrf.mxu0
        %v5128 = vadd.f32 0.0, %v5127
        %v5129 = vpop.f32.mrf.mxu0
        %5130 = vmatprep.mubr.bf16.mxu0 0
        %5131 = vmatmul.mubr.bf16.gmra.mxu0 %v5077
        %v5132 = vpop.f32.mrf.mxu0
        %v5133 = vadd.f32 0.0, %v5132
        %v5134 = vpop.f32.mrf.mxu0
        %v5135 = vpop.f32.mrf.mxu0
        %v5136 = vadd.f32 0.0, %v5135
        %v5137 = vpop.f32.mrf.mxu0
        %5138 = vmatprep.mubr.bf16.mxu0 0
        %5139 = vmatmul.mubr.bf16.gmra.mxu0 %v5080
        %v5140 = vpop.f32.mrf.mxu0
        %v5141 = vadd.f32 0.0, %v5140
        %v5142 = vpop.f32.mrf.mxu0
        %v5143 = vpop.f32.mrf.mxu0
        %v5144 = vadd.f32 0.0, %v5143
        %v5145 = vpop.f32.mrf.mxu0
        %5146 = vdwg.mxu0
        %v5147 = vpack.c.bf16 %v5120, %v5117
        %v5148 = vpack.c.bf16 %v5128, %v5125
        %v5149 = vpack.c.bf16 %v5136, %v5133
        %v5150 = vpack.c.bf16 %v5144, %v5141
        %s5151 = scalar_lea.vmem %s3, 42
        %v5152 = vld [vmem:[%s5151] sm:$0x3]
        %v5154 = vsel %vm619, %v5147, 0
        %v5157 = vsel %vm619, %v5148, 0
        %v5160 = vsel %vm619, %v5149, 0
        %v5163 = vsel %vm619, %v5150, 0
        %v5166 = vsel %vm632, %v5152, 0
        %5168 = vmatprep.subr.bf16.mxu0 0
        %5169 = vmatpush1.bf16.msra.mxu0 0
        %5170 = vmatprep.subr.bf16.mxu0 0
        %5171 = vmatpush1.bf16.msra.mxu0 0
        %5172 = vmatprep.subr.bf16.mxu0 0
        %5173 = vmatpush1.bf16.msra.mxu0 0
        %5174 = vmatprep.subr.bf16.mxu0 0
        %5175 = vmatpush1.bf16.msra.mxu0 0
        %5176 = vmatprep.subr.bf16.mxu0 0
        %5177 = vmatpush1.bf16.msra.mxu0 0
        %5178 = vmatprep.subr.bf16.mxu0 0
        %5179 = vmatpush1.bf16.msra.mxu0 0
        %5180 = vmatprep.subr.bf16.mxu0 0
        %5181 = vmatpush1.bf16.msra.mxu0 0
        %5182 = vmatprep.subr.bf16.mxu0 0
        %5183 = vmatpush1.bf16.msra.mxu0 %v5166
        %5184 = vmatprep.subr.bf16.mxu0 0
        %5185 = vmatpush2.bf16.msra.mxu0 0
        %5186 = vmatprep.subr.bf16.mxu0 0
        %5187 = vmatpush2.bf16.msra.mxu0 0
        %5188 = vmatprep.subr.bf16.mxu0 0
        %5189 = vmatpush2.bf16.msra.mxu0 0
        %5190 = vmatprep.subr.bf16.mxu0 0
        %5191 = vmatpush2.bf16.msra.mxu0 0
        %5192 = vmatprep.subr.bf16.mxu0 0
        %5193 = vmatpush2.bf16.msra.mxu0 0
        %5194 = vmatprep.subr.bf16.mxu0 0
        %5195 = vmatpush2.bf16.msra.mxu0 0
        %5196 = vmatprep.subr.bf16.mxu0 0
        %5197 = vmatpush2.bf16.msra.mxu0 0
        %5198 = vmatprep.subr.bf16.mxu0 0
        %5199 = vmatpush2.bf16.msra.mxu0 0
        %5200 = vmatprep.mubr.bf16.mxu0 0
        %5201 = vmatmul.mubr.bf16.gmra.mxu0 %v5154
        %v5202 = vpop.f32.mrf.mxu0
        %v5203 = vadd.f32 0.0, %v5202
        %v5204 = vpop.f32.mrf.mxu0
        %v5205 = vpop.f32.mrf.mxu0
        %v5206 = vadd.f32 0.0, %v5205
        %v5207 = vpop.f32.mrf.mxu0
        %5208 = vmatprep.mubr.bf16.mxu0 0
        %5209 = vmatmul.mubr.bf16.gmra.mxu0 %v5157
        %v5210 = vpop.f32.mrf.mxu0
        %v5211 = vadd.f32 0.0, %v5210
        %v5212 = vpop.f32.mrf.mxu0
        %v5213 = vpop.f32.mrf.mxu0
        %v5214 = vadd.f32 0.0, %v5213
        %v5215 = vpop.f32.mrf.mxu0
        %5216 = vmatprep.mubr.bf16.mxu0 0
        %5217 = vmatmul.mubr.bf16.gmra.mxu0 %v5160
        %v5218 = vpop.f32.mrf.mxu0
        %v5219 = vadd.f32 0.0, %v5218
        %v5220 = vpop.f32.mrf.mxu0
        %v5221 = vpop.f32.mrf.mxu0
        %v5222 = vadd.f32 0.0, %v5221
        %v5223 = vpop.f32.mrf.mxu0
        %5224 = vmatprep.mubr.bf16.mxu0 0
        %5225 = vmatmul.mubr.bf16.gmra.mxu0 %v5163
        %v5226 = vpop.f32.mrf.mxu0
        %v5227 = vadd.f32 0.0, %v5226
        %v5228 = vpop.f32.mrf.mxu0
        %v5229 = vpop.f32.mrf.mxu0
        %v5230 = vadd.f32 0.0, %v5229
        %v5231 = vpop.f32.mrf.mxu0
        %5232 = vdwg.mxu0
        %v5233 = vadd.f32 %v5010, %v5203
        %v5234 = vadd.f32 %v5011, %v5206
        %v5235 = vadd.f32 %v5012, %v5211
        %v5236 = vadd.f32 %v5013, %v5214
        %v5237 = vadd.f32 %v5014, %v5219
        %v5238 = vadd.f32 %v5015, %v5222
        %v5239 = vadd.f32 %v5016, %v5227
        %v5240 = vadd.f32 %v5017, %v5230
        %5241 = vset.pattern.permute.xlu0 22
        %5242 = vperm.xlu0 %5241, %v315
        %v5243 = vpop.permute.xlu0 %5242
        %5244 = vset.pattern.permute.xlu0 22
        %5245 = vperm.xlu0 %5244, %v316
        %v5246 = vpop.permute.xlu0 %5245
        %5247 = vset.pattern.permute.xlu0 22
        %5248 = vperm.xlu0 %5247, %v317
        %v5249 = vpop.permute.xlu0 %5248
        %5250 = vset.pattern.permute.xlu0 22
        %5251 = vperm.xlu0 %5250, %v318
        %v5252 = vpop.permute.xlu0 %5251
        %5253 = vset.pattern.permute.xlu0 22
        %5254 = vperm.xlu0 %5253, %v319
        %v5255 = vpop.permute.xlu0 %5254
        %5256 = vset.pattern.permute.xlu0 22
        %5257 = vperm.xlu0 %5256, %v320
        %v5258 = vpop.permute.xlu0 %5257
        %5259 = vset.pattern.permute.xlu0 22
        %5260 = vperm.xlu0 %5259, %v321
        %v5261 = vpop.permute.xlu0 %5260
        %5262 = vset.pattern.permute.xlu0 22
        %5263 = vperm.xlu0 %5262, %v322
        %v5264 = vpop.permute.xlu0 %5263
        %vm5265 = vcmp.eq.s32.totalorder %v5243, %v324
        %vm5266 = vcmp.eq.s32.totalorder %v5246, %v324
        %vm5267 = vcmp.eq.s32.totalorder %v5249, %v324
        %vm5268 = vcmp.eq.s32.totalorder %v5252, %v324
        %vm5269 = vcmp.eq.s32.totalorder %v5255, %v324
        %vm5270 = vcmp.eq.s32.totalorder %v5258, %v324
        %vm5271 = vcmp.eq.s32.totalorder %v5261, %v324
        %vm5272 = vcmp.eq.s32.totalorder %v5264, %v324
        %v5273 = vsel %vm5265, 1, 0
        %v5274 = vsel %vm5266, 1, 0
        %v5275 = vsel %vm5267, 1, 0
        %v5276 = vsel %vm5268, 1, 0
        %v5277 = vsel %vm5269, 1, 0
        %v5278 = vsel %vm5270, 1, 0
        %v5279 = vsel %vm5271, 1, 0
        %v5280 = vsel %vm5272, 1, 0
        %v5281 = vcvt.s32.f32 %v5273
        %v5282 = vcvt.s32.f32 %v5274
        %v5283 = vcvt.s32.f32 %v5275
        %v5284 = vcvt.s32.f32 %v5276
        %v5285 = vcvt.s32.f32 %v5277
        %v5286 = vcvt.s32.f32 %v5278
        %v5287 = vcvt.s32.f32 %v5279
        %v5288 = vcvt.s32.f32 %v5280
        %v5289 = vpack.c.bf16 %v5282, %v5281
        %v5290 = vpack.c.bf16 %v5284, %v5283
        %v5291 = vpack.c.bf16 %v5286, %v5285
        %v5292 = vpack.c.bf16 %v5288, %v5287
        %v5294 = vsel %vm401, %v5289, 0
        %v5297 = vsel %vm401, %v5290, 0
        %v5300 = vsel %vm401, %v5291, 0
        %v5303 = vsel %vm401, %v5292, 0
        %5305 = vmatprep.subr.bf16.mxu0 0
        %5306 = vmatpush1.bf16.msra.mxu0 0
        %5307 = vmatprep.subr.bf16.mxu0 0
        %5308 = vmatpush1.bf16.msra.mxu0 0
        %5309 = vmatprep.subr.bf16.mxu0 0
        %5310 = vmatpush1.bf16.msra.mxu0 0
        %5311 = vmatprep.subr.bf16.mxu0 0
        %5312 = vmatpush1.bf16.msra.mxu0 0
        %5313 = vmatprep.subr.bf16.mxu0 0
        %5314 = vmatpush1.bf16.msra.mxu0 %v396
        %5315 = vmatprep.subr.bf16.mxu0 0
        %5316 = vmatpush1.bf16.msra.mxu0 %v395
        %5317 = vmatprep.subr.bf16.mxu0 0
        %5318 = vmatpush1.bf16.msra.mxu0 %v394
        %5319 = vmatprep.subr.bf16.mxu0 0
        %5320 = vmatpush1.bf16.msra.mxu0 %v393
        %5321 = vmatprep.subr.bf16.mxu0 0
        %5322 = vmatpush2.bf16.msra.mxu0 0
        %5323 = vmatprep.subr.bf16.mxu0 0
        %5324 = vmatpush2.bf16.msra.mxu0 0
        %5325 = vmatprep.subr.bf16.mxu0 0
        %5326 = vmatpush2.bf16.msra.mxu0 0
        %5327 = vmatprep.subr.bf16.mxu0 0
        %5328 = vmatpush2.bf16.msra.mxu0 0
        %5329 = vmatprep.subr.bf16.mxu0 0
        %5330 = vmatpush2.bf16.msra.mxu0 0
        %5331 = vmatprep.subr.bf16.mxu0 0
        %5332 = vmatpush2.bf16.msra.mxu0 0
        %5333 = vmatprep.subr.bf16.mxu0 0
        %5334 = vmatpush2.bf16.msra.mxu0 0
        %5335 = vmatprep.subr.bf16.mxu0 0
        %5336 = vmatpush2.bf16.msra.mxu0 0
        %5337 = vmatprep.mubr.bf16.mxu0 0
        %5338 = vmatmul.mubr.bf16.gmra.mxu0 %v5294
        %v5339 = vpop.f32.mrf.mxu0
        %v5340 = vadd.f32 0.0, %v5339
        %v5341 = vpop.f32.mrf.mxu0
        %v5342 = vpop.f32.mrf.mxu0
        %v5343 = vadd.f32 0.0, %v5342
        %v5344 = vpop.f32.mrf.mxu0
        %5345 = vmatprep.mubr.bf16.mxu0 0
        %5346 = vmatmul.mubr.bf16.gmra.mxu0 %v5297
        %v5347 = vpop.f32.mrf.mxu0
        %v5348 = vadd.f32 0.0, %v5347
        %v5349 = vpop.f32.mrf.mxu0
        %v5350 = vpop.f32.mrf.mxu0
        %v5351 = vadd.f32 0.0, %v5350
        %v5352 = vpop.f32.mrf.mxu0
        %5353 = vmatprep.mubr.bf16.mxu0 0
        %5354 = vmatmul.mubr.bf16.gmra.mxu0 %v5300
        %v5355 = vpop.f32.mrf.mxu0
        %v5356 = vadd.f32 0.0, %v5355
        %v5357 = vpop.f32.mrf.mxu0
        %v5358 = vpop.f32.mrf.mxu0
        %v5359 = vadd.f32 0.0, %v5358
        %v5360 = vpop.f32.mrf.mxu0
        %5361 = vmatprep.mubr.bf16.mxu0 0
        %5362 = vmatmul.mubr.bf16.gmra.mxu0 %v5303
        %v5363 = vpop.f32.mrf.mxu0
        %v5364 = vadd.f32 0.0, %v5363
        %v5365 = vpop.f32.mrf.mxu0
        %v5366 = vpop.f32.mrf.mxu0
        %v5367 = vadd.f32 0.0, %v5366
        %v5368 = vpop.f32.mrf.mxu0
        %5369 = vdwg.mxu0
        %v5370 = vpack.c.bf16 %v5343, %v5340
        %v5371 = vpack.c.bf16 %v5351, %v5348
        %v5372 = vpack.c.bf16 %v5359, %v5356
        %v5373 = vpack.c.bf16 %v5367, %v5364
        %s5374 = scalar_lea.vmem %s3, 44
        %v5375 = vld [vmem:[%s5374] sm:$0x3]
        %v5377 = vsel %vm619, %v5370, 0
        %v5380 = vsel %vm619, %v5371, 0
        %v5383 = vsel %vm619, %v5372, 0
        %v5386 = vsel %vm619, %v5373, 0
        %v5389 = vsel %vm632, %v5375, 0
        %5391 = vmatprep.subr.bf16.mxu0 0
        %5392 = vmatpush1.bf16.msra.mxu0 0
        %5393 = vmatprep.subr.bf16.mxu0 0
        %5394 = vmatpush1.bf16.msra.mxu0 0
        %5395 = vmatprep.subr.bf16.mxu0 0
        %5396 = vmatpush1.bf16.msra.mxu0 0
        %5397 = vmatprep.subr.bf16.mxu0 0
        %5398 = vmatpush1.bf16.msra.mxu0 0
        %5399 = vmatprep.subr.bf16.mxu0 0
        %5400 = vmatpush1.bf16.msra.mxu0 0
        %5401 = vmatprep.subr.bf16.mxu0 0
        %5402 = vmatpush1.bf16.msra.mxu0 0
        %5403 = vmatprep.subr.bf16.mxu0 0
        %5404 = vmatpush1.bf16.msra.mxu0 0
        %5405 = vmatprep.subr.bf16.mxu0 0
        %5406 = vmatpush1.bf16.msra.mxu0 %v5389
        %5407 = vmatprep.subr.bf16.mxu0 0
        %5408 = vmatpush2.bf16.msra.mxu0 0
        %5409 = vmatprep.subr.bf16.mxu0 0
        %5410 = vmatpush2.bf16.msra.mxu0 0
        %5411 = vmatprep.subr.bf16.mxu0 0
        %5412 = vmatpush2.bf16.msra.mxu0 0
        %5413 = vmatprep.subr.bf16.mxu0 0
        %5414 = vmatpush2.bf16.msra.mxu0 0
        %5415 = vmatprep.subr.bf16.mxu0 0
        %5416 = vmatpush2.bf16.msra.mxu0 0
        %5417 = vmatprep.subr.bf16.mxu0 0
        %5418 = vmatpush2.bf16.msra.mxu0 0
        %5419 = vmatprep.subr.bf16.mxu0 0
        %5420 = vmatpush2.bf16.msra.mxu0 0
        %5421 = vmatprep.subr.bf16.mxu0 0
        %5422 = vmatpush2.bf16.msra.mxu0 0
        %5423 = vmatprep.mubr.bf16.mxu0 0
        %5424 = vmatmul.mubr.bf16.gmra.mxu0 %v5377
        %v5425 = vpop.f32.mrf.mxu0
        %v5426 = vadd.f32 0.0, %v5425
        %v5427 = vpop.f32.mrf.mxu0
        %v5428 = vpop.f32.mrf.mxu0
        %v5429 = vadd.f32 0.0, %v5428
        %v5430 = vpop.f32.mrf.mxu0
        %5431 = vmatprep.mubr.bf16.mxu0 0
        %5432 = vmatmul.mubr.bf16.gmra.mxu0 %v5380
        %v5433 = vpop.f32.mrf.mxu0
        %v5434 = vadd.f32 0.0, %v5433
        %v5435 = vpop.f32.mrf.mxu0
        %v5436 = vpop.f32.mrf.mxu0
        %v5437 = vadd.f32 0.0, %v5436
        %v5438 = vpop.f32.mrf.mxu0
        %5439 = vmatprep.mubr.bf16.mxu0 0
        %5440 = vmatmul.mubr.bf16.gmra.mxu0 %v5383
        %v5441 = vpop.f32.mrf.mxu0
        %v5442 = vadd.f32 0.0, %v5441
        %v5443 = vpop.f32.mrf.mxu0
        %v5444 = vpop.f32.mrf.mxu0
        %v5445 = vadd.f32 0.0, %v5444
        %v5446 = vpop.f32.mrf.mxu0
        %5447 = vmatprep.mubr.bf16.mxu0 0
        %5448 = vmatmul.mubr.bf16.gmra.mxu0 %v5386
        %v5449 = vpop.f32.mrf.mxu0
        %v5450 = vadd.f32 0.0, %v5449
        %v5451 = vpop.f32.mrf.mxu0
        %v5452 = vpop.f32.mrf.mxu0
        %v5453 = vadd.f32 0.0, %v5452
        %v5454 = vpop.f32.mrf.mxu0
        %5455 = vdwg.mxu0
        %v5456 = vadd.f32 %v5233, %v5426
        %v5457 = vadd.f32 %v5234, %v5429
        %v5458 = vadd.f32 %v5235, %v5434
        %v5459 = vadd.f32 %v5236, %v5437
        %v5460 = vadd.f32 %v5237, %v5442
        %v5461 = vadd.f32 %v5238, %v5445
        %v5462 = vadd.f32 %v5239, %v5450
        %v5463 = vadd.f32 %v5240, %v5453
        %5464 = vset.pattern.permute.xlu0 23
        %5465 = vperm.xlu0 %5464, %v315
        %v5466 = vpop.permute.xlu0 %5465
        %5467 = vset.pattern.permute.xlu0 23
        %5468 = vperm.xlu0 %5467, %v316
        %v5469 = vpop.permute.xlu0 %5468
        %5470 = vset.pattern.permute.xlu0 23
        %5471 = vperm.xlu0 %5470, %v317
        %v5472 = vpop.permute.xlu0 %5471
        %5473 = vset.pattern.permute.xlu0 23
        %5474 = vperm.xlu0 %5473, %v318
        %v5475 = vpop.permute.xlu0 %5474
        %5476 = vset.pattern.permute.xlu0 23
        %5477 = vperm.xlu0 %5476, %v319
        %v5478 = vpop.permute.xlu0 %5477
        %5479 = vset.pattern.permute.xlu0 23
        %5480 = vperm.xlu0 %5479, %v320
        %v5481 = vpop.permute.xlu0 %5480
        %5482 = vset.pattern.permute.xlu0 23
        %5483 = vperm.xlu0 %5482, %v321
        %v5484 = vpop.permute.xlu0 %5483
        %5485 = vset.pattern.permute.xlu0 23
        %5486 = vperm.xlu0 %5485, %v322
        %v5487 = vpop.permute.xlu0 %5486
        %vm5488 = vcmp.eq.s32.totalorder %v5466, %v324
        %vm5489 = vcmp.eq.s32.totalorder %v5469, %v324
        %vm5490 = vcmp.eq.s32.totalorder %v5472, %v324
        %vm5491 = vcmp.eq.s32.totalorder %v5475, %v324
        %vm5492 = vcmp.eq.s32.totalorder %v5478, %v324
        %vm5493 = vcmp.eq.s32.totalorder %v5481, %v324
        %vm5494 = vcmp.eq.s32.totalorder %v5484, %v324
        %vm5495 = vcmp.eq.s32.totalorder %v5487, %v324
        %v5496 = vsel %vm5488, 1, 0
        %v5497 = vsel %vm5489, 1, 0
        %v5498 = vsel %vm5490, 1, 0
        %v5499 = vsel %vm5491, 1, 0
        %v5500 = vsel %vm5492, 1, 0
        %v5501 = vsel %vm5493, 1, 0
        %v5502 = vsel %vm5494, 1, 0
        %v5503 = vsel %vm5495, 1, 0
        %v5504 = vcvt.s32.f32 %v5496
        %v5505 = vcvt.s32.f32 %v5497
        %v5506 = vcvt.s32.f32 %v5498
        %v5507 = vcvt.s32.f32 %v5499
        %v5508 = vcvt.s32.f32 %v5500
        %v5509 = vcvt.s32.f32 %v5501
        %v5510 = vcvt.s32.f32 %v5502
        %v5511 = vcvt.s32.f32 %v5503
        %v5512 = vpack.c.bf16 %v5505, %v5504
        %v5513 = vpack.c.bf16 %v5507, %v5506
        %v5514 = vpack.c.bf16 %v5509, %v5508
        %v5515 = vpack.c.bf16 %v5511, %v5510
        %v5517 = vsel %vm401, %v5512, 0
        %v5520 = vsel %vm401, %v5513, 0
        %v5523 = vsel %vm401, %v5514, 0
        %v5526 = vsel %vm401, %v5515, 0
        %5528 = vmatprep.subr.bf16.mxu0 0
        %5529 = vmatpush1.bf16.msra.mxu0 0
        %5530 = vmatprep.subr.bf16.mxu0 0
        %5531 = vmatpush1.bf16.msra.mxu0 0
        %5532 = vmatprep.subr.bf16.mxu0 0
        %5533 = vmatpush1.bf16.msra.mxu0 0
        %5534 = vmatprep.subr.bf16.mxu0 0
        %5535 = vmatpush1.bf16.msra.mxu0 0
        %5536 = vmatprep.subr.bf16.mxu0 0
        %5537 = vmatpush1.bf16.msra.mxu0 %v396
        %5538 = vmatprep.subr.bf16.mxu0 0
        %5539 = vmatpush1.bf16.msra.mxu0 %v395
        %5540 = vmatprep.subr.bf16.mxu0 0
        %5541 = vmatpush1.bf16.msra.mxu0 %v394
        %5542 = vmatprep.subr.bf16.mxu0 0
        %5543 = vmatpush1.bf16.msra.mxu0 %v393
        %5544 = vmatprep.subr.bf16.mxu0 0
        %5545 = vmatpush2.bf16.msra.mxu0 0
        %5546 = vmatprep.subr.bf16.mxu0 0
        %5547 = vmatpush2.bf16.msra.mxu0 0
        %5548 = vmatprep.subr.bf16.mxu0 0
        %5549 = vmatpush2.bf16.msra.mxu0 0
        %5550 = vmatprep.subr.bf16.mxu0 0
        %5551 = vmatpush2.bf16.msra.mxu0 0
        %5552 = vmatprep.subr.bf16.mxu0 0
        %5553 = vmatpush2.bf16.msra.mxu0 0
        %5554 = vmatprep.subr.bf16.mxu0 0
        %5555 = vmatpush2.bf16.msra.mxu0 0
        %5556 = vmatprep.subr.bf16.mxu0 0
        %5557 = vmatpush2.bf16.msra.mxu0 0
        %5558 = vmatprep.subr.bf16.mxu0 0
        %5559 = vmatpush2.bf16.msra.mxu0 0
        %5560 = vmatprep.mubr.bf16.mxu0 0
        %5561 = vmatmul.mubr.bf16.gmra.mxu0 %v5517
        %v5562 = vpop.f32.mrf.mxu0
        %v5563 = vadd.f32 0.0, %v5562
        %v5564 = vpop.f32.mrf.mxu0
        %v5565 = vpop.f32.mrf.mxu0
        %v5566 = vadd.f32 0.0, %v5565
        %v5567 = vpop.f32.mrf.mxu0
        %5568 = vmatprep.mubr.bf16.mxu0 0
        %5569 = vmatmul.mubr.bf16.gmra.mxu0 %v5520
        %v5570 = vpop.f32.mrf.mxu0
        %v5571 = vadd.f32 0.0, %v5570
        %v5572 = vpop.f32.mrf.mxu0
        %v5573 = vpop.f32.mrf.mxu0
        %v5574 = vadd.f32 0.0, %v5573
        %v5575 = vpop.f32.mrf.mxu0
        %5576 = vmatprep.mubr.bf16.mxu0 0
        %5577 = vmatmul.mubr.bf16.gmra.mxu0 %v5523
        %v5578 = vpop.f32.mrf.mxu0
        %v5579 = vadd.f32 0.0, %v5578
        %v5580 = vpop.f32.mrf.mxu0
        %v5581 = vpop.f32.mrf.mxu0
        %v5582 = vadd.f32 0.0, %v5581
        %v5583 = vpop.f32.mrf.mxu0
        %5584 = vmatprep.mubr.bf16.mxu0 0
        %5585 = vmatmul.mubr.bf16.gmra.mxu0 %v5526
        %v5586 = vpop.f32.mrf.mxu0
        %v5587 = vadd.f32 0.0, %v5586
        %v5588 = vpop.f32.mrf.mxu0
        %v5589 = vpop.f32.mrf.mxu0
        %v5590 = vadd.f32 0.0, %v5589
        %v5591 = vpop.f32.mrf.mxu0
        %5592 = vdwg.mxu0
        %v5593 = vpack.c.bf16 %v5566, %v5563
        %v5594 = vpack.c.bf16 %v5574, %v5571
        %v5595 = vpack.c.bf16 %v5582, %v5579
        %v5596 = vpack.c.bf16 %v5590, %v5587
        %s5597 = scalar_lea.vmem %s3, 46
        %v5598 = vld [vmem:[%s5597] sm:$0x3]
        %v5600 = vsel %vm619, %v5593, 0
        %v5603 = vsel %vm619, %v5594, 0
        %v5606 = vsel %vm619, %v5595, 0
        %v5609 = vsel %vm619, %v5596, 0
        %v5612 = vsel %vm632, %v5598, 0
        %5614 = vmatprep.subr.bf16.mxu0 0
        %5615 = vmatpush1.bf16.msra.mxu0 0
        %5616 = vmatprep.subr.bf16.mxu0 0
        %5617 = vmatpush1.bf16.msra.mxu0 0
        %5618 = vmatprep.subr.bf16.mxu0 0
        %5619 = vmatpush1.bf16.msra.mxu0 0
        %5620 = vmatprep.subr.bf16.mxu0 0
        %5621 = vmatpush1.bf16.msra.mxu0 0
        %5622 = vmatprep.subr.bf16.mxu0 0
        %5623 = vmatpush1.bf16.msra.mxu0 0
        %5624 = vmatprep.subr.bf16.mxu0 0
        %5625 = vmatpush1.bf16.msra.mxu0 0
        %5626 = vmatprep.subr.bf16.mxu0 0
        %5627 = vmatpush1.bf16.msra.mxu0 0
        %5628 = vmatprep.subr.bf16.mxu0 0
        %5629 = vmatpush1.bf16.msra.mxu0 %v5612
        %5630 = vmatprep.subr.bf16.mxu0 0
        %5631 = vmatpush2.bf16.msra.mxu0 0
        %5632 = vmatprep.subr.bf16.mxu0 0
        %5633 = vmatpush2.bf16.msra.mxu0 0
        %5634 = vmatprep.subr.bf16.mxu0 0
        %5635 = vmatpush2.bf16.msra.mxu0 0
        %5636 = vmatprep.subr.bf16.mxu0 0
        %5637 = vmatpush2.bf16.msra.mxu0 0
        %5638 = vmatprep.subr.bf16.mxu0 0
        %5639 = vmatpush2.bf16.msra.mxu0 0
        %5640 = vmatprep.subr.bf16.mxu0 0
        %5641 = vmatpush2.bf16.msra.mxu0 0
        %5642 = vmatprep.subr.bf16.mxu0 0
        %5643 = vmatpush2.bf16.msra.mxu0 0
        %5644 = vmatprep.subr.bf16.mxu0 0
        %5645 = vmatpush2.bf16.msra.mxu0 0
        %5646 = vmatprep.mubr.bf16.mxu0 0
        %5647 = vmatmul.mubr.bf16.gmra.mxu0 %v5600
        %v5648 = vpop.f32.mrf.mxu0
        %v5649 = vadd.f32 0.0, %v5648
        %v5650 = vpop.f32.mrf.mxu0
        %v5651 = vpop.f32.mrf.mxu0
        %v5652 = vadd.f32 0.0, %v5651
        %v5653 = vpop.f32.mrf.mxu0
        %5654 = vmatprep.mubr.bf16.mxu0 0
        %5655 = vmatmul.mubr.bf16.gmra.mxu0 %v5603
        %v5656 = vpop.f32.mrf.mxu0
        %v5657 = vadd.f32 0.0, %v5656
        %v5658 = vpop.f32.mrf.mxu0
        %v5659 = vpop.f32.mrf.mxu0
        %v5660 = vadd.f32 0.0, %v5659
        %v5661 = vpop.f32.mrf.mxu0
        %5662 = vmatprep.mubr.bf16.mxu0 0
        %5663 = vmatmul.mubr.bf16.gmra.mxu0 %v5606
        %v5664 = vpop.f32.mrf.mxu0
        %v5665 = vadd.f32 0.0, %v5664
        %v5666 = vpop.f32.mrf.mxu0
        %v5667 = vpop.f32.mrf.mxu0
        %v5668 = vadd.f32 0.0, %v5667
        %v5669 = vpop.f32.mrf.mxu0
        %5670 = vmatprep.mubr.bf16.mxu0 0
        %5671 = vmatmul.mubr.bf16.gmra.mxu0 %v5609
        %v5672 = vpop.f32.mrf.mxu0
        %v5673 = vadd.f32 0.0, %v5672
        %v5674 = vpop.f32.mrf.mxu0
        %v5675 = vpop.f32.mrf.mxu0
        %v5676 = vadd.f32 0.0, %v5675
        %v5677 = vpop.f32.mrf.mxu0
        %5678 = vdwg.mxu0
        %v5679 = vadd.f32 %v5456, %v5649
        %v5680 = vadd.f32 %v5457, %v5652
        %v5681 = vadd.f32 %v5458, %v5657
        %v5682 = vadd.f32 %v5459, %v5660
        %v5683 = vadd.f32 %v5460, %v5665
        %v5684 = vadd.f32 %v5461, %v5668
        %v5685 = vadd.f32 %v5462, %v5673
        %v5686 = vadd.f32 %v5463, %v5676
        %5687 = vset.pattern.permute.xlu0 24
        %5688 = vperm.xlu0 %5687, %v315
        %v5689 = vpop.permute.xlu0 %5688
        %5690 = vset.pattern.permute.xlu0 24
        %5691 = vperm.xlu0 %5690, %v316
        %v5692 = vpop.permute.xlu0 %5691
        %5693 = vset.pattern.permute.xlu0 24
        %5694 = vperm.xlu0 %5693, %v317
        %v5695 = vpop.permute.xlu0 %5694
        %5696 = vset.pattern.permute.xlu0 24
        %5697 = vperm.xlu0 %5696, %v318
        %v5698 = vpop.permute.xlu0 %5697
        %5699 = vset.pattern.permute.xlu0 24
        %5700 = vperm.xlu0 %5699, %v319
        %v5701 = vpop.permute.xlu0 %5700
        %5702 = vset.pattern.permute.xlu0 24
        %5703 = vperm.xlu0 %5702, %v320
        %v5704 = vpop.permute.xlu0 %5703
        %5705 = vset.pattern.permute.xlu0 24
        %5706 = vperm.xlu0 %5705, %v321
        %v5707 = vpop.permute.xlu0 %5706
        %5708 = vset.pattern.permute.xlu0 24
        %5709 = vperm.xlu0 %5708, %v322
        %v5710 = vpop.permute.xlu0 %5709
        %vm5711 = vcmp.eq.s32.totalorder %v5689, %v324
        %vm5712 = vcmp.eq.s32.totalorder %v5692, %v324
        %vm5713 = vcmp.eq.s32.totalorder %v5695, %v324
        %vm5714 = vcmp.eq.s32.totalorder %v5698, %v324
        %vm5715 = vcmp.eq.s32.totalorder %v5701, %v324
        %vm5716 = vcmp.eq.s32.totalorder %v5704, %v324
        %vm5717 = vcmp.eq.s32.totalorder %v5707, %v324
        %vm5718 = vcmp.eq.s32.totalorder %v5710, %v324
        %v5719 = vsel %vm5711, 1, 0
        %v5720 = vsel %vm5712, 1, 0
        %v5721 = vsel %vm5713, 1, 0
        %v5722 = vsel %vm5714, 1, 0
        %v5723 = vsel %vm5715, 1, 0
        %v5724 = vsel %vm5716, 1, 0
        %v5725 = vsel %vm5717, 1, 0
        %v5726 = vsel %vm5718, 1, 0
        %v5727 = vcvt.s32.f32 %v5719
        %v5728 = vcvt.s32.f32 %v5720
        %v5729 = vcvt.s32.f32 %v5721
        %v5730 = vcvt.s32.f32 %v5722
        %v5731 = vcvt.s32.f32 %v5723
        %v5732 = vcvt.s32.f32 %v5724
        %v5733 = vcvt.s32.f32 %v5725
        %v5734 = vcvt.s32.f32 %v5726
        %v5735 = vpack.c.bf16 %v5728, %v5727
        %v5736 = vpack.c.bf16 %v5730, %v5729
        %v5737 = vpack.c.bf16 %v5732, %v5731
        %v5738 = vpack.c.bf16 %v5734, %v5733
        %v5740 = vsel %vm401, %v5735, 0
        %v5743 = vsel %vm401, %v5736, 0
        %v5746 = vsel %vm401, %v5737, 0
        %v5749 = vsel %vm401, %v5738, 0
        %5751 = vmatprep.subr.bf16.mxu0 0
        %5752 = vmatpush1.bf16.msra.mxu0 0
        %5753 = vmatprep.subr.bf16.mxu0 0
        %5754 = vmatpush1.bf16.msra.mxu0 0
        %5755 = vmatprep.subr.bf16.mxu0 0
        %5756 = vmatpush1.bf16.msra.mxu0 0
        %5757 = vmatprep.subr.bf16.mxu0 0
        %5758 = vmatpush1.bf16.msra.mxu0 0
        %5759 = vmatprep.subr.bf16.mxu0 0
        %5760 = vmatpush1.bf16.msra.mxu0 %v396
        %5761 = vmatprep.subr.bf16.mxu0 0
        %5762 = vmatpush1.bf16.msra.mxu0 %v395
        %5763 = vmatprep.subr.bf16.mxu0 0
        %5764 = vmatpush1.bf16.msra.mxu0 %v394
        %5765 = vmatprep.subr.bf16.mxu0 0
        %5766 = vmatpush1.bf16.msra.mxu0 %v393
        %5767 = vmatprep.subr.bf16.mxu0 0
        %5768 = vmatpush2.bf16.msra.mxu0 0
        %5769 = vmatprep.subr.bf16.mxu0 0
        %5770 = vmatpush2.bf16.msra.mxu0 0
        %5771 = vmatprep.subr.bf16.mxu0 0
        %5772 = vmatpush2.bf16.msra.mxu0 0
        %5773 = vmatprep.subr.bf16.mxu0 0
        %5774 = vmatpush2.bf16.msra.mxu0 0
        %5775 = vmatprep.subr.bf16.mxu0 0
        %5776 = vmatpush2.bf16.msra.mxu0 0
        %5777 = vmatprep.subr.bf16.mxu0 0
        %5778 = vmatpush2.bf16.msra.mxu0 0
        %5779 = vmatprep.subr.bf16.mxu0 0
        %5780 = vmatpush2.bf16.msra.mxu0 0
        %5781 = vmatprep.subr.bf16.mxu0 0
        %5782 = vmatpush2.bf16.msra.mxu0 0
        %5783 = vmatprep.mubr.bf16.mxu0 0
        %5784 = vmatmul.mubr.bf16.gmra.mxu0 %v5740
        %v5785 = vpop.f32.mrf.mxu0
        %v5786 = vadd.f32 0.0, %v5785
        %v5787 = vpop.f32.mrf.mxu0
        %v5788 = vpop.f32.mrf.mxu0
        %v5789 = vadd.f32 0.0, %v5788
        %v5790 = vpop.f32.mrf.mxu0
        %5791 = vmatprep.mubr.bf16.mxu0 0
        %5792 = vmatmul.mubr.bf16.gmra.mxu0 %v5743
        %v5793 = vpop.f32.mrf.mxu0
        %v5794 = vadd.f32 0.0, %v5793
        %v5795 = vpop.f32.mrf.mxu0
        %v5796 = vpop.f32.mrf.mxu0
        %v5797 = vadd.f32 0.0, %v5796
        %v5798 = vpop.f32.mrf.mxu0
        %5799 = vmatprep.mubr.bf16.mxu0 0
        %5800 = vmatmul.mubr.bf16.gmra.mxu0 %v5746
        %v5801 = vpop.f32.mrf.mxu0
        %v5802 = vadd.f32 0.0, %v5801
        %v5803 = vpop.f32.mrf.mxu0
        %v5804 = vpop.f32.mrf.mxu0
        %v5805 = vadd.f32 0.0, %v5804
        %v5806 = vpop.f32.mrf.mxu0
        %5807 = vmatprep.mubr.bf16.mxu0 0
        %5808 = vmatmul.mubr.bf16.gmra.mxu0 %v5749
        %v5809 = vpop.f32.mrf.mxu0
        %v5810 = vadd.f32 0.0, %v5809
        %v5811 = vpop.f32.mrf.mxu0
        %v5812 = vpop.f32.mrf.mxu0
        %v5813 = vadd.f32 0.0, %v5812
        %v5814 = vpop.f32.mrf.mxu0
        %5815 = vdwg.mxu0
        %v5816 = vpack.c.bf16 %v5789, %v5786
        %v5817 = vpack.c.bf16 %v5797, %v5794
        %v5818 = vpack.c.bf16 %v5805, %v5802
        %v5819 = vpack.c.bf16 %v5813, %v5810
        %s5820 = scalar_lea.vmem %s3, 48
        %v5821 = vld [vmem:[%s5820] sm:$0x3]
        %v5823 = vsel %vm619, %v5816, 0
        %v5826 = vsel %vm619, %v5817, 0
        %v5829 = vsel %vm619, %v5818, 0
        %v5832 = vsel %vm619, %v5819, 0
        %v5835 = vsel %vm632, %v5821, 0
        %5837 = vmatprep.subr.bf16.mxu0 0
        %5838 = vmatpush1.bf16.msra.mxu0 0
        %5839 = vmatprep.subr.bf16.mxu0 0
        %5840 = vmatpush1.bf16.msra.mxu0 0
        %5841 = vmatprep.subr.bf16.mxu0 0
        %5842 = vmatpush1.bf16.msra.mxu0 0
        %5843 = vmatprep.subr.bf16.mxu0 0
        %5844 = vmatpush1.bf16.msra.mxu0 0
        %5845 = vmatprep.subr.bf16.mxu0 0
        %5846 = vmatpush1.bf16.msra.mxu0 0
        %5847 = vmatprep.subr.bf16.mxu0 0
        %5848 = vmatpush1.bf16.msra.mxu0 0
        %5849 = vmatprep.subr.bf16.mxu0 0
        %5850 = vmatpush1.bf16.msra.mxu0 0
        %5851 = vmatprep.subr.bf16.mxu0 0
        %5852 = vmatpush1.bf16.msra.mxu0 %v5835
        %5853 = vmatprep.subr.bf16.mxu0 0
        %5854 = vmatpush2.bf16.msra.mxu0 0
        %5855 = vmatprep.subr.bf16.mxu0 0
        %5856 = vmatpush2.bf16.msra.mxu0 0
        %5857 = vmatprep.subr.bf16.mxu0 0
        %5858 = vmatpush2.bf16.msra.mxu0 0
        %5859 = vmatprep.subr.bf16.mxu0 0
        %5860 = vmatpush2.bf16.msra.mxu0 0
        %5861 = vmatprep.subr.bf16.mxu0 0
        %5862 = vmatpush2.bf16.msra.mxu0 0
        %5863 = vmatprep.subr.bf16.mxu0 0
        %5864 = vmatpush2.bf16.msra.mxu0 0
        %5865 = vmatprep.subr.bf16.mxu0 0
        %5866 = vmatpush2.bf16.msra.mxu0 0
        %5867 = vmatprep.subr.bf16.mxu0 0
        %5868 = vmatpush2.bf16.msra.mxu0 0
        %5869 = vmatprep.mubr.bf16.mxu0 0
        %5870 = vmatmul.mubr.bf16.gmra.mxu0 %v5823
        %v5871 = vpop.f32.mrf.mxu0
        %v5872 = vadd.f32 0.0, %v5871
        %v5873 = vpop.f32.mrf.mxu0
        %v5874 = vpop.f32.mrf.mxu0
        %v5875 = vadd.f32 0.0, %v5874
        %v5876 = vpop.f32.mrf.mxu0
        %5877 = vmatprep.mubr.bf16.mxu0 0
        %5878 = vmatmul.mubr.bf16.gmra.mxu0 %v5826
        %v5879 = vpop.f32.mrf.mxu0
        %v5880 = vadd.f32 0.0, %v5879
        %v5881 = vpop.f32.mrf.mxu0
        %v5882 = vpop.f32.mrf.mxu0
        %v5883 = vadd.f32 0.0, %v5882
        %v5884 = vpop.f32.mrf.mxu0
        %5885 = vmatprep.mubr.bf16.mxu0 0
        %5886 = vmatmul.mubr.bf16.gmra.mxu0 %v5829
        %v5887 = vpop.f32.mrf.mxu0
        %v5888 = vadd.f32 0.0, %v5887
        %v5889 = vpop.f32.mrf.mxu0
        %v5890 = vpop.f32.mrf.mxu0
        %v5891 = vadd.f32 0.0, %v5890
        %v5892 = vpop.f32.mrf.mxu0
        %5893 = vmatprep.mubr.bf16.mxu0 0
        %5894 = vmatmul.mubr.bf16.gmra.mxu0 %v5832
        %v5895 = vpop.f32.mrf.mxu0
        %v5896 = vadd.f32 0.0, %v5895
        %v5897 = vpop.f32.mrf.mxu0
        %v5898 = vpop.f32.mrf.mxu0
        %v5899 = vadd.f32 0.0, %v5898
        %v5900 = vpop.f32.mrf.mxu0
        %5901 = vdwg.mxu0
        %v5902 = vadd.f32 %v5679, %v5872
        %v5903 = vadd.f32 %v5680, %v5875
        %v5904 = vadd.f32 %v5681, %v5880
        %v5905 = vadd.f32 %v5682, %v5883
        %v5906 = vadd.f32 %v5683, %v5888
        %v5907 = vadd.f32 %v5684, %v5891
        %v5908 = vadd.f32 %v5685, %v5896
        %v5909 = vadd.f32 %v5686, %v5899
        %5910 = vset.pattern.permute.xlu0 25
        %5911 = vperm.xlu0 %5910, %v315
        %v5912 = vpop.permute.xlu0 %5911
        %5913 = vset.pattern.permute.xlu0 25
        %5914 = vperm.xlu0 %5913, %v316
        %v5915 = vpop.permute.xlu0 %5914
        %5916 = vset.pattern.permute.xlu0 25
        %5917 = vperm.xlu0 %5916, %v317
        %v5918 = vpop.permute.xlu0 %5917
        %5919 = vset.pattern.permute.xlu0 25
        %5920 = vperm.xlu0 %5919, %v318
        %v5921 = vpop.permute.xlu0 %5920
        %5922 = vset.pattern.permute.xlu0 25
        %5923 = vperm.xlu0 %5922, %v319
        %v5924 = vpop.permute.xlu0 %5923
        %5925 = vset.pattern.permute.xlu0 25
        %5926 = vperm.xlu0 %5925, %v320
        %v5927 = vpop.permute.xlu0 %5926
        %5928 = vset.pattern.permute.xlu0 25
        %5929 = vperm.xlu0 %5928, %v321
        %v5930 = vpop.permute.xlu0 %5929
        %5931 = vset.pattern.permute.xlu0 25
        %5932 = vperm.xlu0 %5931, %v322
        %v5933 = vpop.permute.xlu0 %5932
        %vm5934 = vcmp.eq.s32.totalorder %v5912, %v324
        %vm5935 = vcmp.eq.s32.totalorder %v5915, %v324
        %vm5936 = vcmp.eq.s32.totalorder %v5918, %v324
        %vm5937 = vcmp.eq.s32.totalorder %v5921, %v324
        %vm5938 = vcmp.eq.s32.totalorder %v5924, %v324
        %vm5939 = vcmp.eq.s32.totalorder %v5927, %v324
        %vm5940 = vcmp.eq.s32.totalorder %v5930, %v324
        %vm5941 = vcmp.eq.s32.totalorder %v5933, %v324
        %v5942 = vsel %vm5934, 1, 0
        %v5943 = vsel %vm5935, 1, 0
        %v5944 = vsel %vm5936, 1, 0
        %v5945 = vsel %vm5937, 1, 0
        %v5946 = vsel %vm5938, 1, 0
        %v5947 = vsel %vm5939, 1, 0
        %v5948 = vsel %vm5940, 1, 0
        %v5949 = vsel %vm5941, 1, 0
        %v5950 = vcvt.s32.f32 %v5942
        %v5951 = vcvt.s32.f32 %v5943
        %v5952 = vcvt.s32.f32 %v5944
        %v5953 = vcvt.s32.f32 %v5945
        %v5954 = vcvt.s32.f32 %v5946
        %v5955 = vcvt.s32.f32 %v5947
        %v5956 = vcvt.s32.f32 %v5948
        %v5957 = vcvt.s32.f32 %v5949
        %v5958 = vpack.c.bf16 %v5951, %v5950
        %v5959 = vpack.c.bf16 %v5953, %v5952
        %v5960 = vpack.c.bf16 %v5955, %v5954
        %v5961 = vpack.c.bf16 %v5957, %v5956
        %v5963 = vsel %vm401, %v5958, 0
        %v5966 = vsel %vm401, %v5959, 0
        %v5969 = vsel %vm401, %v5960, 0
        %v5972 = vsel %vm401, %v5961, 0
        %5974 = vmatprep.subr.bf16.mxu0 0
        %5975 = vmatpush1.bf16.msra.mxu0 0
        %5976 = vmatprep.subr.bf16.mxu0 0
        %5977 = vmatpush1.bf16.msra.mxu0 0
        %5978 = vmatprep.subr.bf16.mxu0 0
        %5979 = vmatpush1.bf16.msra.mxu0 0
        %5980 = vmatprep.subr.bf16.mxu0 0
        %5981 = vmatpush1.bf16.msra.mxu0 0
        %5982 = vmatprep.subr.bf16.mxu0 0
        %5983 = vmatpush1.bf16.msra.mxu0 %v396
        %5984 = vmatprep.subr.bf16.mxu0 0
        %5985 = vmatpush1.bf16.msra.mxu0 %v395
        %5986 = vmatprep.subr.bf16.mxu0 0
        %5987 = vmatpush1.bf16.msra.mxu0 %v394
        %5988 = vmatprep.subr.bf16.mxu0 0
        %5989 = vmatpush1.bf16.msra.mxu0 %v393
        %5990 = vmatprep.subr.bf16.mxu0 0
        %5991 = vmatpush2.bf16.msra.mxu0 0
        %5992 = vmatprep.subr.bf16.mxu0 0
        %5993 = vmatpush2.bf16.msra.mxu0 0
        %5994 = vmatprep.subr.bf16.mxu0 0
        %5995 = vmatpush2.bf16.msra.mxu0 0
        %5996 = vmatprep.subr.bf16.mxu0 0
        %5997 = vmatpush2.bf16.msra.mxu0 0
        %5998 = vmatprep.subr.bf16.mxu0 0
        %5999 = vmatpush2.bf16.msra.mxu0 0
        %6000 = vmatprep.subr.bf16.mxu0 0
        %6001 = vmatpush2.bf16.msra.mxu0 0
        %6002 = vmatprep.subr.bf16.mxu0 0
        %6003 = vmatpush2.bf16.msra.mxu0 0
        %6004 = vmatprep.subr.bf16.mxu0 0
        %6005 = vmatpush2.bf16.msra.mxu0 0
        %6006 = vmatprep.mubr.bf16.mxu0 0
        %6007 = vmatmul.mubr.bf16.gmra.mxu0 %v5963
        %v6008 = vpop.f32.mrf.mxu0
        %v6009 = vadd.f32 0.0, %v6008
        %v6010 = vpop.f32.mrf.mxu0
        %v6011 = vpop.f32.mrf.mxu0
        %v6012 = vadd.f32 0.0, %v6011
        %v6013 = vpop.f32.mrf.mxu0
        %6014 = vmatprep.mubr.bf16.mxu0 0
        %6015 = vmatmul.mubr.bf16.gmra.mxu0 %v5966
        %v6016 = vpop.f32.mrf.mxu0
        %v6017 = vadd.f32 0.0, %v6016
        %v6018 = vpop.f32.mrf.mxu0
        %v6019 = vpop.f32.mrf.mxu0
        %v6020 = vadd.f32 0.0, %v6019
        %v6021 = vpop.f32.mrf.mxu0
        %6022 = vmatprep.mubr.bf16.mxu0 0
        %6023 = vmatmul.mubr.bf16.gmra.mxu0 %v5969
        %v6024 = vpop.f32.mrf.mxu0
        %v6025 = vadd.f32 0.0, %v6024
        %v6026 = vpop.f32.mrf.mxu0
        %v6027 = vpop.f32.mrf.mxu0
        %v6028 = vadd.f32 0.0, %v6027
        %v6029 = vpop.f32.mrf.mxu0
        %6030 = vmatprep.mubr.bf16.mxu0 0
        %6031 = vmatmul.mubr.bf16.gmra.mxu0 %v5972
        %v6032 = vpop.f32.mrf.mxu0
        %v6033 = vadd.f32 0.0, %v6032
        %v6034 = vpop.f32.mrf.mxu0
        %v6035 = vpop.f32.mrf.mxu0
        %v6036 = vadd.f32 0.0, %v6035
        %v6037 = vpop.f32.mrf.mxu0
        %6038 = vdwg.mxu0
        %v6039 = vpack.c.bf16 %v6012, %v6009
        %v6040 = vpack.c.bf16 %v6020, %v6017
        %v6041 = vpack.c.bf16 %v6028, %v6025
        %v6042 = vpack.c.bf16 %v6036, %v6033
        %s6043 = scalar_lea.vmem %s3, 50
        %v6044 = vld [vmem:[%s6043] sm:$0x3]
        %v6046 = vsel %vm619, %v6039, 0
        %v6049 = vsel %vm619, %v6040, 0
        %v6052 = vsel %vm619, %v6041, 0
        %v6055 = vsel %vm619, %v6042, 0
        %v6058 = vsel %vm632, %v6044, 0
        %6060 = vmatprep.subr.bf16.mxu0 0
        %6061 = vmatpush1.bf16.msra.mxu0 0
        %6062 = vmatprep.subr.bf16.mxu0 0
        %6063 = vmatpush1.bf16.msra.mxu0 0
        %6064 = vmatprep.subr.bf16.mxu0 0
        %6065 = vmatpush1.bf16.msra.mxu0 0
        %6066 = vmatprep.subr.bf16.mxu0 0
        %6067 = vmatpush1.bf16.msra.mxu0 0
        %6068 = vmatprep.subr.bf16.mxu0 0
        %6069 = vmatpush1.bf16.msra.mxu0 0
        %6070 = vmatprep.subr.bf16.mxu0 0
        %6071 = vmatpush1.bf16.msra.mxu0 0
        %6072 = vmatprep.subr.bf16.mxu0 0
        %6073 = vmatpush1.bf16.msra.mxu0 0
        %6074 = vmatprep.subr.bf16.mxu0 0
        %6075 = vmatpush1.bf16.msra.mxu0 %v6058
        %6076 = vmatprep.subr.bf16.mxu0 0
        %6077 = vmatpush2.bf16.msra.mxu0 0
        %6078 = vmatprep.subr.bf16.mxu0 0
        %6079 = vmatpush2.bf16.msra.mxu0 0
        %6080 = vmatprep.subr.bf16.mxu0 0
        %6081 = vmatpush2.bf16.msra.mxu0 0
        %6082 = vmatprep.subr.bf16.mxu0 0
        %6083 = vmatpush2.bf16.msra.mxu0 0
        %6084 = vmatprep.subr.bf16.mxu0 0
        %6085 = vmatpush2.bf16.msra.mxu0 0
        %6086 = vmatprep.subr.bf16.mxu0 0
        %6087 = vmatpush2.bf16.msra.mxu0 0
        %6088 = vmatprep.subr.bf16.mxu0 0
        %6089 = vmatpush2.bf16.msra.mxu0 0
        %6090 = vmatprep.subr.bf16.mxu0 0
        %6091 = vmatpush2.bf16.msra.mxu0 0
        %6092 = vmatprep.mubr.bf16.mxu0 0
        %6093 = vmatmul.mubr.bf16.gmra.mxu0 %v6046
        %v6094 = vpop.f32.mrf.mxu0
        %v6095 = vadd.f32 0.0, %v6094
        %v6096 = vpop.f32.mrf.mxu0
        %v6097 = vpop.f32.mrf.mxu0
        %v6098 = vadd.f32 0.0, %v6097
        %v6099 = vpop.f32.mrf.mxu0
        %6100 = vmatprep.mubr.bf16.mxu0 0
        %6101 = vmatmul.mubr.bf16.gmra.mxu0 %v6049
        %v6102 = vpop.f32.mrf.mxu0
        %v6103 = vadd.f32 0.0, %v6102
        %v6104 = vpop.f32.mrf.mxu0
        %v6105 = vpop.f32.mrf.mxu0
        %v6106 = vadd.f32 0.0, %v6105
        %v6107 = vpop.f32.mrf.mxu0
        %6108 = vmatprep.mubr.bf16.mxu0 0
        %6109 = vmatmul.mubr.bf16.gmra.mxu0 %v6052
        %v6110 = vpop.f32.mrf.mxu0
        %v6111 = vadd.f32 0.0, %v6110
        %v6112 = vpop.f32.mrf.mxu0
        %v6113 = vpop.f32.mrf.mxu0
        %v6114 = vadd.f32 0.0, %v6113
        %v6115 = vpop.f32.mrf.mxu0
        %6116 = vmatprep.mubr.bf16.mxu0 0
        %6117 = vmatmul.mubr.bf16.gmra.mxu0 %v6055
        %v6118 = vpop.f32.mrf.mxu0
        %v6119 = vadd.f32 0.0, %v6118
        %v6120 = vpop.f32.mrf.mxu0
        %v6121 = vpop.f32.mrf.mxu0
        %v6122 = vadd.f32 0.0, %v6121
        %v6123 = vpop.f32.mrf.mxu0
        %6124 = vdwg.mxu0
        %v6125 = vadd.f32 %v5902, %v6095
        %v6126 = vadd.f32 %v5903, %v6098
        %v6127 = vadd.f32 %v5904, %v6103
        %v6128 = vadd.f32 %v5905, %v6106
        %v6129 = vadd.f32 %v5906, %v6111
        %v6130 = vadd.f32 %v5907, %v6114
        %v6131 = vadd.f32 %v5908, %v6119
        %v6132 = vadd.f32 %v5909, %v6122
        %6133 = vset.pattern.permute.xlu0 26
        %6134 = vperm.xlu0 %6133, %v315
        %v6135 = vpop.permute.xlu0 %6134
        %6136 = vset.pattern.permute.xlu0 26
        %6137 = vperm.xlu0 %6136, %v316
        %v6138 = vpop.permute.xlu0 %6137
        %6139 = vset.pattern.permute.xlu0 26
        %6140 = vperm.xlu0 %6139, %v317
        %v6141 = vpop.permute.xlu0 %6140
        %6142 = vset.pattern.permute.xlu0 26
        %6143 = vperm.xlu0 %6142, %v318
        %v6144 = vpop.permute.xlu0 %6143
        %6145 = vset.pattern.permute.xlu0 26
        %6146 = vperm.xlu0 %6145, %v319
        %v6147 = vpop.permute.xlu0 %6146
        %6148 = vset.pattern.permute.xlu0 26
        %6149 = vperm.xlu0 %6148, %v320
        %v6150 = vpop.permute.xlu0 %6149
        %6151 = vset.pattern.permute.xlu0 26
        %6152 = vperm.xlu0 %6151, %v321
        %v6153 = vpop.permute.xlu0 %6152
        %6154 = vset.pattern.permute.xlu0 26
        %6155 = vperm.xlu0 %6154, %v322
        %v6156 = vpop.permute.xlu0 %6155
        %vm6157 = vcmp.eq.s32.totalorder %v6135, %v324
        %vm6158 = vcmp.eq.s32.totalorder %v6138, %v324
        %vm6159 = vcmp.eq.s32.totalorder %v6141, %v324
        %vm6160 = vcmp.eq.s32.totalorder %v6144, %v324
        %vm6161 = vcmp.eq.s32.totalorder %v6147, %v324
        %vm6162 = vcmp.eq.s32.totalorder %v6150, %v324
        %vm6163 = vcmp.eq.s32.totalorder %v6153, %v324
        %vm6164 = vcmp.eq.s32.totalorder %v6156, %v324
        %v6165 = vsel %vm6157, 1, 0
        %v6166 = vsel %vm6158, 1, 0
        %v6167 = vsel %vm6159, 1, 0
        %v6168 = vsel %vm6160, 1, 0
        %v6169 = vsel %vm6161, 1, 0
        %v6170 = vsel %vm6162, 1, 0
        %v6171 = vsel %vm6163, 1, 0
        %v6172 = vsel %vm6164, 1, 0
        %v6173 = vcvt.s32.f32 %v6165
        %v6174 = vcvt.s32.f32 %v6166
        %v6175 = vcvt.s32.f32 %v6167
        %v6176 = vcvt.s32.f32 %v6168
        %v6177 = vcvt.s32.f32 %v6169
        %v6178 = vcvt.s32.f32 %v6170
        %v6179 = vcvt.s32.f32 %v6171
        %v6180 = vcvt.s32.f32 %v6172
        %v6181 = vpack.c.bf16 %v6174, %v6173
        %v6182 = vpack.c.bf16 %v6176, %v6175
        %v6183 = vpack.c.bf16 %v6178, %v6177
        %v6184 = vpack.c.bf16 %v6180, %v6179
        %v6186 = vsel %vm401, %v6181, 0
        %v6189 = vsel %vm401, %v6182, 0
        %v6192 = vsel %vm401, %v6183, 0
        %v6195 = vsel %vm401, %v6184, 0
        %6197 = vmatprep.subr.bf16.mxu0 0
        %6198 = vmatpush1.bf16.msra.mxu0 0
        %6199 = vmatprep.subr.bf16.mxu0 0
        %6200 = vmatpush1.bf16.msra.mxu0 0
        %6201 = vmatprep.subr.bf16.mxu0 0
        %6202 = vmatpush1.bf16.msra.mxu0 0
        %6203 = vmatprep.subr.bf16.mxu0 0
        %6204 = vmatpush1.bf16.msra.mxu0 0
        %6205 = vmatprep.subr.bf16.mxu0 0
        %6206 = vmatpush1.bf16.msra.mxu0 %v396
        %6207 = vmatprep.subr.bf16.mxu0 0
        %6208 = vmatpush1.bf16.msra.mxu0 %v395
        %6209 = vmatprep.subr.bf16.mxu0 0
        %6210 = vmatpush1.bf16.msra.mxu0 %v394
        %6211 = vmatprep.subr.bf16.mxu0 0
        %6212 = vmatpush1.bf16.msra.mxu0 %v393
        %6213 = vmatprep.subr.bf16.mxu0 0
        %6214 = vmatpush2.bf16.msra.mxu0 0
        %6215 = vmatprep.subr.bf16.mxu0 0
        %6216 = vmatpush2.bf16.msra.mxu0 0
        %6217 = vmatprep.subr.bf16.mxu0 0
        %6218 = vmatpush2.bf16.msra.mxu0 0
        %6219 = vmatprep.subr.bf16.mxu0 0
        %6220 = vmatpush2.bf16.msra.mxu0 0
        %6221 = vmatprep.subr.bf16.mxu0 0
        %6222 = vmatpush2.bf16.msra.mxu0 0
        %6223 = vmatprep.subr.bf16.mxu0 0
        %6224 = vmatpush2.bf16.msra.mxu0 0
        %6225 = vmatprep.subr.bf16.mxu0 0
        %6226 = vmatpush2.bf16.msra.mxu0 0
        %6227 = vmatprep.subr.bf16.mxu0 0
        %6228 = vmatpush2.bf16.msra.mxu0 0
        %6229 = vmatprep.mubr.bf16.mxu0 0
        %6230 = vmatmul.mubr.bf16.gmra.mxu0 %v6186
        %v6231 = vpop.f32.mrf.mxu0
        %v6232 = vadd.f32 0.0, %v6231
        %v6233 = vpop.f32.mrf.mxu0
        %v6234 = vpop.f32.mrf.mxu0
        %v6235 = vadd.f32 0.0, %v6234
        %v6236 = vpop.f32.mrf.mxu0
        %6237 = vmatprep.mubr.bf16.mxu0 0
        %6238 = vmatmul.mubr.bf16.gmra.mxu0 %v6189
        %v6239 = vpop.f32.mrf.mxu0
        %v6240 = vadd.f32 0.0, %v6239
        %v6241 = vpop.f32.mrf.mxu0
        %v6242 = vpop.f32.mrf.mxu0
        %v6243 = vadd.f32 0.0, %v6242
        %v6244 = vpop.f32.mrf.mxu0
        %6245 = vmatprep.mubr.bf16.mxu0 0
        %6246 = vmatmul.mubr.bf16.gmra.mxu0 %v6192
        %v6247 = vpop.f32.mrf.mxu0
        %v6248 = vadd.f32 0.0, %v6247
        %v6249 = vpop.f32.mrf.mxu0
        %v6250 = vpop.f32.mrf.mxu0
        %v6251 = vadd.f32 0.0, %v6250
        %v6252 = vpop.f32.mrf.mxu0
        %6253 = vmatprep.mubr.bf16.mxu0 0
        %6254 = vmatmul.mubr.bf16.gmra.mxu0 %v6195
        %v6255 = vpop.f32.mrf.mxu0
        %v6256 = vadd.f32 0.0, %v6255
        %v6257 = vpop.f32.mrf.mxu0
        %v6258 = vpop.f32.mrf.mxu0
        %v6259 = vadd.f32 0.0, %v6258
        %v6260 = vpop.f32.mrf.mxu0
        %6261 = vdwg.mxu0
        %v6262 = vpack.c.bf16 %v6235, %v6232
        %v6263 = vpack.c.bf16 %v6243, %v6240
        %v6264 = vpack.c.bf16 %v6251, %v6248
        %v6265 = vpack.c.bf16 %v6259, %v6256
        %s6266 = scalar_lea.vmem %s3, 52
        %v6267 = vld [vmem:[%s6266] sm:$0x3]
        %v6269 = vsel %vm619, %v6262, 0
        %v6272 = vsel %vm619, %v6263, 0
        %v6275 = vsel %vm619, %v6264, 0
        %v6278 = vsel %vm619, %v6265, 0
        %v6281 = vsel %vm632, %v6267, 0
        %6283 = vmatprep.subr.bf16.mxu0 0
        %6284 = vmatpush1.bf16.msra.mxu0 0
        %6285 = vmatprep.subr.bf16.mxu0 0
        %6286 = vmatpush1.bf16.msra.mxu0 0
        %6287 = vmatprep.subr.bf16.mxu0 0
        %6288 = vmatpush1.bf16.msra.mxu0 0
        %6289 = vmatprep.subr.bf16.mxu0 0
        %6290 = vmatpush1.bf16.msra.mxu0 0
        %6291 = vmatprep.subr.bf16.mxu0 0
        %6292 = vmatpush1.bf16.msra.mxu0 0
        %6293 = vmatprep.subr.bf16.mxu0 0
        %6294 = vmatpush1.bf16.msra.mxu0 0
        %6295 = vmatprep.subr.bf16.mxu0 0
        %6296 = vmatpush1.bf16.msra.mxu0 0
        %6297 = vmatprep.subr.bf16.mxu0 0
        %6298 = vmatpush1.bf16.msra.mxu0 %v6281
        %6299 = vmatprep.subr.bf16.mxu0 0
        %6300 = vmatpush2.bf16.msra.mxu0 0
        %6301 = vmatprep.subr.bf16.mxu0 0
        %6302 = vmatpush2.bf16.msra.mxu0 0
        %6303 = vmatprep.subr.bf16.mxu0 0
        %6304 = vmatpush2.bf16.msra.mxu0 0
        %6305 = vmatprep.subr.bf16.mxu0 0
        %6306 = vmatpush2.bf16.msra.mxu0 0
        %6307 = vmatprep.subr.bf16.mxu0 0
        %6308 = vmatpush2.bf16.msra.mxu0 0
        %6309 = vmatprep.subr.bf16.mxu0 0
        %6310 = vmatpush2.bf16.msra.mxu0 0
        %6311 = vmatprep.subr.bf16.mxu0 0
        %6312 = vmatpush2.bf16.msra.mxu0 0
        %6313 = vmatprep.subr.bf16.mxu0 0
        %6314 = vmatpush2.bf16.msra.mxu0 0
        %6315 = vmatprep.mubr.bf16.mxu0 0
        %6316 = vmatmul.mubr.bf16.gmra.mxu0 %v6269
        %v6317 = vpop.f32.mrf.mxu0
        %v6318 = vadd.f32 0.0, %v6317
        %v6319 = vpop.f32.mrf.mxu0
        %v6320 = vpop.f32.mrf.mxu0
        %v6321 = vadd.f32 0.0, %v6320
        %v6322 = vpop.f32.mrf.mxu0
        %6323 = vmatprep.mubr.bf16.mxu0 0
        %6324 = vmatmul.mubr.bf16.gmra.mxu0 %v6272
        %v6325 = vpop.f32.mrf.mxu0
        %v6326 = vadd.f32 0.0, %v6325
        %v6327 = vpop.f32.mrf.mxu0
        %v6328 = vpop.f32.mrf.mxu0
        %v6329 = vadd.f32 0.0, %v6328
        %v6330 = vpop.f32.mrf.mxu0
        %6331 = vmatprep.mubr.bf16.mxu0 0
        %6332 = vmatmul.mubr.bf16.gmra.mxu0 %v6275
        %v6333 = vpop.f32.mrf.mxu0
        %v6334 = vadd.f32 0.0, %v6333
        %v6335 = vpop.f32.mrf.mxu0
        %v6336 = vpop.f32.mrf.mxu0
        %v6337 = vadd.f32 0.0, %v6336
        %v6338 = vpop.f32.mrf.mxu0
        %6339 = vmatprep.mubr.bf16.mxu0 0
        %6340 = vmatmul.mubr.bf16.gmra.mxu0 %v6278
        %v6341 = vpop.f32.mrf.mxu0
        %v6342 = vadd.f32 0.0, %v6341
        %v6343 = vpop.f32.mrf.mxu0
        %v6344 = vpop.f32.mrf.mxu0
        %v6345 = vadd.f32 0.0, %v6344
        %v6346 = vpop.f32.mrf.mxu0
        %6347 = vdwg.mxu0
        %v6348 = vadd.f32 %v6125, %v6318
        %v6349 = vadd.f32 %v6126, %v6321
        %v6350 = vadd.f32 %v6127, %v6326
        %v6351 = vadd.f32 %v6128, %v6329
        %v6352 = vadd.f32 %v6129, %v6334
        %v6353 = vadd.f32 %v6130, %v6337
        %v6354 = vadd.f32 %v6131, %v6342
        %v6355 = vadd.f32 %v6132, %v6345
        %s6356 = scvt.s32.f32 %s306
        %s6357 = smax.f32 %s6356, 1.0
        %s6358 = smul.f32 %s6357, 2.0
        %v6359 = vadd.f32 %v6348, %v6349
        %v6360 = vadd.f32 %v6359, %v6350
        %v6361 = vadd.f32 %v6360, %v6351
        %v6362 = vadd.f32 %v6361, %v6352
        %v6363 = vadd.f32 %v6362, %v6353
        %v6364 = vadd.f32 %v6363, %v6354
        %v6365 = vadd.f32 %v6364, %v6355
        %v6366 = vrot.slane %v6365, 4
        %v6367 = vadd.f32 %v6365, %v6366
        %v6368 = vrot.slane %v6367, 2
        %v6369 = vadd.f32 %v6367, %v6368
        %v6370 = vrot.slane %v6369, 1
        %v6371 = vadd.f32 %v6369, %v6370
        %v6372 = vmul.f32 %v6348, %v6348
        %v6373 = vmul.f32 %v6349, %v6349
        %v6374 = vmul.f32 %v6350, %v6350
        %v6375 = vmul.f32 %v6351, %v6351
        %v6376 = vmul.f32 %v6352, %v6352
        %v6377 = vmul.f32 %v6353, %v6353
        %v6378 = vmul.f32 %v6354, %v6354
        %v6379 = vmul.f32 %v6355, %v6355
        %v6380 = vadd.f32 %v6372, %v6373
        %v6381 = vadd.f32 %v6380, %v6374
        %v6382 = vadd.f32 %v6381, %v6375
        %v6383 = vadd.f32 %v6382, %v6376
        %v6384 = vadd.f32 %v6383, %v6377
        %v6385 = vadd.f32 %v6384, %v6378
        %v6386 = vadd.f32 %v6385, %v6379
        %v6387 = vrot.slane %v6386, 4
        %v6388 = vadd.f32 %v6386, %v6387
        %v6389 = vrot.slane %v6388, 2
        %v6390 = vadd.f32 %v6388, %v6389
        %v6391 = vrot.slane %v6390, 1
        %v6392 = vadd.f32 %v6390, %v6391
        %vm6393 = vcmask 1040384
        %v6394 = vsel %vm6393, %v6371, %v6392
        %v6395 = vld [vmem:[%s4] sm:$0xff]
        %v6396 = vld [vmem:[%s4 + $0x8] sm:$0xff]
        %v6397 = vld [vmem:[%s4 + $0x10] sm:$0xff]
        %v6398 = vld [vmem:[%s4 + $0x18] sm:$0xff]
        %v6399 = vld [vmem:[%s4 + $0x20] sm:$0xff]
        %v6400 = vld [vmem:[%s4 + $0x28] sm:$0xff]
        %v6401 = vld [vmem:[%s4 + $0x30] sm:$0xff]
        %v6402 = vld [vmem:[%s4 + $0x38] sm:$0xff]
        %v6403 = vld [vmem:[%s4 + $0x40] sm:$0xff]
        %v6404 = vld [vmem:[%s4 + $0x48] sm:$0xff]
        %v6405 = vld [vmem:[%s4 + $0x50] sm:$0xff]
        %v6406 = vld [vmem:[%s4 + $0x58] sm:$0xff]
        %v6407 = vld [vmem:[%s4 + $0x60] sm:$0xff]
        %v6408 = vld [vmem:[%s4 + $0x68] sm:$0xff]
        %v6409 = vld [vmem:[%s4 + $0x70] sm:$0xff]
        %v6410 = vld [vmem:[%s4 + $0x78] sm:$0xff]
        %6411 = vmatprep.subr.mxu0 0.0
        %6412 = vmatpush1.msra.mxu0 %v6410
        %6413 = vmatprep.subr.mxu0 0.0
        %6414 = vmatpush1.msra.mxu0 %v6409
        %6415 = vmatprep.subr.mxu0 0.0
        %6416 = vmatpush1.msra.mxu0 %v6408
        %6417 = vmatprep.subr.mxu0 0.0
        %6418 = vmatpush1.msra.mxu0 %v6407
        %6419 = vmatprep.subr.mxu0 0.0
        %6420 = vmatpush1.msra.mxu0 %v6406
        %6421 = vmatprep.subr.mxu0 0.0
        %6422 = vmatpush1.msra.mxu0 %v6405
        %6423 = vmatprep.subr.mxu0 0.0
        %6424 = vmatpush1.msra.mxu0 %v6404
        %6425 = vmatprep.subr.mxu0 0.0
        %6426 = vmatpush1.msra.mxu0 %v6403
        %6427 = vmatprep.subr.mxu0 0.0
        %6428 = vmatpush1.msra.mxu0 %v6402
        %6429 = vmatprep.subr.mxu0 0.0
        %6430 = vmatpush1.msra.mxu0 %v6401
        %6431 = vmatprep.subr.mxu0 0.0
        %6432 = vmatpush1.msra.mxu0 %v6400
        %6433 = vmatprep.subr.mxu0 0.0
        %6434 = vmatpush1.msra.mxu0 %v6399
        %6435 = vmatprep.subr.mxu0 0.0
        %6436 = vmatpush1.msra.mxu0 %v6398
        %6437 = vmatprep.subr.mxu0 0.0
        %6438 = vmatpush1.msra.mxu0 %v6397
        %6439 = vmatprep.subr.mxu0 0.0
        %6440 = vmatpush1.msra.mxu0 %v6396
        %6441 = vmatprep.subr.mxu0 0.0
        %6442 = vmatpush1.msra.mxu0 %v6395
        %6443 = vmatprep.subr.mxu0 0.0
        %6444 = vmatpush2.msra.mxu0 0.0
        %6445 = vmatprep.subr.mxu0 0.0
        %6446 = vmatpush2.msra.mxu0 0.0
        %6447 = vmatprep.subr.mxu0 0.0
        %6448 = vmatpush2.msra.mxu0 0.0
        %6449 = vmatprep.subr.mxu0 0.0
        %6450 = vmatpush2.msra.mxu0 0.0
        %6451 = vmatprep.subr.mxu0 0.0
        %6452 = vmatpush2.msra.mxu0 0.0
        %6453 = vmatprep.subr.mxu0 0.0
        %6454 = vmatpush2.msra.mxu0 0.0
        %6455 = vmatprep.subr.mxu0 0.0
        %6456 = vmatpush2.msra.mxu0 0.0
        %6457 = vmatprep.subr.mxu0 0.0
        %6458 = vmatpush2.msra.mxu0 0.0
        %6459 = vmatprep.subr.mxu0 0.0
        %6460 = vmatpush2.msra.mxu0 0.0
        %6461 = vmatprep.subr.mxu0 0.0
        %6462 = vmatpush2.msra.mxu0 0.0
        %6463 = vmatprep.subr.mxu0 0.0
        %6464 = vmatpush2.msra.mxu0 0.0
        %6465 = vmatprep.subr.mxu0 0.0
        %6466 = vmatpush2.msra.mxu0 0.0
        %6467 = vmatprep.subr.mxu0 0.0
        %6468 = vmatpush2.msra.mxu0 0.0
        %6469 = vmatprep.subr.mxu0 0.0
        %6470 = vmatpush2.msra.mxu0 0.0
        %6471 = vmatprep.subr.mxu0 0.0
        %6472 = vmatpush2.msra.mxu0 0.0
        %6473 = vmatprep.subr.mxu0 0.0
        %6474 = vmatpush2.msra.mxu0 0.0
        %6475 = vmatprep.mubr.f32.mxu0 0.0
        %6476 = vmatmul.mubr.f32.gmra.mxu0 %v6394
        %v6477 = vpop.f32.mrf.mxu0
        %v6478 = vadd.f32 0.0, %v6477
        %v6479 = vpop.f32.mrf.mxu0
        %6480 = vdwg.mxu0
        %v6481 = vstv %s6358
        %v6482 = vrcp.pop %v6481
        %v6483 = vmul.f32 %v6478, %v6482
        %v6484 = vmul.f32 %v6483, %v6483
        %v6486 = vrot.slane %v6484, 7
        %v6488 = vsub.f32 %v6483, %v6486
        %v6489 = vmax.f32 %v6488, 0.0
        %v6490 = vadd.f32 %v6489, 1e-05
        %v6491 = vrsqrt.pop %v6490
        %v6492 = vlaneseq
        %v6493 = vshrl.u32 %v6492, 7
        %v6494 = vsub.s32 0, %v6493
        %v6495 = vrot.slane %v6483, %v6494
        %v6496 = vsub.f32 %v6348, %v6495
        %v6497 = vsub.f32 %v6349, %v6495
        %v6498 = vsub.f32 %v6350, %v6495
        %v6499 = vsub.f32 %v6351, %v6495
        %v6500 = vsub.f32 %v6352, %v6495
        %v6501 = vsub.f32 %v6353, %v6495
        %v6502 = vsub.f32 %v6354, %v6495
        %v6503 = vsub.f32 %v6355, %v6495
        %v6504 = vld [vmem:[%s301] sm:$0x1]
        %v6506 = vlaneseq
        %v6507 = vshrl.u32 %v6506, 7
        %v6508 = vsub.s32 0, %v6507
        %v6509 = vrot.slane %v6504, %v6508
        %v6511 = vmul.f32 %v6491, %v6509
        %v6512 = vlaneseq
        %v6513 = vshrl.u32 %v6512, 7
        %v6514 = vsub.s32 1, %v6513
        %v6515 = vrot.slane %v6511, %v6514
        %v6516 = vmul.f32 %v6496, %v6515
        %v6517 = vmul.f32 %v6497, %v6515
        %v6518 = vmul.f32 %v6498, %v6515
        %v6519 = vmul.f32 %v6499, %v6515
        %v6520 = vmul.f32 %v6500, %v6515
        %v6521 = vmul.f32 %v6501, %v6515
        %v6522 = vmul.f32 %v6502, %v6515
        %v6523 = vmul.f32 %v6503, %v6515
        %v6524 = vld [vmem:[%s304] sm:$0x1]
        %v6526 = vlaneseq
        %v6527 = vshrl.u32 %v6526, 7
        %v6528 = vsub.s32 0, %v6527
        %v6529 = vrot.slane %v6524, %v6528
        %v6531 = vadd.f32 %v6516, %v6529
        %v6532 = vadd.f32 %v6517, %v6529
        %v6533 = vadd.f32 %v6518, %v6529
        %v6534 = vadd.f32 %v6519, %v6529
        %v6535 = vadd.f32 %v6520, %v6529
        %v6536 = vadd.f32 %v6521, %v6529
        %v6537 = vadd.f32 %v6522, %v6529
        %v6538 = vadd.f32 %v6523, %v6529
        %v6539 = vxor.u32 %v6531, 2147483648
        %v6540 = vxor.u32 %v6532, 2147483648
        %v6541 = vxor.u32 %v6533, 2147483648
        %v6542 = vxor.u32 %v6534, 2147483648
        %v6543 = vxor.u32 %v6535, 2147483648
        %v6544 = vxor.u32 %v6536, 2147483648
        %v6545 = vxor.u32 %v6537, 2147483648
        %v6546 = vxor.u32 %v6538, 2147483648
        %v6547 = vmul.f32 %v6539, 1.442695
        %v6548 = vpow.pop %v6547
        %v6549 = vmul.f32 %v6540, 1.442695
        %v6550 = vpow.pop %v6549
        %v6551 = vmul.f32 %v6541, 1.442695
        %v6552 = vpow.pop %v6551
        %v6553 = vmul.f32 %v6542, 1.442695
        %v6554 = vpow.pop %v6553
        %v6555 = vmul.f32 %v6543, 1.442695
        %v6556 = vpow.pop %v6555
        %v6557 = vmul.f32 %v6544, 1.442695
        %v6558 = vpow.pop %v6557
        %v6559 = vmul.f32 %v6545, 1.442695
        %v6560 = vpow.pop %v6559
        %v6561 = vmul.f32 %v6546, 1.442695
        %v6562 = vpow.pop %v6561
        %v6563 = vadd.f32 %v6548, 1.0
        %v6564 = vadd.f32 %v6550, 1.0
        %v6565 = vadd.f32 %v6552, 1.0
        %v6566 = vadd.f32 %v6554, 1.0
        %v6567 = vadd.f32 %v6556, 1.0
        %v6568 = vadd.f32 %v6558, 1.0
        %v6569 = vadd.f32 %v6560, 1.0
        %v6570 = vadd.f32 %v6562, 1.0
        %v6571 = vrcp.pop %v6563
        %v6572 = vmul.f32 1.0, %v6571
        %v6573 = vrcp.pop %v6564
        %v6574 = vmul.f32 1.0, %v6573
        %v6575 = vrcp.pop %v6565
        %v6576 = vmul.f32 1.0, %v6575
        %v6577 = vrcp.pop %v6566
        %v6578 = vmul.f32 1.0, %v6577
        %v6579 = vrcp.pop %v6567
        %v6580 = vmul.f32 1.0, %v6579
        %v6581 = vrcp.pop %v6568
        %v6582 = vmul.f32 1.0, %v6581
        %v6583 = vrcp.pop %v6569
        %v6584 = vmul.f32 1.0, %v6583
        %v6585 = vrcp.pop %v6570
        %v6586 = vmul.f32 1.0, %v6585
        %v6587 = vmul.f32 %v6531, %v6572
        %v6588 = vmul.f32 %v6532, %v6574
        %v6589 = vmul.f32 %v6533, %v6576
        %v6590 = vmul.f32 %v6534, %v6578
        %v6591 = vmul.f32 %v6535, %v6580
        %v6592 = vmul.f32 %v6536, %v6582
        %v6593 = vmul.f32 %v6537, %v6584
        %v6594 = vmul.f32 %v6538, %v6586
        %v6595 = vpack.c.bf16 %v6588, %v6587
        %v6596 = vpack.c.bf16 %v6590, %v6589
        %v6597 = vpack.c.bf16 %v6592, %v6591
        %v6598 = vpack.c.bf16 %v6594, %v6593
        %v6603 = vunpack.c.l.b16 %v6595
        %v6604 = vunpack.c.h.b16 %v6595
        %v6605 = vunpack.c.l.b16 %v6596
        %v6606 = vunpack.c.h.b16 %v6596
        %v6607 = vunpack.c.l.b16 %v6597
        %v6608 = vunpack.c.h.b16 %v6597
        %v6609 = vunpack.c.l.b16 %v6598
        %v6610 = vunpack.c.h.b16 %v6598
        %v6611 = vpack.c.b16 %v6603, %v6603
        %v6612 = vpack.c.b16 %v6604, %v6604
        %v6613 = vpack.c.b16 %v6605, %v6605
        %v6614 = vpack.c.b16 %v6606, %v6606
        %v6615 = vpack.c.b16 %v6607, %v6607
        %v6616 = vpack.c.b16 %v6608, %v6608
        %v6617 = vpack.c.b16 %v6609, %v6609
        %v6618 = vpack.c.b16 %v6610, %v6610
        %6627 = vst [vmem:[%s288] sm:$0xf] %v6611
        %6628 = vst [vmem:[%s288 + $0x4] sm:$0xf] %v6612
        %6629 = vst [vmem:[%s288 + $0x8] sm:$0xf] %v6613
        %6630 = vst [vmem:[%s288 + $0xc] sm:$0xf] %v6614
        %6631 = vst [vmem:[%s288 + $0x10] sm:$0xf] %v6615
        %6632 = vst [vmem:[%s288 + $0x14] sm:$0xf] %v6616
        %6633 = vst [vmem:[%s288 + $0x18] sm:$0xf] %v6617
        %6634 = vst [vmem:[%s288 + $0x1c] sm:$0xf] %v6618
        %s6635 = sand.u32 %s181, 1
        %s6636 = scalar_lea.sflag [#allocation5], %s6635
        %s6637 = sand.u32 %s181, 1
        %s6638 = smul.addr %s6637, 32
        %s6639 = scalar_lea.vmem [#allocation4], %s6638
        // Predicated region
        $region45: #{tpu_custom_call.1} parent=43 // pred_check
          %p6640 = pneg %p191
        $region46: #{tpu_custom_call.1} parent=43 // pred_check_branch
          %6642 = sbr.rel (%p6640) target = $region48
        $region47: #{tpu_custom_call.1} parent=43 // pred_region
          %s6644 = ssub.s32 512, 512
          %6645 = vsyncadd %s6636, %s6644
          %s6646 = smul.addr %s27, 8
          %s6647 = smul.addr %s6646, 64
          %s6648 = scalar_lea.hbm %s7, %s6647
          %s6649 = sshll.u32 %s6639, 4
          %s6650 = int_to_ptr.vmem [resolvable:$true] %s6649
          %6655 = dma.vmem_to_hbm [thread:$0]  %s6650, 512, %s6648, %s6636, 64, 64, 4
        $region48: #{tpu_custom_call.1} parent=43 // pred_fallthru
          _
      $region44: #{tpu_custom_call.1} parent=5 // pred_fallthru
        _
      %p6656 = scmp.le.s32.totalorder 2, %s22
      // Predicated region
      $region49: #{tpu_custom_call.1} parent=5 // pred_check
        %p6657 = pneg %p6656
      $region50: #{tpu_custom_call.1} parent=5 // pred_check_branch
        %6659 = sbr.rel (%p6657) target = $region52
      $region51: #{tpu_custom_call.1} parent=5 // pred_region
        %s6660 = ssub.s32 %s22, 2
        // Predicated region
        $region53: #{tpu_custom_call.1} parent=51 // pred_check
          %p6661 = pneg %p197
        $region54: #{tpu_custom_call.1} parent=51 // pred_check_branch
          %6663 = sbr.rel (%p6661) target = $region56
        $region55: #{tpu_custom_call.1} parent=51 // pred_region
          %s6664 = sand.u32 %s182, 1
          %s6665 = scalar_lea.sflag [#allocation5], %s6664
          %s6666 = sand.u32 %s182, 1
          %s6667 = smul.addr %s6666, 32
          %s6668 = scalar_lea.vmem [#allocation4], %s6667
          %6669 = dma.done %s6665, 512
        $region56: #{tpu_custom_call.1} parent=51 // pred_fallthru
          _
      $region52: #{tpu_custom_call.1} parent=5 // pred_fallthru
        _
    $region6: #{tpu_custom_call.1} parent=1 // loop_footer
      %s26 = sadd.s32 1, %s22
    $region7: #{tpu_custom_call.1} parent=1 // loop_footer_branch
      %21 = sbr.rel target = $region3
    $region8: #{tpu_custom_call.1} parent=1 // loop_exit
      _
    %6670 = vsyncpa [#allocation5], 1
    %s6671 = scalar_lea.sflag [#allocation5], 1
    %6672 = vsyncpa %s6671, 1

</llo_original>
